<compile_context>
chip_gen: v5e
topology: v5e:2x2
jax: 0.10.0
libtpu: 0.0.40
codegen_flags: <defaults>
</compile_context>

<pallas_src>
import functools

import numpy as np

import jax
import jax.numpy as jnp
from jax import lax
from jax.experimental import pallas as pl
from jax.experimental.pallas import tpu as pltpu


# ----------------------------------------------------------------------------
# Tiling helpers
# ----------------------------------------------------------------------------
def _round_up(x, m):
    return ((x + m - 1) // m) * m


def _pick_tm(m, tmax):
    """M-tile size: <= tmax, a multiple of 8 (or == M), and giving at least
    two grid blocks whenever M allows it so ("parallel",) uses both v7x TCs."""
    if m <= 2 * tmax:
        tm = _round_up(-(-m // 2), 8)          # ceil(m/2) rounded up to 8
        return m if tm >= m else tm
    return tmax


# ----------------------------------------------------------------------------
# Pallas kernel 1:  Y = [relu](X @ W + b)   (bf16 operands, f32 accumulation)
# ----------------------------------------------------------------------------
def _mm_bias_act_kernel(x_ref, w_ref, b_ref, o_ref, *, apply_relu):
    acc = jnp.dot(x_ref[...], w_ref[...], preferred_element_type=jnp.float32)
    acc = acc + b_ref[...]                       # (TM, N) + (1, N), f32
    if apply_relu:
        acc = jnp.maximum(acc, 0.0)
    o_ref[...] = acc.astype(o_ref.dtype)


def matmul_bias(x, w, b, *, relu, out_dtype=jnp.bfloat16, tmax=512):
    """x: (M, K), w: (K, N), b: (N,) -> (M, N) via an M-tiled Pallas matmul."""
    M, K = x.shape
    N = w.shape[1]

    x = x.astype(jnp.bfloat16)
    w = w.astype(jnp.bfloat16)
    b = b.reshape(1, N).astype(jnp.float32)

    tm = _pick_tm(M, tmax)
    grid = (pl.cdiv(M, tm),)          # partial edge block: Pallas masks stores

    cost = pl.CostEstimate(
        flops=2 * M * K * N,
        transcendentals=0,
        bytes_accessed=(M * K + K * N) * 2 + N * 4
                       + M * N * np.dtype(out_dtype).itemsize,
    )

    return pl.pallas_call(
        functools.partial(_mm_bias_act_kernel, apply_relu=relu),
        out_shape=jax.ShapeDtypeStruct((M, N), out_dtype),
        grid=grid,
        in_specs=[
            pl.BlockSpec((tm, K), lambda i: (i, 0)),   # X tile (pipelined)
            pl.BlockSpec((K, N), lambda i: (0, 0)),    # W stays resident
            pl.BlockSpec((1, N), lambda i: (0, 0)),    # bias stays resident
        ],
        out_specs=pl.BlockSpec((tm, N), lambda i: (i, 0)),
        compiler_params=pltpu.CompilerParams(
            dimension_semantics=("parallel",),         # megacore on v7x
            # Let XLA fuse the im2col slice/concat/cast producer into the X
            # operand read instead of materializing patches in HBM.
            allow_input_fusion=[True, False, False],
        ),
        cost_estimate=cost,
    )(x, w, b)


# ----------------------------------------------------------------------------
# Pallas kernel 2: fused conv4 (k=4, s=2 on a 6x6x128 input) + fc.
# The (B,2,2,256) conv4 activation never leaves VMEM.
# ----------------------------------------------------------------------------
def _conv4_fc_kernel(x_ref, w4_ref, b4_ref, wfc_ref, bfc_ref, o_ref):
    # x_ref  : (tb, 4*2048) — per-sample concat of conv4's 4 output-pixel
    #          im2col rows; slab index p = h*2 + w (HWC flatten order).
    # w4_ref : (2048, 256)   b4_ref : (1, 256)
    # wfc_ref: (1024, E) fc weight folded over the HWC flatten; bfc_ref: (1,E)
    k4 = w4_ref.shape[0]          # 2048
    c4 = w4_ref.shape[1]          # 256
    acc = jnp.zeros(o_ref.shape, jnp.float32)
    for p in range(4):            # unrolled: 4 conv + 4 fc partial matmuls
        x_p = x_ref[:, p * k4:(p + 1) * k4]                    # (tb, 2048)
        y_p = jnp.dot(x_p, w4_ref[...],
                      preferred_element_type=jnp.float32)      # (tb, 256)
        y_p = jnp.maximum(y_p + b4_ref[...], 0.0)              # conv4 + ReLU
        w_p = wfc_ref[p * c4:(p + 1) * c4, :]                  # (256, E)
        acc = acc + jnp.dot(y_p.astype(wfc_ref.dtype), w_p,
                            preferred_element_type=jnp.float32)
    o_ref[...] = (acc + bfc_ref[...]).astype(o_ref.dtype)


def conv4_fc_fused(patches, w4_mat, b4, wfc, bfc, *, out_dtype=jnp.float32,
                   tb_max=256):
    """patches: (4B, 2048) conv4 im2col rows ordered (b, p=h*2+w)."""
    M4, K4 = patches.shape
    assert M4 % 4 == 0
    B = M4 // 4
    N4 = w4_mat.shape[1]
    KF, E = wfc.shape
    assert KF == 4 * N4

    # (4B, 2048) -> (B, 8192) is a row-major regrouping: no data movement.
    x = patches.reshape(B, 4 * K4).astype(jnp.bfloat16)
    w4 = w4_mat.astype(jnp.bfloat16)
    wfc = wfc.astype(jnp.bfloat16)
    b4 = b4.reshape(1, N4).astype(jnp.float32)
    bfc = bfc.reshape(1, E).astype(jnp.float32)

    tb = _pick_tm(B, tb_max)
    grid = (pl.cdiv(B, tb),)

    cost = pl.CostEstimate(
        flops=2 * M4 * K4 * N4 + 2 * B * KF * E,
        transcendentals=0,
        bytes_accessed=(B * 4 * K4 + K4 * N4 + KF * E) * 2
                       + (N4 + E) * 4 + B * E * np.dtype(out_dtype).itemsize,
    )

    return pl.pallas_call(
        _conv4_fc_kernel,
        out_shape=jax.ShapeDtypeStruct((B, E), out_dtype),
        grid=grid,
        in_specs=[
            pl.BlockSpec((tb, 4 * K4), lambda i: (i, 0)),   # patch slabs
            pl.BlockSpec((K4, N4), lambda i: (0, 0)),       # conv4 W resident
            pl.BlockSpec((1, N4), lambda i: (0, 0)),
            pl.BlockSpec((KF, E), lambda i: (0, 0)),        # fc W resident
            pl.BlockSpec((1, E), lambda i: (0, 0)),
        ],
        out_specs=pl.BlockSpec((tb, E), lambda i: (i, 0)),
        compiler_params=pltpu.CompilerParams(
            dimension_semantics=("parallel",),
            allow_input_fusion=[True, False, False, False, False],
            vmem_limit_bytes=32 * 1024 * 1024,   # portable to v5e's 16 MiB default
        ),
        cost_estimate=cost,
    )(x, w4, b4, wfc, bfc)


# ----------------------------------------------------------------------------
# Conv2d(k=4, stride=2, valid) + ReLU via im2col feeding the Pallas matmul.
# ----------------------------------------------------------------------------
def _im2col_4x4_s2(x_nhwc):
    """(B, H, W, C) -> (B*Ho*Wo, 16*C) patches, K ordered (kh, kw, cin)."""
    B, H, W, C = x_nhwc.shape
    Ho = (H - 4) // 2 + 1
    Wo = (W - 4) // 2 + 1
    cols = []
    for kh in range(4):
        for kw in range(4):
            cols.append(x_nhwc[:, kh:kh + 2 * Ho:2, kw:kw + 2 * Wo:2, :])
    patches = jnp.concatenate(cols, axis=-1)            # (B, Ho, Wo, 16*C)
    return patches.reshape(B * Ho * Wo, 16 * C), (B, Ho, Wo)


def conv4x4_s2_relu_pallas(x_nhwc, w_mat, b, *, tmax=512):
    """w_mat: (16*Cin, Cout), rows ordered (kh, kw, cin) to match _im2col."""
    patches, (B, Ho, Wo) = _im2col_4x4_s2(x_nhwc)
    cout = w_mat.shape[1]
    y = matmul_bias(patches, w_mat, b, relu=True, out_dtype=jnp.bfloat16,
                    tmax=tmax)
    return y.reshape(B, Ho, Wo, cout)


def conv1_first_layer(x_nchw, w_oihw, b):
    # First conv (3 -> 32): handled by XLA's native conv per the perf review.
    # TODO(synk): replace with an all-Pallas conv1 (packed input layout +
    # in-register window assembly) if a pure-Pallas path is required.
    y = lax.conv_general_dilated(
        x_nchw.astype(jnp.bfloat16),
        w_oihw.astype(jnp.bfloat16),
        window_strides=(2, 2),
        padding='VALID',
        dimension_numbers=('NCHW', 'OIHW', 'NHWC'),
        preferred_element_type=jnp.float32,
    )
    y = jnp.maximum(y + b.reshape(1, 1, 1, -1), 0.0)
    return y.astype(jnp.bfloat16)                        # (B, 31, 31, 32)


# ----------------------------------------------------------------------------
# Encoder module (parameters initialized deterministically in-script)
# ----------------------------------------------------------------------------
class EncoderPallas:
    def __init__(self, config, key):
        if config['activation function'] != 'relu':
            raise NotImplementedError('Not implemented other than Relu as of now')
        self.embed_size = config['embedding size']

        keys = jax.random.split(key, 5)

        def conv_params(k, cin, cout):
            kw_, kb_ = jax.random.split(k)
            fan_in = cin * 16
            bound = 1.0 / (fan_in ** 0.5)
            w = jax.random.uniform(kw_, (cout, cin, 4, 4), jnp.float32, -bound, bound)
            bias = jax.random.uniform(kb_, (cout,), jnp.float32, -bound, bound)
            return w, bias

        # conv1 stays OIHW (for lax.conv); conv2-4 are pre-reshaped once into
        # the (16*Cin, Cout) matrices consumed by the Pallas matmul, with rows
        # ordered (kh, kw, cin) to match _im2col_4x4_s2.
        self.conv1 = conv_params(keys[0], 3, 32)

        def conv_mat(k, cin, cout):
            w, bias = conv_params(k, cin, cout)
            w_mat = jnp.transpose(w, (2, 3, 1, 0)).reshape(16 * cin, cout)
            return w_mat, bias

        self.conv2 = conv_mat(keys[1], 32, 64)
        self.conv3 = conv_mat(keys[2], 64, 128)
        self.conv4 = conv_mat(keys[3], 128, 256)

        if self.embed_size == 1024:
            self.fc = None                               # nn.Identity()
        else:
            kw_, kb_ = jax.random.split(keys[4])
            bound = 1.0 / (1024.0 ** 0.5)
            # PyTorch-layout Linear weight (embed, 1024) defined over the NCHW
            # (c, h, w) flatten order ...
            w_pt = jax.random.uniform(kw_, (self.embed_size, 1024), jnp.float32,
                                      -bound, bound)
            fc_b = jax.random.uniform(kb_, (self.embed_size,), jnp.float32,
                                      -bound, bound)
            # ... with the flatten permutation folded into the rows once here,
            # so the forward pass needs no runtime NHWC->NCHW transpose:
            #   ours:    k' = (h*2 + w) * 256 + c
            #   PyTorch: k  = c * 4 + (h*2 + w)
            w_kn = w_pt.T                                            # rows k
            w_fold = w_kn.reshape(256, 4, self.embed_size)
            w_fold = jnp.transpose(w_fold, (1, 0, 2)).reshape(1024, self.embed_size)
            self.fc = (w_fold, fc_b)

    def __call__(self, observation_nchw):
        x = observation_nchw.astype(jnp.float32)

        x = conv1_first_layer(x, *self.conv1)                       # (B,31,31, 32)
        x = conv4x4_s2_relu_pallas(x, *self.conv2, tmax=2048)       # (B,14,14, 64)
        x = conv4x4_s2_relu_pallas(x, *self.conv3, tmax=2048)       # (B, 6, 6,128)

        B = x.shape[0]
        if self.fc is None:
            # nn.Identity(): conv4 as a standalone Pallas matmul, then
            # reproduce PyTorch's NCHW .view(-1, 1024) exactly.
            x = conv4x4_s2_relu_pallas(x, *self.conv4, tmax=512)    # (B,2,2,256)
            return jnp.transpose(x, (0, 3, 1, 2)).reshape(B, 1024).astype(jnp.float32)

        # Fused conv4 + fc: conv4's activation stays in VMEM.
        patches, _ = _im2col_4x4_s2(x)                              # (4B, 2048)
        return conv4_fc_fused(patches, self.conv4[0], self.conv4[1],
                              self.fc[0], self.fc[1], out_dtype=jnp.float32)


if __name__ == "__main__":
    cfg = {'activation function': 'relu', 'embedding size': 256}
    enc = EncoderPallas(cfg, jax.random.PRNGKey(1))

    # Observation must be 64x64 spatially so conv4's output flattens to 1024,
    # exactly as the PyTorch module assumes.
    obs = jax.random.normal(jax.random.PRNGKey(0), (2, 3, 64, 64), jnp.float32)

    out = jax.jit(enc)(obs)
    out = jax.block_until_ready(out)
    assert out.shape == (2, cfg['embedding size']), out.shape
    assert out.dtype == jnp.float32, out.dtype
    print("KERNEL_OK")
</pallas_src>

<mosaic_0001>
module attributes {stable_mosaic.version = 11 : i64} {
  func.func @_mm_bias_act_kernel(%arg0: i32, %arg1: memref<200x512xbf16, #tpu.memory_space<vmem>>, %arg2: memref<512x64xbf16, #tpu.memory_space<vmem>>, %arg3: memref<1x64xf32, #tpu.memory_space<vmem>>, %arg4: memref<200x64xbf16, #tpu.memory_space<vmem>>) attributes {dimension_semantics = [#tpu.dimension_semantics<parallel>], iteration_bounds = array<i64: 2>, scalar_prefetch = 0 : i64, scratch_operands = 0 : i64, tpu.core_type = #tpu.core_type<tc>, window_params = [{transform_indices = @transform_0, window_bounds = array<i64: 200, 512>}, {pipeline_mode = #tpu.pipeline_mode<synchronous>, transform_indices = @transform_1, window_bounds = array<i64: 512, 64>}, {pipeline_mode = #tpu.pipeline_mode<synchronous>, transform_indices = @transform_2, window_bounds = array<i64: 1, 64>}, {transform_indices = @transform_3, window_bounds = array<i64: 200, 64>}]} {
    %c0 = arith.constant 0 : index
    %c0_0 = arith.constant 0 : index
    %0 = vector.load %arg1[%c0, %c0_0] : memref<200x512xbf16, #tpu.memory_space<vmem>>, vector<200x512xbf16>
    %c0_1 = arith.constant 0 : index
    %c0_2 = arith.constant 0 : index
    %1 = vector.load %arg2[%c0_1, %c0_2] : memref<512x64xbf16, #tpu.memory_space<vmem>>, vector<512x64xbf16>
    %cst = arith.constant dense<0.000000e+00> : vector<200x64xf32>
    %2 = tpu.matmul %0, %1, %cst {dimension_numbers = #tpu.dot_dimension_numbers<[1], [0], [0], [1], [0, 0, 1, 1], [], []>} : vector<200x512xbf16>, vector<512x64xbf16>, vector<200x64xf32> -> vector<200x64xf32>
    %c0_3 = arith.constant 0 : index
    %c0_4 = arith.constant 0 : index
    %3 = vector.load %arg3[%c0_3, %c0_4] : memref<1x64xf32, #tpu.memory_space<vmem>>, vector<1x64xf32>
    %4 = vector.broadcast %3 : vector<1x64xf32> to vector<200x64xf32>
    %5 = arith.addf %2, %4 : vector<200x64xf32>
    %cst_5 = arith.constant 0.000000e+00 : f32
    %6 = vector.broadcast %cst_5 : f32 to vector<200x64xf32>
    %7 = arith.maximumf %5, %6 : vector<200x64xf32>
    %8 = arith.truncf %7 : vector<200x64xf32> to vector<200x64xbf16>
    %c0_6 = arith.constant 0 : index
    %c0_7 = arith.constant 0 : index
    %9 = vector.load %arg4[%c0_6, %c0_7] : memref<200x64xbf16, #tpu.memory_space<vmem>>, vector<200x64xbf16>
    tpu.vector_store %arg4[%c0_6, %c0_7], %8 {strides = array<i32>} : memref<200x64xbf16, #tpu.memory_space<vmem>>, vector<200x64xbf16>,
    return
  }
  func.func @transform_0(%arg0: i32) -> (i32, i32) {
    %c0_i32 = arith.constant 0 : i32
    %c0_i32_0 = arith.constant 0 : i32
    return %arg0, %c0_i32 : i32, i32
  }
  func.func @transform_1(%arg0: i32) -> (i32, i32) {
    %c0_i32 = arith.constant 0 : i32
    %c0_i32_0 = arith.constant 0 : i32
    %c0_i32_1 = arith.constant 0 : i32
    return %c0_i32, %c0_i32_0 : i32, i32
  }
  func.func @transform_2(%arg0: i32) -> (i32, i32) {
    %c0_i32 = arith.constant 0 : i32
    %c0_i32_0 = arith.constant 0 : i32
    %c0_i32_1 = arith.constant 0 : i32
    return %c0_i32, %c0_i32_0 : i32, i32
  }
  func.func @transform_3(%arg0: i32) -> (i32, i32) {
    %c0_i32 = arith.constant 0 : i32
    %c0_i32_0 = arith.constant 0 : i32
    return %arg0, %c0_i32 : i32, i32
  }
}

module attributes {stable_mosaic.version = 11 : i64} {
  func.func @_mm_bias_act_kernel(%arg0: i32, %arg1: memref<40x1024xbf16, #tpu.memory_space<vmem>>, %arg2: memref<1024x128xbf16, #tpu.memory_space<vmem>>, %arg3: memref<1x128xf32, #tpu.memory_space<vmem>>, %arg4: memref<40x128xbf16, #tpu.memory_space<vmem>>) attributes {dimension_semantics = [#tpu.dimension_semantics<parallel>], iteration_bounds = array<i64: 2>, scalar_prefetch = 0 : i64, scratch_operands = 0 : i64, tpu.core_type = #tpu.core_type<tc>, window_params = [{transform_indices = @transform_0, window_bounds = array<i64: 40, 1024>}, {pipeline_mode = #tpu.pipeline_mode<synchronous>, transform_indices = @transform_1, window_bounds = array<i64: 1024, 128>}, {pipeline_mode = #tpu.pipeline_mode<synchronous>, transform_indices = @transform_2, window_bounds = array<i64: 1, 128>}, {transform_indices = @transform_3, window_bounds = array<i64: 40, 128>}]} {
    %c0 = arith.constant 0 : index
    %c0_0 = arith.constant 0 : index
    %0 = vector.load %arg1[%c0, %c0_0] : memref<40x1024xbf16, #tpu.memory_space<vmem>>, vector<40x1024xbf16>
    %c0_1 = arith.constant 0 : index
    %c0_2 = arith.constant 0 : index
    %1 = vector.load %arg2[%c0_1, %c0_2] : memref<1024x128xbf16, #tpu.memory_space<vmem>>, vector<1024x128xbf16>
    %cst = arith.constant dense<0.000000e+00> : vector<40x128xf32>
    %2 = tpu.matmul %0, %1, %cst {dimension_numbers = #tpu.dot_dimension_numbers<[1], [0], [0], [1], [0, 0, 1, 1], [], []>} : vector<40x1024xbf16>, vector<1024x128xbf16>, vector<40x128xf32> -> vector<40x128xf32>
    %c0_3 = arith.constant 0 : index
    %c0_4 = arith.constant 0 : index
    %3 = vector.load %arg3[%c0_3, %c0_4] : memref<1x128xf32, #tpu.memory_space<vmem>>, vector<1x128xf32>
    %4 = vector.broadcast %3 : vector<1x128xf32> to vector<40x128xf32>
    %5 = arith.addf %2, %4 : vector<40x128xf32>
    %cst_5 = arith.constant 0.000000e+00 : f32
    %6 = vector.broadcast %cst_5 : f32 to vector<40x128xf32>
    %7 = arith.maximumf %5, %6 : vector<40x128xf32>
    %8 = arith.truncf %7 : vector<40x128xf32> to vector<40x128xbf16>
    %c0_6 = arith.constant 0 : index
    %c0_7 = arith.constant 0 : index
    %9 = vector.load %arg4[%c0_6, %c0_7] : memref<40x128xbf16, #tpu.memory_space<vmem>>, vector<40x128xbf16>
    tpu.vector_store %arg4[%c0_6, %c0_7], %8 {strides = array<i32>} : memref<40x128xbf16, #tpu.memory_space<vmem>>, vector<40x128xbf16>,
    return
  }
  func.func @transform_0(%arg0: i32) -> (i32, i32) {
    %c0_i32 = arith.constant 0 : i32
    %c0_i32_0 = arith.constant 0 : i32
    return %arg0, %c0_i32 : i32, i32
  }
  func.func @transform_1(%arg0: i32) -> (i32, i32) {
    %c0_i32 = arith.constant 0 : i32
    %c0_i32_0 = arith.constant 0 : i32
    %c0_i32_1 = arith.constant 0 : i32
    return %c0_i32, %c0_i32_0 : i32, i32
  }
  func.func @transform_2(%arg0: i32) -> (i32, i32) {
    %c0_i32 = arith.constant 0 : i32
    %c0_i32_0 = arith.constant 0 : i32
    %c0_i32_1 = arith.constant 0 : i32
    return %c0_i32, %c0_i32_0 : i32, i32
  }
  func.func @transform_3(%arg0: i32) -> (i32, i32) {
    %c0_i32 = arith.constant 0 : i32
    %c0_i32_0 = arith.constant 0 : i32
    return %arg0, %c0_i32 : i32, i32
  }
}

module attributes {stable_mosaic.version = 11 : i64} {
  func.func @_conv4_fc_kernel(%arg0: i32, %arg1: memref<2x8192xbf16, #tpu.memory_space<vmem>>, %arg2: memref<2048x256xbf16, #tpu.memory_space<vmem>>, %arg3: memref<1x256xf32, #tpu.memory_space<vmem>>, %arg4: memref<1024x256xbf16, #tpu.memory_space<vmem>>, %arg5: memref<1x256xf32, #tpu.memory_space<vmem>>, %arg6: memref<2x256xf32, #tpu.memory_space<vmem>>) attributes {dimension_semantics = [#tpu.dimension_semantics<parallel>], iteration_bounds = array<i64: 1>, scalar_prefetch = 0 : i64, scratch_operands = 0 : i64, tpu.core_type = #tpu.core_type<tc>, window_params = [{transform_indices = @transform_0, window_bounds = array<i64: 2, 8192>}, {pipeline_mode = #tpu.pipeline_mode<synchronous>, transform_indices = @transform_1, window_bounds = array<i64: 2048, 256>}, {pipeline_mode = #tpu.pipeline_mode<synchronous>, transform_indices = @transform_2, window_bounds = array<i64: 1, 256>}, {pipeline_mode = #tpu.pipeline_mode<synchronous>, transform_indices = @transform_3, window_bounds = array<i64: 1024, 256>}, {pipeline_mode = #tpu.pipeline_mode<synchronous>, transform_indices = @transform_4, window_bounds = array<i64: 1, 256>}, {transform_indices = @transform_5, window_bounds = array<i64: 2, 256>}]} {
    %cst = arith.constant 0.000000e+00 : f32
    %0 = vector.broadcast %cst : f32 to vector<2x256xf32>
    %c0 = arith.constant 0 : index
    %c0_0 = arith.constant 0 : index
    %1 = vector.load %arg1[%c0, %c0_0] : memref<2x8192xbf16, #tpu.memory_space<vmem>>, vector<2x2048xbf16>
    %c0_1 = arith.constant 0 : index
    %c0_2 = arith.constant 0 : index
    %2 = vector.load %arg2[%c0_1, %c0_2] : memref<2048x256xbf16, #tpu.memory_space<vmem>>, vector<2048x256xbf16>
    %cst_3 = arith.constant dense<0.000000e+00> : vector<2x256xf32>
    %3 = tpu.matmul %1, %2, %cst_3 {dimension_numbers = #tpu.dot_dimension_numbers<[1], [0], [0], [1], [0, 0, 1, 1], [], []>} : vector<2x2048xbf16>, vector<2048x256xbf16>, vector<2x256xf32> -> vector<2x256xf32>
    %c0_4 = arith.constant 0 : index
    %c0_5 = arith.constant 0 : index
    %4 = vector.load %arg3[%c0_4, %c0_5] : memref<1x256xf32, #tpu.memory_space<vmem>>, vector<1x256xf32>
    %5 = vector.broadcast %4 : vector<1x256xf32> to vector<2x256xf32>
    %6 = arith.addf %3, %5 : vector<2x256xf32>
    %cst_6 = arith.constant 0.000000e+00 : f32
    %7 = vector.broadcast %cst_6 : f32 to vector<2x256xf32>
    %8 = arith.maximumf %6, %7 : vector<2x256xf32>
    %c0_7 = arith.constant 0 : index
    %c0_8 = arith.constant 0 : index
    %9 = vector.load %arg4[%c0_7, %c0_8] : memref<1024x256xbf16, #tpu.memory_space<vmem>>, vector<256x256xbf16>
    %10 = arith.truncf %8 : vector<2x256xf32> to vector<2x256xbf16>
    %cst_9 = arith.constant dense<0.000000e+00> : vector<2x256xf32>
    %11 = tpu.matmul %10, %9, %cst_9 {dimension_numbers = #tpu.dot_dimension_numbers<[1], [0], [0], [1], [0, 0, 1, 1], [], []>} : vector<2x256xbf16>, vector<256x256xbf16>, vector<2x256xf32> -> vector<2x256xf32>
    %12 = arith.addf %0, %11 : vector<2x256xf32>
    %c0_10 = arith.constant 0 : index
    %c2048 = arith.constant 2048 : index
    %13 = vector.load %arg1[%c0_10, %c2048] : memref<2x8192xbf16, #tpu.memory_space<vmem>>, vector<2x2048xbf16>
    %c0_11 = arith.constant 0 : index
    %c0_12 = arith.constant 0 : index
    %14 = vector.load %arg2[%c0_11, %c0_12] : memref<2048x256xbf16, #tpu.memory_space<vmem>>, vector<2048x256xbf16>
    %cst_13 = arith.constant dense<0.000000e+00> : vector<2x256xf32>
    %15 = tpu.matmul %13, %14, %cst_13 {dimension_numbers = #tpu.dot_dimension_numbers<[1], [0], [0], [1], [0, 0, 1, 1], [], []>} : vector<2x2048xbf16>, vector<2048x256xbf16>, vector<2x256xf32> -> vector<2x256xf32>
    %c0_14 = arith.constant 0 : index
    %c0_15 = arith.constant 0 : index
    %16 = vector.load %arg3[%c0_14, %c0_15] : memref<1x256xf32, #tpu.memory_space<vmem>>, vector<1x256xf32>
    %17 = vector.broadcast %16 : vector<1x256xf32> to vector<2x256xf32>
    %18 = arith.addf %15, %17 : vector<2x256xf32>
    %cst_16 = arith.constant 0.000000e+00 : f32
    %19 = vector.broadcast %cst_16 : f32 to vector<2x256xf32>
    %20 = arith.maximumf %18, %19 : vector<2x256xf32>
    %c256 = arith.constant 256 : index
    %c0_17 = arith.constant 0 : index
    %21 = vector.load %arg4[%c256, %c0_17] : memref<1024x256xbf16, #tpu.memory_space<vmem>>, vector<256x256xbf16>
    %22 = arith.truncf %20 : vector<2x256xf32> to vector<2x256xbf16>
    %cst_18 = arith.constant dense<0.000000e+00> : vector<2x256xf32>
    %23 = tpu.matmul %22, %21, %cst_18 {dimension_numbers = #tpu.dot_dimension_numbers<[1], [0], [0], [1], [0, 0, 1, 1], [], []>} : vector<2x256xbf16>, vector<256x256xbf16>, vector<2x256xf32> -> vector<2x256xf32>
    %24 = arith.addf %12, %23 : vector<2x256xf32>
    %c0_19 = arith.constant 0 : index
    %c4096 = arith.constant 4096 : index
    %25 = vector.load %arg1[%c0_19, %c4096] : memref<2x8192xbf16, #tpu.memory_space<vmem>>, vector<2x2048xbf16>
    %c0_20 = arith.constant 0 : index
    %c0_21 = arith.constant 0 : index
    %26 = vector.load %arg2[%c0_20, %c0_21] : memref<2048x256xbf16, #tpu.memory_space<vmem>>, vector<2048x256xbf16>
    %cst_22 = arith.constant dense<0.000000e+00> : vector<2x256xf32>
    %27 = tpu.matmul %25, %26, %cst_22 {dimension_numbers = #tpu.dot_dimension_numbers<[1], [0], [0], [1], [0, 0, 1, 1], [], []>} : vector<2x2048xbf16>, vector<2048x256xbf16>, vector<2x256xf32> -> vector<2x256xf32>
    %c0_23 = arith.constant 0 : index
    %c0_24 = arith.constant 0 : index
    %28 = vector.load %arg3[%c0_23, %c0_24] : memref<1x256xf32, #tpu.memory_space<vmem>>, vector<1x256xf32>
    %29 = vector.broadcast %28 : vector<1x256xf32> to vector<2x256xf32>
    %30 = arith.addf %27, %29 : vector<2x256xf32>
    %cst_25 = arith.constant 0.000000e+00 : f32
    %31 = vector.broadcast %cst_25 : f32 to vector<2x256xf32>
    %32 = arith.maximumf %30, %31 : vector<2x256xf32>
    %c512 = arith.constant 512 : index
    %c0_26 = arith.constant 0 : index
    %33 = vector.load %arg4[%c512, %c0_26] : memref<1024x256xbf16, #tpu.memory_space<vmem>>, vector<256x256xbf16>
    %34 = arith.truncf %32 : vector<2x256xf32> to vector<2x256xbf16>
    %cst_27 = arith.constant dense<0.000000e+00> : vector<2x256xf32>
    %35 = tpu.matmul %34, %33, %cst_27 {dimension_numbers = #tpu.dot_dimension_numbers<[1], [0], [0], [1], [0, 0, 1, 1], [], []>} : vector<2x256xbf16>, vector<256x256xbf16>, vector<2x256xf32> -> vector<2x256xf32>
    %36 = arith.addf %24, %35 : vector<2x256xf32>
    %c0_28 = arith.constant 0 : index
    %c6144 = arith.constant 6144 : index
    %37 = vector.load %arg1[%c0_28, %c6144] : memref<2x8192xbf16, #tpu.memory_space<vmem>>, vector<2x2048xbf16>
    %c0_29 = arith.constant 0 : index
    %c0_30 = arith.constant 0 : index
    %38 = vector.load %arg2[%c0_29, %c0_30] : memref<2048x256xbf16, #tpu.memory_space<vmem>>, vector<2048x256xbf16>
    %cst_31 = arith.constant dense<0.000000e+00> : vector<2x256xf32>
    %39 = tpu.matmul %37, %38, %cst_31 {dimension_numbers = #tpu.dot_dimension_numbers<[1], [0], [0], [1], [0, 0, 1, 1], [], []>} : vector<2x2048xbf16>, vector<2048x256xbf16>, vector<2x256xf32> -> vector<2x256xf32>
    %c0_32 = arith.constant 0 : index
    %c0_33 = arith.constant 0 : index
    %40 = vector.load %arg3[%c0_32, %c0_33] : memref<1x256xf32, #tpu.memory_space<vmem>>, vector<1x256xf32>
    %41 = vector.broadcast %40 : vector<1x256xf32> to vector<2x256xf32>
    %42 = arith.addf %39, %41 : vector<2x256xf32>
    %cst_34 = arith.constant 0.000000e+00 : f32
    %43 = vector.broadcast %cst_34 : f32 to vector<2x256xf32>
    %44 = arith.maximumf %42, %43 : vector<2x256xf32>
    %c768 = arith.constant 768 : index
    %c0_35 = arith.constant 0 : index
    %45 = vector.load %arg4[%c768, %c0_35] : memref<1024x256xbf16, #tpu.memory_space<vmem>>, vector<256x256xbf16>
    %46 = arith.truncf %44 : vector<2x256xf32> to vector<2x256xbf16>
    %cst_36 = arith.constant dense<0.000000e+00> : vector<2x256xf32>
    %47 = tpu.matmul %46, %45, %cst_36 {dimension_numbers = #tpu.dot_dimension_numbers<[1], [0], [0], [1], [0, 0, 1, 1], [], []>} : vector<2x256xbf16>, vector<256x256xbf16>, vector<2x256xf32> -> vector<2x256xf32>
    %48 = arith.addf %36, %47 : vector<2x256xf32>
    %c0_37 = arith.constant 0 : index
    %c0_38 = arith.constant 0 : index
    %49 = vector.load %arg5[%c0_37, %c0_38] : memref<1x256xf32, #tpu.memory_space<vmem>>, vector<1x256xf32>
    %50 = vector.broadcast %49 : vector<1x256xf32> to vector<2x256xf32>
    %51 = arith.addf %48, %50 : vector<2x256xf32>
    %c0_39 = arith.constant 0 : index
    %c0_40 = arith.constant 0 : index
    %52 = vector.load %arg6[%c0_39, %c0_40] : memref<2x256xf32, #tpu.memory_space<vmem>>, vector<2x256xf32>
    tpu.vector_store %arg6[%c0_39, %c0_40], %51 {strides = array<i32>} : memref<2x256xf32, #tpu.memory_space<vmem>>, vector<2x256xf32>,
    return
  }
  func.func @transform_0(%arg0: i32) -> (i32, i32) {
    %c0_i32 = arith.constant 0 : i32
    %c0_i32_0 = arith.constant 0 : i32
    return %arg0, %c0_i32 : i32, i32
  }
  func.func @transform_1(%arg0: i32) -> (i32, i32) {
    %c0_i32 = arith.constant 0 : i32
    %c0_i32_0 = arith.constant 0 : i32
    %c0_i32_1 = arith.constant 0 : i32
    return %c0_i32, %c0_i32_0 : i32, i32
  }
  func.func @transform_2(%arg0: i32) -> (i32, i32) {
    %c0_i32 = arith.constant 0 : i32
    %c0_i32_0 = arith.constant 0 : i32
    %c0_i32_1 = arith.constant 0 : i32
    return %c0_i32, %c0_i32_0 : i32, i32
  }
  func.func @transform_3(%arg0: i32) -> (i32, i32) {
    %c0_i32 = arith.constant 0 : i32
    %c0_i32_0 = arith.constant 0 : i32
    %c0_i32_1 = arith.constant 0 : i32
    return %c0_i32, %c0_i32_0 : i32, i32
  }
  func.func @transform_4(%arg0: i32) -> (i32, i32) {
    %c0_i32 = arith.constant 0 : i32
    %c0_i32_0 = arith.constant 0 : i32
    %c0_i32_1 = arith.constant 0 : i32
    return %c0_i32, %c0_i32_0 : i32, i32
  }
  func.func @transform_5(%arg0: i32) -> (i32, i32) {
    %c0_i32 = arith.constant 0 : i32
    %c0_i32_0 = arith.constant 0 : i32
    return %arg0, %c0_i32 : i32, i32
  }
}

</mosaic_0001>

<llo_original>
// kernel: _unnamed_function_.3
$region0: #{_unnamed_function_.3}
  #allocation0 [shape = 'u32[]', space=smem, size = 0x4, offset = 0x4, fixed_abs, tag = 'smem constant byte address 0x4 - core index']
  #allocation1 [shape = 'u32[72,128]{1,0:T(1,128)}', space=vmem, size = 0x9000, scoped, tag = 'internal scratch']
  %s0 = inlined_call_operand.vmem [shape: bf16[392,512], index: 0, kind: input, shape index: {}]
  %s1 = inlined_call_operand.vmem [shape: bf16[512,64], index: 1, kind: input, shape index: {}]
  %s2 = inlined_call_operand.vmem [shape: f32[1,64], index: 2, kind: input, shape index: {}]
  %s3 = inlined_call_operand.vmem [shape: bf16[392,64], index: 3, kind: output, shape index: {}]
  %s4 = sld [smem:[#allocation0]]
  $region89: #{_unnamed_function_.3} parent=0
    _
  %s6 = ssub.s32 1, %s4
  %s7 = scalar_select 0, %s6, %s4
  $region1: #{_unnamed_function_.3} parent=0
    #allocation2 [shape = 'u8[102400]{0}', space=vmem, size = 0x19000, scoped, tag = 'output window, operand 0']
    loop: start=0, step=1, limit=4
    $region2: #{_unnamed_function_.3} parent=1 // loop_pre_header
      _
    $region3: #{_unnamed_function_.3} parent=1 // loop_header
      %s9 = sphi 0, %s13
      %p10 = scmp.ge.s32.totalorder %s9, 4
      %s19 = sphi 0, %s21
      %s22 = sphi 0, %s19
      %s23 = sphi 0, %s22
      %s39 = sphi 0, %s23
      %s43 = sphi 0, %s43
      %s45 = sphi 0, %s43
      %s46 = sphi 0, %s45
      %s60 = sphi 0, %s46
      %s64 = sphi 0, %s64
      %s66 = sphi 0, %s64
      %s67 = sphi 0, %s66
      %s81 = sphi 0, %s67
      %s87 = sphi 0, %s89
      %s90 = sphi 0, %s87
      %s91 = sphi 0, %s90
      %s107 = sphi 0, %s91
    $region4: #{_unnamed_function_.3} parent=1 // loop_header_branch
      %12 = sbr.rel (%p10) target = $region8
    $region5: #{_unnamed_function_.3} parent=1 // loop_body
      %s14 = ssub.s32 %s9, 1
      %s15 = ssub.s32 %s9, 2
      %s16 = sadd.s32 %s9, 1
      %s17 = ssub.s32 %s9, %s16
      %p18 = scmp.eq.s32.totalorder %s17, 0
      %s20 = sadd.s32 %s19, 1
      %s21 = scalar_select %p18, %s19, %s20
      %p24 = pneg %p18
      %p25 = scmp.eq.s32.totalorder %s9, 1
      %p26 = por %p24, %p25
      %p27 = scmp.ne.s32.totalorder %s19, %s22
      %p28 = scmp.eq.s32.totalorder %s9, 0
      %p29 = por %p27, %p28
      %p30 = scmp.ne.s32.totalorder %s19, %s22
      %p31 = scmp.eq.s32.totalorder %s14, 1
      %p32 = por %p30, %p31
      %p33 = scmp.ne.s32.totalorder %s22, %s23
      %p34 = scmp.eq.s32.totalorder %s14, 0
      %p35 = por %p33, %p34
      %p36 = scmp.ne.s32.totalorder %s22, %s23
      %p37 = scmp.eq.s32.totalorder %s15, 1
      %p38 = por %p36, %p37
      %p40 = scmp.ne.s32.totalorder %s23, %s39
      %p41 = scmp.eq.s32.totalorder %s15, 0
      %p42 = por %p40, %p41
      %s44 = sadd.s32 %s43, 1
      %p47 = scmp.eq.s32.totalorder %s9, 1
      %p48 = scmp.ne.s32.totalorder %s43, %s45
      %p49 = scmp.eq.s32.totalorder %s9, 0
      %p50 = por %p48, %p49
      %p51 = scmp.ne.s32.totalorder %s43, %s45
      %p52 = scmp.eq.s32.totalorder %s14, 1
      %p53 = por %p51, %p52
      %p54 = scmp.ne.s32.totalorder %s45, %s46
      %p55 = scmp.eq.s32.totalorder %s14, 0
      %p56 = por %p54, %p55
      %p57 = scmp.ne.s32.totalorder %s45, %s46
      %p58 = scmp.eq.s32.totalorder %s15, 1
      %p59 = por %p57, %p58
      %p61 = scmp.ne.s32.totalorder %s46, %s60
      %p62 = scmp.eq.s32.totalorder %s15, 0
      %p63 = por %p61, %p62
      %s65 = sadd.s32 %s64, 1
      %p68 = scmp.eq.s32.totalorder %s9, 1
      %p69 = scmp.ne.s32.totalorder %s64, %s66
      %p70 = scmp.eq.s32.totalorder %s9, 0
      %p71 = por %p69, %p70
      %p72 = scmp.ne.s32.totalorder %s64, %s66
      %p73 = scmp.eq.s32.totalorder %s14, 1
      %p74 = por %p72, %p73
      %p75 = scmp.ne.s32.totalorder %s66, %s67
      %p76 = scmp.eq.s32.totalorder %s14, 0
      %p77 = por %p75, %p76
      %p78 = scmp.ne.s32.totalorder %s66, %s67
      %p79 = scmp.eq.s32.totalorder %s15, 1
      %p80 = por %p78, %p79
      %p82 = scmp.ne.s32.totalorder %s67, %s81
      %p83 = scmp.eq.s32.totalorder %s15, 0
      %p84 = por %p82, %p83
      %s85 = ssub.s32 %s9, %s16
      %p86 = scmp.eq.s32.totalorder %s85, 0
      %s88 = sadd.s32 %s87, 1
      %s89 = scalar_select %p86, %s87, %s88
      %p92 = pneg %p86
      %p93 = scmp.eq.s32.totalorder %s9, 1
      %p94 = por %p92, %p93
      %p95 = scmp.ne.s32.totalorder %s87, %s90
      %p96 = scmp.eq.s32.totalorder %s9, 0
      %p97 = por %p95, %p96
      %p98 = scmp.ne.s32.totalorder %s87, %s90
      %p99 = scmp.eq.s32.totalorder %s14, 1
      %p100 = por %p98, %p99
      %p101 = scmp.ne.s32.totalorder %s90, %s91
      %p102 = scmp.eq.s32.totalorder %s14, 0
      %p103 = por %p101, %p102
      %p104 = scmp.ne.s32.totalorder %s90, %s91
      %p105 = scmp.eq.s32.totalorder %s15, 1
      %p106 = por %p104, %p105
      %p108 = scmp.ne.s32.totalorder %s91, %s107
      %p109 = scmp.eq.s32.totalorder %s15, 0
      %p110 = por %p108, %p109
      %p111 = scmp.le.s32.totalorder 1, %s9
      %p112 = scmp.lt.s32.totalorder %s9, 3
      %p113 = pnand %p111, %p112
      %p114 = pneg %p113
      // Predicated region
      $region9: #{_unnamed_function_.3} parent=5 // pred_check
        _
      $region10: #{_unnamed_function_.3} parent=5 // pred_check_branch
        %116 = sbr.rel (%p113) target = $region12
      $region11: #{_unnamed_function_.3} parent=5 // pred_region
        %s117 = ssub.s32 %s9, 1
        // Predicated region
        $region13: #{_unnamed_function_.3} parent=11 // pred_check
          %p118 = pneg %p56
        $region14: #{_unnamed_function_.3} parent=11 // pred_check_branch
          %120 = sbr.rel (%p118) target = $region16
        $region15: #{_unnamed_function_.3} parent=11 // pred_region
          _
        $region16: #{_unnamed_function_.3} parent=11 // pred_fallthru
          _
        // Predicated region
        $region17: #{_unnamed_function_.3} parent=11 // pred_check
          %p121 = pneg %p77
        $region18: #{_unnamed_function_.3} parent=11 // pred_check_branch
          %123 = sbr.rel (%p121) target = $region20
        $region19: #{_unnamed_function_.3} parent=11 // pred_region
          _
        $region20: #{_unnamed_function_.3} parent=11 // pred_fallthru
          _
      $region12: #{_unnamed_function_.3} parent=5 // pred_fallthru
        _
      %p124 = scmp.lt.s32.totalorder %s9, 2
      // Predicated region
      $region21: #{_unnamed_function_.3} parent=5 // pred_check
        %p125 = pneg %p124
      $region22: #{_unnamed_function_.3} parent=5 // pred_check_branch
        %127 = sbr.rel (%p125) target = $region24
      $region23: #{_unnamed_function_.3} parent=5 // pred_region
        // Predicated region
        $region25: #{_unnamed_function_.3} parent=23 // pred_check
          %p128 = pneg %p29
        $region26: #{_unnamed_function_.3} parent=23 // pred_check_branch
          %130 = sbr.rel (%p128) target = $region28
        $region27: #{_unnamed_function_.3} parent=23 // pred_region
          %s131 = smul.u32 25, %s9
          %s132 = ssub.s32 49, %s131
          %p133 = scmp.lt.s32.totalorder %s132, 25
          %s134 = scalar_select %p133, %s132, 25
          %s135 = smul.u32 4, %s134
          %s136 = smul.u32 %s135, 4
          %p137 = scmp.lt.s32.totalorder %s131, 48
          %s138 = scalar_select %p137, %s131, 48
          %s139 = smul.addr %s138, 4
          %s140 = smul.addr %s139, 4
          %s141 = scalar_lea.vmem %s0, %s140
          %s142 = smul.u32 25, %s9
          %s143 = ssub.s32 49, %s142
          %p144 = scmp.lt.s32.totalorder %s143, 25
          %s145 = scalar_select %p144, %s143, 25
          %s146 = smul.u32 4, %s145
          %s147 = smul.u32 %s146, 4
        $region28: #{_unnamed_function_.3} parent=23 // pred_fallthru
          _
      $region24: #{_unnamed_function_.3} parent=5 // pred_fallthru
        _
      %p148 = scmp.le.s32.totalorder 1, %s9
      %p149 = scmp.lt.s32.totalorder %s9, 3
      %p150 = pnand %p148, %p149
      %p151 = pneg %p150
      // Predicated region
      $region29: #{_unnamed_function_.3} parent=5 // pred_check
        _
      $region30: #{_unnamed_function_.3} parent=5 // pred_check_branch
        %153 = sbr.rel (%p150) target = $region32
      $region31: #{_unnamed_function_.3} parent=5 // pred_region
        %s154 = ssub.s32 %s9, 1
        %s155 = smul.u32 25, %s14
        %s156 = ssub.s32 49, %s155
        %p157 = scmp.lt.s32.totalorder %s156, 25
        %s158 = scalar_select %p157, %s156, 25
        %s159 = smul.u32 4, %s158
        %s160 = smul.u32 %s159, 4
        %p161 = scmp.lt.s32.totalorder %s155, 48
        %s162 = scalar_select %p161, %s155, 48
        %s163 = smul.addr %s162, 4
        %s164 = smul.addr %s163, 4
        %s165 = scalar_lea.vmem %s0, %s164
        %p166 = pneg %p35
        %p167 = pneg %p32
        %p168 = pneg %p56
        %p169 = pneg %p53
        %p170 = pneg %p77
        %p171 = pneg %p74
        %p172 = pneg %p103
        %p173 = pneg %p100
        %s174 = sand.u32 %s90, 1
        %s175 = sand.u32 %s90, 1
        %s176 = smul.addr %s175, 100
        %s177 = scalar_lea.vmem [#allocation2], %s176
        %s178 = smul.u32 25, %s14
        %s179 = ssub.s32 49, %s178
        %p180 = scmp.lt.s32.totalorder %s179, 25
        %s181 = scalar_select %p180, %s179, 25
        %s182 = smul.u32 4, %s181
        %s183 = smul.u32 %s182, 4
        %p184 = scmp.lt.s32.totalorder %s178, 48
        %s185 = scalar_select %p184, %s178, 48
        %s186 = smul.addr %s185, 4
        %s187 = smul.addr %s186, 4
        %s188 = scalar_lea.vmem %s0, %s187
        %s189 = smul.u32 25, %s14
        %s190 = ssub.s32 49, %s189
        %p191 = scmp.lt.s32.totalorder %s190, 25
        %s192 = scalar_select %p191, %s190, 25
        %s193 = smul.u32 4, %s192
        %s194 = smul.u32 %s193, 4
        %s195 = smul.u32 25, %s14
        %s196 = ssub.s32 49, %s195
        %p197 = scmp.lt.s32.totalorder %s196, 25
        %s198 = scalar_select %p197, %s196, 25
        %s199 = smul.u32 4, %s198
        %v200 = vld [vmem:[%s188] sm:$0xff]
        %v201 = vld [vmem:[%s188 + $0x8] sm:$0xff]
        %v202 = vld [vmem:[%s188 + $0x10] sm:$0xff]
        %v203 = vld [vmem:[%s188 + $0x18] sm:$0xff]
        %v204 = vld [vmem:[%s188 + $0x20] sm:$0xff]
        %v205 = vld [vmem:[%s188 + $0x28] sm:$0xff]
        %v206 = vld [vmem:[%s188 + $0x30] sm:$0xff]
        %v207 = vld [vmem:[%s188 + $0x38] sm:$0xff]
        %v208 = vld [vmem:[%s188 + $0x40] sm:$0xff]
        %v209 = vld [vmem:[%s188 + $0x48] sm:$0xff]
        %v210 = vld [vmem:[%s188 + $0x50] sm:$0xff]
        %v211 = vld [vmem:[%s188 + $0x58] sm:$0xff]
        %v212 = vld [vmem:[%s188 + $0x60] sm:$0xff]
        %v213 = vld [vmem:[%s188 + $0x68] sm:$0xff]
        %v214 = vld [vmem:[%s188 + $0x70] sm:$0xff]
        %v215 = vld [vmem:[%s188 + $0x78] sm:$0xff]
        %v216 = vld [vmem:[%s188 + $0x80] sm:$0xff]
        %v217 = vld [vmem:[%s188 + $0x88] sm:$0xff]
        %v218 = vld [vmem:[%s188 + $0x90] sm:$0xff]
        %v219 = vld [vmem:[%s188 + $0x98] sm:$0xff]
        %v220 = vld [vmem:[%s188 + $0xa0] sm:$0xff]
        %v221 = vld [vmem:[%s188 + $0xa8] sm:$0xff]
        %v222 = vld [vmem:[%s188 + $0xb0] sm:$0xff]
        %v223 = vld [vmem:[%s188 + $0xb8] sm:$0xff]
        %v224 = vld [vmem:[%s188 + $0xc0] sm:$0xff]
        %v225 = vld [vmem:[%s188 + $0xc8] sm:$0xff]
        %v226 = vld [vmem:[%s188 + $0xd0] sm:$0xff]
        %v227 = vld [vmem:[%s188 + $0xd8] sm:$0xff]
        %v228 = vld [vmem:[%s188 + $0xe0] sm:$0xff]
        %v229 = vld [vmem:[%s188 + $0xe8] sm:$0xff]
        %v230 = vld [vmem:[%s188 + $0xf0] sm:$0xff]
        %v231 = vld [vmem:[%s188 + $0xf8] sm:$0xff]
        %v232 = vld [vmem:[%s188 + $0x100] sm:$0xff]
        %v233 = vld [vmem:[%s188 + $0x108] sm:$0xff]
        %v234 = vld [vmem:[%s188 + $0x110] sm:$0xff]
        %v235 = vld [vmem:[%s188 + $0x118] sm:$0xff]
        %v236 = vld [vmem:[%s188 + $0x120] sm:$0xff]
        %v237 = vld [vmem:[%s188 + $0x128] sm:$0xff]
        %v238 = vld [vmem:[%s188 + $0x130] sm:$0xff]
        %v239 = vld [vmem:[%s188 + $0x138] sm:$0xff]
        %v240 = vld [vmem:[%s188 + $0x140] sm:$0xff]
        %v241 = vld [vmem:[%s188 + $0x148] sm:$0xff]
        %v242 = vld [vmem:[%s188 + $0x150] sm:$0xff]
        %v243 = vld [vmem:[%s188 + $0x158] sm:$0xff]
        %v244 = vld [vmem:[%s188 + $0x160] sm:$0xff]
        %v245 = vld [vmem:[%s188 + $0x168] sm:$0xff]
        %v246 = vld [vmem:[%s188 + $0x170] sm:$0xff]
        %v247 = vld [vmem:[%s188 + $0x178] sm:$0xff]
        %v248 = vld [vmem:[%s188 + $0x180] sm:$0xff]
        %v249 = vld [vmem:[%s188 + $0x188] sm:$0xff]
        %v250 = vld [vmem:[%s1] sm:$0xf]
        %v251 = vld [vmem:[%s1 + $0x4] sm:$0xf]
        %v252 = vld [vmem:[%s1 + $0x8] sm:$0xf]
        %v253 = vld [vmem:[%s1 + $0xc] sm:$0xf]
        %v254 = vld [vmem:[%s1 + $0x10] sm:$0xf]
        %v255 = vld [vmem:[%s1 + $0x14] sm:$0xf]
        %v256 = vld [vmem:[%s1 + $0x18] sm:$0xf]
        %v257 = vld [vmem:[%s1 + $0x1c] sm:$0xf]
        %v258 = vld [vmem:[%s1 + $0x20] sm:$0xf]
        %v259 = vld [vmem:[%s1 + $0x24] sm:$0xf]
        %v260 = vld [vmem:[%s1 + $0x28] sm:$0xf]
        %v261 = vld [vmem:[%s1 + $0x2c] sm:$0xf]
        %v262 = vld [vmem:[%s1 + $0x30] sm:$0xf]
        %v263 = vld [vmem:[%s1 + $0x34] sm:$0xf]
        %v264 = vld [vmem:[%s1 + $0x38] sm:$0xf]
        %v265 = vld [vmem:[%s1 + $0x3c] sm:$0xf]
        %v266 = vld [vmem:[%s1 + $0x40] sm:$0xf]
        %v267 = vld [vmem:[%s1 + $0x44] sm:$0xf]
        %v268 = vld [vmem:[%s1 + $0x48] sm:$0xf]
        %v269 = vld [vmem:[%s1 + $0x4c] sm:$0xf]
        %v270 = vld [vmem:[%s1 + $0x50] sm:$0xf]
        %v271 = vld [vmem:[%s1 + $0x54] sm:$0xf]
        %v272 = vld [vmem:[%s1 + $0x58] sm:$0xf]
        %v273 = vld [vmem:[%s1 + $0x5c] sm:$0xf]
        %v274 = vld [vmem:[%s1 + $0x60] sm:$0xf]
        %v275 = vld [vmem:[%s1 + $0x64] sm:$0xf]
        %v276 = vld [vmem:[%s1 + $0x68] sm:$0xf]
        %v277 = vld [vmem:[%s1 + $0x6c] sm:$0xf]
        %v278 = vld [vmem:[%s1 + $0x70] sm:$0xf]
        %v279 = vld [vmem:[%s1 + $0x74] sm:$0xf]
        %v280 = vld [vmem:[%s1 + $0x78] sm:$0xf]
        %v281 = vld [vmem:[%s1 + $0x7c] sm:$0xf]
        %v282 = vld [vmem:[%s1 + $0x80] sm:$0xf]
        %v283 = vld [vmem:[%s1 + $0x84] sm:$0xf]
        %v284 = vld [vmem:[%s1 + $0x88] sm:$0xf]
        %v285 = vld [vmem:[%s1 + $0x8c] sm:$0xf]
        %v286 = vld [vmem:[%s1 + $0x90] sm:$0xf]
        %v287 = vld [vmem:[%s1 + $0x94] sm:$0xf]
        %v288 = vld [vmem:[%s1 + $0x98] sm:$0xf]
        %v289 = vld [vmem:[%s1 + $0x9c] sm:$0xf]
        %v290 = vld [vmem:[%s1 + $0xa0] sm:$0xf]
        %v291 = vld [vmem:[%s1 + $0xa4] sm:$0xf]
        %v292 = vld [vmem:[%s1 + $0xa8] sm:$0xf]
        %v293 = vld [vmem:[%s1 + $0xac] sm:$0xf]
        %v294 = vld [vmem:[%s1 + $0xb0] sm:$0xf]
        %v295 = vld [vmem:[%s1 + $0xb4] sm:$0xf]
        %v296 = vld [vmem:[%s1 + $0xb8] sm:$0xf]
        %v297 = vld [vmem:[%s1 + $0xbc] sm:$0xf]
        %v298 = vld [vmem:[%s1 + $0xc0] sm:$0xf]
        %v299 = vld [vmem:[%s1 + $0xc4] sm:$0xf]
        %v300 = vld [vmem:[%s1 + $0xc8] sm:$0xf]
        %v301 = vld [vmem:[%s1 + $0xcc] sm:$0xf]
        %v302 = vld [vmem:[%s1 + $0xd0] sm:$0xf]
        %v303 = vld [vmem:[%s1 + $0xd4] sm:$0xf]
        %v304 = vld [vmem:[%s1 + $0xd8] sm:$0xf]
        %v305 = vld [vmem:[%s1 + $0xdc] sm:$0xf]
        %v306 = vld [vmem:[%s1 + $0xe0] sm:$0xf]
        %v307 = vld [vmem:[%s1 + $0xe4] sm:$0xf]
        %v308 = vld [vmem:[%s1 + $0xe8] sm:$0xf]
        %v309 = vld [vmem:[%s1 + $0xec] sm:$0xf]
        %v310 = vld [vmem:[%s1 + $0xf0] sm:$0xf]
        %v311 = vld [vmem:[%s1 + $0xf4] sm:$0xf]
        %v312 = vld [vmem:[%s1 + $0xf8] sm:$0xf]
        %v313 = vld [vmem:[%s1 + $0xfc] sm:$0xf]
        %v314 = vld [vmem:[%s2] sm:$0x1]
        %v316 = vperm.slane %v314, 0
        %v368 = vunpack.c.l.b16 %v200
        %v369 = vunpack.c.h.b16 %v200
        %v370 = vunpack.c.l.b16 %v201
        %v371 = vunpack.c.h.b16 %v201
        %v372 = vunpack.c.l.b16 %v202
        %v373 = vunpack.c.h.b16 %v202
        %v374 = vunpack.c.l.b16 %v203
        %v375 = vunpack.c.h.b16 %v203
        %v376 = vunpack.c.l.b16 %v204
        %v377 = vunpack.c.h.b16 %v204
        %v378 = vunpack.c.l.b16 %v205
        %v379 = vunpack.c.h.b16 %v205
        %v380 = vunpack.c.l.b16 %v206
        %v381 = vunpack.c.h.b16 %v206
        %v382 = vunpack.c.l.b16 %v207
        %v383 = vunpack.c.h.b16 %v207
        %v384 = vunpack.c.l.b16 %v208
        %v385 = vunpack.c.h.b16 %v208
        %v386 = vunpack.c.l.b16 %v209
        %v387 = vunpack.c.h.b16 %v209
        %v388 = vunpack.c.l.b16 %v210
        %v389 = vunpack.c.h.b16 %v210
        %v390 = vunpack.c.l.b16 %v211
        %v391 = vunpack.c.h.b16 %v211
        %v392 = vunpack.c.l.b16 %v212
        %v393 = vunpack.c.h.b16 %v212
        %v394 = vunpack.c.l.b16 %v213
        %v395 = vunpack.c.h.b16 %v213
        %v396 = vunpack.c.l.b16 %v214
        %v397 = vunpack.c.h.b16 %v214
        %v398 = vunpack.c.l.b16 %v215
        %v399 = vunpack.c.h.b16 %v215
        %v400 = vunpack.c.l.b16 %v216
        %v401 = vunpack.c.h.b16 %v216
        %v402 = vunpack.c.l.b16 %v217
        %v403 = vunpack.c.h.b16 %v217
        %v404 = vunpack.c.l.b16 %v218
        %v405 = vunpack.c.h.b16 %v218
        %v406 = vunpack.c.l.b16 %v219
        %v407 = vunpack.c.h.b16 %v219
        %v408 = vunpack.c.l.b16 %v220
        %v409 = vunpack.c.h.b16 %v220
        %v410 = vunpack.c.l.b16 %v221
        %v411 = vunpack.c.h.b16 %v221
        %v412 = vunpack.c.l.b16 %v222
        %v413 = vunpack.c.h.b16 %v222
        %v414 = vunpack.c.l.b16 %v223
        %v415 = vunpack.c.h.b16 %v223
        %v416 = vunpack.c.l.b16 %v224
        %v417 = vunpack.c.h.b16 %v224
        %v418 = vunpack.c.l.b16 %v225
        %v419 = vunpack.c.h.b16 %v225
        %v420 = vunpack.c.l.b16 %v226
        %v421 = vunpack.c.h.b16 %v226
        %v422 = vunpack.c.l.b16 %v227
        %v423 = vunpack.c.h.b16 %v227
        %v424 = vunpack.c.l.b16 %v228
        %v425 = vunpack.c.h.b16 %v228
        %v426 = vunpack.c.l.b16 %v229
        %v427 = vunpack.c.h.b16 %v229
        %v428 = vunpack.c.l.b16 %v230
        %v429 = vunpack.c.h.b16 %v230
        %v430 = vunpack.c.l.b16 %v231
        %v431 = vunpack.c.h.b16 %v231
        %v432 = vunpack.c.l.b16 %v232
        %v433 = vunpack.c.h.b16 %v232
        %v434 = vunpack.c.l.b16 %v233
        %v435 = vunpack.c.h.b16 %v233
        %v436 = vunpack.c.l.b16 %v234
        %v437 = vunpack.c.h.b16 %v234
        %v438 = vunpack.c.l.b16 %v235
        %v439 = vunpack.c.h.b16 %v235
        %v440 = vunpack.c.l.b16 %v236
        %v441 = vunpack.c.h.b16 %v236
        %v442 = vunpack.c.l.b16 %v237
        %v443 = vunpack.c.h.b16 %v237
        %v444 = vunpack.c.l.b16 %v238
        %v445 = vunpack.c.h.b16 %v238
        %v446 = vunpack.c.l.b16 %v239
        %v447 = vunpack.c.h.b16 %v239
        %v448 = vunpack.c.l.b16 %v240
        %v449 = vunpack.c.h.b16 %v240
        %v450 = vunpack.c.l.b16 %v241
        %v451 = vunpack.c.h.b16 %v241
        %v452 = vunpack.c.l.b16 %v242
        %v453 = vunpack.c.h.b16 %v242
        %v454 = vunpack.c.l.b16 %v243
        %v455 = vunpack.c.h.b16 %v243
        %v456 = vunpack.c.l.b16 %v244
        %v457 = vunpack.c.h.b16 %v244
        %v458 = vunpack.c.l.b16 %v245
        %v459 = vunpack.c.h.b16 %v245
        %v460 = vunpack.c.l.b16 %v246
        %v461 = vunpack.c.h.b16 %v246
        %v462 = vunpack.c.l.b16 %v247
        %v463 = vunpack.c.h.b16 %v247
        %v464 = vunpack.c.l.b16 %v248
        %v465 = vunpack.c.h.b16 %v248
        %v466 = vunpack.c.l.b16 %v249
        %v467 = vunpack.c.h.b16 %v249
        %v468 = vpack.c.b16 %v372, %v368
        %v469 = vpack.c.b16 %v373, %v369
        %v470 = vpack.c.b16 %v374, %v370
        %v471 = vpack.c.b16 %v375, %v371
        %v472 = vpack.c.b16 %v380, %v376
        %v473 = vpack.c.b16 %v381, %v377
        %v474 = vpack.c.b16 %v382, %v378
        %v475 = vpack.c.b16 %v383, %v379
        %v476 = vpack.c.b16 %v388, %v384
        %v477 = vpack.c.b16 %v389, %v385
        %v478 = vpack.c.b16 %v390, %v386
        %v479 = vpack.c.b16 %v391, %v387
        %v480 = vpack.c.b16 %v396, %v392
        %v481 = vpack.c.b16 %v397, %v393
        %v482 = vpack.c.b16 %v398, %v394
        %v483 = vpack.c.b16 %v399, %v395
        %v484 = vpack.c.b16 %v404, %v400
        %v485 = vpack.c.b16 %v405, %v401
        %v486 = vpack.c.b16 %v406, %v402
        %v487 = vpack.c.b16 %v407, %v403
        %v488 = vpack.c.b16 %v412, %v408
        %v489 = vpack.c.b16 %v413, %v409
        %v490 = vpack.c.b16 %v414, %v410
        %v491 = vpack.c.b16 %v415, %v411
        %v492 = vpack.c.b16 %v420, %v416
        %v493 = vpack.c.b16 %v421, %v417
        %v494 = vpack.c.b16 %v422, %v418
        %v495 = vpack.c.b16 %v423, %v419
        %v496 = vpack.c.b16 %v428, %v424
        %v497 = vpack.c.b16 %v429, %v425
        %v498 = vpack.c.b16 %v430, %v426
        %v499 = vpack.c.b16 %v431, %v427
        %v500 = vpack.c.b16 %v436, %v432
        %v501 = vpack.c.b16 %v437, %v433
        %v502 = vpack.c.b16 %v438, %v434
        %v503 = vpack.c.b16 %v439, %v435
        %v504 = vpack.c.b16 %v444, %v440
        %v505 = vpack.c.b16 %v445, %v441
        %v506 = vpack.c.b16 %v446, %v442
        %v507 = vpack.c.b16 %v447, %v443
        %v508 = vpack.c.b16 %v452, %v448
        %v509 = vpack.c.b16 %v453, %v449
        %v510 = vpack.c.b16 %v454, %v450
        %v511 = vpack.c.b16 %v455, %v451
        %v512 = vpack.c.b16 %v460, %v456
        %v513 = vpack.c.b16 %v461, %v457
        %v514 = vpack.c.b16 %v462, %v458
        %v515 = vpack.c.b16 %v463, %v459
        %v516 = vpack.c.b16 %v464, %v464
        %v517 = vpack.c.b16 %v465, %v465
        %v518 = vpack.c.b16 %v466, %v466
        %v519 = vpack.c.b16 %v467, %v467
        %v636 = vunpack.c.l.b16 %v250
        %v637 = vunpack.c.l.b16 %v251
        %v638 = vunpack.c.l.b16 %v252
        %v639 = vunpack.c.l.b16 %v253
        %v640 = vunpack.c.l.b16 %v254
        %v641 = vunpack.c.l.b16 %v255
        %v642 = vunpack.c.l.b16 %v256
        %v643 = vunpack.c.l.b16 %v257
        %v644 = vunpack.c.l.b16 %v258
        %v645 = vunpack.c.l.b16 %v259
        %v646 = vunpack.c.l.b16 %v260
        %v647 = vunpack.c.l.b16 %v261
        %v648 = vunpack.c.l.b16 %v262
        %v649 = vunpack.c.l.b16 %v263
        %v650 = vunpack.c.l.b16 %v264
        %v651 = vunpack.c.l.b16 %v265
        %v652 = vunpack.c.l.b16 %v266
        %v653 = vunpack.c.l.b16 %v267
        %v654 = vunpack.c.l.b16 %v268
        %v655 = vunpack.c.l.b16 %v269
        %v656 = vunpack.c.l.b16 %v270
        %v657 = vunpack.c.l.b16 %v271
        %v658 = vunpack.c.l.b16 %v272
        %v659 = vunpack.c.l.b16 %v273
        %v660 = vunpack.c.l.b16 %v274
        %v661 = vunpack.c.l.b16 %v275
        %v662 = vunpack.c.l.b16 %v276
        %v663 = vunpack.c.l.b16 %v277
        %v664 = vunpack.c.l.b16 %v278
        %v665 = vunpack.c.l.b16 %v279
        %v666 = vunpack.c.l.b16 %v280
        %v667 = vunpack.c.l.b16 %v281
        %v668 = vunpack.c.l.b16 %v282
        %v669 = vunpack.c.l.b16 %v283
        %v670 = vunpack.c.l.b16 %v284
        %v671 = vunpack.c.l.b16 %v285
        %v672 = vunpack.c.l.b16 %v286
        %v673 = vunpack.c.l.b16 %v287
        %v674 = vunpack.c.l.b16 %v288
        %v675 = vunpack.c.l.b16 %v289
        %v676 = vunpack.c.l.b16 %v290
        %v677 = vunpack.c.l.b16 %v291
        %v678 = vunpack.c.l.b16 %v292
        %v679 = vunpack.c.l.b16 %v293
        %v680 = vunpack.c.l.b16 %v294
        %v681 = vunpack.c.l.b16 %v295
        %v682 = vunpack.c.l.b16 %v296
        %v683 = vunpack.c.l.b16 %v297
        %v684 = vunpack.c.l.b16 %v298
        %v685 = vunpack.c.l.b16 %v299
        %v686 = vunpack.c.l.b16 %v300
        %v687 = vunpack.c.l.b16 %v301
        %v688 = vunpack.c.l.b16 %v302
        %v689 = vunpack.c.l.b16 %v303
        %v690 = vunpack.c.l.b16 %v304
        %v691 = vunpack.c.l.b16 %v305
        %v692 = vunpack.c.l.b16 %v306
        %v693 = vunpack.c.l.b16 %v307
        %v694 = vunpack.c.l.b16 %v308
        %v695 = vunpack.c.l.b16 %v309
        %v696 = vunpack.c.l.b16 %v310
        %v697 = vunpack.c.l.b16 %v311
        %v698 = vunpack.c.l.b16 %v312
        %v699 = vunpack.c.l.b16 %v313
        %v700 = vpack.c.b16 %v637, %v636
        %v701 = vpack.c.b16 %v639, %v638
        %v702 = vpack.c.b16 %v641, %v640
        %v703 = vpack.c.b16 %v643, %v642
        %v704 = vpack.c.b16 %v645, %v644
        %v705 = vpack.c.b16 %v647, %v646
        %v706 = vpack.c.b16 %v649, %v648
        %v707 = vpack.c.b16 %v651, %v650
        %v708 = vpack.c.b16 %v653, %v652
        %v709 = vpack.c.b16 %v655, %v654
        %v710 = vpack.c.b16 %v657, %v656
        %v711 = vpack.c.b16 %v659, %v658
        %v712 = vpack.c.b16 %v661, %v660
        %v713 = vpack.c.b16 %v663, %v662
        %v714 = vpack.c.b16 %v665, %v664
        %v715 = vpack.c.b16 %v667, %v666
        %v716 = vpack.c.b16 %v669, %v668
        %v717 = vpack.c.b16 %v671, %v670
        %v718 = vpack.c.b16 %v673, %v672
        %v719 = vpack.c.b16 %v675, %v674
        %v720 = vpack.c.b16 %v677, %v676
        %v721 = vpack.c.b16 %v679, %v678
        %v722 = vpack.c.b16 %v681, %v680
        %v723 = vpack.c.b16 %v683, %v682
        %v724 = vpack.c.b16 %v685, %v684
        %v725 = vpack.c.b16 %v687, %v686
        %v726 = vpack.c.b16 %v689, %v688
        %v727 = vpack.c.b16 %v691, %v690
        %v728 = vpack.c.b16 %v693, %v692
        %v729 = vpack.c.b16 %v695, %v694
        %v730 = vpack.c.b16 %v697, %v696
        %v731 = vpack.c.b16 %v699, %v698
        %764 = vmatpush.bf16.msra.mxu0 %v707
        %765 = vmatpush.bf16.msra.mxu0 %v706
        %766 = vmatpush.bf16.msra.mxu0 %v705
        %767 = vmatpush.bf16.msra.mxu0 %v704
        %768 = vmatpush.bf16.msra.mxu0 %v703
        %769 = vmatpush.bf16.msra.mxu0 %v702
        %770 = vmatpush.bf16.msra.mxu0 %v701
        %771 = vmatpush.bf16.msra.mxu0 %v700
        %772 = vmatmul.bf16.gmra.mxu0 %v468
        %v773 = vpop.f32.mrf.mxu0
        %v774 = vadd.f32 %v316, %v773
        %v775 = vpop.f32.mrf.mxu0
        %v776 = vadd.f32 %v316, %v775
        %777 = vmatmul.bf16.gmra.mxu0 %v472
        %v778 = vpop.f32.mrf.mxu0
        %v779 = vadd.f32 %v316, %v778
        %v780 = vpop.f32.mrf.mxu0
        %v781 = vadd.f32 %v316, %v780
        %782 = vmatmul.bf16.gmra.mxu0 %v476
        %v783 = vpop.f32.mrf.mxu0
        %v784 = vadd.f32 %v316, %v783
        %v785 = vpop.f32.mrf.mxu0
        %v786 = vadd.f32 %v316, %v785
        %787 = vmatmul.bf16.gmra.mxu0 %v480
        %v788 = vpop.f32.mrf.mxu0
        %v789 = vadd.f32 %v316, %v788
        %v790 = vpop.f32.mrf.mxu0
        %v791 = vadd.f32 %v316, %v790
        %792 = vmatmul.bf16.gmra.mxu0 %v484
        %v793 = vpop.f32.mrf.mxu0
        %v794 = vadd.f32 %v316, %v793
        %v795 = vpop.f32.mrf.mxu0
        %v796 = vadd.f32 %v316, %v795
        %797 = vmatmul.bf16.gmra.mxu0 %v488
        %v798 = vpop.f32.mrf.mxu0
        %v799 = vadd.f32 %v316, %v798
        %v800 = vpop.f32.mrf.mxu0
        %v801 = vadd.f32 %v316, %v800
        %802 = vmatmul.bf16.gmra.mxu0 %v492
        %v803 = vpop.f32.mrf.mxu0
        %v804 = vadd.f32 %v316, %v803
        %v805 = vpop.f32.mrf.mxu0
        %v806 = vadd.f32 %v316, %v805
        %807 = vmatmul.bf16.gmra.mxu0 %v496
        %v808 = vpop.f32.mrf.mxu0
        %v809 = vadd.f32 %v316, %v808
        %v810 = vpop.f32.mrf.mxu0
        %v811 = vadd.f32 %v316, %v810
        %812 = vmatmul.bf16.gmra.mxu0 %v500
        %v813 = vpop.f32.mrf.mxu0
        %v814 = vadd.f32 %v316, %v813
        %v815 = vpop.f32.mrf.mxu0
        %v816 = vadd.f32 %v316, %v815
        %817 = vmatmul.bf16.gmra.mxu0 %v504
        %v818 = vpop.f32.mrf.mxu0
        %v819 = vadd.f32 %v316, %v818
        %v820 = vpop.f32.mrf.mxu0
        %v821 = vadd.f32 %v316, %v820
        %822 = vmatmul.bf16.gmra.mxu0 %v508
        %v823 = vpop.f32.mrf.mxu0
        %v824 = vadd.f32 %v316, %v823
        %v825 = vpop.f32.mrf.mxu0
        %v826 = vadd.f32 %v316, %v825
        %827 = vmatmul.bf16.gmra.mxu0 %v512
        %v828 = vpop.f32.mrf.mxu0
        %v829 = vadd.f32 %v316, %v828
        %v830 = vpop.f32.mrf.mxu0
        %v831 = vadd.f32 %v316, %v830
        %832 = vmatmul.bf16.gmra.mxu0 %v516
        %v833 = vpop.f32.mrf.mxu0
        %v834 = vadd.f32 %v316, %v833
        %v835 = vpop.f32.mrf.mxu0
        %836 = vdwg.mxu0
        %837 = vmatpush.bf16.msra.mxu0 %v715
        %838 = vmatpush.bf16.msra.mxu0 %v714
        %839 = vmatpush.bf16.msra.mxu0 %v713
        %840 = vmatpush.bf16.msra.mxu0 %v712
        %841 = vmatpush.bf16.msra.mxu0 %v711
        %842 = vmatpush.bf16.msra.mxu0 %v710
        %843 = vmatpush.bf16.msra.mxu0 %v709
        %844 = vmatpush.bf16.msra.mxu0 %v708
        %845 = vmatmul.bf16.gmra.mxu0 %v469
        %v846 = vpop.f32.mrf.mxu0
        %v847 = vadd.f32 %v774, %v846
        %v848 = vpop.f32.mrf.mxu0
        %v849 = vadd.f32 %v776, %v848
        %850 = vmatmul.bf16.gmra.mxu0 %v473
        %v851 = vpop.f32.mrf.mxu0
        %v852 = vadd.f32 %v779, %v851
        %v853 = vpop.f32.mrf.mxu0
        %v854 = vadd.f32 %v781, %v853
        %855 = vmatmul.bf16.gmra.mxu0 %v477
        %v856 = vpop.f32.mrf.mxu0
        %v857 = vadd.f32 %v784, %v856
        %v858 = vpop.f32.mrf.mxu0
        %v859 = vadd.f32 %v786, %v858
        %860 = vmatmul.bf16.gmra.mxu0 %v481
        %v861 = vpop.f32.mrf.mxu0
        %v862 = vadd.f32 %v789, %v861
        %v863 = vpop.f32.mrf.mxu0
        %v864 = vadd.f32 %v791, %v863
        %865 = vmatmul.bf16.gmra.mxu0 %v485
        %v866 = vpop.f32.mrf.mxu0
        %v867 = vadd.f32 %v794, %v866
        %v868 = vpop.f32.mrf.mxu0
        %v869 = vadd.f32 %v796, %v868
        %870 = vmatmul.bf16.gmra.mxu0 %v489
        %v871 = vpop.f32.mrf.mxu0
        %v872 = vadd.f32 %v799, %v871
        %v873 = vpop.f32.mrf.mxu0
        %v874 = vadd.f32 %v801, %v873
        %875 = vmatmul.bf16.gmra.mxu0 %v493
        %v876 = vpop.f32.mrf.mxu0
        %v877 = vadd.f32 %v804, %v876
        %v878 = vpop.f32.mrf.mxu0
        %v879 = vadd.f32 %v806, %v878
        %880 = vmatmul.bf16.gmra.mxu0 %v497
        %v881 = vpop.f32.mrf.mxu0
        %v882 = vadd.f32 %v809, %v881
        %v883 = vpop.f32.mrf.mxu0
        %v884 = vadd.f32 %v811, %v883
        %885 = vmatmul.bf16.gmra.mxu0 %v501
        %v886 = vpop.f32.mrf.mxu0
        %v887 = vadd.f32 %v814, %v886
        %v888 = vpop.f32.mrf.mxu0
        %v889 = vadd.f32 %v816, %v888
        %890 = vmatmul.bf16.gmra.mxu0 %v505
        %v891 = vpop.f32.mrf.mxu0
        %v892 = vadd.f32 %v819, %v891
        %v893 = vpop.f32.mrf.mxu0
        %v894 = vadd.f32 %v821, %v893
        %895 = vmatmul.bf16.gmra.mxu0 %v509
        %v896 = vpop.f32.mrf.mxu0
        %v897 = vadd.f32 %v824, %v896
        %v898 = vpop.f32.mrf.mxu0
        %v899 = vadd.f32 %v826, %v898
        %900 = vmatmul.bf16.gmra.mxu0 %v513
        %v901 = vpop.f32.mrf.mxu0
        %v902 = vadd.f32 %v829, %v901
        %v903 = vpop.f32.mrf.mxu0
        %v904 = vadd.f32 %v831, %v903
        %905 = vmatmul.bf16.gmra.mxu0 %v517
        %v906 = vpop.f32.mrf.mxu0
        %v907 = vadd.f32 %v834, %v906
        %v908 = vpop.f32.mrf.mxu0
        %909 = vdwg.mxu0
        %910 = vmatpush.bf16.msra.mxu0 %v723
        %911 = vmatpush.bf16.msra.mxu0 %v722
        %912 = vmatpush.bf16.msra.mxu0 %v721
        %913 = vmatpush.bf16.msra.mxu0 %v720
        %914 = vmatpush.bf16.msra.mxu0 %v719
        %915 = vmatpush.bf16.msra.mxu0 %v718
        %916 = vmatpush.bf16.msra.mxu0 %v717
        %917 = vmatpush.bf16.msra.mxu0 %v716
        %918 = vmatmul.bf16.gmra.mxu0 %v470
        %v919 = vpop.f32.mrf.mxu0
        %v920 = vadd.f32 %v847, %v919
        %v921 = vpop.f32.mrf.mxu0
        %v922 = vadd.f32 %v849, %v921
        %923 = vmatmul.bf16.gmra.mxu0 %v474
        %v924 = vpop.f32.mrf.mxu0
        %v925 = vadd.f32 %v852, %v924
        %v926 = vpop.f32.mrf.mxu0
        %v927 = vadd.f32 %v854, %v926
        %928 = vmatmul.bf16.gmra.mxu0 %v478
        %v929 = vpop.f32.mrf.mxu0
        %v930 = vadd.f32 %v857, %v929
        %v931 = vpop.f32.mrf.mxu0
        %v932 = vadd.f32 %v859, %v931
        %933 = vmatmul.bf16.gmra.mxu0 %v482
        %v934 = vpop.f32.mrf.mxu0
        %v935 = vadd.f32 %v862, %v934
        %v936 = vpop.f32.mrf.mxu0
        %v937 = vadd.f32 %v864, %v936
        %938 = vmatmul.bf16.gmra.mxu0 %v486
        %v939 = vpop.f32.mrf.mxu0
        %v940 = vadd.f32 %v867, %v939
        %v941 = vpop.f32.mrf.mxu0
        %v942 = vadd.f32 %v869, %v941
        %943 = vmatmul.bf16.gmra.mxu0 %v490
        %v944 = vpop.f32.mrf.mxu0
        %v945 = vadd.f32 %v872, %v944
        %v946 = vpop.f32.mrf.mxu0
        %v947 = vadd.f32 %v874, %v946
        %948 = vmatmul.bf16.gmra.mxu0 %v494
        %v949 = vpop.f32.mrf.mxu0
        %v950 = vadd.f32 %v877, %v949
        %v951 = vpop.f32.mrf.mxu0
        %v952 = vadd.f32 %v879, %v951
        %953 = vmatmul.bf16.gmra.mxu0 %v498
        %v954 = vpop.f32.mrf.mxu0
        %v955 = vadd.f32 %v882, %v954
        %v956 = vpop.f32.mrf.mxu0
        %v957 = vadd.f32 %v884, %v956
        %958 = vmatmul.bf16.gmra.mxu0 %v502
        %v959 = vpop.f32.mrf.mxu0
        %v960 = vadd.f32 %v887, %v959
        %v961 = vpop.f32.mrf.mxu0
        %v962 = vadd.f32 %v889, %v961
        %963 = vmatmul.bf16.gmra.mxu0 %v506
        %v964 = vpop.f32.mrf.mxu0
        %v965 = vadd.f32 %v892, %v964
        %v966 = vpop.f32.mrf.mxu0
        %v967 = vadd.f32 %v894, %v966
        %968 = vmatmul.bf16.gmra.mxu0 %v510
        %v969 = vpop.f32.mrf.mxu0
        %v970 = vadd.f32 %v897, %v969
        %v971 = vpop.f32.mrf.mxu0
        %v972 = vadd.f32 %v899, %v971
        %973 = vmatmul.bf16.gmra.mxu0 %v514
        %v974 = vpop.f32.mrf.mxu0
        %v975 = vadd.f32 %v902, %v974
        %v976 = vpop.f32.mrf.mxu0
        %v977 = vadd.f32 %v904, %v976
        %978 = vmatmul.bf16.gmra.mxu0 %v518
        %v979 = vpop.f32.mrf.mxu0
        %v980 = vadd.f32 %v907, %v979
        %v981 = vpop.f32.mrf.mxu0
        %982 = vdwg.mxu0
        %983 = vmatpush.bf16.msra.mxu0 %v731
        %984 = vmatpush.bf16.msra.mxu0 %v730
        %985 = vmatpush.bf16.msra.mxu0 %v729
        %986 = vmatpush.bf16.msra.mxu0 %v728
        %987 = vmatpush.bf16.msra.mxu0 %v727
        %988 = vmatpush.bf16.msra.mxu0 %v726
        %989 = vmatpush.bf16.msra.mxu0 %v725
        %990 = vmatpush.bf16.msra.mxu0 %v724
        %991 = vmatmul.bf16.gmra.mxu0 %v471
        %v992 = vpop.f32.mrf.mxu0
        %v993 = vadd.f32 %v920, %v992
        %v994 = vpop.f32.mrf.mxu0
        %v995 = vadd.f32 %v922, %v994
        %996 = vmatmul.bf16.gmra.mxu0 %v475
        %v997 = vpop.f32.mrf.mxu0
        %v998 = vadd.f32 %v925, %v997
        %v999 = vpop.f32.mrf.mxu0
        %v1000 = vadd.f32 %v927, %v999
        %1001 = vmatmul.bf16.gmra.mxu0 %v479
        %v1002 = vpop.f32.mrf.mxu0
        %v1003 = vadd.f32 %v930, %v1002
        %v1004 = vpop.f32.mrf.mxu0
        %v1005 = vadd.f32 %v932, %v1004
        %1006 = vmatmul.bf16.gmra.mxu0 %v483
        %v1007 = vpop.f32.mrf.mxu0
        %v1008 = vadd.f32 %v935, %v1007
        %v1009 = vpop.f32.mrf.mxu0
        %v1010 = vadd.f32 %v937, %v1009
        %1011 = vmatmul.bf16.gmra.mxu0 %v487
        %v1012 = vpop.f32.mrf.mxu0
        %v1013 = vadd.f32 %v940, %v1012
        %v1014 = vpop.f32.mrf.mxu0
        %v1015 = vadd.f32 %v942, %v1014
        %1016 = vmatmul.bf16.gmra.mxu0 %v491
        %v1017 = vpop.f32.mrf.mxu0
        %v1018 = vadd.f32 %v945, %v1017
        %v1019 = vpop.f32.mrf.mxu0
        %v1020 = vadd.f32 %v947, %v1019
        %1021 = vmatmul.bf16.gmra.mxu0 %v495
        %v1022 = vpop.f32.mrf.mxu0
        %v1023 = vadd.f32 %v950, %v1022
        %v1024 = vpop.f32.mrf.mxu0
        %v1025 = vadd.f32 %v952, %v1024
        %1026 = vmatmul.bf16.gmra.mxu0 %v499
        %v1027 = vpop.f32.mrf.mxu0
        %v1028 = vadd.f32 %v955, %v1027
        %v1029 = vpop.f32.mrf.mxu0
        %v1030 = vadd.f32 %v957, %v1029
        %1031 = vmatmul.bf16.gmra.mxu0 %v503
        %v1032 = vpop.f32.mrf.mxu0
        %v1033 = vadd.f32 %v960, %v1032
        %v1034 = vpop.f32.mrf.mxu0
        %v1035 = vadd.f32 %v962, %v1034
        %1036 = vmatmul.bf16.gmra.mxu0 %v507
        %v1037 = vpop.f32.mrf.mxu0
        %v1038 = vadd.f32 %v965, %v1037
        %v1039 = vpop.f32.mrf.mxu0
        %v1040 = vadd.f32 %v967, %v1039
        %1041 = vmatmul.bf16.gmra.mxu0 %v511
        %v1042 = vpop.f32.mrf.mxu0
        %v1043 = vadd.f32 %v970, %v1042
        %v1044 = vpop.f32.mrf.mxu0
        %v1045 = vadd.f32 %v972, %v1044
        %1046 = vmatmul.bf16.gmra.mxu0 %v515
        %v1047 = vpop.f32.mrf.mxu0
        %v1048 = vadd.f32 %v975, %v1047
        %v1049 = vpop.f32.mrf.mxu0
        %v1050 = vadd.f32 %v977, %v1049
        %1051 = vmatmul.bf16.gmra.mxu0 %v519
        %v1052 = vpop.f32.mrf.mxu0
        %v1053 = vadd.f32 %v980, %v1052
        %v1054 = vpop.f32.mrf.mxu0
        %1055 = vdwg.mxu0
        %v1056 = vmax.f32 %v993, 0.0
        %v1057 = vmax.f32 %v995, 0.0
        %v1058 = vmax.f32 %v998, 0.0
        %v1059 = vmax.f32 %v1000, 0.0
        %v1060 = vmax.f32 %v1003, 0.0
        %v1061 = vmax.f32 %v1005, 0.0
        %v1062 = vmax.f32 %v1008, 0.0
        %v1063 = vmax.f32 %v1010, 0.0
        %v1064 = vmax.f32 %v1013, 0.0
        %v1065 = vmax.f32 %v1015, 0.0
        %v1066 = vmax.f32 %v1018, 0.0
        %v1067 = vmax.f32 %v1020, 0.0
        %v1068 = vmax.f32 %v1023, 0.0
        %v1069 = vmax.f32 %v1025, 0.0
        %v1070 = vmax.f32 %v1028, 0.0
        %v1071 = vmax.f32 %v1030, 0.0
        %v1072 = vmax.f32 %v1033, 0.0
        %v1073 = vmax.f32 %v1035, 0.0
        %v1074 = vmax.f32 %v1038, 0.0
        %v1075 = vmax.f32 %v1040, 0.0
        %v1076 = vmax.f32 %v1043, 0.0
        %v1077 = vmax.f32 %v1045, 0.0
        %v1078 = vmax.f32 %v1048, 0.0
        %v1079 = vmax.f32 %v1050, 0.0
        %v1080 = vmax.f32 %v1053, 0.0
        %v1081 = vpack.c.bf16 %v1056, %v1056
        %v1082 = vpack.c.bf16 %v1057, %v1057
        %v1083 = vpack.c.bf16 %v1058, %v1058
        %v1084 = vpack.c.bf16 %v1059, %v1059
        %v1085 = vpack.c.bf16 %v1060, %v1060
        %v1086 = vpack.c.bf16 %v1061, %v1061
        %v1087 = vpack.c.bf16 %v1062, %v1062
        %v1088 = vpack.c.bf16 %v1063, %v1063
        %v1089 = vpack.c.bf16 %v1064, %v1064
        %v1090 = vpack.c.bf16 %v1065, %v1065
        %v1091 = vpack.c.bf16 %v1066, %v1066
        %v1092 = vpack.c.bf16 %v1067, %v1067
        %v1093 = vpack.c.bf16 %v1068, %v1068
        %v1094 = vpack.c.bf16 %v1069, %v1069
        %v1095 = vpack.c.bf16 %v1070, %v1070
        %v1096 = vpack.c.bf16 %v1071, %v1071
        %v1097 = vpack.c.bf16 %v1072, %v1072
        %v1098 = vpack.c.bf16 %v1073, %v1073
        %v1099 = vpack.c.bf16 %v1074, %v1074
        %v1100 = vpack.c.bf16 %v1075, %v1075
        %v1101 = vpack.c.bf16 %v1076, %v1076
        %v1102 = vpack.c.bf16 %v1077, %v1077
        %v1103 = vpack.c.bf16 %v1078, %v1078
        %v1104 = vpack.c.bf16 %v1079, %v1079
        %v1105 = vpack.c.bf16 %v1080, %v1080
        %vm1106 = vcmask 519168
        %1107 = vst.msk [vmem:[%s177] sm:$0xf] %vm1106, %v1081
        %1108 = vst.msk [vmem:[%s177 + $0x4] sm:$0xf] %vm1106, %v1082
        %1109 = vst.msk [vmem:[%s177 + $0x8] sm:$0xf] %vm1106, %v1083
        %1110 = vst.msk [vmem:[%s177 + $0xc] sm:$0xf] %vm1106, %v1084
        %1111 = vst.msk [vmem:[%s177 + $0x10] sm:$0xf] %vm1106, %v1085
        %1112 = vst.msk [vmem:[%s177 + $0x14] sm:$0xf] %vm1106, %v1086
        %1113 = vst.msk [vmem:[%s177 + $0x18] sm:$0xf] %vm1106, %v1087
        %1114 = vst.msk [vmem:[%s177 + $0x1c] sm:$0xf] %vm1106, %v1088
        %1115 = vst.msk [vmem:[%s177 + $0x20] sm:$0xf] %vm1106, %v1089
        %1116 = vst.msk [vmem:[%s177 + $0x24] sm:$0xf] %vm1106, %v1090
        %1117 = vst.msk [vmem:[%s177 + $0x28] sm:$0xf] %vm1106, %v1091
        %1118 = vst.msk [vmem:[%s177 + $0x2c] sm:$0xf] %vm1106, %v1092
        %1119 = vst.msk [vmem:[%s177 + $0x30] sm:$0xf] %vm1106, %v1093
        %1120 = vst.msk [vmem:[%s177 + $0x34] sm:$0xf] %vm1106, %v1094
        %1121 = vst.msk [vmem:[%s177 + $0x38] sm:$0xf] %vm1106, %v1095
        %1122 = vst.msk [vmem:[%s177 + $0x3c] sm:$0xf] %vm1106, %v1096
        %1123 = vst.msk [vmem:[%s177 + $0x40] sm:$0xf] %vm1106, %v1097
        %1124 = vst.msk [vmem:[%s177 + $0x44] sm:$0xf] %vm1106, %v1098
        %1125 = vst.msk [vmem:[%s177 + $0x48] sm:$0xf] %vm1106, %v1099
        %1126 = vst.msk [vmem:[%s177 + $0x4c] sm:$0xf] %vm1106, %v1100
        %1127 = vst.msk [vmem:[%s177 + $0x50] sm:$0xf] %vm1106, %v1101
        %1128 = vst.msk [vmem:[%s177 + $0x54] sm:$0xf] %vm1106, %v1102
        %1129 = vst.msk [vmem:[%s177 + $0x58] sm:$0xf] %vm1106, %v1103
        %1130 = vst.msk [vmem:[%s177 + $0x5c] sm:$0xf] %vm1106, %v1104
        %1131 = vst.msk [vmem:[%s177 + $0x60] sm:$0xf] %vm1106, %v1105
        %s1132 = sand.u32 %s90, 1
        %s1133 = sand.u32 %s90, 1
        %s1134 = smul.addr %s1133, 100
        %s1135 = scalar_lea.vmem [#allocation2], %s1134
        // Predicated region
        $region33: #{_unnamed_function_.3} parent=31 // pred_check
          %p1136 = pneg %p100
        $region34: #{_unnamed_function_.3} parent=31 // pred_check_branch
          %1138 = sbr.rel (%p1136) target = $region36
        $region35: #{_unnamed_function_.3} parent=31 // pred_region
          %s1139 = smul.u32 25, %s14
          %s1140 = ssub.s32 49, %s1139
          %p1141 = scmp.lt.s32.totalorder %s1140, 25
          %s1142 = scalar_select %p1141, %s1140, 25
          %s1143 = smul.u32 4, %s1142
          %p1144 = scmp.ne.s32.totalorder 0, %s1143
          %s1145 = smul.addr %s1139, 4
          %s1146 = scalar_lea.vmem %s3, %s1145
          // Predicated region
          $region37: #{_unnamed_function_.3} parent=35 // pred_check
            %p1147 = pneg %p1144
          $region38: #{_unnamed_function_.3} parent=35 // pred_check_branch
            %1149 = sbr.rel (%p1147) target = $region40
          $region39: #{_unnamed_function_.3} parent=35 // pred_region
            // Predicated region
            $region41: #{_unnamed_function_.3} parent=39 // pred_check
              _
            $region42: #{_unnamed_function_.3} parent=39 // pred_check_branch
              %1151 = sbr.rel target = $region44
            $region43: #{_unnamed_function_.3} parent=39 // pred_region
              // Predicated region
              $region63: #{_unnamed_function_.3} parent=43 // pred_check
                _
              $region64: #{_unnamed_function_.3} parent=43 // pred_check_branch
                %1250 = sbr.rel (0) target = $region66
              $region65: #{_unnamed_function_.3} parent=43 // pred_region
                %s1252 = ssub.s32 16, 1
                %s1253 = sdiv.u32.pop %s1142, 25
                %s1254 = srem.u32.pop %s1142, 25
                // While loop
                $region67: #{_unnamed_function_.3} parent=65 // loop_pre_header
                  _
                $region68: #{_unnamed_function_.3} parent=65 // loop_header
                  %s1256 = sphi 0, %s1258
                  %p1257 = scmp.ge.s32.totalorder %s1256, %s1253
                  %s1261 = sphi 0, %s1316
                  %s1262 = sphi %s1135, %s1319
                  %s1263 = sphi %s1146, %s1320
                $region69: #{_unnamed_function_.3} parent=65 // loop_header_branch
                  %1260 = sbr.rel (%p1257) target = $region73
                $region70: #{_unnamed_function_.3} parent=65 // loop_body
                  %v1264 = vld [vmem:[%s1262] sm:%s1252]
                  %1265 = vst [vmem:[%s1263] sm:%s1252] %v1264
                  %v1266 = vld [vmem:[%s1262 + $0x4] sm:%s1252]
                  %1267 = vst [vmem:[%s1263 + $0x4] sm:%s1252] %v1266
                  %v1268 = vld [vmem:[%s1262 + $0x8] sm:%s1252]
                  %1269 = vst [vmem:[%s1263 + $0x8] sm:%s1252] %v1268
                  %v1270 = vld [vmem:[%s1262 + $0xc] sm:%s1252]
                  %1271 = vst [vmem:[%s1263 + $0xc] sm:%s1252] %v1270
                  %v1272 = vld [vmem:[%s1262 + $0x10] sm:%s1252]
                  %1273 = vst [vmem:[%s1263 + $0x10] sm:%s1252] %v1272
                  %v1274 = vld [vmem:[%s1262 + $0x14] sm:%s1252]
                  %1275 = vst [vmem:[%s1263 + $0x14] sm:%s1252] %v1274
                  %v1276 = vld [vmem:[%s1262 + $0x18] sm:%s1252]
                  %1277 = vst [vmem:[%s1263 + $0x18] sm:%s1252] %v1276
                  %v1278 = vld [vmem:[%s1262 + $0x1c] sm:%s1252]
                  %1279 = vst [vmem:[%s1263 + $0x1c] sm:%s1252] %v1278
                  %v1280 = vld [vmem:[%s1262 + $0x20] sm:%s1252]
                  %1281 = vst [vmem:[%s1263 + $0x20] sm:%s1252] %v1280
                  %v1282 = vld [vmem:[%s1262 + $0x24] sm:%s1252]
                  %1283 = vst [vmem:[%s1263 + $0x24] sm:%s1252] %v1282
                  %v1284 = vld [vmem:[%s1262 + $0x28] sm:%s1252]
                  %1285 = vst [vmem:[%s1263 + $0x28] sm:%s1252] %v1284
                  %v1286 = vld [vmem:[%s1262 + $0x2c] sm:%s1252]
                  %1287 = vst [vmem:[%s1263 + $0x2c] sm:%s1252] %v1286
                  %v1288 = vld [vmem:[%s1262 + $0x30] sm:%s1252]
                  %1289 = vst [vmem:[%s1263 + $0x30] sm:%s1252] %v1288
                  %v1290 = vld [vmem:[%s1262 + $0x34] sm:%s1252]
                  %1291 = vst [vmem:[%s1263 + $0x34] sm:%s1252] %v1290
                  %v1292 = vld [vmem:[%s1262 + $0x38] sm:%s1252]
                  %1293 = vst [vmem:[%s1263 + $0x38] sm:%s1252] %v1292
                  %v1294 = vld [vmem:[%s1262 + $0x3c] sm:%s1252]
                  %1295 = vst [vmem:[%s1263 + $0x3c] sm:%s1252] %v1294
                  %v1296 = vld [vmem:[%s1262 + $0x40] sm:%s1252]
                  %1297 = vst [vmem:[%s1263 + $0x40] sm:%s1252] %v1296
                  %v1298 = vld [vmem:[%s1262 + $0x44] sm:%s1252]
                  %1299 = vst [vmem:[%s1263 + $0x44] sm:%s1252] %v1298
                  %v1300 = vld [vmem:[%s1262 + $0x48] sm:%s1252]
                  %1301 = vst [vmem:[%s1263 + $0x48] sm:%s1252] %v1300
                  %v1302 = vld [vmem:[%s1262 + $0x4c] sm:%s1252]
                  %1303 = vst [vmem:[%s1263 + $0x4c] sm:%s1252] %v1302
                  %v1304 = vld [vmem:[%s1262 + $0x50] sm:%s1252]
                  %1305 = vst [vmem:[%s1263 + $0x50] sm:%s1252] %v1304
                  %v1306 = vld [vmem:[%s1262 + $0x54] sm:%s1252]
                  %1307 = vst [vmem:[%s1263 + $0x54] sm:%s1252] %v1306
                  %v1308 = vld [vmem:[%s1262 + $0x58] sm:%s1252]
                  %1309 = vst [vmem:[%s1263 + $0x58] sm:%s1252] %v1308
                  %v1310 = vld [vmem:[%s1262 + $0x5c] sm:%s1252]
                  %1311 = vst [vmem:[%s1263 + $0x5c] sm:%s1252] %v1310
                  %v1312 = vld [vmem:[%s1262 + $0x60] sm:%s1252]
                  %1313 = vst [vmem:[%s1263 + $0x60] sm:%s1252] %v1312
                  %s1314 = sadd.s32 1, %s1261
                  %p1315 = scmp.ge.s32.totalorder %s1314, %s1253
                  %s1316 = scalar_select %p1315, 0, %s1314
                  %s1317 = smul.u32 %s1316, 100
                  %s1318 = smul.u32 %s1316, 100
                  %s1319 = scalar_lea.vmem %s1135, %s1317 [#allocation2]
                  %s1320 = scalar_lea.vmem %s1146, %s1318
                $region71: #{_unnamed_function_.3} parent=65 // loop_footer
                  %s1258 = sadd.s32 %s1256, 1
                $region72: #{_unnamed_function_.3} parent=65 // loop_footer_branch
                  %1255 = sbr.rel target = $region68
                $region73: #{_unnamed_function_.3} parent=65 // loop_exit
                  _
                %s1321 = sdiv.u32.pop %s1142, 25
                %s1322 = srem.u32.pop %s1142, 25
                %s1323 = smul.u32 %s1321, 25
                %s1324 = smul.u32 4, %s1323
                %s1325 = scalar_lea.vmem %s1135, %s1324 [#allocation2]
                %s1326 = smul.u32 4, %s1323
                %s1327 = scalar_lea.vmem %s1146, %s1326
                // While loop
                $region74: #{_unnamed_function_.3} parent=65 // loop_pre_header
                  _
                $region75: #{_unnamed_function_.3} parent=65 // loop_header
                  %s1329 = sphi 0, %s1331
                  %p1330 = scmp.ge.s32.totalorder %s1329, %s1322
                  %s1334 = sphi 0, %s1341
                  %s1335 = sphi %s1325, %s1344
                  %s1336 = sphi %s1327, %s1345
                $region76: #{_unnamed_function_.3} parent=65 // loop_header_branch
                  %1333 = sbr.rel (%p1330) target = $region80
                $region77: #{_unnamed_function_.3} parent=65 // loop_body
                  %v1337 = vld [vmem:[%s1335] sm:%s1252]
                  %1338 = vst [vmem:[%s1336] sm:%s1252] %v1337
                  %s1339 = sadd.s32 1, %s1334
                  %p1340 = scmp.ge.s32.totalorder %s1339, %s1322
                  %s1341 = scalar_select %p1340, 0, %s1339
                  %s1342 = smul.u32 %s1341, 4
                  %s1343 = smul.u32 %s1341, 4
                  %s1344 = scalar_lea.vmem %s1325, %s1342 [#allocation2]
                  %s1345 = scalar_lea.vmem %s1327, %s1343
                $region78: #{_unnamed_function_.3} parent=65 // loop_footer
                  %s1331 = sadd.s32 %s1329, 1
                $region79: #{_unnamed_function_.3} parent=65 // loop_footer_branch
                  %1328 = sbr.rel target = $region75
                $region80: #{_unnamed_function_.3} parent=65 // loop_exit
                  _
              $region66: #{_unnamed_function_.3} parent=43 // pred_fallthru
                _
            $region44: #{_unnamed_function_.3} parent=39 // pred_fallthru
              _
            // Predicated region
            $region45: #{_unnamed_function_.3} parent=39 // pred_check
              _
            $region46: #{_unnamed_function_.3} parent=39 // pred_check_branch
              %1153 = sbr.rel (0) target = $region48
            $region47: #{_unnamed_function_.3} parent=39 // pred_region
              %s1155 = ssub.s32 16, 1
              %s1156 = sdiv.u32.pop %s1142, 25
              %s1157 = srem.u32.pop %s1142, 25
              // While loop
              $region49: #{_unnamed_function_.3} parent=47 // loop_pre_header
                _
              $region50: #{_unnamed_function_.3} parent=47 // loop_header
                %s1159 = sphi 0, %s1161
                %p1160 = scmp.ge.s32.totalorder %s1159, %s1156
                %s1164 = sphi 0, %s1219
                %s1165 = sphi %s1135, %s1222
                %s1166 = sphi %s1146, %s1223
              $region51: #{_unnamed_function_.3} parent=47 // loop_header_branch
                %1163 = sbr.rel (%p1160) target = $region55
              $region52: #{_unnamed_function_.3} parent=47 // loop_body
                %v1167 = vld [vmem:[%s1165] sm:%s1155]
                %1168 = vst [vmem:[%s1166] sm:%s1155] %v1167
                %v1169 = vld [vmem:[%s1165 + $0x4] sm:%s1155]
                %1170 = vst [vmem:[%s1166 + $0x4] sm:%s1155] %v1169
                %v1171 = vld [vmem:[%s1165 + $0x8] sm:%s1155]
                %1172 = vst [vmem:[%s1166 + $0x8] sm:%s1155] %v1171
                %v1173 = vld [vmem:[%s1165 + $0xc] sm:%s1155]
                %1174 = vst [vmem:[%s1166 + $0xc] sm:%s1155] %v1173
                %v1175 = vld [vmem:[%s1165 + $0x10] sm:%s1155]
                %1176 = vst [vmem:[%s1166 + $0x10] sm:%s1155] %v1175
                %v1177 = vld [vmem:[%s1165 + $0x14] sm:%s1155]
                %1178 = vst [vmem:[%s1166 + $0x14] sm:%s1155] %v1177
                %v1179 = vld [vmem:[%s1165 + $0x18] sm:%s1155]
                %1180 = vst [vmem:[%s1166 + $0x18] sm:%s1155] %v1179
                %v1181 = vld [vmem:[%s1165 + $0x1c] sm:%s1155]
                %1182 = vst [vmem:[%s1166 + $0x1c] sm:%s1155] %v1181
                %v1183 = vld [vmem:[%s1165 + $0x20] sm:%s1155]
                %1184 = vst [vmem:[%s1166 + $0x20] sm:%s1155] %v1183
                %v1185 = vld [vmem:[%s1165 + $0x24] sm:%s1155]
                %1186 = vst [vmem:[%s1166 + $0x24] sm:%s1155] %v1185
                %v1187 = vld [vmem:[%s1165 + $0x28] sm:%s1155]
                %1188 = vst [vmem:[%s1166 + $0x28] sm:%s1155] %v1187
                %v1189 = vld [vmem:[%s1165 + $0x2c] sm:%s1155]
                %1190 = vst [vmem:[%s1166 + $0x2c] sm:%s1155] %v1189
                %v1191 = vld [vmem:[%s1165 + $0x30] sm:%s1155]
                %1192 = vst [vmem:[%s1166 + $0x30] sm:%s1155] %v1191
                %v1193 = vld [vmem:[%s1165 + $0x34] sm:%s1155]
                %1194 = vst [vmem:[%s1166 + $0x34] sm:%s1155] %v1193
                %v1195 = vld [vmem:[%s1165 + $0x38] sm:%s1155]
                %1196 = vst [vmem:[%s1166 + $0x38] sm:%s1155] %v1195
                %v1197 = vld [vmem:[%s1165 + $0x3c] sm:%s1155]
                %1198 = vst [vmem:[%s1166 + $0x3c] sm:%s1155] %v1197
                %v1199 = vld [vmem:[%s1165 + $0x40] sm:%s1155]
                %1200 = vst [vmem:[%s1166 + $0x40] sm:%s1155] %v1199
                %v1201 = vld [vmem:[%s1165 + $0x44] sm:%s1155]
                %1202 = vst [vmem:[%s1166 + $0x44] sm:%s1155] %v1201
                %v1203 = vld [vmem:[%s1165 + $0x48] sm:%s1155]
                %1204 = vst [vmem:[%s1166 + $0x48] sm:%s1155] %v1203
                %v1205 = vld [vmem:[%s1165 + $0x4c] sm:%s1155]
                %1206 = vst [vmem:[%s1166 + $0x4c] sm:%s1155] %v1205
                %v1207 = vld [vmem:[%s1165 + $0x50] sm:%s1155]
                %1208 = vst [vmem:[%s1166 + $0x50] sm:%s1155] %v1207
                %v1209 = vld [vmem:[%s1165 + $0x54] sm:%s1155]
                %1210 = vst [vmem:[%s1166 + $0x54] sm:%s1155] %v1209
                %v1211 = vld [vmem:[%s1165 + $0x58] sm:%s1155]
                %1212 = vst [vmem:[%s1166 + $0x58] sm:%s1155] %v1211
                %v1213 = vld [vmem:[%s1165 + $0x5c] sm:%s1155]
                %1214 = vst [vmem:[%s1166 + $0x5c] sm:%s1155] %v1213
                %v1215 = vld [vmem:[%s1165 + $0x60] sm:%s1155]
                %1216 = vst [vmem:[%s1166 + $0x60] sm:%s1155] %v1215
                %s1217 = sadd.s32 1, %s1164
                %p1218 = scmp.ge.s32.totalorder %s1217, %s1156
                %s1219 = scalar_select %p1218, 0, %s1217
                %s1220 = smul.u32 %s1219, 100
                %s1221 = smul.u32 %s1219, 100
                %s1222 = scalar_lea.vmem %s1135, %s1220 [#allocation2]
                %s1223 = scalar_lea.vmem %s1146, %s1221
              $region53: #{_unnamed_function_.3} parent=47 // loop_footer
                %s1161 = sadd.s32 %s1159, 1
              $region54: #{_unnamed_function_.3} parent=47 // loop_footer_branch
                %1158 = sbr.rel target = $region50
              $region55: #{_unnamed_function_.3} parent=47 // loop_exit
                _
              %s1224 = sdiv.u32.pop %s1142, 25
              %s1225 = srem.u32.pop %s1142, 25
              %s1226 = smul.u32 %s1224, 25
              %s1227 = smul.u32 4, %s1226
              %s1228 = scalar_lea.vmem %s1135, %s1227 [#allocation2]
              %s1229 = smul.u32 4, %s1226
              %s1230 = scalar_lea.vmem %s1146, %s1229
              // While loop
              $region56: #{_unnamed_function_.3} parent=47 // loop_pre_header
                _
              $region57: #{_unnamed_function_.3} parent=47 // loop_header
                %s1232 = sphi 0, %s1234
                %p1233 = scmp.ge.s32.totalorder %s1232, %s1225
                %s1237 = sphi 0, %s1244
                %s1238 = sphi %s1228, %s1247
                %s1239 = sphi %s1230, %s1248
              $region58: #{_unnamed_function_.3} parent=47 // loop_header_branch
                %1236 = sbr.rel (%p1233) target = $region62
              $region59: #{_unnamed_function_.3} parent=47 // loop_body
                %v1240 = vld [vmem:[%s1238] sm:%s1155]
                %1241 = vst [vmem:[%s1239] sm:%s1155] %v1240
                %s1242 = sadd.s32 1, %s1237
                %p1243 = scmp.ge.s32.totalorder %s1242, %s1225
                %s1244 = scalar_select %p1243, 0, %s1242
                %s1245 = smul.u32 %s1244, 4
                %s1246 = smul.u32 %s1244, 4
                %s1247 = scalar_lea.vmem %s1228, %s1245 [#allocation2]
                %s1248 = scalar_lea.vmem %s1230, %s1246
              $region60: #{_unnamed_function_.3} parent=47 // loop_footer
                %s1234 = sadd.s32 %s1232, 1
              $region61: #{_unnamed_function_.3} parent=47 // loop_footer_branch
                %1231 = sbr.rel target = $region57
              $region62: #{_unnamed_function_.3} parent=47 // loop_exit
                _
            $region48: #{_unnamed_function_.3} parent=39 // pred_fallthru
              _
          $region40: #{_unnamed_function_.3} parent=35 // pred_fallthru
            _
          %1346 = vnop
        $region36: #{_unnamed_function_.3} parent=31 // pred_fallthru
          _
      $region32: #{_unnamed_function_.3} parent=5 // pred_fallthru
        _
      %p1347 = scmp.le.s32.totalorder 2, %s9
      // Predicated region
      $region81: #{_unnamed_function_.3} parent=5 // pred_check
        %p1348 = pneg %p1347
      $region82: #{_unnamed_function_.3} parent=5 // pred_check_branch
        %1350 = sbr.rel (%p1348) target = $region84
      $region83: #{_unnamed_function_.3} parent=5 // pred_region
        %s1351 = ssub.s32 %s9, 2
        // Predicated region
        $region85: #{_unnamed_function_.3} parent=83 // pred_check
          %p1352 = pneg %p106
        $region86: #{_unnamed_function_.3} parent=83 // pred_check_branch
          %1354 = sbr.rel (%p1352) target = $region88
        $region87: #{_unnamed_function_.3} parent=83 // pred_region
          %s1355 = sand.u32 %s91, 1
          %s1356 = sand.u32 %s91, 1
          %s1357 = smul.addr %s1356, 100
          %s1358 = scalar_lea.vmem [#allocation2], %s1357
        $region88: #{_unnamed_function_.3} parent=83 // pred_fallthru
          _
      $region84: #{_unnamed_function_.3} parent=5 // pred_fallthru
        _
    $region6: #{_unnamed_function_.3} parent=1 // loop_footer
      %s13 = sadd.s32 1, %s9
    $region7: #{_unnamed_function_.3} parent=1 // loop_footer_branch
      %8 = sbr.rel target = $region3
    $region8: #{_unnamed_function_.3} parent=1 // loop_exit
      _

// kernel: _unnamed_function_.4
$region0: #{_unnamed_function_.4}
  #allocation0 [shape = 'u32[]', space=smem, size = 0x4, offset = 0x4, fixed_abs, tag = 'smem constant byte address 0x4 - core index']
  #allocation1 [shape = 'u32[72,128]{1,0:T(1,128)}', space=vmem, size = 0x9000, scoped, tag = 'internal scratch']
  %s0 = inlined_call_operand.vmem [shape: bf16[72,1024], index: 0, kind: input, shape index: {}]
  %s1 = inlined_call_operand.vmem [shape: bf16[1024,128], index: 1, kind: input, shape index: {}]
  %s2 = inlined_call_operand.vmem [shape: f32[1,128], index: 2, kind: input, shape index: {}]
  %s3 = inlined_call_operand.vmem [shape: bf16[72,128], index: 3, kind: output, shape index: {}]
  %s4 = sld [smem:[#allocation0]]
  $region89: #{_unnamed_function_.4} parent=0
    _
  %s6 = ssub.s32 1, %s4
  %s7 = scalar_select 0, %s6, %s4
  $region1: #{_unnamed_function_.4} parent=0
    #allocation2 [shape = 'u8[20480]{0}', space=vmem, size = 0x5000, scoped, tag = 'output window, operand 0']
    loop: start=0, step=1, limit=4
    $region2: #{_unnamed_function_.4} parent=1 // loop_pre_header
      _
    $region3: #{_unnamed_function_.4} parent=1 // loop_header
      %s9 = sphi 0, %s13
      %p10 = scmp.ge.s32.totalorder %s9, 4
      %s19 = sphi 0, %s21
      %s22 = sphi 0, %s19
      %s23 = sphi 0, %s22
      %s39 = sphi 0, %s23
      %s43 = sphi 0, %s43
      %s45 = sphi 0, %s43
      %s46 = sphi 0, %s45
      %s60 = sphi 0, %s46
      %s64 = sphi 0, %s64
      %s66 = sphi 0, %s64
      %s67 = sphi 0, %s66
      %s81 = sphi 0, %s67
      %s87 = sphi 0, %s89
      %s90 = sphi 0, %s87
      %s91 = sphi 0, %s90
      %s107 = sphi 0, %s91
    $region4: #{_unnamed_function_.4} parent=1 // loop_header_branch
      %12 = sbr.rel (%p10) target = $region8
    $region5: #{_unnamed_function_.4} parent=1 // loop_body
      %s14 = ssub.s32 %s9, 1
      %s15 = ssub.s32 %s9, 2
      %s16 = sadd.s32 %s9, 1
      %s17 = ssub.s32 %s9, %s16
      %p18 = scmp.eq.s32.totalorder %s17, 0
      %s20 = sadd.s32 %s19, 1
      %s21 = scalar_select %p18, %s19, %s20
      %p24 = pneg %p18
      %p25 = scmp.eq.s32.totalorder %s9, 1
      %p26 = por %p24, %p25
      %p27 = scmp.ne.s32.totalorder %s19, %s22
      %p28 = scmp.eq.s32.totalorder %s9, 0
      %p29 = por %p27, %p28
      %p30 = scmp.ne.s32.totalorder %s19, %s22
      %p31 = scmp.eq.s32.totalorder %s14, 1
      %p32 = por %p30, %p31
      %p33 = scmp.ne.s32.totalorder %s22, %s23
      %p34 = scmp.eq.s32.totalorder %s14, 0
      %p35 = por %p33, %p34
      %p36 = scmp.ne.s32.totalorder %s22, %s23
      %p37 = scmp.eq.s32.totalorder %s15, 1
      %p38 = por %p36, %p37
      %p40 = scmp.ne.s32.totalorder %s23, %s39
      %p41 = scmp.eq.s32.totalorder %s15, 0
      %p42 = por %p40, %p41
      %s44 = sadd.s32 %s43, 1
      %p47 = scmp.eq.s32.totalorder %s9, 1
      %p48 = scmp.ne.s32.totalorder %s43, %s45
      %p49 = scmp.eq.s32.totalorder %s9, 0
      %p50 = por %p48, %p49
      %p51 = scmp.ne.s32.totalorder %s43, %s45
      %p52 = scmp.eq.s32.totalorder %s14, 1
      %p53 = por %p51, %p52
      %p54 = scmp.ne.s32.totalorder %s45, %s46
      %p55 = scmp.eq.s32.totalorder %s14, 0
      %p56 = por %p54, %p55
      %p57 = scmp.ne.s32.totalorder %s45, %s46
      %p58 = scmp.eq.s32.totalorder %s15, 1
      %p59 = por %p57, %p58
      %p61 = scmp.ne.s32.totalorder %s46, %s60
      %p62 = scmp.eq.s32.totalorder %s15, 0
      %p63 = por %p61, %p62
      %s65 = sadd.s32 %s64, 1
      %p68 = scmp.eq.s32.totalorder %s9, 1
      %p69 = scmp.ne.s32.totalorder %s64, %s66
      %p70 = scmp.eq.s32.totalorder %s9, 0
      %p71 = por %p69, %p70
      %p72 = scmp.ne.s32.totalorder %s64, %s66
      %p73 = scmp.eq.s32.totalorder %s14, 1
      %p74 = por %p72, %p73
      %p75 = scmp.ne.s32.totalorder %s66, %s67
      %p76 = scmp.eq.s32.totalorder %s14, 0
      %p77 = por %p75, %p76
      %p78 = scmp.ne.s32.totalorder %s66, %s67
      %p79 = scmp.eq.s32.totalorder %s15, 1
      %p80 = por %p78, %p79
      %p82 = scmp.ne.s32.totalorder %s67, %s81
      %p83 = scmp.eq.s32.totalorder %s15, 0
      %p84 = por %p82, %p83
      %s85 = ssub.s32 %s9, %s16
      %p86 = scmp.eq.s32.totalorder %s85, 0
      %s88 = sadd.s32 %s87, 1
      %s89 = scalar_select %p86, %s87, %s88
      %p92 = pneg %p86
      %p93 = scmp.eq.s32.totalorder %s9, 1
      %p94 = por %p92, %p93
      %p95 = scmp.ne.s32.totalorder %s87, %s90
      %p96 = scmp.eq.s32.totalorder %s9, 0
      %p97 = por %p95, %p96
      %p98 = scmp.ne.s32.totalorder %s87, %s90
      %p99 = scmp.eq.s32.totalorder %s14, 1
      %p100 = por %p98, %p99
      %p101 = scmp.ne.s32.totalorder %s90, %s91
      %p102 = scmp.eq.s32.totalorder %s14, 0
      %p103 = por %p101, %p102
      %p104 = scmp.ne.s32.totalorder %s90, %s91
      %p105 = scmp.eq.s32.totalorder %s15, 1
      %p106 = por %p104, %p105
      %p108 = scmp.ne.s32.totalorder %s91, %s107
      %p109 = scmp.eq.s32.totalorder %s15, 0
      %p110 = por %p108, %p109
      %p111 = scmp.le.s32.totalorder 1, %s9
      %p112 = scmp.lt.s32.totalorder %s9, 3
      %p113 = pnand %p111, %p112
      %p114 = pneg %p113
      // Predicated region
      $region9: #{_unnamed_function_.4} parent=5 // pred_check
        _
      $region10: #{_unnamed_function_.4} parent=5 // pred_check_branch
        %116 = sbr.rel (%p113) target = $region12
      $region11: #{_unnamed_function_.4} parent=5 // pred_region
        %s117 = ssub.s32 %s9, 1
        // Predicated region
        $region13: #{_unnamed_function_.4} parent=11 // pred_check
          %p118 = pneg %p56
        $region14: #{_unnamed_function_.4} parent=11 // pred_check_branch
          %120 = sbr.rel (%p118) target = $region16
        $region15: #{_unnamed_function_.4} parent=11 // pred_region
          _
        $region16: #{_unnamed_function_.4} parent=11 // pred_fallthru
          _
        // Predicated region
        $region17: #{_unnamed_function_.4} parent=11 // pred_check
          %p121 = pneg %p77
        $region18: #{_unnamed_function_.4} parent=11 // pred_check_branch
          %123 = sbr.rel (%p121) target = $region20
        $region19: #{_unnamed_function_.4} parent=11 // pred_region
          _
        $region20: #{_unnamed_function_.4} parent=11 // pred_fallthru
          _
      $region12: #{_unnamed_function_.4} parent=5 // pred_fallthru
        _
      %p124 = scmp.lt.s32.totalorder %s9, 2
      // Predicated region
      $region21: #{_unnamed_function_.4} parent=5 // pred_check
        %p125 = pneg %p124
      $region22: #{_unnamed_function_.4} parent=5 // pred_check_branch
        %127 = sbr.rel (%p125) target = $region24
      $region23: #{_unnamed_function_.4} parent=5 // pred_region
        // Predicated region
        $region25: #{_unnamed_function_.4} parent=23 // pred_check
          %p128 = pneg %p29
        $region26: #{_unnamed_function_.4} parent=23 // pred_check_branch
          %130 = sbr.rel (%p128) target = $region28
        $region27: #{_unnamed_function_.4} parent=23 // pred_region
          %s131 = smul.u32 5, %s9
          %s132 = ssub.s32 9, %s131
          %p133 = scmp.lt.s32.totalorder %s132, 5
          %s134 = scalar_select %p133, %s132, 5
          %s135 = smul.u32 4, %s134
          %s136 = smul.u32 %s135, 8
          %p137 = scmp.lt.s32.totalorder %s131, 8
          %s138 = scalar_select %p137, %s131, 8
          %s139 = smul.addr %s138, 8
          %s140 = smul.addr %s139, 4
          %s141 = scalar_lea.vmem %s0, %s140
          %s142 = smul.u32 5, %s9
          %s143 = ssub.s32 9, %s142
          %p144 = scmp.lt.s32.totalorder %s143, 5
          %s145 = scalar_select %p144, %s143, 5
          %s146 = smul.u32 4, %s145
          %s147 = smul.u32 %s146, 8
        $region28: #{_unnamed_function_.4} parent=23 // pred_fallthru
          _
      $region24: #{_unnamed_function_.4} parent=5 // pred_fallthru
        _
      %p148 = scmp.le.s32.totalorder 1, %s9
      %p149 = scmp.lt.s32.totalorder %s9, 3
      %p150 = pnand %p148, %p149
      %p151 = pneg %p150
      // Predicated region
      $region29: #{_unnamed_function_.4} parent=5 // pred_check
        _
      $region30: #{_unnamed_function_.4} parent=5 // pred_check_branch
        %153 = sbr.rel (%p150) target = $region32
      $region31: #{_unnamed_function_.4} parent=5 // pred_region
        %s154 = ssub.s32 %s9, 1
        %s155 = smul.u32 5, %s14
        %s156 = ssub.s32 9, %s155
        %p157 = scmp.lt.s32.totalorder %s156, 5
        %s158 = scalar_select %p157, %s156, 5
        %s159 = smul.u32 4, %s158
        %s160 = smul.u32 %s159, 8
        %p161 = scmp.lt.s32.totalorder %s155, 8
        %s162 = scalar_select %p161, %s155, 8
        %s163 = smul.addr %s162, 8
        %s164 = smul.addr %s163, 4
        %s165 = scalar_lea.vmem %s0, %s164
        %p166 = pneg %p35
        %p167 = pneg %p32
        %p168 = pneg %p56
        %p169 = pneg %p53
        %p170 = pneg %p77
        %p171 = pneg %p74
        %p172 = pneg %p103
        %p173 = pneg %p100
        %s174 = sand.u32 %s90, 1
        %s175 = sand.u32 %s90, 1
        %s176 = smul.addr %s175, 20
        %s177 = scalar_lea.vmem [#allocation2], %s176
        %s178 = smul.u32 5, %s14
        %s179 = ssub.s32 9, %s178
        %p180 = scmp.lt.s32.totalorder %s179, 5
        %s181 = scalar_select %p180, %s179, 5
        %s182 = smul.u32 4, %s181
        %s183 = smul.u32 %s182, 8
        %p184 = scmp.lt.s32.totalorder %s178, 8
        %s185 = scalar_select %p184, %s178, 8
        %s186 = smul.addr %s185, 8
        %s187 = smul.addr %s186, 4
        %s188 = scalar_lea.vmem %s0, %s187
        %s189 = smul.u32 5, %s14
        %s190 = ssub.s32 9, %s189
        %p191 = scmp.lt.s32.totalorder %s190, 5
        %s192 = scalar_select %p191, %s190, 5
        %s193 = smul.u32 4, %s192
        %s194 = smul.u32 %s193, 8
        %s195 = smul.u32 5, %s14
        %s196 = ssub.s32 9, %s195
        %p197 = scmp.lt.s32.totalorder %s196, 5
        %s198 = scalar_select %p197, %s196, 5
        %s199 = smul.u32 4, %s198
        %v200 = vld [vmem:[%s188] sm:$0xff]
        %v201 = vld [vmem:[%s188 + $0x8] sm:$0xff]
        %v202 = vld [vmem:[%s188 + $0x10] sm:$0xff]
        %v203 = vld [vmem:[%s188 + $0x18] sm:$0xff]
        %v204 = vld [vmem:[%s188 + $0x20] sm:$0xff]
        %v205 = vld [vmem:[%s188 + $0x28] sm:$0xff]
        %v206 = vld [vmem:[%s188 + $0x30] sm:$0xff]
        %v207 = vld [vmem:[%s188 + $0x38] sm:$0xff]
        %v208 = vld [vmem:[%s188 + $0x40] sm:$0xff]
        %v209 = vld [vmem:[%s188 + $0x48] sm:$0xff]
        %v210 = vld [vmem:[%s188 + $0x50] sm:$0xff]
        %v211 = vld [vmem:[%s188 + $0x58] sm:$0xff]
        %v212 = vld [vmem:[%s188 + $0x60] sm:$0xff]
        %v213 = vld [vmem:[%s188 + $0x68] sm:$0xff]
        %v214 = vld [vmem:[%s188 + $0x70] sm:$0xff]
        %v215 = vld [vmem:[%s188 + $0x78] sm:$0xff]
        %v216 = vld [vmem:[%s188 + $0x80] sm:$0xff]
        %v217 = vld [vmem:[%s188 + $0x88] sm:$0xff]
        %v218 = vld [vmem:[%s188 + $0x90] sm:$0xff]
        %v219 = vld [vmem:[%s188 + $0x98] sm:$0xff]
        %v220 = vld [vmem:[%s1] sm:$0xf]
        %v221 = vld [vmem:[%s1 + $0x4] sm:$0xf]
        %v222 = vld [vmem:[%s1 + $0x8] sm:$0xf]
        %v223 = vld [vmem:[%s1 + $0xc] sm:$0xf]
        %v224 = vld [vmem:[%s1 + $0x10] sm:$0xf]
        %v225 = vld [vmem:[%s1 + $0x14] sm:$0xf]
        %v226 = vld [vmem:[%s1 + $0x18] sm:$0xf]
        %v227 = vld [vmem:[%s1 + $0x1c] sm:$0xf]
        %v228 = vld [vmem:[%s1 + $0x20] sm:$0xf]
        %v229 = vld [vmem:[%s1 + $0x24] sm:$0xf]
        %v230 = vld [vmem:[%s1 + $0x28] sm:$0xf]
        %v231 = vld [vmem:[%s1 + $0x2c] sm:$0xf]
        %v232 = vld [vmem:[%s1 + $0x30] sm:$0xf]
        %v233 = vld [vmem:[%s1 + $0x34] sm:$0xf]
        %v234 = vld [vmem:[%s1 + $0x38] sm:$0xf]
        %v235 = vld [vmem:[%s1 + $0x3c] sm:$0xf]
        %v236 = vld [vmem:[%s1 + $0x40] sm:$0xf]
        %v237 = vld [vmem:[%s1 + $0x44] sm:$0xf]
        %v238 = vld [vmem:[%s1 + $0x48] sm:$0xf]
        %v239 = vld [vmem:[%s1 + $0x4c] sm:$0xf]
        %v240 = vld [vmem:[%s1 + $0x50] sm:$0xf]
        %v241 = vld [vmem:[%s1 + $0x54] sm:$0xf]
        %v242 = vld [vmem:[%s1 + $0x58] sm:$0xf]
        %v243 = vld [vmem:[%s1 + $0x5c] sm:$0xf]
        %v244 = vld [vmem:[%s1 + $0x60] sm:$0xf]
        %v245 = vld [vmem:[%s1 + $0x64] sm:$0xf]
        %v246 = vld [vmem:[%s1 + $0x68] sm:$0xf]
        %v247 = vld [vmem:[%s1 + $0x6c] sm:$0xf]
        %v248 = vld [vmem:[%s1 + $0x70] sm:$0xf]
        %v249 = vld [vmem:[%s1 + $0x74] sm:$0xf]
        %v250 = vld [vmem:[%s1 + $0x78] sm:$0xf]
        %v251 = vld [vmem:[%s1 + $0x7c] sm:$0xf]
        %v252 = vld [vmem:[%s1 + $0x80] sm:$0xf]
        %v253 = vld [vmem:[%s1 + $0x84] sm:$0xf]
        %v254 = vld [vmem:[%s1 + $0x88] sm:$0xf]
        %v255 = vld [vmem:[%s1 + $0x8c] sm:$0xf]
        %v256 = vld [vmem:[%s1 + $0x90] sm:$0xf]
        %v257 = vld [vmem:[%s1 + $0x94] sm:$0xf]
        %v258 = vld [vmem:[%s1 + $0x98] sm:$0xf]
        %v259 = vld [vmem:[%s1 + $0x9c] sm:$0xf]
        %v260 = vld [vmem:[%s1 + $0xa0] sm:$0xf]
        %v261 = vld [vmem:[%s1 + $0xa4] sm:$0xf]
        %v262 = vld [vmem:[%s1 + $0xa8] sm:$0xf]
        %v263 = vld [vmem:[%s1 + $0xac] sm:$0xf]
        %v264 = vld [vmem:[%s1 + $0xb0] sm:$0xf]
        %v265 = vld [vmem:[%s1 + $0xb4] sm:$0xf]
        %v266 = vld [vmem:[%s1 + $0xb8] sm:$0xf]
        %v267 = vld [vmem:[%s1 + $0xbc] sm:$0xf]
        %v268 = vld [vmem:[%s1 + $0xc0] sm:$0xf]
        %v269 = vld [vmem:[%s1 + $0xc4] sm:$0xf]
        %v270 = vld [vmem:[%s1 + $0xc8] sm:$0xf]
        %v271 = vld [vmem:[%s1 + $0xcc] sm:$0xf]
        %v272 = vld [vmem:[%s1 + $0xd0] sm:$0xf]
        %v273 = vld [vmem:[%s1 + $0xd4] sm:$0xf]
        %v274 = vld [vmem:[%s1 + $0xd8] sm:$0xf]
        %v275 = vld [vmem:[%s1 + $0xdc] sm:$0xf]
        %v276 = vld [vmem:[%s1 + $0xe0] sm:$0xf]
        %v277 = vld [vmem:[%s1 + $0xe4] sm:$0xf]
        %v278 = vld [vmem:[%s1 + $0xe8] sm:$0xf]
        %v279 = vld [vmem:[%s1 + $0xec] sm:$0xf]
        %v280 = vld [vmem:[%s1 + $0xf0] sm:$0xf]
        %v281 = vld [vmem:[%s1 + $0xf4] sm:$0xf]
        %v282 = vld [vmem:[%s1 + $0xf8] sm:$0xf]
        %v283 = vld [vmem:[%s1 + $0xfc] sm:$0xf]
        %v284 = vld [vmem:[%s1 + $0x100] sm:$0xf]
        %v285 = vld [vmem:[%s1 + $0x104] sm:$0xf]
        %v286 = vld [vmem:[%s1 + $0x108] sm:$0xf]
        %v287 = vld [vmem:[%s1 + $0x10c] sm:$0xf]
        %v288 = vld [vmem:[%s1 + $0x110] sm:$0xf]
        %v289 = vld [vmem:[%s1 + $0x114] sm:$0xf]
        %v290 = vld [vmem:[%s1 + $0x118] sm:$0xf]
        %v291 = vld [vmem:[%s1 + $0x11c] sm:$0xf]
        %v292 = vld [vmem:[%s1 + $0x120] sm:$0xf]
        %v293 = vld [vmem:[%s1 + $0x124] sm:$0xf]
        %v294 = vld [vmem:[%s1 + $0x128] sm:$0xf]
        %v295 = vld [vmem:[%s1 + $0x12c] sm:$0xf]
        %v296 = vld [vmem:[%s1 + $0x130] sm:$0xf]
        %v297 = vld [vmem:[%s1 + $0x134] sm:$0xf]
        %v298 = vld [vmem:[%s1 + $0x138] sm:$0xf]
        %v299 = vld [vmem:[%s1 + $0x13c] sm:$0xf]
        %v300 = vld [vmem:[%s1 + $0x140] sm:$0xf]
        %v301 = vld [vmem:[%s1 + $0x144] sm:$0xf]
        %v302 = vld [vmem:[%s1 + $0x148] sm:$0xf]
        %v303 = vld [vmem:[%s1 + $0x14c] sm:$0xf]
        %v304 = vld [vmem:[%s1 + $0x150] sm:$0xf]
        %v305 = vld [vmem:[%s1 + $0x154] sm:$0xf]
        %v306 = vld [vmem:[%s1 + $0x158] sm:$0xf]
        %v307 = vld [vmem:[%s1 + $0x15c] sm:$0xf]
        %v308 = vld [vmem:[%s1 + $0x160] sm:$0xf]
        %v309 = vld [vmem:[%s1 + $0x164] sm:$0xf]
        %v310 = vld [vmem:[%s1 + $0x168] sm:$0xf]
        %v311 = vld [vmem:[%s1 + $0x16c] sm:$0xf]
        %v312 = vld [vmem:[%s1 + $0x170] sm:$0xf]
        %v313 = vld [vmem:[%s1 + $0x174] sm:$0xf]
        %v314 = vld [vmem:[%s1 + $0x178] sm:$0xf]
        %v315 = vld [vmem:[%s1 + $0x17c] sm:$0xf]
        %v316 = vld [vmem:[%s1 + $0x180] sm:$0xf]
        %v317 = vld [vmem:[%s1 + $0x184] sm:$0xf]
        %v318 = vld [vmem:[%s1 + $0x188] sm:$0xf]
        %v319 = vld [vmem:[%s1 + $0x18c] sm:$0xf]
        %v320 = vld [vmem:[%s1 + $0x190] sm:$0xf]
        %v321 = vld [vmem:[%s1 + $0x194] sm:$0xf]
        %v322 = vld [vmem:[%s1 + $0x198] sm:$0xf]
        %v323 = vld [vmem:[%s1 + $0x19c] sm:$0xf]
        %v324 = vld [vmem:[%s1 + $0x1a0] sm:$0xf]
        %v325 = vld [vmem:[%s1 + $0x1a4] sm:$0xf]
        %v326 = vld [vmem:[%s1 + $0x1a8] sm:$0xf]
        %v327 = vld [vmem:[%s1 + $0x1ac] sm:$0xf]
        %v328 = vld [vmem:[%s1 + $0x1b0] sm:$0xf]
        %v329 = vld [vmem:[%s1 + $0x1b4] sm:$0xf]
        %v330 = vld [vmem:[%s1 + $0x1b8] sm:$0xf]
        %v331 = vld [vmem:[%s1 + $0x1bc] sm:$0xf]
        %v332 = vld [vmem:[%s1 + $0x1c0] sm:$0xf]
        %v333 = vld [vmem:[%s1 + $0x1c4] sm:$0xf]
        %v334 = vld [vmem:[%s1 + $0x1c8] sm:$0xf]
        %v335 = vld [vmem:[%s1 + $0x1cc] sm:$0xf]
        %v336 = vld [vmem:[%s1 + $0x1d0] sm:$0xf]
        %v337 = vld [vmem:[%s1 + $0x1d4] sm:$0xf]
        %v338 = vld [vmem:[%s1 + $0x1d8] sm:$0xf]
        %v339 = vld [vmem:[%s1 + $0x1dc] sm:$0xf]
        %v340 = vld [vmem:[%s1 + $0x1e0] sm:$0xf]
        %v341 = vld [vmem:[%s1 + $0x1e4] sm:$0xf]
        %v342 = vld [vmem:[%s1 + $0x1e8] sm:$0xf]
        %v343 = vld [vmem:[%s1 + $0x1ec] sm:$0xf]
        %v344 = vld [vmem:[%s1 + $0x1f0] sm:$0xf]
        %v345 = vld [vmem:[%s1 + $0x1f4] sm:$0xf]
        %v346 = vld [vmem:[%s1 + $0x1f8] sm:$0xf]
        %v347 = vld [vmem:[%s1 + $0x1fc] sm:$0xf]
        %v348 = vld [vmem:[%s2] sm:$0x1]
        %v350 = vperm.slane %v348, 0
        %v372 = vunpack.c.l.b16 %v200
        %v373 = vunpack.c.h.b16 %v200
        %v374 = vunpack.c.l.b16 %v201
        %v375 = vunpack.c.h.b16 %v201
        %v376 = vunpack.c.l.b16 %v202
        %v377 = vunpack.c.h.b16 %v202
        %v378 = vunpack.c.l.b16 %v203
        %v379 = vunpack.c.h.b16 %v203
        %v380 = vunpack.c.l.b16 %v204
        %v381 = vunpack.c.h.b16 %v204
        %v382 = vunpack.c.l.b16 %v205
        %v383 = vunpack.c.h.b16 %v205
        %v384 = vunpack.c.l.b16 %v206
        %v385 = vunpack.c.h.b16 %v206
        %v386 = vunpack.c.l.b16 %v207
        %v387 = vunpack.c.h.b16 %v207
        %v388 = vunpack.c.l.b16 %v208
        %v389 = vunpack.c.h.b16 %v208
        %v390 = vunpack.c.l.b16 %v209
        %v391 = vunpack.c.h.b16 %v209
        %v392 = vunpack.c.l.b16 %v210
        %v393 = vunpack.c.h.b16 %v210
        %v394 = vunpack.c.l.b16 %v211
        %v395 = vunpack.c.h.b16 %v211
        %v396 = vunpack.c.l.b16 %v212
        %v397 = vunpack.c.h.b16 %v212
        %v398 = vunpack.c.l.b16 %v213
        %v399 = vunpack.c.h.b16 %v213
        %v400 = vunpack.c.l.b16 %v214
        %v401 = vunpack.c.h.b16 %v214
        %v402 = vunpack.c.l.b16 %v215
        %v403 = vunpack.c.h.b16 %v215
        %v404 = vunpack.c.l.b16 %v216
        %v405 = vunpack.c.h.b16 %v216
        %v406 = vunpack.c.l.b16 %v217
        %v407 = vunpack.c.h.b16 %v217
        %v408 = vunpack.c.l.b16 %v218
        %v409 = vunpack.c.h.b16 %v218
        %v410 = vunpack.c.l.b16 %v219
        %v411 = vunpack.c.h.b16 %v219
        %v412 = vpack.c.b16 %v380, %v372
        %v413 = vpack.c.b16 %v381, %v373
        %v414 = vpack.c.b16 %v382, %v374
        %v415 = vpack.c.b16 %v383, %v375
        %v416 = vpack.c.b16 %v384, %v376
        %v417 = vpack.c.b16 %v385, %v377
        %v418 = vpack.c.b16 %v386, %v378
        %v419 = vpack.c.b16 %v387, %v379
        %v420 = vpack.c.b16 %v396, %v388
        %v421 = vpack.c.b16 %v397, %v389
        %v422 = vpack.c.b16 %v398, %v390
        %v423 = vpack.c.b16 %v399, %v391
        %v424 = vpack.c.b16 %v400, %v392
        %v425 = vpack.c.b16 %v401, %v393
        %v426 = vpack.c.b16 %v402, %v394
        %v427 = vpack.c.b16 %v403, %v395
        %v428 = vpack.c.b16 %v404, %v404
        %v429 = vpack.c.b16 %v405, %v405
        %v430 = vpack.c.b16 %v406, %v406
        %v431 = vpack.c.b16 %v407, %v407
        %v432 = vpack.c.b16 %v408, %v408
        %v433 = vpack.c.b16 %v409, %v409
        %v434 = vpack.c.b16 %v410, %v410
        %v435 = vpack.c.b16 %v411, %v411
        %v588 = vunpack.c.l.b16 %v220
        %v589 = vunpack.c.l.b16 %v221
        %v590 = vunpack.c.l.b16 %v222
        %v591 = vunpack.c.l.b16 %v223
        %v592 = vunpack.c.l.b16 %v224
        %v593 = vunpack.c.l.b16 %v225
        %v594 = vunpack.c.l.b16 %v226
        %v595 = vunpack.c.l.b16 %v227
        %v596 = vunpack.c.l.b16 %v228
        %v597 = vunpack.c.l.b16 %v229
        %v598 = vunpack.c.l.b16 %v230
        %v599 = vunpack.c.l.b16 %v231
        %v600 = vunpack.c.l.b16 %v232
        %v601 = vunpack.c.l.b16 %v233
        %v602 = vunpack.c.l.b16 %v234
        %v603 = vunpack.c.l.b16 %v235
        %v604 = vunpack.c.l.b16 %v236
        %v605 = vunpack.c.l.b16 %v237
        %v606 = vunpack.c.l.b16 %v238
        %v607 = vunpack.c.l.b16 %v239
        %v608 = vunpack.c.l.b16 %v240
        %v609 = vunpack.c.l.b16 %v241
        %v610 = vunpack.c.l.b16 %v242
        %v611 = vunpack.c.l.b16 %v243
        %v612 = vunpack.c.l.b16 %v244
        %v613 = vunpack.c.l.b16 %v245
        %v614 = vunpack.c.l.b16 %v246
        %v615 = vunpack.c.l.b16 %v247
        %v616 = vunpack.c.l.b16 %v248
        %v617 = vunpack.c.l.b16 %v249
        %v618 = vunpack.c.l.b16 %v250
        %v619 = vunpack.c.l.b16 %v251
        %v620 = vunpack.c.l.b16 %v252
        %v621 = vunpack.c.l.b16 %v253
        %v622 = vunpack.c.l.b16 %v254
        %v623 = vunpack.c.l.b16 %v255
        %v624 = vunpack.c.l.b16 %v256
        %v625 = vunpack.c.l.b16 %v257
        %v626 = vunpack.c.l.b16 %v258
        %v627 = vunpack.c.l.b16 %v259
        %v628 = vunpack.c.l.b16 %v260
        %v629 = vunpack.c.l.b16 %v261
        %v630 = vunpack.c.l.b16 %v262
        %v631 = vunpack.c.l.b16 %v263
        %v632 = vunpack.c.l.b16 %v264
        %v633 = vunpack.c.l.b16 %v265
        %v634 = vunpack.c.l.b16 %v266
        %v635 = vunpack.c.l.b16 %v267
        %v636 = vunpack.c.l.b16 %v268
        %v637 = vunpack.c.l.b16 %v269
        %v638 = vunpack.c.l.b16 %v270
        %v639 = vunpack.c.l.b16 %v271
        %v640 = vunpack.c.l.b16 %v272
        %v641 = vunpack.c.l.b16 %v273
        %v642 = vunpack.c.l.b16 %v274
        %v643 = vunpack.c.l.b16 %v275
        %v644 = vunpack.c.l.b16 %v276
        %v645 = vunpack.c.l.b16 %v277
        %v646 = vunpack.c.l.b16 %v278
        %v647 = vunpack.c.l.b16 %v279
        %v648 = vunpack.c.l.b16 %v280
        %v649 = vunpack.c.l.b16 %v281
        %v650 = vunpack.c.l.b16 %v282
        %v651 = vunpack.c.l.b16 %v283
        %v652 = vunpack.c.l.b16 %v284
        %v653 = vunpack.c.l.b16 %v285
        %v654 = vunpack.c.l.b16 %v286
        %v655 = vunpack.c.l.b16 %v287
        %v656 = vunpack.c.l.b16 %v288
        %v657 = vunpack.c.l.b16 %v289
        %v658 = vunpack.c.l.b16 %v290
        %v659 = vunpack.c.l.b16 %v291
        %v660 = vunpack.c.l.b16 %v292
        %v661 = vunpack.c.l.b16 %v293
        %v662 = vunpack.c.l.b16 %v294
        %v663 = vunpack.c.l.b16 %v295
        %v664 = vunpack.c.l.b16 %v296
        %v665 = vunpack.c.l.b16 %v297
        %v666 = vunpack.c.l.b16 %v298
        %v667 = vunpack.c.l.b16 %v299
        %v668 = vunpack.c.l.b16 %v300
        %v669 = vunpack.c.l.b16 %v301
        %v670 = vunpack.c.l.b16 %v302
        %v671 = vunpack.c.l.b16 %v303
        %v672 = vunpack.c.l.b16 %v304
        %v673 = vunpack.c.l.b16 %v305
        %v674 = vunpack.c.l.b16 %v306
        %v675 = vunpack.c.l.b16 %v307
        %v676 = vunpack.c.l.b16 %v308
        %v677 = vunpack.c.l.b16 %v309
        %v678 = vunpack.c.l.b16 %v310
        %v679 = vunpack.c.l.b16 %v311
        %v680 = vunpack.c.l.b16 %v312
        %v681 = vunpack.c.l.b16 %v313
        %v682 = vunpack.c.l.b16 %v314
        %v683 = vunpack.c.l.b16 %v315
        %v684 = vunpack.c.l.b16 %v316
        %v685 = vunpack.c.l.b16 %v317
        %v686 = vunpack.c.l.b16 %v318
        %v687 = vunpack.c.l.b16 %v319
        %v688 = vunpack.c.l.b16 %v320
        %v689 = vunpack.c.l.b16 %v321
        %v690 = vunpack.c.l.b16 %v322
        %v691 = vunpack.c.l.b16 %v323
        %v692 = vunpack.c.l.b16 %v324
        %v693 = vunpack.c.l.b16 %v325
        %v694 = vunpack.c.l.b16 %v326
        %v695 = vunpack.c.l.b16 %v327
        %v696 = vunpack.c.l.b16 %v328
        %v697 = vunpack.c.l.b16 %v329
        %v698 = vunpack.c.l.b16 %v330
        %v699 = vunpack.c.l.b16 %v331
        %v700 = vunpack.c.l.b16 %v332
        %v701 = vunpack.c.l.b16 %v333
        %v702 = vunpack.c.l.b16 %v334
        %v703 = vunpack.c.l.b16 %v335
        %v704 = vunpack.c.l.b16 %v336
        %v705 = vunpack.c.l.b16 %v337
        %v706 = vunpack.c.l.b16 %v338
        %v707 = vunpack.c.l.b16 %v339
        %v708 = vunpack.c.l.b16 %v340
        %v709 = vunpack.c.l.b16 %v341
        %v710 = vunpack.c.l.b16 %v342
        %v711 = vunpack.c.l.b16 %v343
        %v712 = vunpack.c.l.b16 %v344
        %v713 = vunpack.c.l.b16 %v345
        %v714 = vunpack.c.l.b16 %v346
        %v715 = vunpack.c.l.b16 %v347
        %v716 = vpack.c.b16 %v589, %v588
        %v717 = vpack.c.b16 %v591, %v590
        %v718 = vpack.c.b16 %v593, %v592
        %v719 = vpack.c.b16 %v595, %v594
        %v720 = vpack.c.b16 %v597, %v596
        %v721 = vpack.c.b16 %v599, %v598
        %v722 = vpack.c.b16 %v601, %v600
        %v723 = vpack.c.b16 %v603, %v602
        %v724 = vpack.c.b16 %v605, %v604
        %v725 = vpack.c.b16 %v607, %v606
        %v726 = vpack.c.b16 %v609, %v608
        %v727 = vpack.c.b16 %v611, %v610
        %v728 = vpack.c.b16 %v613, %v612
        %v729 = vpack.c.b16 %v615, %v614
        %v730 = vpack.c.b16 %v617, %v616
        %v731 = vpack.c.b16 %v619, %v618
        %v732 = vpack.c.b16 %v621, %v620
        %v733 = vpack.c.b16 %v623, %v622
        %v734 = vpack.c.b16 %v625, %v624
        %v735 = vpack.c.b16 %v627, %v626
        %v736 = vpack.c.b16 %v629, %v628
        %v737 = vpack.c.b16 %v631, %v630
        %v738 = vpack.c.b16 %v633, %v632
        %v739 = vpack.c.b16 %v635, %v634
        %v740 = vpack.c.b16 %v637, %v636
        %v741 = vpack.c.b16 %v639, %v638
        %v742 = vpack.c.b16 %v641, %v640
        %v743 = vpack.c.b16 %v643, %v642
        %v744 = vpack.c.b16 %v645, %v644
        %v745 = vpack.c.b16 %v647, %v646
        %v746 = vpack.c.b16 %v649, %v648
        %v747 = vpack.c.b16 %v651, %v650
        %v748 = vpack.c.b16 %v653, %v652
        %v749 = vpack.c.b16 %v655, %v654
        %v750 = vpack.c.b16 %v657, %v656
        %v751 = vpack.c.b16 %v659, %v658
        %v752 = vpack.c.b16 %v661, %v660
        %v753 = vpack.c.b16 %v663, %v662
        %v754 = vpack.c.b16 %v665, %v664
        %v755 = vpack.c.b16 %v667, %v666
        %v756 = vpack.c.b16 %v669, %v668
        %v757 = vpack.c.b16 %v671, %v670
        %v758 = vpack.c.b16 %v673, %v672
        %v759 = vpack.c.b16 %v675, %v674
        %v760 = vpack.c.b16 %v677, %v676
        %v761 = vpack.c.b16 %v679, %v678
        %v762 = vpack.c.b16 %v681, %v680
        %v763 = vpack.c.b16 %v683, %v682
        %v764 = vpack.c.b16 %v685, %v684
        %v765 = vpack.c.b16 %v687, %v686
        %v766 = vpack.c.b16 %v689, %v688
        %v767 = vpack.c.b16 %v691, %v690
        %v768 = vpack.c.b16 %v693, %v692
        %v769 = vpack.c.b16 %v695, %v694
        %v770 = vpack.c.b16 %v697, %v696
        %v771 = vpack.c.b16 %v699, %v698
        %v772 = vpack.c.b16 %v701, %v700
        %v773 = vpack.c.b16 %v703, %v702
        %v774 = vpack.c.b16 %v705, %v704
        %v775 = vpack.c.b16 %v707, %v706
        %v776 = vpack.c.b16 %v709, %v708
        %v777 = vpack.c.b16 %v711, %v710
        %v778 = vpack.c.b16 %v713, %v712
        %v779 = vpack.c.b16 %v715, %v714
        %844 = vmatpush.bf16.msra.mxu0 %v723
        %845 = vmatpush.bf16.msra.mxu0 %v722
        %846 = vmatpush.bf16.msra.mxu0 %v721
        %847 = vmatpush.bf16.msra.mxu0 %v720
        %848 = vmatpush.bf16.msra.mxu0 %v719
        %849 = vmatpush.bf16.msra.mxu0 %v718
        %850 = vmatpush.bf16.msra.mxu0 %v717
        %851 = vmatpush.bf16.msra.mxu0 %v716
        %852 = vmatmul.bf16.gmra.mxu0 %v412
        %v853 = vpop.f32.mrf.mxu0
        %v854 = vadd.f32 %v350, %v853
        %v855 = vpop.f32.mrf.mxu0
        %v856 = vadd.f32 %v350, %v855
        %857 = vmatmul.bf16.gmra.mxu0 %v420
        %v858 = vpop.f32.mrf.mxu0
        %v859 = vadd.f32 %v350, %v858
        %v860 = vpop.f32.mrf.mxu0
        %v861 = vadd.f32 %v350, %v860
        %862 = vmatmul.bf16.gmra.mxu0 %v428
        %v863 = vpop.f32.mrf.mxu0
        %v864 = vadd.f32 %v350, %v863
        %v865 = vpop.f32.mrf.mxu0
        %866 = vdwg.mxu0
        %867 = vmatpush.bf16.msra.mxu0 %v731
        %868 = vmatpush.bf16.msra.mxu0 %v730
        %869 = vmatpush.bf16.msra.mxu0 %v729
        %870 = vmatpush.bf16.msra.mxu0 %v728
        %871 = vmatpush.bf16.msra.mxu0 %v727
        %872 = vmatpush.bf16.msra.mxu0 %v726
        %873 = vmatpush.bf16.msra.mxu0 %v725
        %874 = vmatpush.bf16.msra.mxu0 %v724
        %875 = vmatmul.bf16.gmra.mxu0 %v413
        %v876 = vpop.f32.mrf.mxu0
        %v877 = vadd.f32 %v854, %v876
        %v878 = vpop.f32.mrf.mxu0
        %v879 = vadd.f32 %v856, %v878
        %880 = vmatmul.bf16.gmra.mxu0 %v421
        %v881 = vpop.f32.mrf.mxu0
        %v882 = vadd.f32 %v859, %v881
        %v883 = vpop.f32.mrf.mxu0
        %v884 = vadd.f32 %v861, %v883
        %885 = vmatmul.bf16.gmra.mxu0 %v429
        %v886 = vpop.f32.mrf.mxu0
        %v887 = vadd.f32 %v864, %v886
        %v888 = vpop.f32.mrf.mxu0
        %889 = vdwg.mxu0
        %890 = vmatpush.bf16.msra.mxu0 %v739
        %891 = vmatpush.bf16.msra.mxu0 %v738
        %892 = vmatpush.bf16.msra.mxu0 %v737
        %893 = vmatpush.bf16.msra.mxu0 %v736
        %894 = vmatpush.bf16.msra.mxu0 %v735
        %895 = vmatpush.bf16.msra.mxu0 %v734
        %896 = vmatpush.bf16.msra.mxu0 %v733
        %897 = vmatpush.bf16.msra.mxu0 %v732
        %898 = vmatmul.bf16.gmra.mxu0 %v414
        %v899 = vpop.f32.mrf.mxu0
        %v900 = vadd.f32 %v877, %v899
        %v901 = vpop.f32.mrf.mxu0
        %v902 = vadd.f32 %v879, %v901
        %903 = vmatmul.bf16.gmra.mxu0 %v422
        %v904 = vpop.f32.mrf.mxu0
        %v905 = vadd.f32 %v882, %v904
        %v906 = vpop.f32.mrf.mxu0
        %v907 = vadd.f32 %v884, %v906
        %908 = vmatmul.bf16.gmra.mxu0 %v430
        %v909 = vpop.f32.mrf.mxu0
        %v910 = vadd.f32 %v887, %v909
        %v911 = vpop.f32.mrf.mxu0
        %912 = vdwg.mxu0
        %913 = vmatpush.bf16.msra.mxu0 %v747
        %914 = vmatpush.bf16.msra.mxu0 %v746
        %915 = vmatpush.bf16.msra.mxu0 %v745
        %916 = vmatpush.bf16.msra.mxu0 %v744
        %917 = vmatpush.bf16.msra.mxu0 %v743
        %918 = vmatpush.bf16.msra.mxu0 %v742
        %919 = vmatpush.bf16.msra.mxu0 %v741
        %920 = vmatpush.bf16.msra.mxu0 %v740
        %921 = vmatmul.bf16.gmra.mxu0 %v415
        %v922 = vpop.f32.mrf.mxu0
        %v923 = vadd.f32 %v900, %v922
        %v924 = vpop.f32.mrf.mxu0
        %v925 = vadd.f32 %v902, %v924
        %926 = vmatmul.bf16.gmra.mxu0 %v423
        %v927 = vpop.f32.mrf.mxu0
        %v928 = vadd.f32 %v905, %v927
        %v929 = vpop.f32.mrf.mxu0
        %v930 = vadd.f32 %v907, %v929
        %931 = vmatmul.bf16.gmra.mxu0 %v431
        %v932 = vpop.f32.mrf.mxu0
        %v933 = vadd.f32 %v910, %v932
        %v934 = vpop.f32.mrf.mxu0
        %935 = vdwg.mxu0
        %936 = vmatpush.bf16.msra.mxu0 %v755
        %937 = vmatpush.bf16.msra.mxu0 %v754
        %938 = vmatpush.bf16.msra.mxu0 %v753
        %939 = vmatpush.bf16.msra.mxu0 %v752
        %940 = vmatpush.bf16.msra.mxu0 %v751
        %941 = vmatpush.bf16.msra.mxu0 %v750
        %942 = vmatpush.bf16.msra.mxu0 %v749
        %943 = vmatpush.bf16.msra.mxu0 %v748
        %944 = vmatmul.bf16.gmra.mxu0 %v416
        %v945 = vpop.f32.mrf.mxu0
        %v946 = vadd.f32 %v923, %v945
        %v947 = vpop.f32.mrf.mxu0
        %v948 = vadd.f32 %v925, %v947
        %949 = vmatmul.bf16.gmra.mxu0 %v424
        %v950 = vpop.f32.mrf.mxu0
        %v951 = vadd.f32 %v928, %v950
        %v952 = vpop.f32.mrf.mxu0
        %v953 = vadd.f32 %v930, %v952
        %954 = vmatmul.bf16.gmra.mxu0 %v432
        %v955 = vpop.f32.mrf.mxu0
        %v956 = vadd.f32 %v933, %v955
        %v957 = vpop.f32.mrf.mxu0
        %958 = vdwg.mxu0
        %959 = vmatpush.bf16.msra.mxu0 %v763
        %960 = vmatpush.bf16.msra.mxu0 %v762
        %961 = vmatpush.bf16.msra.mxu0 %v761
        %962 = vmatpush.bf16.msra.mxu0 %v760
        %963 = vmatpush.bf16.msra.mxu0 %v759
        %964 = vmatpush.bf16.msra.mxu0 %v758
        %965 = vmatpush.bf16.msra.mxu0 %v757
        %966 = vmatpush.bf16.msra.mxu0 %v756
        %967 = vmatmul.bf16.gmra.mxu0 %v417
        %v968 = vpop.f32.mrf.mxu0
        %v969 = vadd.f32 %v946, %v968
        %v970 = vpop.f32.mrf.mxu0
        %v971 = vadd.f32 %v948, %v970
        %972 = vmatmul.bf16.gmra.mxu0 %v425
        %v973 = vpop.f32.mrf.mxu0
        %v974 = vadd.f32 %v951, %v973
        %v975 = vpop.f32.mrf.mxu0
        %v976 = vadd.f32 %v953, %v975
        %977 = vmatmul.bf16.gmra.mxu0 %v433
        %v978 = vpop.f32.mrf.mxu0
        %v979 = vadd.f32 %v956, %v978
        %v980 = vpop.f32.mrf.mxu0
        %981 = vdwg.mxu0
        %982 = vmatpush.bf16.msra.mxu0 %v771
        %983 = vmatpush.bf16.msra.mxu0 %v770
        %984 = vmatpush.bf16.msra.mxu0 %v769
        %985 = vmatpush.bf16.msra.mxu0 %v768
        %986 = vmatpush.bf16.msra.mxu0 %v767
        %987 = vmatpush.bf16.msra.mxu0 %v766
        %988 = vmatpush.bf16.msra.mxu0 %v765
        %989 = vmatpush.bf16.msra.mxu0 %v764
        %990 = vmatmul.bf16.gmra.mxu0 %v418
        %v991 = vpop.f32.mrf.mxu0
        %v992 = vadd.f32 %v969, %v991
        %v993 = vpop.f32.mrf.mxu0
        %v994 = vadd.f32 %v971, %v993
        %995 = vmatmul.bf16.gmra.mxu0 %v426
        %v996 = vpop.f32.mrf.mxu0
        %v997 = vadd.f32 %v974, %v996
        %v998 = vpop.f32.mrf.mxu0
        %v999 = vadd.f32 %v976, %v998
        %1000 = vmatmul.bf16.gmra.mxu0 %v434
        %v1001 = vpop.f32.mrf.mxu0
        %v1002 = vadd.f32 %v979, %v1001
        %v1003 = vpop.f32.mrf.mxu0
        %1004 = vdwg.mxu0
        %1005 = vmatpush.bf16.msra.mxu0 %v779
        %1006 = vmatpush.bf16.msra.mxu0 %v778
        %1007 = vmatpush.bf16.msra.mxu0 %v777
        %1008 = vmatpush.bf16.msra.mxu0 %v776
        %1009 = vmatpush.bf16.msra.mxu0 %v775
        %1010 = vmatpush.bf16.msra.mxu0 %v774
        %1011 = vmatpush.bf16.msra.mxu0 %v773
        %1012 = vmatpush.bf16.msra.mxu0 %v772
        %1013 = vmatmul.bf16.gmra.mxu0 %v419
        %v1014 = vpop.f32.mrf.mxu0
        %v1015 = vadd.f32 %v992, %v1014
        %v1016 = vpop.f32.mrf.mxu0
        %v1017 = vadd.f32 %v994, %v1016
        %1018 = vmatmul.bf16.gmra.mxu0 %v427
        %v1019 = vpop.f32.mrf.mxu0
        %v1020 = vadd.f32 %v997, %v1019
        %v1021 = vpop.f32.mrf.mxu0
        %v1022 = vadd.f32 %v999, %v1021
        %1023 = vmatmul.bf16.gmra.mxu0 %v435
        %v1024 = vpop.f32.mrf.mxu0
        %v1025 = vadd.f32 %v1002, %v1024
        %v1026 = vpop.f32.mrf.mxu0
        %1027 = vdwg.mxu0
        %v1028 = vmax.f32 %v1015, 0.0
        %v1029 = vmax.f32 %v1017, 0.0
        %v1030 = vmax.f32 %v1020, 0.0
        %v1031 = vmax.f32 %v1022, 0.0
        %v1032 = vmax.f32 %v1025, 0.0
        %v1033 = vpack.c.bf16 %v1028, %v1028
        %v1034 = vpack.c.bf16 %v1029, %v1029
        %v1035 = vpack.c.bf16 %v1030, %v1030
        %v1036 = vpack.c.bf16 %v1031, %v1031
        %v1037 = vpack.c.bf16 %v1032, %v1032
        %1038 = vst [vmem:[%s177] sm:$0xf] %v1033
        %1039 = vst [vmem:[%s177 + $0x4] sm:$0xf] %v1034
        %1040 = vst [vmem:[%s177 + $0x8] sm:$0xf] %v1035
        %1041 = vst [vmem:[%s177 + $0xc] sm:$0xf] %v1036
        %1042 = vst [vmem:[%s177 + $0x10] sm:$0xf] %v1037
        %s1043 = sand.u32 %s90, 1
        %s1044 = sand.u32 %s90, 1
        %s1045 = smul.addr %s1044, 20
        %s1046 = scalar_lea.vmem [#allocation2], %s1045
        // Predicated region
        $region33: #{_unnamed_function_.4} parent=31 // pred_check
          %p1047 = pneg %p100
        $region34: #{_unnamed_function_.4} parent=31 // pred_check_branch
          %1049 = sbr.rel (%p1047) target = $region36
        $region35: #{_unnamed_function_.4} parent=31 // pred_region
          %s1050 = smul.u32 5, %s14
          %s1051 = ssub.s32 9, %s1050
          %p1052 = scmp.lt.s32.totalorder %s1051, 5
          %s1053 = scalar_select %p1052, %s1051, 5
          %s1054 = smul.u32 4, %s1053
          %p1055 = scmp.ne.s32.totalorder 0, %s1054
          %s1056 = smul.addr %s1050, 4
          %s1057 = scalar_lea.vmem %s3, %s1056
          // Predicated region
          $region37: #{_unnamed_function_.4} parent=35 // pred_check
            %p1058 = pneg %p1055
          $region38: #{_unnamed_function_.4} parent=35 // pred_check_branch
            %1060 = sbr.rel (%p1058) target = $region40
          $region39: #{_unnamed_function_.4} parent=35 // pred_region
            // Predicated region
            $region41: #{_unnamed_function_.4} parent=39 // pred_check
              _
            $region42: #{_unnamed_function_.4} parent=39 // pred_check_branch
              %1062 = sbr.rel target = $region44
            $region43: #{_unnamed_function_.4} parent=39 // pred_region
              // Predicated region
              $region63: #{_unnamed_function_.4} parent=43 // pred_check
                _
              $region64: #{_unnamed_function_.4} parent=43 // pred_check_branch
                %1121 = sbr.rel (0) target = $region66
              $region65: #{_unnamed_function_.4} parent=43 // pred_region
                %s1123 = ssub.s32 16, 1
                %s1124 = sdiv.u32.pop %s1053, 5
                %s1125 = srem.u32.pop %s1053, 5
                // While loop
                $region67: #{_unnamed_function_.4} parent=65 // loop_pre_header
                  _
                $region68: #{_unnamed_function_.4} parent=65 // loop_header
                  %s1127 = sphi 0, %s1129
                  %p1128 = scmp.ge.s32.totalorder %s1127, %s1124
                  %s1132 = sphi 0, %s1147
                  %s1133 = sphi %s1046, %s1150
                  %s1134 = sphi %s1057, %s1151
                $region69: #{_unnamed_function_.4} parent=65 // loop_header_branch
                  %1131 = sbr.rel (%p1128) target = $region73
                $region70: #{_unnamed_function_.4} parent=65 // loop_body
                  %v1135 = vld [vmem:[%s1133] sm:%s1123]
                  %1136 = vst [vmem:[%s1134] sm:%s1123] %v1135
                  %v1137 = vld [vmem:[%s1133 + $0x4] sm:%s1123]
                  %1138 = vst [vmem:[%s1134 + $0x4] sm:%s1123] %v1137
                  %v1139 = vld [vmem:[%s1133 + $0x8] sm:%s1123]
                  %1140 = vst [vmem:[%s1134 + $0x8] sm:%s1123] %v1139
                  %v1141 = vld [vmem:[%s1133 + $0xc] sm:%s1123]
                  %1142 = vst [vmem:[%s1134 + $0xc] sm:%s1123] %v1141
                  %v1143 = vld [vmem:[%s1133 + $0x10] sm:%s1123]
                  %1144 = vst [vmem:[%s1134 + $0x10] sm:%s1123] %v1143
                  %s1145 = sadd.s32 1, %s1132
                  %p1146 = scmp.ge.s32.totalorder %s1145, %s1124
                  %s1147 = scalar_select %p1146, 0, %s1145
                  %s1148 = smul.u32 %s1147, 20
                  %s1149 = smul.u32 %s1147, 20
                  %s1150 = scalar_lea.vmem %s1046, %s1148 [#allocation2]
                  %s1151 = scalar_lea.vmem %s1057, %s1149
                $region71: #{_unnamed_function_.4} parent=65 // loop_footer
                  %s1129 = sadd.s32 %s1127, 1
                $region72: #{_unnamed_function_.4} parent=65 // loop_footer_branch
                  %1126 = sbr.rel target = $region68
                $region73: #{_unnamed_function_.4} parent=65 // loop_exit
                  _
                %s1152 = sdiv.u32.pop %s1053, 5
                %s1153 = srem.u32.pop %s1053, 5
                %s1154 = smul.u32 %s1152, 5
                %s1155 = smul.u32 4, %s1154
                %s1156 = scalar_lea.vmem %s1046, %s1155 [#allocation2]
                %s1157 = smul.u32 4, %s1154
                %s1158 = scalar_lea.vmem %s1057, %s1157
                // While loop
                $region74: #{_unnamed_function_.4} parent=65 // loop_pre_header
                  _
                $region75: #{_unnamed_function_.4} parent=65 // loop_header
                  %s1160 = sphi 0, %s1162
                  %p1161 = scmp.ge.s32.totalorder %s1160, %s1153
                  %s1165 = sphi 0, %s1172
                  %s1166 = sphi %s1156, %s1175
                  %s1167 = sphi %s1158, %s1176
                $region76: #{_unnamed_function_.4} parent=65 // loop_header_branch
                  %1164 = sbr.rel (%p1161) target = $region80
                $region77: #{_unnamed_function_.4} parent=65 // loop_body
                  %v1168 = vld [vmem:[%s1166] sm:%s1123]
                  %1169 = vst [vmem:[%s1167] sm:%s1123] %v1168
                  %s1170 = sadd.s32 1, %s1165
                  %p1171 = scmp.ge.s32.totalorder %s1170, %s1153
                  %s1172 = scalar_select %p1171, 0, %s1170
                  %s1173 = smul.u32 %s1172, 4
                  %s1174 = smul.u32 %s1172, 4
                  %s1175 = scalar_lea.vmem %s1156, %s1173 [#allocation2]
                  %s1176 = scalar_lea.vmem %s1158, %s1174
                $region78: #{_unnamed_function_.4} parent=65 // loop_footer
                  %s1162 = sadd.s32 %s1160, 1
                $region79: #{_unnamed_function_.4} parent=65 // loop_footer_branch
                  %1159 = sbr.rel target = $region75
                $region80: #{_unnamed_function_.4} parent=65 // loop_exit
                  _
              $region66: #{_unnamed_function_.4} parent=43 // pred_fallthru
                _
            $region44: #{_unnamed_function_.4} parent=39 // pred_fallthru
              _
            // Predicated region
            $region45: #{_unnamed_function_.4} parent=39 // pred_check
              _
            $region46: #{_unnamed_function_.4} parent=39 // pred_check_branch
              %1064 = sbr.rel (0) target = $region48
            $region47: #{_unnamed_function_.4} parent=39 // pred_region
              %s1066 = ssub.s32 16, 1
              %s1067 = sdiv.u32.pop %s1053, 5
              %s1068 = srem.u32.pop %s1053, 5
              // While loop
              $region49: #{_unnamed_function_.4} parent=47 // loop_pre_header
                _
              $region50: #{_unnamed_function_.4} parent=47 // loop_header
                %s1070 = sphi 0, %s1072
                %p1071 = scmp.ge.s32.totalorder %s1070, %s1067
                %s1075 = sphi 0, %s1090
                %s1076 = sphi %s1046, %s1093
                %s1077 = sphi %s1057, %s1094
              $region51: #{_unnamed_function_.4} parent=47 // loop_header_branch
                %1074 = sbr.rel (%p1071) target = $region55
              $region52: #{_unnamed_function_.4} parent=47 // loop_body
                %v1078 = vld [vmem:[%s1076] sm:%s1066]
                %1079 = vst [vmem:[%s1077] sm:%s1066] %v1078
                %v1080 = vld [vmem:[%s1076 + $0x4] sm:%s1066]
                %1081 = vst [vmem:[%s1077 + $0x4] sm:%s1066] %v1080
                %v1082 = vld [vmem:[%s1076 + $0x8] sm:%s1066]
                %1083 = vst [vmem:[%s1077 + $0x8] sm:%s1066] %v1082
                %v1084 = vld [vmem:[%s1076 + $0xc] sm:%s1066]
                %1085 = vst [vmem:[%s1077 + $0xc] sm:%s1066] %v1084
                %v1086 = vld [vmem:[%s1076 + $0x10] sm:%s1066]
                %1087 = vst [vmem:[%s1077 + $0x10] sm:%s1066] %v1086
                %s1088 = sadd.s32 1, %s1075
                %p1089 = scmp.ge.s32.totalorder %s1088, %s1067
                %s1090 = scalar_select %p1089, 0, %s1088
                %s1091 = smul.u32 %s1090, 20
                %s1092 = smul.u32 %s1090, 20
                %s1093 = scalar_lea.vmem %s1046, %s1091 [#allocation2]
                %s1094 = scalar_lea.vmem %s1057, %s1092
              $region53: #{_unnamed_function_.4} parent=47 // loop_footer
                %s1072 = sadd.s32 %s1070, 1
              $region54: #{_unnamed_function_.4} parent=47 // loop_footer_branch
                %1069 = sbr.rel target = $region50
              $region55: #{_unnamed_function_.4} parent=47 // loop_exit
                _
              %s1095 = sdiv.u32.pop %s1053, 5
              %s1096 = srem.u32.pop %s1053, 5
              %s1097 = smul.u32 %s1095, 5
              %s1098 = smul.u32 4, %s1097
              %s1099 = scalar_lea.vmem %s1046, %s1098 [#allocation2]
              %s1100 = smul.u32 4, %s1097
              %s1101 = scalar_lea.vmem %s1057, %s1100
              // While loop
              $region56: #{_unnamed_function_.4} parent=47 // loop_pre_header
                _
              $region57: #{_unnamed_function_.4} parent=47 // loop_header
                %s1103 = sphi 0, %s1105
                %p1104 = scmp.ge.s32.totalorder %s1103, %s1096
                %s1108 = sphi 0, %s1115
                %s1109 = sphi %s1099, %s1118
                %s1110 = sphi %s1101, %s1119
              $region58: #{_unnamed_function_.4} parent=47 // loop_header_branch
                %1107 = sbr.rel (%p1104) target = $region62
              $region59: #{_unnamed_function_.4} parent=47 // loop_body
                %v1111 = vld [vmem:[%s1109] sm:%s1066]
                %1112 = vst [vmem:[%s1110] sm:%s1066] %v1111
                %s1113 = sadd.s32 1, %s1108
                %p1114 = scmp.ge.s32.totalorder %s1113, %s1096
                %s1115 = scalar_select %p1114, 0, %s1113
                %s1116 = smul.u32 %s1115, 4
                %s1117 = smul.u32 %s1115, 4
                %s1118 = scalar_lea.vmem %s1099, %s1116 [#allocation2]
                %s1119 = scalar_lea.vmem %s1101, %s1117
              $region60: #{_unnamed_function_.4} parent=47 // loop_footer
                %s1105 = sadd.s32 %s1103, 1
              $region61: #{_unnamed_function_.4} parent=47 // loop_footer_branch
                %1102 = sbr.rel target = $region57
              $region62: #{_unnamed_function_.4} parent=47 // loop_exit
                _
            $region48: #{_unnamed_function_.4} parent=39 // pred_fallthru
              _
          $region40: #{_unnamed_function_.4} parent=35 // pred_fallthru
            _
          %1177 = vnop
        $region36: #{_unnamed_function_.4} parent=31 // pred_fallthru
          _
      $region32: #{_unnamed_function_.4} parent=5 // pred_fallthru
        _
      %p1178 = scmp.le.s32.totalorder 2, %s9
      // Predicated region
      $region81: #{_unnamed_function_.4} parent=5 // pred_check
        %p1179 = pneg %p1178
      $region82: #{_unnamed_function_.4} parent=5 // pred_check_branch
        %1181 = sbr.rel (%p1179) target = $region84
      $region83: #{_unnamed_function_.4} parent=5 // pred_region
        %s1182 = ssub.s32 %s9, 2
        // Predicated region
        $region85: #{_unnamed_function_.4} parent=83 // pred_check
          %p1183 = pneg %p106
        $region86: #{_unnamed_function_.4} parent=83 // pred_check_branch
          %1185 = sbr.rel (%p1183) target = $region88
        $region87: #{_unnamed_function_.4} parent=83 // pred_region
          %s1186 = sand.u32 %s91, 1
          %s1187 = sand.u32 %s91, 1
          %s1188 = smul.addr %s1187, 20
          %s1189 = scalar_lea.vmem [#allocation2], %s1188
        $region88: #{_unnamed_function_.4} parent=83 // pred_fallthru
          _
      $region84: #{_unnamed_function_.4} parent=5 // pred_fallthru
        _
    $region6: #{_unnamed_function_.4} parent=1 // loop_footer
      %s13 = sadd.s32 1, %s9
    $region7: #{_unnamed_function_.4} parent=1 // loop_footer_branch
      %8 = sbr.rel target = $region3
    $region8: #{_unnamed_function_.4} parent=1 // loop_exit
      _

// kernel: _unnamed_function_.5
$region0: #{_unnamed_function_.5}
  #allocation0 [shape = 'u32[]', space=smem, size = 0x4, offset = 0x4, fixed_abs, tag = 'smem constant byte address 0x4 - core index']
  #allocation1 [shape = 'u32[72,128]{1,0:T(1,128)}', space=vmem, size = 0x9000, scoped, tag = 'internal scratch']
  %s0 = inlined_call_operand.vmem [shape: bf16[2,8192], index: 0, kind: input, shape index: {}]
  %s1 = inlined_call_operand.vmem [shape: bf16[2048,256], index: 1, kind: input, shape index: {}]
  %s2 = inlined_call_operand.vmem [shape: f32[1,256], index: 2, kind: input, shape index: {}]
  %s3 = inlined_call_operand.vmem [shape: bf16[1024,256], index: 3, kind: input, shape index: {}]
  %s4 = inlined_call_operand.vmem [shape: f32[1,256], index: 4, kind: input, shape index: {}]
  %s5 = inlined_call_operand.hbm [shape: f32[2,256], index: 5, kind: output, shape index: {}]
  %s6 = sld [smem:[#allocation0]]
  $region30: #{_unnamed_function_.5} parent=0
    _
  %s8 = ssub.s32 1, %s6
  %s9 = scalar_select 0, %s8, %s6
  $region1: #{_unnamed_function_.5} parent=0
    #allocation2 [shape = 'u8[2048]{0}', space=vmem, size = 0x800, scoped, tag = 'output window, operand 0, single buffered']
    #allocation3 [shape = 's32[1]{0}', space=sflag, size = 0x4, scoped, tag = 'scoped memory for _unnamed_function_.5']
    %10 = vsyncpa [#allocation3], 0
    // Predicated region
    $region2: #{_unnamed_function_.5} parent=1 // pred_check
      _
    $region3: #{_unnamed_function_.5} parent=1 // pred_check_branch
      %12 = sbr.rel (0) target = $region5
    $region4: #{_unnamed_function_.5} parent=1 // pred_region
      _
    $region5: #{_unnamed_function_.5} parent=1 // pred_fallthru
      _
    // Predicated region
    $region6: #{_unnamed_function_.5} parent=1 // pred_check
      _
    $region7: #{_unnamed_function_.5} parent=1 // pred_check_branch
      %14 = sbr.rel (0) target = $region9
    $region8: #{_unnamed_function_.5} parent=1 // pred_region
      _
    $region9: #{_unnamed_function_.5} parent=1 // pred_fallthru
      _
    // Predicated region
    $region10: #{_unnamed_function_.5} parent=1 // pred_check
      _
    $region11: #{_unnamed_function_.5} parent=1 // pred_check_branch
      %16 = sbr.rel (0) target = $region13
    $region12: #{_unnamed_function_.5} parent=1 // pred_region
      _
    $region13: #{_unnamed_function_.5} parent=1 // pred_fallthru
      _
    // Predicated region
    $region14: #{_unnamed_function_.5} parent=1 // pred_check
      _
    $region15: #{_unnamed_function_.5} parent=1 // pred_check_branch
      %18 = sbr.rel (0) target = $region17
    $region16: #{_unnamed_function_.5} parent=1 // pred_region
      _
    $region17: #{_unnamed_function_.5} parent=1 // pred_fallthru
      _
    // Predicated region
    $region18: #{_unnamed_function_.5} parent=1 // pred_check
      _
    $region19: #{_unnamed_function_.5} parent=1 // pred_check_branch
      %20 = sbr.rel (0) target = $region21
    $region20: #{_unnamed_function_.5} parent=1 // pred_region
      _
    $region21: #{_unnamed_function_.5} parent=1 // pred_fallthru
      _
    %v21 = vld [vmem:[%s0] sm:$0xff]
    %v22 = vld [vmem:[%s0 + $0x8] sm:$0xff]
    %v23 = vld [vmem:[%s1] sm:$0xff]
    %v24 = vld [vmem:[%s1 + $0x8] sm:$0xff]
    %v25 = vld [vmem:[%s1 + $0x10] sm:$0xff]
    %v26 = vld [vmem:[%s1 + $0x18] sm:$0xff]
    %v27 = vld [vmem:[%s1 + $0x20] sm:$0xff]
    %v28 = vld [vmem:[%s1 + $0x28] sm:$0xff]
    %v29 = vld [vmem:[%s1 + $0x30] sm:$0xff]
    %v30 = vld [vmem:[%s1 + $0x38] sm:$0xff]
    %v31 = vld [vmem:[%s1 + $0x40] sm:$0xff]
    %v32 = vld [vmem:[%s1 + $0x48] sm:$0xff]
    %v33 = vld [vmem:[%s1 + $0x50] sm:$0xff]
    %v34 = vld [vmem:[%s1 + $0x58] sm:$0xff]
    %v35 = vld [vmem:[%s1 + $0x60] sm:$0xff]
    %v36 = vld [vmem:[%s1 + $0x68] sm:$0xff]
    %v37 = vld [vmem:[%s1 + $0x70] sm:$0xff]
    %v38 = vld [vmem:[%s1 + $0x78] sm:$0xff]
    %v39 = vld [vmem:[%s1 + $0x80] sm:$0xff]
    %v40 = vld [vmem:[%s1 + $0x88] sm:$0xff]
    %v41 = vld [vmem:[%s1 + $0x90] sm:$0xff]
    %v42 = vld [vmem:[%s1 + $0x98] sm:$0xff]
    %v43 = vld [vmem:[%s1 + $0xa0] sm:$0xff]
    %v44 = vld [vmem:[%s1 + $0xa8] sm:$0xff]
    %v45 = vld [vmem:[%s1 + $0xb0] sm:$0xff]
    %v46 = vld [vmem:[%s1 + $0xb8] sm:$0xff]
    %v47 = vld [vmem:[%s1 + $0xc0] sm:$0xff]
    %v48 = vld [vmem:[%s1 + $0xc8] sm:$0xff]
    %v49 = vld [vmem:[%s1 + $0xd0] sm:$0xff]
    %v50 = vld [vmem:[%s1 + $0xd8] sm:$0xff]
    %v51 = vld [vmem:[%s1 + $0xe0] sm:$0xff]
    %v52 = vld [vmem:[%s1 + $0xe8] sm:$0xff]
    %v53 = vld [vmem:[%s1 + $0xf0] sm:$0xff]
    %v54 = vld [vmem:[%s1 + $0xf8] sm:$0xff]
    %v55 = vld [vmem:[%s1 + $0x100] sm:$0xff]
    %v56 = vld [vmem:[%s1 + $0x108] sm:$0xff]
    %v57 = vld [vmem:[%s1 + $0x110] sm:$0xff]
    %v58 = vld [vmem:[%s1 + $0x118] sm:$0xff]
    %v59 = vld [vmem:[%s1 + $0x120] sm:$0xff]
    %v60 = vld [vmem:[%s1 + $0x128] sm:$0xff]
    %v61 = vld [vmem:[%s1 + $0x130] sm:$0xff]
    %v62 = vld [vmem:[%s1 + $0x138] sm:$0xff]
    %v63 = vld [vmem:[%s1 + $0x140] sm:$0xff]
    %v64 = vld [vmem:[%s1 + $0x148] sm:$0xff]
    %v65 = vld [vmem:[%s1 + $0x150] sm:$0xff]
    %v66 = vld [vmem:[%s1 + $0x158] sm:$0xff]
    %v67 = vld [vmem:[%s1 + $0x160] sm:$0xff]
    %v68 = vld [vmem:[%s1 + $0x168] sm:$0xff]
    %v69 = vld [vmem:[%s1 + $0x170] sm:$0xff]
    %v70 = vld [vmem:[%s1 + $0x178] sm:$0xff]
    %v71 = vld [vmem:[%s1 + $0x180] sm:$0xff]
    %v72 = vld [vmem:[%s1 + $0x188] sm:$0xff]
    %v73 = vld [vmem:[%s1 + $0x190] sm:$0xff]
    %v74 = vld [vmem:[%s1 + $0x198] sm:$0xff]
    %v75 = vld [vmem:[%s1 + $0x1a0] sm:$0xff]
    %v76 = vld [vmem:[%s1 + $0x1a8] sm:$0xff]
    %v77 = vld [vmem:[%s1 + $0x1b0] sm:$0xff]
    %v78 = vld [vmem:[%s1 + $0x1b8] sm:$0xff]
    %v79 = vld [vmem:[%s1 + $0x1c0] sm:$0xff]
    %v80 = vld [vmem:[%s1 + $0x1c8] sm:$0xff]
    %v81 = vld [vmem:[%s1 + $0x1d0] sm:$0xff]
    %v82 = vld [vmem:[%s1 + $0x1d8] sm:$0xff]
    %v83 = vld [vmem:[%s1 + $0x1e0] sm:$0xff]
    %v84 = vld [vmem:[%s1 + $0x1e8] sm:$0xff]
    %v85 = vld [vmem:[%s1 + $0x1f0] sm:$0xff]
    %v86 = vld [vmem:[%s1 + $0x1f8] sm:$0xff]
    %v87 = vld [vmem:[%s1 + $0x200] sm:$0xff]
    %v88 = vld [vmem:[%s1 + $0x208] sm:$0xff]
    %v89 = vld [vmem:[%s1 + $0x210] sm:$0xff]
    %v90 = vld [vmem:[%s1 + $0x218] sm:$0xff]
    %v91 = vld [vmem:[%s1 + $0x220] sm:$0xff]
    %v92 = vld [vmem:[%s1 + $0x228] sm:$0xff]
    %v93 = vld [vmem:[%s1 + $0x230] sm:$0xff]
    %v94 = vld [vmem:[%s1 + $0x238] sm:$0xff]
    %v95 = vld [vmem:[%s1 + $0x240] sm:$0xff]
    %v96 = vld [vmem:[%s1 + $0x248] sm:$0xff]
    %v97 = vld [vmem:[%s1 + $0x250] sm:$0xff]
    %v98 = vld [vmem:[%s1 + $0x258] sm:$0xff]
    %v99 = vld [vmem:[%s1 + $0x260] sm:$0xff]
    %v100 = vld [vmem:[%s1 + $0x268] sm:$0xff]
    %v101 = vld [vmem:[%s1 + $0x270] sm:$0xff]
    %v102 = vld [vmem:[%s1 + $0x278] sm:$0xff]
    %v103 = vld [vmem:[%s1 + $0x280] sm:$0xff]
    %v104 = vld [vmem:[%s1 + $0x288] sm:$0xff]
    %v105 = vld [vmem:[%s1 + $0x290] sm:$0xff]
    %v106 = vld [vmem:[%s1 + $0x298] sm:$0xff]
    %v107 = vld [vmem:[%s1 + $0x2a0] sm:$0xff]
    %v108 = vld [vmem:[%s1 + $0x2a8] sm:$0xff]
    %v109 = vld [vmem:[%s1 + $0x2b0] sm:$0xff]
    %v110 = vld [vmem:[%s1 + $0x2b8] sm:$0xff]
    %v111 = vld [vmem:[%s1 + $0x2c0] sm:$0xff]
    %v112 = vld [vmem:[%s1 + $0x2c8] sm:$0xff]
    %v113 = vld [vmem:[%s1 + $0x2d0] sm:$0xff]
    %v114 = vld [vmem:[%s1 + $0x2d8] sm:$0xff]
    %v115 = vld [vmem:[%s1 + $0x2e0] sm:$0xff]
    %v116 = vld [vmem:[%s1 + $0x2e8] sm:$0xff]
    %v117 = vld [vmem:[%s1 + $0x2f0] sm:$0xff]
    %v118 = vld [vmem:[%s1 + $0x2f8] sm:$0xff]
    %v119 = vld [vmem:[%s1 + $0x300] sm:$0xff]
    %v120 = vld [vmem:[%s1 + $0x308] sm:$0xff]
    %v121 = vld [vmem:[%s1 + $0x310] sm:$0xff]
    %v122 = vld [vmem:[%s1 + $0x318] sm:$0xff]
    %v123 = vld [vmem:[%s1 + $0x320] sm:$0xff]
    %v124 = vld [vmem:[%s1 + $0x328] sm:$0xff]
    %v125 = vld [vmem:[%s1 + $0x330] sm:$0xff]
    %v126 = vld [vmem:[%s1 + $0x338] sm:$0xff]
    %v127 = vld [vmem:[%s1 + $0x340] sm:$0xff]
    %v128 = vld [vmem:[%s1 + $0x348] sm:$0xff]
    %v129 = vld [vmem:[%s1 + $0x350] sm:$0xff]
    %v130 = vld [vmem:[%s1 + $0x358] sm:$0xff]
    %v131 = vld [vmem:[%s1 + $0x360] sm:$0xff]
    %v132 = vld [vmem:[%s1 + $0x368] sm:$0xff]
    %v133 = vld [vmem:[%s1 + $0x370] sm:$0xff]
    %v134 = vld [vmem:[%s1 + $0x378] sm:$0xff]
    %v135 = vld [vmem:[%s1 + $0x380] sm:$0xff]
    %v136 = vld [vmem:[%s1 + $0x388] sm:$0xff]
    %v137 = vld [vmem:[%s1 + $0x390] sm:$0xff]
    %v138 = vld [vmem:[%s1 + $0x398] sm:$0xff]
    %v139 = vld [vmem:[%s1 + $0x3a0] sm:$0xff]
    %v140 = vld [vmem:[%s1 + $0x3a8] sm:$0xff]
    %v141 = vld [vmem:[%s1 + $0x3b0] sm:$0xff]
    %v142 = vld [vmem:[%s1 + $0x3b8] sm:$0xff]
    %v143 = vld [vmem:[%s1 + $0x3c0] sm:$0xff]
    %v144 = vld [vmem:[%s1 + $0x3c8] sm:$0xff]
    %v145 = vld [vmem:[%s1 + $0x3d0] sm:$0xff]
    %v146 = vld [vmem:[%s1 + $0x3d8] sm:$0xff]
    %v147 = vld [vmem:[%s1 + $0x3e0] sm:$0xff]
    %v148 = vld [vmem:[%s1 + $0x3e8] sm:$0xff]
    %v149 = vld [vmem:[%s1 + $0x3f0] sm:$0xff]
    %v150 = vld [vmem:[%s1 + $0x3f8] sm:$0xff]
    %v151 = vld [vmem:[%s1 + $0x400] sm:$0xff]
    %v152 = vld [vmem:[%s1 + $0x408] sm:$0xff]
    %v153 = vld [vmem:[%s1 + $0x410] sm:$0xff]
    %v154 = vld [vmem:[%s1 + $0x418] sm:$0xff]
    %v155 = vld [vmem:[%s1 + $0x420] sm:$0xff]
    %v156 = vld [vmem:[%s1 + $0x428] sm:$0xff]
    %v157 = vld [vmem:[%s1 + $0x430] sm:$0xff]
    %v158 = vld [vmem:[%s1 + $0x438] sm:$0xff]
    %v159 = vld [vmem:[%s1 + $0x440] sm:$0xff]
    %v160 = vld [vmem:[%s1 + $0x448] sm:$0xff]
    %v161 = vld [vmem:[%s1 + $0x450] sm:$0xff]
    %v162 = vld [vmem:[%s1 + $0x458] sm:$0xff]
    %v163 = vld [vmem:[%s1 + $0x460] sm:$0xff]
    %v164 = vld [vmem:[%s1 + $0x468] sm:$0xff]
    %v165 = vld [vmem:[%s1 + $0x470] sm:$0xff]
    %v166 = vld [vmem:[%s1 + $0x478] sm:$0xff]
    %v167 = vld [vmem:[%s1 + $0x480] sm:$0xff]
    %v168 = vld [vmem:[%s1 + $0x488] sm:$0xff]
    %v169 = vld [vmem:[%s1 + $0x490] sm:$0xff]
    %v170 = vld [vmem:[%s1 + $0x498] sm:$0xff]
    %v171 = vld [vmem:[%s1 + $0x4a0] sm:$0xff]
    %v172 = vld [vmem:[%s1 + $0x4a8] sm:$0xff]
    %v173 = vld [vmem:[%s1 + $0x4b0] sm:$0xff]
    %v174 = vld [vmem:[%s1 + $0x4b8] sm:$0xff]
    %v175 = vld [vmem:[%s1 + $0x4c0] sm:$0xff]
    %v176 = vld [vmem:[%s1 + $0x4c8] sm:$0xff]
    %v177 = vld [vmem:[%s1 + $0x4d0] sm:$0xff]
    %v178 = vld [vmem:[%s1 + $0x4d8] sm:$0xff]
    %v179 = vld [vmem:[%s1 + $0x4e0] sm:$0xff]
    %v180 = vld [vmem:[%s1 + $0x4e8] sm:$0xff]
    %v181 = vld [vmem:[%s1 + $0x4f0] sm:$0xff]
    %v182 = vld [vmem:[%s1 + $0x4f8] sm:$0xff]
    %v183 = vld [vmem:[%s1 + $0x500] sm:$0xff]
    %v184 = vld [vmem:[%s1 + $0x508] sm:$0xff]
    %v185 = vld [vmem:[%s1 + $0x510] sm:$0xff]
    %v186 = vld [vmem:[%s1 + $0x518] sm:$0xff]
    %v187 = vld [vmem:[%s1 + $0x520] sm:$0xff]
    %v188 = vld [vmem:[%s1 + $0x528] sm:$0xff]
    %v189 = vld [vmem:[%s1 + $0x530] sm:$0xff]
    %v190 = vld [vmem:[%s1 + $0x538] sm:$0xff]
    %v191 = vld [vmem:[%s1 + $0x540] sm:$0xff]
    %v192 = vld [vmem:[%s1 + $0x548] sm:$0xff]
    %v193 = vld [vmem:[%s1 + $0x550] sm:$0xff]
    %v194 = vld [vmem:[%s1 + $0x558] sm:$0xff]
    %v195 = vld [vmem:[%s1 + $0x560] sm:$0xff]
    %v196 = vld [vmem:[%s1 + $0x568] sm:$0xff]
    %v197 = vld [vmem:[%s1 + $0x570] sm:$0xff]
    %v198 = vld [vmem:[%s1 + $0x578] sm:$0xff]
    %v199 = vld [vmem:[%s1 + $0x580] sm:$0xff]
    %v200 = vld [vmem:[%s1 + $0x588] sm:$0xff]
    %v201 = vld [vmem:[%s1 + $0x590] sm:$0xff]
    %v202 = vld [vmem:[%s1 + $0x598] sm:$0xff]
    %v203 = vld [vmem:[%s1 + $0x5a0] sm:$0xff]
    %v204 = vld [vmem:[%s1 + $0x5a8] sm:$0xff]
    %v205 = vld [vmem:[%s1 + $0x5b0] sm:$0xff]
    %v206 = vld [vmem:[%s1 + $0x5b8] sm:$0xff]
    %v207 = vld [vmem:[%s1 + $0x5c0] sm:$0xff]
    %v208 = vld [vmem:[%s1 + $0x5c8] sm:$0xff]
    %v209 = vld [vmem:[%s1 + $0x5d0] sm:$0xff]
    %v210 = vld [vmem:[%s1 + $0x5d8] sm:$0xff]
    %v211 = vld [vmem:[%s1 + $0x5e0] sm:$0xff]
    %v212 = vld [vmem:[%s1 + $0x5e8] sm:$0xff]
    %v213 = vld [vmem:[%s1 + $0x5f0] sm:$0xff]
    %v214 = vld [vmem:[%s1 + $0x5f8] sm:$0xff]
    %v215 = vld [vmem:[%s1 + $0x600] sm:$0xff]
    %v216 = vld [vmem:[%s1 + $0x608] sm:$0xff]
    %v217 = vld [vmem:[%s1 + $0x610] sm:$0xff]
    %v218 = vld [vmem:[%s1 + $0x618] sm:$0xff]
    %v219 = vld [vmem:[%s1 + $0x620] sm:$0xff]
    %v220 = vld [vmem:[%s1 + $0x628] sm:$0xff]
    %v221 = vld [vmem:[%s1 + $0x630] sm:$0xff]
    %v222 = vld [vmem:[%s1 + $0x638] sm:$0xff]
    %v223 = vld [vmem:[%s1 + $0x640] sm:$0xff]
    %v224 = vld [vmem:[%s1 + $0x648] sm:$0xff]
    %v225 = vld [vmem:[%s1 + $0x650] sm:$0xff]
    %v226 = vld [vmem:[%s1 + $0x658] sm:$0xff]
    %v227 = vld [vmem:[%s1 + $0x660] sm:$0xff]
    %v228 = vld [vmem:[%s1 + $0x668] sm:$0xff]
    %v229 = vld [vmem:[%s1 + $0x670] sm:$0xff]
    %v230 = vld [vmem:[%s1 + $0x678] sm:$0xff]
    %v231 = vld [vmem:[%s1 + $0x680] sm:$0xff]
    %v232 = vld [vmem:[%s1 + $0x688] sm:$0xff]
    %v233 = vld [vmem:[%s1 + $0x690] sm:$0xff]
    %v234 = vld [vmem:[%s1 + $0x698] sm:$0xff]
    %v235 = vld [vmem:[%s1 + $0x6a0] sm:$0xff]
    %v236 = vld [vmem:[%s1 + $0x6a8] sm:$0xff]
    %v237 = vld [vmem:[%s1 + $0x6b0] sm:$0xff]
    %v238 = vld [vmem:[%s1 + $0x6b8] sm:$0xff]
    %v239 = vld [vmem:[%s1 + $0x6c0] sm:$0xff]
    %v240 = vld [vmem:[%s1 + $0x6c8] sm:$0xff]
    %v241 = vld [vmem:[%s1 + $0x6d0] sm:$0xff]
    %v242 = vld [vmem:[%s1 + $0x6d8] sm:$0xff]
    %v243 = vld [vmem:[%s1 + $0x6e0] sm:$0xff]
    %v244 = vld [vmem:[%s1 + $0x6e8] sm:$0xff]
    %v245 = vld [vmem:[%s1 + $0x6f0] sm:$0xff]
    %v246 = vld [vmem:[%s1 + $0x6f8] sm:$0xff]
    %v247 = vld [vmem:[%s1 + $0x700] sm:$0xff]
    %v248 = vld [vmem:[%s1 + $0x708] sm:$0xff]
    %v249 = vld [vmem:[%s1 + $0x710] sm:$0xff]
    %v250 = vld [vmem:[%s1 + $0x718] sm:$0xff]
    %v251 = vld [vmem:[%s1 + $0x720] sm:$0xff]
    %v252 = vld [vmem:[%s1 + $0x728] sm:$0xff]
    %v253 = vld [vmem:[%s1 + $0x730] sm:$0xff]
    %v254 = vld [vmem:[%s1 + $0x738] sm:$0xff]
    %v255 = vld [vmem:[%s1 + $0x740] sm:$0xff]
    %v256 = vld [vmem:[%s1 + $0x748] sm:$0xff]
    %v257 = vld [vmem:[%s1 + $0x750] sm:$0xff]
    %v258 = vld [vmem:[%s1 + $0x758] sm:$0xff]
    %v259 = vld [vmem:[%s1 + $0x760] sm:$0xff]
    %v260 = vld [vmem:[%s1 + $0x768] sm:$0xff]
    %v261 = vld [vmem:[%s1 + $0x770] sm:$0xff]
    %v262 = vld [vmem:[%s1 + $0x778] sm:$0xff]
    %v263 = vld [vmem:[%s1 + $0x780] sm:$0xff]
    %v264 = vld [vmem:[%s1 + $0x788] sm:$0xff]
    %v265 = vld [vmem:[%s1 + $0x790] sm:$0xff]
    %v266 = vld [vmem:[%s1 + $0x798] sm:$0xff]
    %v267 = vld [vmem:[%s1 + $0x7a0] sm:$0xff]
    %v268 = vld [vmem:[%s1 + $0x7a8] sm:$0xff]
    %v269 = vld [vmem:[%s1 + $0x7b0] sm:$0xff]
    %v270 = vld [vmem:[%s1 + $0x7b8] sm:$0xff]
    %v271 = vld [vmem:[%s1 + $0x7c0] sm:$0xff]
    %v272 = vld [vmem:[%s1 + $0x7c8] sm:$0xff]
    %v273 = vld [vmem:[%s1 + $0x7d0] sm:$0xff]
    %v274 = vld [vmem:[%s1 + $0x7d8] sm:$0xff]
    %v275 = vld [vmem:[%s1 + $0x7e0] sm:$0xff]
    %v276 = vld [vmem:[%s1 + $0x7e8] sm:$0xff]
    %v277 = vld [vmem:[%s1 + $0x7f0] sm:$0xff]
    %v278 = vld [vmem:[%s1 + $0x7f8] sm:$0xff]
    %v279 = vld [vmem:[%s2] sm:$0x3]
    %v281 = vperm.slane %v279, 0
    %v282 = vperm.slane %v279, 1
    %286 = vst [vmem:[#allocation1] ss:$9 sm:$0xff] %v21
    %v287 = vld [vmem:[#allocation1] sm:$0xff]
    %v288 = vld [vmem:[#allocation1 + $0x9] sm:$0xff]
    %v289 = vld [vmem:[#allocation1 + $0x12] sm:$0xff]
    %v290 = vld [vmem:[#allocation1 + $0x1b] sm:$0xff]
    %v291 = vld [vmem:[#allocation1 + $0x24] sm:$0xff]
    %v292 = vld [vmem:[#allocation1 + $0x2d] sm:$0xff]
    %v293 = vld [vmem:[#allocation1 + $0x36] sm:$0xff]
    %v294 = vld [vmem:[#allocation1 + $0x3f] sm:$0xff]
    %296 = vst [vmem:[#allocation1] ss:$9 sm:$0xff] %v22
    %v297 = vld [vmem:[#allocation1] sm:$0xff]
    %v298 = vld [vmem:[#allocation1 + $0x9] sm:$0xff]
    %v299 = vld [vmem:[#allocation1 + $0x12] sm:$0xff]
    %v300 = vld [vmem:[#allocation1 + $0x1b] sm:$0xff]
    %v301 = vld [vmem:[#allocation1 + $0x24] sm:$0xff]
    %v302 = vld [vmem:[#allocation1 + $0x2d] sm:$0xff]
    %v303 = vld [vmem:[#allocation1 + $0x36] sm:$0xff]
    %v304 = vld [vmem:[#allocation1 + $0x3f] sm:$0xff]
    %v577 = vunpack.c.l.b16 %v23
    %v578 = vunpack.c.h.b16 %v23
    %v579 = vunpack.c.l.b16 %v24
    %v580 = vunpack.c.h.b16 %v24
    %v581 = vunpack.c.l.b16 %v25
    %v582 = vunpack.c.h.b16 %v25
    %v583 = vunpack.c.l.b16 %v26
    %v584 = vunpack.c.h.b16 %v26
    %v585 = vunpack.c.l.b16 %v27
    %v586 = vunpack.c.h.b16 %v27
    %v587 = vunpack.c.l.b16 %v28
    %v588 = vunpack.c.h.b16 %v28
    %v589 = vunpack.c.l.b16 %v29
    %v590 = vunpack.c.h.b16 %v29
    %v591 = vunpack.c.l.b16 %v30
    %v592 = vunpack.c.h.b16 %v30
    %v593 = vunpack.c.l.b16 %v31
    %v594 = vunpack.c.h.b16 %v31
    %v595 = vunpack.c.l.b16 %v32
    %v596 = vunpack.c.h.b16 %v32
    %v597 = vunpack.c.l.b16 %v33
    %v598 = vunpack.c.h.b16 %v33
    %v599 = vunpack.c.l.b16 %v34
    %v600 = vunpack.c.h.b16 %v34
    %v601 = vunpack.c.l.b16 %v35
    %v602 = vunpack.c.h.b16 %v35
    %v603 = vunpack.c.l.b16 %v36
    %v604 = vunpack.c.h.b16 %v36
    %v605 = vunpack.c.l.b16 %v37
    %v606 = vunpack.c.h.b16 %v37
    %v607 = vunpack.c.l.b16 %v38
    %v608 = vunpack.c.h.b16 %v38
    %v609 = vunpack.c.l.b16 %v39
    %v610 = vunpack.c.h.b16 %v39
    %v611 = vunpack.c.l.b16 %v40
    %v612 = vunpack.c.h.b16 %v40
    %v613 = vunpack.c.l.b16 %v41
    %v614 = vunpack.c.h.b16 %v41
    %v615 = vunpack.c.l.b16 %v42
    %v616 = vunpack.c.h.b16 %v42
    %v617 = vunpack.c.l.b16 %v43
    %v618 = vunpack.c.h.b16 %v43
    %v619 = vunpack.c.l.b16 %v44
    %v620 = vunpack.c.h.b16 %v44
    %v621 = vunpack.c.l.b16 %v45
    %v622 = vunpack.c.h.b16 %v45
    %v623 = vunpack.c.l.b16 %v46
    %v624 = vunpack.c.h.b16 %v46
    %v625 = vunpack.c.l.b16 %v47
    %v626 = vunpack.c.h.b16 %v47
    %v627 = vunpack.c.l.b16 %v48
    %v628 = vunpack.c.h.b16 %v48
    %v629 = vunpack.c.l.b16 %v49
    %v630 = vunpack.c.h.b16 %v49
    %v631 = vunpack.c.l.b16 %v50
    %v632 = vunpack.c.h.b16 %v50
    %v633 = vunpack.c.l.b16 %v51
    %v634 = vunpack.c.h.b16 %v51
    %v635 = vunpack.c.l.b16 %v52
    %v636 = vunpack.c.h.b16 %v52
    %v637 = vunpack.c.l.b16 %v53
    %v638 = vunpack.c.h.b16 %v53
    %v639 = vunpack.c.l.b16 %v54
    %v640 = vunpack.c.h.b16 %v54
    %v641 = vunpack.c.l.b16 %v55
    %v642 = vunpack.c.h.b16 %v55
    %v643 = vunpack.c.l.b16 %v56
    %v644 = vunpack.c.h.b16 %v56
    %v645 = vunpack.c.l.b16 %v57
    %v646 = vunpack.c.h.b16 %v57
    %v647 = vunpack.c.l.b16 %v58
    %v648 = vunpack.c.h.b16 %v58
    %v649 = vunpack.c.l.b16 %v59
    %v650 = vunpack.c.h.b16 %v59
    %v651 = vunpack.c.l.b16 %v60
    %v652 = vunpack.c.h.b16 %v60
    %v653 = vunpack.c.l.b16 %v61
    %v654 = vunpack.c.h.b16 %v61
    %v655 = vunpack.c.l.b16 %v62
    %v656 = vunpack.c.h.b16 %v62
    %v657 = vunpack.c.l.b16 %v63
    %v658 = vunpack.c.h.b16 %v63
    %v659 = vunpack.c.l.b16 %v64
    %v660 = vunpack.c.h.b16 %v64
    %v661 = vunpack.c.l.b16 %v65
    %v662 = vunpack.c.h.b16 %v65
    %v663 = vunpack.c.l.b16 %v66
    %v664 = vunpack.c.h.b16 %v66
    %v665 = vunpack.c.l.b16 %v67
    %v666 = vunpack.c.h.b16 %v67
    %v667 = vunpack.c.l.b16 %v68
    %v668 = vunpack.c.h.b16 %v68
    %v669 = vunpack.c.l.b16 %v69
    %v670 = vunpack.c.h.b16 %v69
    %v671 = vunpack.c.l.b16 %v70
    %v672 = vunpack.c.h.b16 %v70
    %v673 = vunpack.c.l.b16 %v71
    %v674 = vunpack.c.h.b16 %v71
    %v675 = vunpack.c.l.b16 %v72
    %v676 = vunpack.c.h.b16 %v72
    %v677 = vunpack.c.l.b16 %v73
    %v678 = vunpack.c.h.b16 %v73
    %v679 = vunpack.c.l.b16 %v74
    %v680 = vunpack.c.h.b16 %v74
    %v681 = vunpack.c.l.b16 %v75
    %v682 = vunpack.c.h.b16 %v75
    %v683 = vunpack.c.l.b16 %v76
    %v684 = vunpack.c.h.b16 %v76
    %v685 = vunpack.c.l.b16 %v77
    %v686 = vunpack.c.h.b16 %v77
    %v687 = vunpack.c.l.b16 %v78
    %v688 = vunpack.c.h.b16 %v78
    %v689 = vunpack.c.l.b16 %v79
    %v690 = vunpack.c.h.b16 %v79
    %v691 = vunpack.c.l.b16 %v80
    %v692 = vunpack.c.h.b16 %v80
    %v693 = vunpack.c.l.b16 %v81
    %v694 = vunpack.c.h.b16 %v81
    %v695 = vunpack.c.l.b16 %v82
    %v696 = vunpack.c.h.b16 %v82
    %v697 = vunpack.c.l.b16 %v83
    %v698 = vunpack.c.h.b16 %v83
    %v699 = vunpack.c.l.b16 %v84
    %v700 = vunpack.c.h.b16 %v84
    %v701 = vunpack.c.l.b16 %v85
    %v702 = vunpack.c.h.b16 %v85
    %v703 = vunpack.c.l.b16 %v86
    %v704 = vunpack.c.h.b16 %v86
    %v705 = vunpack.c.l.b16 %v87
    %v706 = vunpack.c.h.b16 %v87
    %v707 = vunpack.c.l.b16 %v88
    %v708 = vunpack.c.h.b16 %v88
    %v709 = vunpack.c.l.b16 %v89
    %v710 = vunpack.c.h.b16 %v89
    %v711 = vunpack.c.l.b16 %v90
    %v712 = vunpack.c.h.b16 %v90
    %v713 = vunpack.c.l.b16 %v91
    %v714 = vunpack.c.h.b16 %v91
    %v715 = vunpack.c.l.b16 %v92
    %v716 = vunpack.c.h.b16 %v92
    %v717 = vunpack.c.l.b16 %v93
    %v718 = vunpack.c.h.b16 %v93
    %v719 = vunpack.c.l.b16 %v94
    %v720 = vunpack.c.h.b16 %v94
    %v721 = vunpack.c.l.b16 %v95
    %v722 = vunpack.c.h.b16 %v95
    %v723 = vunpack.c.l.b16 %v96
    %v724 = vunpack.c.h.b16 %v96
    %v725 = vunpack.c.l.b16 %v97
    %v726 = vunpack.c.h.b16 %v97
    %v727 = vunpack.c.l.b16 %v98
    %v728 = vunpack.c.h.b16 %v98
    %v729 = vunpack.c.l.b16 %v99
    %v730 = vunpack.c.h.b16 %v99
    %v731 = vunpack.c.l.b16 %v100
    %v732 = vunpack.c.h.b16 %v100
    %v733 = vunpack.c.l.b16 %v101
    %v734 = vunpack.c.h.b16 %v101
    %v735 = vunpack.c.l.b16 %v102
    %v736 = vunpack.c.h.b16 %v102
    %v737 = vunpack.c.l.b16 %v103
    %v738 = vunpack.c.h.b16 %v103
    %v739 = vunpack.c.l.b16 %v104
    %v740 = vunpack.c.h.b16 %v104
    %v741 = vunpack.c.l.b16 %v105
    %v742 = vunpack.c.h.b16 %v105
    %v743 = vunpack.c.l.b16 %v106
    %v744 = vunpack.c.h.b16 %v106
    %v745 = vunpack.c.l.b16 %v107
    %v746 = vunpack.c.h.b16 %v107
    %v747 = vunpack.c.l.b16 %v108
    %v748 = vunpack.c.h.b16 %v108
    %v749 = vunpack.c.l.b16 %v109
    %v750 = vunpack.c.h.b16 %v109
    %v751 = vunpack.c.l.b16 %v110
    %v752 = vunpack.c.h.b16 %v110
    %v753 = vunpack.c.l.b16 %v111
    %v754 = vunpack.c.h.b16 %v111
    %v755 = vunpack.c.l.b16 %v112
    %v756 = vunpack.c.h.b16 %v112
    %v757 = vunpack.c.l.b16 %v113
    %v758 = vunpack.c.h.b16 %v113
    %v759 = vunpack.c.l.b16 %v114
    %v760 = vunpack.c.h.b16 %v114
    %v761 = vunpack.c.l.b16 %v115
    %v762 = vunpack.c.h.b16 %v115
    %v763 = vunpack.c.l.b16 %v116
    %v764 = vunpack.c.h.b16 %v116
    %v765 = vunpack.c.l.b16 %v117
    %v766 = vunpack.c.h.b16 %v117
    %v767 = vunpack.c.l.b16 %v118
    %v768 = vunpack.c.h.b16 %v118
    %v769 = vunpack.c.l.b16 %v119
    %v770 = vunpack.c.h.b16 %v119
    %v771 = vunpack.c.l.b16 %v120
    %v772 = vunpack.c.h.b16 %v120
    %v773 = vunpack.c.l.b16 %v121
    %v774 = vunpack.c.h.b16 %v121
    %v775 = vunpack.c.l.b16 %v122
    %v776 = vunpack.c.h.b16 %v122
    %v777 = vunpack.c.l.b16 %v123
    %v778 = vunpack.c.h.b16 %v123
    %v779 = vunpack.c.l.b16 %v124
    %v780 = vunpack.c.h.b16 %v124
    %v781 = vunpack.c.l.b16 %v125
    %v782 = vunpack.c.h.b16 %v125
    %v783 = vunpack.c.l.b16 %v126
    %v784 = vunpack.c.h.b16 %v126
    %v785 = vunpack.c.l.b16 %v127
    %v786 = vunpack.c.h.b16 %v127
    %v787 = vunpack.c.l.b16 %v128
    %v788 = vunpack.c.h.b16 %v128
    %v789 = vunpack.c.l.b16 %v129
    %v790 = vunpack.c.h.b16 %v129
    %v791 = vunpack.c.l.b16 %v130
    %v792 = vunpack.c.h.b16 %v130
    %v793 = vunpack.c.l.b16 %v131
    %v794 = vunpack.c.h.b16 %v131
    %v795 = vunpack.c.l.b16 %v132
    %v796 = vunpack.c.h.b16 %v132
    %v797 = vunpack.c.l.b16 %v133
    %v798 = vunpack.c.h.b16 %v133
    %v799 = vunpack.c.l.b16 %v134
    %v800 = vunpack.c.h.b16 %v134
    %v801 = vunpack.c.l.b16 %v135
    %v802 = vunpack.c.h.b16 %v135
    %v803 = vunpack.c.l.b16 %v136
    %v804 = vunpack.c.h.b16 %v136
    %v805 = vunpack.c.l.b16 %v137
    %v806 = vunpack.c.h.b16 %v137
    %v807 = vunpack.c.l.b16 %v138
    %v808 = vunpack.c.h.b16 %v138
    %v809 = vunpack.c.l.b16 %v139
    %v810 = vunpack.c.h.b16 %v139
    %v811 = vunpack.c.l.b16 %v140
    %v812 = vunpack.c.h.b16 %v140
    %v813 = vunpack.c.l.b16 %v141
    %v814 = vunpack.c.h.b16 %v141
    %v815 = vunpack.c.l.b16 %v142
    %v816 = vunpack.c.h.b16 %v142
    %v817 = vunpack.c.l.b16 %v143
    %v818 = vunpack.c.h.b16 %v143
    %v819 = vunpack.c.l.b16 %v144
    %v820 = vunpack.c.h.b16 %v144
    %v821 = vunpack.c.l.b16 %v145
    %v822 = vunpack.c.h.b16 %v145
    %v823 = vunpack.c.l.b16 %v146
    %v824 = vunpack.c.h.b16 %v146
    %v825 = vunpack.c.l.b16 %v147
    %v826 = vunpack.c.h.b16 %v147
    %v827 = vunpack.c.l.b16 %v148
    %v828 = vunpack.c.h.b16 %v148
    %v829 = vunpack.c.l.b16 %v149
    %v830 = vunpack.c.h.b16 %v149
    %v831 = vunpack.c.l.b16 %v150
    %v832 = vunpack.c.h.b16 %v150
    %v833 = vunpack.c.l.b16 %v151
    %v834 = vunpack.c.h.b16 %v151
    %v835 = vunpack.c.l.b16 %v152
    %v836 = vunpack.c.h.b16 %v152
    %v837 = vunpack.c.l.b16 %v153
    %v838 = vunpack.c.h.b16 %v153
    %v839 = vunpack.c.l.b16 %v154
    %v840 = vunpack.c.h.b16 %v154
    %v841 = vunpack.c.l.b16 %v155
    %v842 = vunpack.c.h.b16 %v155
    %v843 = vunpack.c.l.b16 %v156
    %v844 = vunpack.c.h.b16 %v156
    %v845 = vunpack.c.l.b16 %v157
    %v846 = vunpack.c.h.b16 %v157
    %v847 = vunpack.c.l.b16 %v158
    %v848 = vunpack.c.h.b16 %v158
    %v849 = vunpack.c.l.b16 %v159
    %v850 = vunpack.c.h.b16 %v159
    %v851 = vunpack.c.l.b16 %v160
    %v852 = vunpack.c.h.b16 %v160
    %v853 = vunpack.c.l.b16 %v161
    %v854 = vunpack.c.h.b16 %v161
    %v855 = vunpack.c.l.b16 %v162
    %v856 = vunpack.c.h.b16 %v162
    %v857 = vunpack.c.l.b16 %v163
    %v858 = vunpack.c.h.b16 %v163
    %v859 = vunpack.c.l.b16 %v164
    %v860 = vunpack.c.h.b16 %v164
    %v861 = vunpack.c.l.b16 %v165
    %v862 = vunpack.c.h.b16 %v165
    %v863 = vunpack.c.l.b16 %v166
    %v864 = vunpack.c.h.b16 %v166
    %v865 = vunpack.c.l.b16 %v167
    %v866 = vunpack.c.h.b16 %v167
    %v867 = vunpack.c.l.b16 %v168
    %v868 = vunpack.c.h.b16 %v168
    %v869 = vunpack.c.l.b16 %v169
    %v870 = vunpack.c.h.b16 %v169
    %v871 = vunpack.c.l.b16 %v170
    %v872 = vunpack.c.h.b16 %v170
    %v873 = vunpack.c.l.b16 %v171
    %v874 = vunpack.c.h.b16 %v171
    %v875 = vunpack.c.l.b16 %v172
    %v876 = vunpack.c.h.b16 %v172
    %v877 = vunpack.c.l.b16 %v173
    %v878 = vunpack.c.h.b16 %v173
    %v879 = vunpack.c.l.b16 %v174
    %v880 = vunpack.c.h.b16 %v174
    %v881 = vunpack.c.l.b16 %v175
    %v882 = vunpack.c.h.b16 %v175
    %v883 = vunpack.c.l.b16 %v176
    %v884 = vunpack.c.h.b16 %v176
    %v885 = vunpack.c.l.b16 %v177
    %v886 = vunpack.c.h.b16 %v177
    %v887 = vunpack.c.l.b16 %v178
    %v888 = vunpack.c.h.b16 %v178
    %v889 = vunpack.c.l.b16 %v179
    %v890 = vunpack.c.h.b16 %v179
    %v891 = vunpack.c.l.b16 %v180
    %v892 = vunpack.c.h.b16 %v180
    %v893 = vunpack.c.l.b16 %v181
    %v894 = vunpack.c.h.b16 %v181
    %v895 = vunpack.c.l.b16 %v182
    %v896 = vunpack.c.h.b16 %v182
    %v897 = vunpack.c.l.b16 %v183
    %v898 = vunpack.c.h.b16 %v183
    %v899 = vunpack.c.l.b16 %v184
    %v900 = vunpack.c.h.b16 %v184
    %v901 = vunpack.c.l.b16 %v185
    %v902 = vunpack.c.h.b16 %v185
    %v903 = vunpack.c.l.b16 %v186
    %v904 = vunpack.c.h.b16 %v186
    %v905 = vunpack.c.l.b16 %v187
    %v906 = vunpack.c.h.b16 %v187
    %v907 = vunpack.c.l.b16 %v188
    %v908 = vunpack.c.h.b16 %v188
    %v909 = vunpack.c.l.b16 %v189
    %v910 = vunpack.c.h.b16 %v189
    %v911 = vunpack.c.l.b16 %v190
    %v912 = vunpack.c.h.b16 %v190
    %v913 = vunpack.c.l.b16 %v191
    %v914 = vunpack.c.h.b16 %v191
    %v915 = vunpack.c.l.b16 %v192
    %v916 = vunpack.c.h.b16 %v192
    %v917 = vunpack.c.l.b16 %v193
    %v918 = vunpack.c.h.b16 %v193
    %v919 = vunpack.c.l.b16 %v194
    %v920 = vunpack.c.h.b16 %v194
    %v921 = vunpack.c.l.b16 %v195
    %v922 = vunpack.c.h.b16 %v195
    %v923 = vunpack.c.l.b16 %v196
    %v924 = vunpack.c.h.b16 %v196
    %v925 = vunpack.c.l.b16 %v197
    %v926 = vunpack.c.h.b16 %v197
    %v927 = vunpack.c.l.b16 %v198
    %v928 = vunpack.c.h.b16 %v198
    %v929 = vunpack.c.l.b16 %v199
    %v930 = vunpack.c.h.b16 %v199
    %v931 = vunpack.c.l.b16 %v200
    %v932 = vunpack.c.h.b16 %v200
    %v933 = vunpack.c.l.b16 %v201
    %v934 = vunpack.c.h.b16 %v201
    %v935 = vunpack.c.l.b16 %v202
    %v936 = vunpack.c.h.b16 %v202
    %v937 = vunpack.c.l.b16 %v203
    %v938 = vunpack.c.h.b16 %v203
    %v939 = vunpack.c.l.b16 %v204
    %v940 = vunpack.c.h.b16 %v204
    %v941 = vunpack.c.l.b16 %v205
    %v942 = vunpack.c.h.b16 %v205
    %v943 = vunpack.c.l.b16 %v206
    %v944 = vunpack.c.h.b16 %v206
    %v945 = vunpack.c.l.b16 %v207
    %v946 = vunpack.c.h.b16 %v207
    %v947 = vunpack.c.l.b16 %v208
    %v948 = vunpack.c.h.b16 %v208
    %v949 = vunpack.c.l.b16 %v209
    %v950 = vunpack.c.h.b16 %v209
    %v951 = vunpack.c.l.b16 %v210
    %v952 = vunpack.c.h.b16 %v210
    %v953 = vunpack.c.l.b16 %v211
    %v954 = vunpack.c.h.b16 %v211
    %v955 = vunpack.c.l.b16 %v212
    %v956 = vunpack.c.h.b16 %v212
    %v957 = vunpack.c.l.b16 %v213
    %v958 = vunpack.c.h.b16 %v213
    %v959 = vunpack.c.l.b16 %v214
    %v960 = vunpack.c.h.b16 %v214
    %v961 = vunpack.c.l.b16 %v215
    %v962 = vunpack.c.h.b16 %v215
    %v963 = vunpack.c.l.b16 %v216
    %v964 = vunpack.c.h.b16 %v216
    %v965 = vunpack.c.l.b16 %v217
    %v966 = vunpack.c.h.b16 %v217
    %v967 = vunpack.c.l.b16 %v218
    %v968 = vunpack.c.h.b16 %v218
    %v969 = vunpack.c.l.b16 %v219
    %v970 = vunpack.c.h.b16 %v219
    %v971 = vunpack.c.l.b16 %v220
    %v972 = vunpack.c.h.b16 %v220
    %v973 = vunpack.c.l.b16 %v221
    %v974 = vunpack.c.h.b16 %v221
    %v975 = vunpack.c.l.b16 %v222
    %v976 = vunpack.c.h.b16 %v222
    %v977 = vunpack.c.l.b16 %v223
    %v978 = vunpack.c.h.b16 %v223
    %v979 = vunpack.c.l.b16 %v224
    %v980 = vunpack.c.h.b16 %v224
    %v981 = vunpack.c.l.b16 %v225
    %v982 = vunpack.c.h.b16 %v225
    %v983 = vunpack.c.l.b16 %v226
    %v984 = vunpack.c.h.b16 %v226
    %v985 = vunpack.c.l.b16 %v227
    %v986 = vunpack.c.h.b16 %v227
    %v987 = vunpack.c.l.b16 %v228
    %v988 = vunpack.c.h.b16 %v228
    %v989 = vunpack.c.l.b16 %v229
    %v990 = vunpack.c.h.b16 %v229
    %v991 = vunpack.c.l.b16 %v230
    %v992 = vunpack.c.h.b16 %v230
    %v993 = vunpack.c.l.b16 %v231
    %v994 = vunpack.c.h.b16 %v231
    %v995 = vunpack.c.l.b16 %v232
    %v996 = vunpack.c.h.b16 %v232
    %v997 = vunpack.c.l.b16 %v233
    %v998 = vunpack.c.h.b16 %v233
    %v999 = vunpack.c.l.b16 %v234
    %v1000 = vunpack.c.h.b16 %v234
    %v1001 = vunpack.c.l.b16 %v235
    %v1002 = vunpack.c.h.b16 %v235
    %v1003 = vunpack.c.l.b16 %v236
    %v1004 = vunpack.c.h.b16 %v236
    %v1005 = vunpack.c.l.b16 %v237
    %v1006 = vunpack.c.h.b16 %v237
    %v1007 = vunpack.c.l.b16 %v238
    %v1008 = vunpack.c.h.b16 %v238
    %v1009 = vunpack.c.l.b16 %v239
    %v1010 = vunpack.c.h.b16 %v239
    %v1011 = vunpack.c.l.b16 %v240
    %v1012 = vunpack.c.h.b16 %v240
    %v1013 = vunpack.c.l.b16 %v241
    %v1014 = vunpack.c.h.b16 %v241
    %v1015 = vunpack.c.l.b16 %v242
    %v1016 = vunpack.c.h.b16 %v242
    %v1017 = vunpack.c.l.b16 %v243
    %v1018 = vunpack.c.h.b16 %v243
    %v1019 = vunpack.c.l.b16 %v244
    %v1020 = vunpack.c.h.b16 %v244
    %v1021 = vunpack.c.l.b16 %v245
    %v1022 = vunpack.c.h.b16 %v245
    %v1023 = vunpack.c.l.b16 %v246
    %v1024 = vunpack.c.h.b16 %v246
    %v1025 = vunpack.c.l.b16 %v247
    %v1026 = vunpack.c.h.b16 %v247
    %v1027 = vunpack.c.l.b16 %v248
    %v1028 = vunpack.c.h.b16 %v248
    %v1029 = vunpack.c.l.b16 %v249
    %v1030 = vunpack.c.h.b16 %v249
    %v1031 = vunpack.c.l.b16 %v250
    %v1032 = vunpack.c.h.b16 %v250
    %v1033 = vunpack.c.l.b16 %v251
    %v1034 = vunpack.c.h.b16 %v251
    %v1035 = vunpack.c.l.b16 %v252
    %v1036 = vunpack.c.h.b16 %v252
    %v1037 = vunpack.c.l.b16 %v253
    %v1038 = vunpack.c.h.b16 %v253
    %v1039 = vunpack.c.l.b16 %v254
    %v1040 = vunpack.c.h.b16 %v254
    %v1041 = vunpack.c.l.b16 %v255
    %v1042 = vunpack.c.h.b16 %v255
    %v1043 = vunpack.c.l.b16 %v256
    %v1044 = vunpack.c.h.b16 %v256
    %v1045 = vunpack.c.l.b16 %v257
    %v1046 = vunpack.c.h.b16 %v257
    %v1047 = vunpack.c.l.b16 %v258
    %v1048 = vunpack.c.h.b16 %v258
    %v1049 = vunpack.c.l.b16 %v259
    %v1050 = vunpack.c.h.b16 %v259
    %v1051 = vunpack.c.l.b16 %v260
    %v1052 = vunpack.c.h.b16 %v260
    %v1053 = vunpack.c.l.b16 %v261
    %v1054 = vunpack.c.h.b16 %v261
    %v1055 = vunpack.c.l.b16 %v262
    %v1056 = vunpack.c.h.b16 %v262
    %v1057 = vunpack.c.l.b16 %v263
    %v1058 = vunpack.c.h.b16 %v263
    %v1059 = vunpack.c.l.b16 %v264
    %v1060 = vunpack.c.h.b16 %v264
    %v1061 = vunpack.c.l.b16 %v265
    %v1062 = vunpack.c.h.b16 %v265
    %v1063 = vunpack.c.l.b16 %v266
    %v1064 = vunpack.c.h.b16 %v266
    %v1065 = vunpack.c.l.b16 %v267
    %v1066 = vunpack.c.h.b16 %v267
    %v1067 = vunpack.c.l.b16 %v268
    %v1068 = vunpack.c.h.b16 %v268
    %v1069 = vunpack.c.l.b16 %v269
    %v1070 = vunpack.c.h.b16 %v269
    %v1071 = vunpack.c.l.b16 %v270
    %v1072 = vunpack.c.h.b16 %v270
    %v1073 = vunpack.c.l.b16 %v271
    %v1074 = vunpack.c.h.b16 %v271
    %v1075 = vunpack.c.l.b16 %v272
    %v1076 = vunpack.c.h.b16 %v272
    %v1077 = vunpack.c.l.b16 %v273
    %v1078 = vunpack.c.h.b16 %v273
    %v1079 = vunpack.c.l.b16 %v274
    %v1080 = vunpack.c.h.b16 %v274
    %v1081 = vunpack.c.l.b16 %v275
    %v1082 = vunpack.c.h.b16 %v275
    %v1083 = vunpack.c.l.b16 %v276
    %v1084 = vunpack.c.h.b16 %v276
    %v1085 = vunpack.c.l.b16 %v277
    %v1086 = vunpack.c.h.b16 %v277
    %v1087 = vunpack.c.l.b16 %v278
    %v1088 = vunpack.c.h.b16 %v278
    %v1089 = vpack.c.b16 %v579, %v577
    %v1090 = vpack.c.b16 %v580, %v578
    %v1091 = vpack.c.b16 %v583, %v581
    %v1092 = vpack.c.b16 %v584, %v582
    %v1093 = vpack.c.b16 %v587, %v585
    %v1094 = vpack.c.b16 %v588, %v586
    %v1095 = vpack.c.b16 %v591, %v589
    %v1096 = vpack.c.b16 %v592, %v590
    %v1097 = vpack.c.b16 %v595, %v593
    %v1098 = vpack.c.b16 %v596, %v594
    %v1099 = vpack.c.b16 %v599, %v597
    %v1100 = vpack.c.b16 %v600, %v598
    %v1101 = vpack.c.b16 %v603, %v601
    %v1102 = vpack.c.b16 %v604, %v602
    %v1103 = vpack.c.b16 %v607, %v605
    %v1104 = vpack.c.b16 %v608, %v606
    %v1105 = vpack.c.b16 %v611, %v609
    %v1106 = vpack.c.b16 %v612, %v610
    %v1107 = vpack.c.b16 %v615, %v613
    %v1108 = vpack.c.b16 %v616, %v614
    %v1109 = vpack.c.b16 %v619, %v617
    %v1110 = vpack.c.b16 %v620, %v618
    %v1111 = vpack.c.b16 %v623, %v621
    %v1112 = vpack.c.b16 %v624, %v622
    %v1113 = vpack.c.b16 %v627, %v625
    %v1114 = vpack.c.b16 %v628, %v626
    %v1115 = vpack.c.b16 %v631, %v629
    %v1116 = vpack.c.b16 %v632, %v630
    %v1117 = vpack.c.b16 %v635, %v633
    %v1118 = vpack.c.b16 %v636, %v634
    %v1119 = vpack.c.b16 %v639, %v637
    %v1120 = vpack.c.b16 %v640, %v638
    %v1121 = vpack.c.b16 %v643, %v641
    %v1122 = vpack.c.b16 %v644, %v642
    %v1123 = vpack.c.b16 %v647, %v645
    %v1124 = vpack.c.b16 %v648, %v646
    %v1125 = vpack.c.b16 %v651, %v649
    %v1126 = vpack.c.b16 %v652, %v650
    %v1127 = vpack.c.b16 %v655, %v653
    %v1128 = vpack.c.b16 %v656, %v654
    %v1129 = vpack.c.b16 %v659, %v657
    %v1130 = vpack.c.b16 %v660, %v658
    %v1131 = vpack.c.b16 %v663, %v661
    %v1132 = vpack.c.b16 %v664, %v662
    %v1133 = vpack.c.b16 %v667, %v665
    %v1134 = vpack.c.b16 %v668, %v666
    %v1135 = vpack.c.b16 %v671, %v669
    %v1136 = vpack.c.b16 %v672, %v670
    %v1137 = vpack.c.b16 %v675, %v673
    %v1138 = vpack.c.b16 %v676, %v674
    %v1139 = vpack.c.b16 %v679, %v677
    %v1140 = vpack.c.b16 %v680, %v678
    %v1141 = vpack.c.b16 %v683, %v681
    %v1142 = vpack.c.b16 %v684, %v682
    %v1143 = vpack.c.b16 %v687, %v685
    %v1144 = vpack.c.b16 %v688, %v686
    %v1145 = vpack.c.b16 %v691, %v689
    %v1146 = vpack.c.b16 %v692, %v690
    %v1147 = vpack.c.b16 %v695, %v693
    %v1148 = vpack.c.b16 %v696, %v694
    %v1149 = vpack.c.b16 %v699, %v697
    %v1150 = vpack.c.b16 %v700, %v698
    %v1151 = vpack.c.b16 %v703, %v701
    %v1152 = vpack.c.b16 %v704, %v702
    %v1153 = vpack.c.b16 %v707, %v705
    %v1154 = vpack.c.b16 %v708, %v706
    %v1155 = vpack.c.b16 %v711, %v709
    %v1156 = vpack.c.b16 %v712, %v710
    %v1157 = vpack.c.b16 %v715, %v713
    %v1158 = vpack.c.b16 %v716, %v714
    %v1159 = vpack.c.b16 %v719, %v717
    %v1160 = vpack.c.b16 %v720, %v718
    %v1161 = vpack.c.b16 %v723, %v721
    %v1162 = vpack.c.b16 %v724, %v722
    %v1163 = vpack.c.b16 %v727, %v725
    %v1164 = vpack.c.b16 %v728, %v726
    %v1165 = vpack.c.b16 %v731, %v729
    %v1166 = vpack.c.b16 %v732, %v730
    %v1167 = vpack.c.b16 %v735, %v733
    %v1168 = vpack.c.b16 %v736, %v734
    %v1169 = vpack.c.b16 %v739, %v737
    %v1170 = vpack.c.b16 %v740, %v738
    %v1171 = vpack.c.b16 %v743, %v741
    %v1172 = vpack.c.b16 %v744, %v742
    %v1173 = vpack.c.b16 %v747, %v745
    %v1174 = vpack.c.b16 %v748, %v746
    %v1175 = vpack.c.b16 %v751, %v749
    %v1176 = vpack.c.b16 %v752, %v750
    %v1177 = vpack.c.b16 %v755, %v753
    %v1178 = vpack.c.b16 %v756, %v754
    %v1179 = vpack.c.b16 %v759, %v757
    %v1180 = vpack.c.b16 %v760, %v758
    %v1181 = vpack.c.b16 %v763, %v761
    %v1182 = vpack.c.b16 %v764, %v762
    %v1183 = vpack.c.b16 %v767, %v765
    %v1184 = vpack.c.b16 %v768, %v766
    %v1185 = vpack.c.b16 %v771, %v769
    %v1186 = vpack.c.b16 %v772, %v770
    %v1187 = vpack.c.b16 %v775, %v773
    %v1188 = vpack.c.b16 %v776, %v774
    %v1189 = vpack.c.b16 %v779, %v777
    %v1190 = vpack.c.b16 %v780, %v778
    %v1191 = vpack.c.b16 %v783, %v781
    %v1192 = vpack.c.b16 %v784, %v782
    %v1193 = vpack.c.b16 %v787, %v785
    %v1194 = vpack.c.b16 %v788, %v786
    %v1195 = vpack.c.b16 %v791, %v789
    %v1196 = vpack.c.b16 %v792, %v790
    %v1197 = vpack.c.b16 %v795, %v793
    %v1198 = vpack.c.b16 %v796, %v794
    %v1199 = vpack.c.b16 %v799, %v797
    %v1200 = vpack.c.b16 %v800, %v798
    %v1201 = vpack.c.b16 %v803, %v801
    %v1202 = vpack.c.b16 %v804, %v802
    %v1203 = vpack.c.b16 %v807, %v805
    %v1204 = vpack.c.b16 %v808, %v806
    %v1205 = vpack.c.b16 %v811, %v809
    %v1206 = vpack.c.b16 %v812, %v810
    %v1207 = vpack.c.b16 %v815, %v813
    %v1208 = vpack.c.b16 %v816, %v814
    %v1209 = vpack.c.b16 %v819, %v817
    %v1210 = vpack.c.b16 %v820, %v818
    %v1211 = vpack.c.b16 %v823, %v821
    %v1212 = vpack.c.b16 %v824, %v822
    %v1213 = vpack.c.b16 %v827, %v825
    %v1214 = vpack.c.b16 %v828, %v826
    %v1215 = vpack.c.b16 %v831, %v829
    %v1216 = vpack.c.b16 %v832, %v830
    %v1217 = vpack.c.b16 %v835, %v833
    %v1218 = vpack.c.b16 %v836, %v834
    %v1219 = vpack.c.b16 %v839, %v837
    %v1220 = vpack.c.b16 %v840, %v838
    %v1221 = vpack.c.b16 %v843, %v841
    %v1222 = vpack.c.b16 %v844, %v842
    %v1223 = vpack.c.b16 %v847, %v845
    %v1224 = vpack.c.b16 %v848, %v846
    %v1225 = vpack.c.b16 %v851, %v849
    %v1226 = vpack.c.b16 %v852, %v850
    %v1227 = vpack.c.b16 %v855, %v853
    %v1228 = vpack.c.b16 %v856, %v854
    %v1229 = vpack.c.b16 %v859, %v857
    %v1230 = vpack.c.b16 %v860, %v858
    %v1231 = vpack.c.b16 %v863, %v861
    %v1232 = vpack.c.b16 %v864, %v862
    %v1233 = vpack.c.b16 %v867, %v865
    %v1234 = vpack.c.b16 %v868, %v866
    %v1235 = vpack.c.b16 %v871, %v869
    %v1236 = vpack.c.b16 %v872, %v870
    %v1237 = vpack.c.b16 %v875, %v873
    %v1238 = vpack.c.b16 %v876, %v874
    %v1239 = vpack.c.b16 %v879, %v877
    %v1240 = vpack.c.b16 %v880, %v878
    %v1241 = vpack.c.b16 %v883, %v881
    %v1242 = vpack.c.b16 %v884, %v882
    %v1243 = vpack.c.b16 %v887, %v885
    %v1244 = vpack.c.b16 %v888, %v886
    %v1245 = vpack.c.b16 %v891, %v889
    %v1246 = vpack.c.b16 %v892, %v890
    %v1247 = vpack.c.b16 %v895, %v893
    %v1248 = vpack.c.b16 %v896, %v894
    %v1249 = vpack.c.b16 %v899, %v897
    %v1250 = vpack.c.b16 %v900, %v898
    %v1251 = vpack.c.b16 %v903, %v901
    %v1252 = vpack.c.b16 %v904, %v902
    %v1253 = vpack.c.b16 %v907, %v905
    %v1254 = vpack.c.b16 %v908, %v906
    %v1255 = vpack.c.b16 %v911, %v909
    %v1256 = vpack.c.b16 %v912, %v910
    %v1257 = vpack.c.b16 %v915, %v913
    %v1258 = vpack.c.b16 %v916, %v914
    %v1259 = vpack.c.b16 %v919, %v917
    %v1260 = vpack.c.b16 %v920, %v918
    %v1261 = vpack.c.b16 %v923, %v921
    %v1262 = vpack.c.b16 %v924, %v922
    %v1263 = vpack.c.b16 %v927, %v925
    %v1264 = vpack.c.b16 %v928, %v926
    %v1265 = vpack.c.b16 %v931, %v929
    %v1266 = vpack.c.b16 %v932, %v930
    %v1267 = vpack.c.b16 %v935, %v933
    %v1268 = vpack.c.b16 %v936, %v934
    %v1269 = vpack.c.b16 %v939, %v937
    %v1270 = vpack.c.b16 %v940, %v938
    %v1271 = vpack.c.b16 %v943, %v941
    %v1272 = vpack.c.b16 %v944, %v942
    %v1273 = vpack.c.b16 %v947, %v945
    %v1274 = vpack.c.b16 %v948, %v946
    %v1275 = vpack.c.b16 %v951, %v949
    %v1276 = vpack.c.b16 %v952, %v950
    %v1277 = vpack.c.b16 %v955, %v953
    %v1278 = vpack.c.b16 %v956, %v954
    %v1279 = vpack.c.b16 %v959, %v957
    %v1280 = vpack.c.b16 %v960, %v958
    %v1281 = vpack.c.b16 %v963, %v961
    %v1282 = vpack.c.b16 %v964, %v962
    %v1283 = vpack.c.b16 %v967, %v965
    %v1284 = vpack.c.b16 %v968, %v966
    %v1285 = vpack.c.b16 %v971, %v969
    %v1286 = vpack.c.b16 %v972, %v970
    %v1287 = vpack.c.b16 %v975, %v973
    %v1288 = vpack.c.b16 %v976, %v974
    %v1289 = vpack.c.b16 %v979, %v977
    %v1290 = vpack.c.b16 %v980, %v978
    %v1291 = vpack.c.b16 %v983, %v981
    %v1292 = vpack.c.b16 %v984, %v982
    %v1293 = vpack.c.b16 %v987, %v985
    %v1294 = vpack.c.b16 %v988, %v986
    %v1295 = vpack.c.b16 %v991, %v989
    %v1296 = vpack.c.b16 %v992, %v990
    %v1297 = vpack.c.b16 %v995, %v993
    %v1298 = vpack.c.b16 %v996, %v994
    %v1299 = vpack.c.b16 %v999, %v997
    %v1300 = vpack.c.b16 %v1000, %v998
    %v1301 = vpack.c.b16 %v1003, %v1001
    %v1302 = vpack.c.b16 %v1004, %v1002
    %v1303 = vpack.c.b16 %v1007, %v1005
    %v1304 = vpack.c.b16 %v1008, %v1006
    %v1305 = vpack.c.b16 %v1011, %v1009
    %v1306 = vpack.c.b16 %v1012, %v1010
    %v1307 = vpack.c.b16 %v1015, %v1013
    %v1308 = vpack.c.b16 %v1016, %v1014
    %v1309 = vpack.c.b16 %v1019, %v1017
    %v1310 = vpack.c.b16 %v1020, %v1018
    %v1311 = vpack.c.b16 %v1023, %v1021
    %v1312 = vpack.c.b16 %v1024, %v1022
    %v1313 = vpack.c.b16 %v1027, %v1025
    %v1314 = vpack.c.b16 %v1028, %v1026
    %v1315 = vpack.c.b16 %v1031, %v1029
    %v1316 = vpack.c.b16 %v1032, %v1030
    %v1317 = vpack.c.b16 %v1035, %v1033
    %v1318 = vpack.c.b16 %v1036, %v1034
    %v1319 = vpack.c.b16 %v1039, %v1037
    %v1320 = vpack.c.b16 %v1040, %v1038
    %v1321 = vpack.c.b16 %v1043, %v1041
    %v1322 = vpack.c.b16 %v1044, %v1042
    %v1323 = vpack.c.b16 %v1047, %v1045
    %v1324 = vpack.c.b16 %v1048, %v1046
    %v1325 = vpack.c.b16 %v1051, %v1049
    %v1326 = vpack.c.b16 %v1052, %v1050
    %v1327 = vpack.c.b16 %v1055, %v1053
    %v1328 = vpack.c.b16 %v1056, %v1054
    %v1329 = vpack.c.b16 %v1059, %v1057
    %v1330 = vpack.c.b16 %v1060, %v1058
    %v1331 = vpack.c.b16 %v1063, %v1061
    %v1332 = vpack.c.b16 %v1064, %v1062
    %v1333 = vpack.c.b16 %v1067, %v1065
    %v1334 = vpack.c.b16 %v1068, %v1066
    %v1335 = vpack.c.b16 %v1071, %v1069
    %v1336 = vpack.c.b16 %v1072, %v1070
    %v1337 = vpack.c.b16 %v1075, %v1073
    %v1338 = vpack.c.b16 %v1076, %v1074
    %v1339 = vpack.c.b16 %v1079, %v1077
    %v1340 = vpack.c.b16 %v1080, %v1078
    %v1341 = vpack.c.b16 %v1083, %v1081
    %v1342 = vpack.c.b16 %v1084, %v1082
    %v1343 = vpack.c.b16 %v1087, %v1085
    %v1344 = vpack.c.b16 %v1088, %v1086
    %1601 = vmatpush.bf16.msra.mxu0 %v1103
    %1602 = vmatpush.bf16.msra.mxu0 %v1101
    %1603 = vmatpush.bf16.msra.mxu0 %v1099
    %1604 = vmatpush.bf16.msra.mxu0 %v1097
    %1605 = vmatpush.bf16.msra.mxu0 %v1095
    %1606 = vmatpush.bf16.msra.mxu0 %v1093
    %1607 = vmatpush.bf16.msra.mxu0 %v1091
    %1608 = vmatpush.bf16.msra.mxu0 %v1089
    %1609 = vmatmul.bf16.gmra.mxu0 %v287
    %v1610 = vpop.f32.mrf.mxu0
    %v1611 = vadd.f32 %v281, %v1610
    %v1612 = vpop.f32.mrf.mxu0
    %1613 = vdwg.mxu0
    %1614 = vmatpush.bf16.msra.mxu0 %v1119
    %1615 = vmatpush.bf16.msra.mxu0 %v1117
    %1616 = vmatpush.bf16.msra.mxu0 %v1115
    %1617 = vmatpush.bf16.msra.mxu0 %v1113
    %1618 = vmatpush.bf16.msra.mxu0 %v1111
    %1619 = vmatpush.bf16.msra.mxu0 %v1109
    %1620 = vmatpush.bf16.msra.mxu0 %v1107
    %1621 = vmatpush.bf16.msra.mxu0 %v1105
    %1622 = vmatmul.bf16.gmra.mxu0 %v288
    %v1623 = vpop.f32.mrf.mxu0
    %v1624 = vadd.f32 %v1611, %v1623
    %v1625 = vpop.f32.mrf.mxu0
    %1626 = vdwg.mxu0
    %1627 = vmatpush.bf16.msra.mxu0 %v1135
    %1628 = vmatpush.bf16.msra.mxu0 %v1133
    %1629 = vmatpush.bf16.msra.mxu0 %v1131
    %1630 = vmatpush.bf16.msra.mxu0 %v1129
    %1631 = vmatpush.bf16.msra.mxu0 %v1127
    %1632 = vmatpush.bf16.msra.mxu0 %v1125
    %1633 = vmatpush.bf16.msra.mxu0 %v1123
    %1634 = vmatpush.bf16.msra.mxu0 %v1121
    %1635 = vmatmul.bf16.gmra.mxu0 %v289
    %v1636 = vpop.f32.mrf.mxu0
    %v1637 = vadd.f32 %v1624, %v1636
    %v1638 = vpop.f32.mrf.mxu0
    %1639 = vdwg.mxu0
    %1640 = vmatpush.bf16.msra.mxu0 %v1151
    %1641 = vmatpush.bf16.msra.mxu0 %v1149
    %1642 = vmatpush.bf16.msra.mxu0 %v1147
    %1643 = vmatpush.bf16.msra.mxu0 %v1145
    %1644 = vmatpush.bf16.msra.mxu0 %v1143
    %1645 = vmatpush.bf16.msra.mxu0 %v1141
    %1646 = vmatpush.bf16.msra.mxu0 %v1139
    %1647 = vmatpush.bf16.msra.mxu0 %v1137
    %1648 = vmatmul.bf16.gmra.mxu0 %v290
    %v1649 = vpop.f32.mrf.mxu0
    %v1650 = vadd.f32 %v1637, %v1649
    %v1651 = vpop.f32.mrf.mxu0
    %1652 = vdwg.mxu0
    %1653 = vmatpush.bf16.msra.mxu0 %v1167
    %1654 = vmatpush.bf16.msra.mxu0 %v1165
    %1655 = vmatpush.bf16.msra.mxu0 %v1163
    %1656 = vmatpush.bf16.msra.mxu0 %v1161
    %1657 = vmatpush.bf16.msra.mxu0 %v1159
    %1658 = vmatpush.bf16.msra.mxu0 %v1157
    %1659 = vmatpush.bf16.msra.mxu0 %v1155
    %1660 = vmatpush.bf16.msra.mxu0 %v1153
    %1661 = vmatmul.bf16.gmra.mxu0 %v291
    %v1662 = vpop.f32.mrf.mxu0
    %v1663 = vadd.f32 %v1650, %v1662
    %v1664 = vpop.f32.mrf.mxu0
    %1665 = vdwg.mxu0
    %1666 = vmatpush.bf16.msra.mxu0 %v1183
    %1667 = vmatpush.bf16.msra.mxu0 %v1181
    %1668 = vmatpush.bf16.msra.mxu0 %v1179
    %1669 = vmatpush.bf16.msra.mxu0 %v1177
    %1670 = vmatpush.bf16.msra.mxu0 %v1175
    %1671 = vmatpush.bf16.msra.mxu0 %v1173
    %1672 = vmatpush.bf16.msra.mxu0 %v1171
    %1673 = vmatpush.bf16.msra.mxu0 %v1169
    %1674 = vmatmul.bf16.gmra.mxu0 %v292
    %v1675 = vpop.f32.mrf.mxu0
    %v1676 = vadd.f32 %v1663, %v1675
    %v1677 = vpop.f32.mrf.mxu0
    %1678 = vdwg.mxu0
    %1679 = vmatpush.bf16.msra.mxu0 %v1199
    %1680 = vmatpush.bf16.msra.mxu0 %v1197
    %1681 = vmatpush.bf16.msra.mxu0 %v1195
    %1682 = vmatpush.bf16.msra.mxu0 %v1193
    %1683 = vmatpush.bf16.msra.mxu0 %v1191
    %1684 = vmatpush.bf16.msra.mxu0 %v1189
    %1685 = vmatpush.bf16.msra.mxu0 %v1187
    %1686 = vmatpush.bf16.msra.mxu0 %v1185
    %1687 = vmatmul.bf16.gmra.mxu0 %v293
    %v1688 = vpop.f32.mrf.mxu0
    %v1689 = vadd.f32 %v1676, %v1688
    %v1690 = vpop.f32.mrf.mxu0
    %1691 = vdwg.mxu0
    %1692 = vmatpush.bf16.msra.mxu0 %v1215
    %1693 = vmatpush.bf16.msra.mxu0 %v1213
    %1694 = vmatpush.bf16.msra.mxu0 %v1211
    %1695 = vmatpush.bf16.msra.mxu0 %v1209
    %1696 = vmatpush.bf16.msra.mxu0 %v1207
    %1697 = vmatpush.bf16.msra.mxu0 %v1205
    %1698 = vmatpush.bf16.msra.mxu0 %v1203
    %1699 = vmatpush.bf16.msra.mxu0 %v1201
    %1700 = vmatmul.bf16.gmra.mxu0 %v294
    %v1701 = vpop.f32.mrf.mxu0
    %v1702 = vadd.f32 %v1689, %v1701
    %v1703 = vpop.f32.mrf.mxu0
    %1704 = vdwg.mxu0
    %1705 = vmatpush.bf16.msra.mxu0 %v1231
    %1706 = vmatpush.bf16.msra.mxu0 %v1229
    %1707 = vmatpush.bf16.msra.mxu0 %v1227
    %1708 = vmatpush.bf16.msra.mxu0 %v1225
    %1709 = vmatpush.bf16.msra.mxu0 %v1223
    %1710 = vmatpush.bf16.msra.mxu0 %v1221
    %1711 = vmatpush.bf16.msra.mxu0 %v1219
    %1712 = vmatpush.bf16.msra.mxu0 %v1217
    %1713 = vmatmul.bf16.gmra.mxu0 %v297
    %v1714 = vpop.f32.mrf.mxu0
    %v1715 = vadd.f32 %v1702, %v1714
    %v1716 = vpop.f32.mrf.mxu0
    %1717 = vdwg.mxu0
    %1718 = vmatpush.bf16.msra.mxu0 %v1247
    %1719 = vmatpush.bf16.msra.mxu0 %v1245
    %1720 = vmatpush.bf16.msra.mxu0 %v1243
    %1721 = vmatpush.bf16.msra.mxu0 %v1241
    %1722 = vmatpush.bf16.msra.mxu0 %v1239
    %1723 = vmatpush.bf16.msra.mxu0 %v1237
    %1724 = vmatpush.bf16.msra.mxu0 %v1235
    %1725 = vmatpush.bf16.msra.mxu0 %v1233
    %1726 = vmatmul.bf16.gmra.mxu0 %v298
    %v1727 = vpop.f32.mrf.mxu0
    %v1728 = vadd.f32 %v1715, %v1727
    %v1729 = vpop.f32.mrf.mxu0
    %1730 = vdwg.mxu0
    %1731 = vmatpush.bf16.msra.mxu0 %v1263
    %1732 = vmatpush.bf16.msra.mxu0 %v1261
    %1733 = vmatpush.bf16.msra.mxu0 %v1259
    %1734 = vmatpush.bf16.msra.mxu0 %v1257
    %1735 = vmatpush.bf16.msra.mxu0 %v1255
    %1736 = vmatpush.bf16.msra.mxu0 %v1253
    %1737 = vmatpush.bf16.msra.mxu0 %v1251
    %1738 = vmatpush.bf16.msra.mxu0 %v1249
    %1739 = vmatmul.bf16.gmra.mxu0 %v299
    %v1740 = vpop.f32.mrf.mxu0
    %v1741 = vadd.f32 %v1728, %v1740
    %v1742 = vpop.f32.mrf.mxu0
    %1743 = vdwg.mxu0
    %1744 = vmatpush.bf16.msra.mxu0 %v1279
    %1745 = vmatpush.bf16.msra.mxu0 %v1277
    %1746 = vmatpush.bf16.msra.mxu0 %v1275
    %1747 = vmatpush.bf16.msra.mxu0 %v1273
    %1748 = vmatpush.bf16.msra.mxu0 %v1271
    %1749 = vmatpush.bf16.msra.mxu0 %v1269
    %1750 = vmatpush.bf16.msra.mxu0 %v1267
    %1751 = vmatpush.bf16.msra.mxu0 %v1265
    %1752 = vmatmul.bf16.gmra.mxu0 %v300
    %v1753 = vpop.f32.mrf.mxu0
    %v1754 = vadd.f32 %v1741, %v1753
    %v1755 = vpop.f32.mrf.mxu0
    %1756 = vdwg.mxu0
    %1757 = vmatpush.bf16.msra.mxu0 %v1295
    %1758 = vmatpush.bf16.msra.mxu0 %v1293
    %1759 = vmatpush.bf16.msra.mxu0 %v1291
    %1760 = vmatpush.bf16.msra.mxu0 %v1289
    %1761 = vmatpush.bf16.msra.mxu0 %v1287
    %1762 = vmatpush.bf16.msra.mxu0 %v1285
    %1763 = vmatpush.bf16.msra.mxu0 %v1283
    %1764 = vmatpush.bf16.msra.mxu0 %v1281
    %1765 = vmatmul.bf16.gmra.mxu0 %v301
    %v1766 = vpop.f32.mrf.mxu0
    %v1767 = vadd.f32 %v1754, %v1766
    %v1768 = vpop.f32.mrf.mxu0
    %1769 = vdwg.mxu0
    %1770 = vmatpush.bf16.msra.mxu0 %v1311
    %1771 = vmatpush.bf16.msra.mxu0 %v1309
    %1772 = vmatpush.bf16.msra.mxu0 %v1307
    %1773 = vmatpush.bf16.msra.mxu0 %v1305
    %1774 = vmatpush.bf16.msra.mxu0 %v1303
    %1775 = vmatpush.bf16.msra.mxu0 %v1301
    %1776 = vmatpush.bf16.msra.mxu0 %v1299
    %1777 = vmatpush.bf16.msra.mxu0 %v1297
    %1778 = vmatmul.bf16.gmra.mxu0 %v302
    %v1779 = vpop.f32.mrf.mxu0
    %v1780 = vadd.f32 %v1767, %v1779
    %v1781 = vpop.f32.mrf.mxu0
    %1782 = vdwg.mxu0
    %1783 = vmatpush.bf16.msra.mxu0 %v1327
    %1784 = vmatpush.bf16.msra.mxu0 %v1325
    %1785 = vmatpush.bf16.msra.mxu0 %v1323
    %1786 = vmatpush.bf16.msra.mxu0 %v1321
    %1787 = vmatpush.bf16.msra.mxu0 %v1319
    %1788 = vmatpush.bf16.msra.mxu0 %v1317
    %1789 = vmatpush.bf16.msra.mxu0 %v1315
    %1790 = vmatpush.bf16.msra.mxu0 %v1313
    %1791 = vmatmul.bf16.gmra.mxu0 %v303
    %v1792 = vpop.f32.mrf.mxu0
    %v1793 = vadd.f32 %v1780, %v1792
    %v1794 = vpop.f32.mrf.mxu0
    %1795 = vdwg.mxu0
    %1796 = vmatpush.bf16.msra.mxu0 %v1343
    %1797 = vmatpush.bf16.msra.mxu0 %v1341
    %1798 = vmatpush.bf16.msra.mxu0 %v1339
    %1799 = vmatpush.bf16.msra.mxu0 %v1337
    %1800 = vmatpush.bf16.msra.mxu0 %v1335
    %1801 = vmatpush.bf16.msra.mxu0 %v1333
    %1802 = vmatpush.bf16.msra.mxu0 %v1331
    %1803 = vmatpush.bf16.msra.mxu0 %v1329
    %1804 = vmatmul.bf16.gmra.mxu0 %v304
    %v1805 = vpop.f32.mrf.mxu0
    %v1806 = vadd.f32 %v1793, %v1805
    %v1807 = vpop.f32.mrf.mxu0
    %1808 = vdwg.mxu0
    %1809 = vmatpush.bf16.msra.mxu0 %v1104
    %1810 = vmatpush.bf16.msra.mxu0 %v1102
    %1811 = vmatpush.bf16.msra.mxu0 %v1100
    %1812 = vmatpush.bf16.msra.mxu0 %v1098
    %1813 = vmatpush.bf16.msra.mxu0 %v1096
    %1814 = vmatpush.bf16.msra.mxu0 %v1094
    %1815 = vmatpush.bf16.msra.mxu0 %v1092
    %1816 = vmatpush.bf16.msra.mxu0 %v1090
    %1817 = vmatmul.bf16.gmra.mxu0 %v287
    %v1818 = vpop.f32.mrf.mxu0
    %v1819 = vadd.f32 %v282, %v1818
    %v1820 = vpop.f32.mrf.mxu0
    %1821 = vdwg.mxu0
    %1822 = vmatpush.bf16.msra.mxu0 %v1120
    %1823 = vmatpush.bf16.msra.mxu0 %v1118
    %1824 = vmatpush.bf16.msra.mxu0 %v1116
    %1825 = vmatpush.bf16.msra.mxu0 %v1114
    %1826 = vmatpush.bf16.msra.mxu0 %v1112
    %1827 = vmatpush.bf16.msra.mxu0 %v1110
    %1828 = vmatpush.bf16.msra.mxu0 %v1108
    %1829 = vmatpush.bf16.msra.mxu0 %v1106
    %1830 = vmatmul.bf16.gmra.mxu0 %v288
    %v1831 = vpop.f32.mrf.mxu0
    %v1832 = vadd.f32 %v1819, %v1831
    %v1833 = vpop.f32.mrf.mxu0
    %1834 = vdwg.mxu0
    %1835 = vmatpush.bf16.msra.mxu0 %v1136
    %1836 = vmatpush.bf16.msra.mxu0 %v1134
    %1837 = vmatpush.bf16.msra.mxu0 %v1132
    %1838 = vmatpush.bf16.msra.mxu0 %v1130
    %1839 = vmatpush.bf16.msra.mxu0 %v1128
    %1840 = vmatpush.bf16.msra.mxu0 %v1126
    %1841 = vmatpush.bf16.msra.mxu0 %v1124
    %1842 = vmatpush.bf16.msra.mxu0 %v1122
    %1843 = vmatmul.bf16.gmra.mxu0 %v289
    %v1844 = vpop.f32.mrf.mxu0
    %v1845 = vadd.f32 %v1832, %v1844
    %v1846 = vpop.f32.mrf.mxu0
    %1847 = vdwg.mxu0
    %1848 = vmatpush.bf16.msra.mxu0 %v1152
    %1849 = vmatpush.bf16.msra.mxu0 %v1150
    %1850 = vmatpush.bf16.msra.mxu0 %v1148
    %1851 = vmatpush.bf16.msra.mxu0 %v1146
    %1852 = vmatpush.bf16.msra.mxu0 %v1144
    %1853 = vmatpush.bf16.msra.mxu0 %v1142
    %1854 = vmatpush.bf16.msra.mxu0 %v1140
    %1855 = vmatpush.bf16.msra.mxu0 %v1138
    %1856 = vmatmul.bf16.gmra.mxu0 %v290
    %v1857 = vpop.f32.mrf.mxu0
    %v1858 = vadd.f32 %v1845, %v1857
    %v1859 = vpop.f32.mrf.mxu0
    %1860 = vdwg.mxu0
    %1861 = vmatpush.bf16.msra.mxu0 %v1168
    %1862 = vmatpush.bf16.msra.mxu0 %v1166
    %1863 = vmatpush.bf16.msra.mxu0 %v1164
    %1864 = vmatpush.bf16.msra.mxu0 %v1162
    %1865 = vmatpush.bf16.msra.mxu0 %v1160
    %1866 = vmatpush.bf16.msra.mxu0 %v1158
    %1867 = vmatpush.bf16.msra.mxu0 %v1156
    %1868 = vmatpush.bf16.msra.mxu0 %v1154
    %1869 = vmatmul.bf16.gmra.mxu0 %v291
    %v1870 = vpop.f32.mrf.mxu0
    %v1871 = vadd.f32 %v1858, %v1870
    %v1872 = vpop.f32.mrf.mxu0
    %1873 = vdwg.mxu0
    %1874 = vmatpush.bf16.msra.mxu0 %v1184
    %1875 = vmatpush.bf16.msra.mxu0 %v1182
    %1876 = vmatpush.bf16.msra.mxu0 %v1180
    %1877 = vmatpush.bf16.msra.mxu0 %v1178
    %1878 = vmatpush.bf16.msra.mxu0 %v1176
    %1879 = vmatpush.bf16.msra.mxu0 %v1174
    %1880 = vmatpush.bf16.msra.mxu0 %v1172
    %1881 = vmatpush.bf16.msra.mxu0 %v1170
    %1882 = vmatmul.bf16.gmra.mxu0 %v292
    %v1883 = vpop.f32.mrf.mxu0
    %v1884 = vadd.f32 %v1871, %v1883
    %v1885 = vpop.f32.mrf.mxu0
    %1886 = vdwg.mxu0
    %1887 = vmatpush.bf16.msra.mxu0 %v1200
    %1888 = vmatpush.bf16.msra.mxu0 %v1198
    %1889 = vmatpush.bf16.msra.mxu0 %v1196
    %1890 = vmatpush.bf16.msra.mxu0 %v1194
    %1891 = vmatpush.bf16.msra.mxu0 %v1192
    %1892 = vmatpush.bf16.msra.mxu0 %v1190
    %1893 = vmatpush.bf16.msra.mxu0 %v1188
    %1894 = vmatpush.bf16.msra.mxu0 %v1186
    %1895 = vmatmul.bf16.gmra.mxu0 %v293
    %v1896 = vpop.f32.mrf.mxu0
    %v1897 = vadd.f32 %v1884, %v1896
    %v1898 = vpop.f32.mrf.mxu0
    %1899 = vdwg.mxu0
    %1900 = vmatpush.bf16.msra.mxu0 %v1216
    %1901 = vmatpush.bf16.msra.mxu0 %v1214
    %1902 = vmatpush.bf16.msra.mxu0 %v1212
    %1903 = vmatpush.bf16.msra.mxu0 %v1210
    %1904 = vmatpush.bf16.msra.mxu0 %v1208
    %1905 = vmatpush.bf16.msra.mxu0 %v1206
    %1906 = vmatpush.bf16.msra.mxu0 %v1204
    %1907 = vmatpush.bf16.msra.mxu0 %v1202
    %1908 = vmatmul.bf16.gmra.mxu0 %v294
    %v1909 = vpop.f32.mrf.mxu0
    %v1910 = vadd.f32 %v1897, %v1909
    %v1911 = vpop.f32.mrf.mxu0
    %1912 = vdwg.mxu0
    %1913 = vmatpush.bf16.msra.mxu0 %v1232
    %1914 = vmatpush.bf16.msra.mxu0 %v1230
    %1915 = vmatpush.bf16.msra.mxu0 %v1228
    %1916 = vmatpush.bf16.msra.mxu0 %v1226
    %1917 = vmatpush.bf16.msra.mxu0 %v1224
    %1918 = vmatpush.bf16.msra.mxu0 %v1222
    %1919 = vmatpush.bf16.msra.mxu0 %v1220
    %1920 = vmatpush.bf16.msra.mxu0 %v1218
    %1921 = vmatmul.bf16.gmra.mxu0 %v297
    %v1922 = vpop.f32.mrf.mxu0
    %v1923 = vadd.f32 %v1910, %v1922
    %v1924 = vpop.f32.mrf.mxu0
    %1925 = vdwg.mxu0
    %1926 = vmatpush.bf16.msra.mxu0 %v1248
    %1927 = vmatpush.bf16.msra.mxu0 %v1246
    %1928 = vmatpush.bf16.msra.mxu0 %v1244
    %1929 = vmatpush.bf16.msra.mxu0 %v1242
    %1930 = vmatpush.bf16.msra.mxu0 %v1240
    %1931 = vmatpush.bf16.msra.mxu0 %v1238
    %1932 = vmatpush.bf16.msra.mxu0 %v1236
    %1933 = vmatpush.bf16.msra.mxu0 %v1234
    %1934 = vmatmul.bf16.gmra.mxu0 %v298
    %v1935 = vpop.f32.mrf.mxu0
    %v1936 = vadd.f32 %v1923, %v1935
    %v1937 = vpop.f32.mrf.mxu0
    %1938 = vdwg.mxu0
    %1939 = vmatpush.bf16.msra.mxu0 %v1264
    %1940 = vmatpush.bf16.msra.mxu0 %v1262
    %1941 = vmatpush.bf16.msra.mxu0 %v1260
    %1942 = vmatpush.bf16.msra.mxu0 %v1258
    %1943 = vmatpush.bf16.msra.mxu0 %v1256
    %1944 = vmatpush.bf16.msra.mxu0 %v1254
    %1945 = vmatpush.bf16.msra.mxu0 %v1252
    %1946 = vmatpush.bf16.msra.mxu0 %v1250
    %1947 = vmatmul.bf16.gmra.mxu0 %v299
    %v1948 = vpop.f32.mrf.mxu0
    %v1949 = vadd.f32 %v1936, %v1948
    %v1950 = vpop.f32.mrf.mxu0
    %1951 = vdwg.mxu0
    %1952 = vmatpush.bf16.msra.mxu0 %v1280
    %1953 = vmatpush.bf16.msra.mxu0 %v1278
    %1954 = vmatpush.bf16.msra.mxu0 %v1276
    %1955 = vmatpush.bf16.msra.mxu0 %v1274
    %1956 = vmatpush.bf16.msra.mxu0 %v1272
    %1957 = vmatpush.bf16.msra.mxu0 %v1270
    %1958 = vmatpush.bf16.msra.mxu0 %v1268
    %1959 = vmatpush.bf16.msra.mxu0 %v1266
    %1960 = vmatmul.bf16.gmra.mxu0 %v300
    %v1961 = vpop.f32.mrf.mxu0
    %v1962 = vadd.f32 %v1949, %v1961
    %v1963 = vpop.f32.mrf.mxu0
    %1964 = vdwg.mxu0
    %1965 = vmatpush.bf16.msra.mxu0 %v1296
    %1966 = vmatpush.bf16.msra.mxu0 %v1294
    %1967 = vmatpush.bf16.msra.mxu0 %v1292
    %1968 = vmatpush.bf16.msra.mxu0 %v1290
    %1969 = vmatpush.bf16.msra.mxu0 %v1288
    %1970 = vmatpush.bf16.msra.mxu0 %v1286
    %1971 = vmatpush.bf16.msra.mxu0 %v1284
    %1972 = vmatpush.bf16.msra.mxu0 %v1282
    %1973 = vmatmul.bf16.gmra.mxu0 %v301
    %v1974 = vpop.f32.mrf.mxu0
    %v1975 = vadd.f32 %v1962, %v1974
    %v1976 = vpop.f32.mrf.mxu0
    %1977 = vdwg.mxu0
    %1978 = vmatpush.bf16.msra.mxu0 %v1312
    %1979 = vmatpush.bf16.msra.mxu0 %v1310
    %1980 = vmatpush.bf16.msra.mxu0 %v1308
    %1981 = vmatpush.bf16.msra.mxu0 %v1306
    %1982 = vmatpush.bf16.msra.mxu0 %v1304
    %1983 = vmatpush.bf16.msra.mxu0 %v1302
    %1984 = vmatpush.bf16.msra.mxu0 %v1300
    %1985 = vmatpush.bf16.msra.mxu0 %v1298
    %1986 = vmatmul.bf16.gmra.mxu0 %v302
    %v1987 = vpop.f32.mrf.mxu0
    %v1988 = vadd.f32 %v1975, %v1987
    %v1989 = vpop.f32.mrf.mxu0
    %1990 = vdwg.mxu0
    %1991 = vmatpush.bf16.msra.mxu0 %v1328
    %1992 = vmatpush.bf16.msra.mxu0 %v1326
    %1993 = vmatpush.bf16.msra.mxu0 %v1324
    %1994 = vmatpush.bf16.msra.mxu0 %v1322
    %1995 = vmatpush.bf16.msra.mxu0 %v1320
    %1996 = vmatpush.bf16.msra.mxu0 %v1318
    %1997 = vmatpush.bf16.msra.mxu0 %v1316
    %1998 = vmatpush.bf16.msra.mxu0 %v1314
    %1999 = vmatmul.bf16.gmra.mxu0 %v303
    %v2000 = vpop.f32.mrf.mxu0
    %v2001 = vadd.f32 %v1988, %v2000
    %v2002 = vpop.f32.mrf.mxu0
    %2003 = vdwg.mxu0
    %2004 = vmatpush.bf16.msra.mxu0 %v1344
    %2005 = vmatpush.bf16.msra.mxu0 %v1342
    %2006 = vmatpush.bf16.msra.mxu0 %v1340
    %2007 = vmatpush.bf16.msra.mxu0 %v1338
    %2008 = vmatpush.bf16.msra.mxu0 %v1336
    %2009 = vmatpush.bf16.msra.mxu0 %v1334
    %2010 = vmatpush.bf16.msra.mxu0 %v1332
    %2011 = vmatpush.bf16.msra.mxu0 %v1330
    %2012 = vmatmul.bf16.gmra.mxu0 %v304
    %v2013 = vpop.f32.mrf.mxu0
    %v2014 = vadd.f32 %v2001, %v2013
    %v2015 = vpop.f32.mrf.mxu0
    %2016 = vdwg.mxu0
    %v2017 = vmax.f32 %v1806, 0.0
    %v2018 = vmax.f32 %v2014, 0.0
    %v2019 = vld [vmem:[%s3] sm:$0xff]
    %v2020 = vld [vmem:[%s3 + $0x8] sm:$0xff]
    %v2021 = vld [vmem:[%s3 + $0x10] sm:$0xff]
    %v2022 = vld [vmem:[%s3 + $0x18] sm:$0xff]
    %v2023 = vld [vmem:[%s3 + $0x20] sm:$0xff]
    %v2024 = vld [vmem:[%s3 + $0x28] sm:$0xff]
    %v2025 = vld [vmem:[%s3 + $0x30] sm:$0xff]
    %v2026 = vld [vmem:[%s3 + $0x38] sm:$0xff]
    %v2027 = vld [vmem:[%s3 + $0x40] sm:$0xff]
    %v2028 = vld [vmem:[%s3 + $0x48] sm:$0xff]
    %v2029 = vld [vmem:[%s3 + $0x50] sm:$0xff]
    %v2030 = vld [vmem:[%s3 + $0x58] sm:$0xff]
    %v2031 = vld [vmem:[%s3 + $0x60] sm:$0xff]
    %v2032 = vld [vmem:[%s3 + $0x68] sm:$0xff]
    %v2033 = vld [vmem:[%s3 + $0x70] sm:$0xff]
    %v2034 = vld [vmem:[%s3 + $0x78] sm:$0xff]
    %v2035 = vld [vmem:[%s3 + $0x80] sm:$0xff]
    %v2036 = vld [vmem:[%s3 + $0x88] sm:$0xff]
    %v2037 = vld [vmem:[%s3 + $0x90] sm:$0xff]
    %v2038 = vld [vmem:[%s3 + $0x98] sm:$0xff]
    %v2039 = vld [vmem:[%s3 + $0xa0] sm:$0xff]
    %v2040 = vld [vmem:[%s3 + $0xa8] sm:$0xff]
    %v2041 = vld [vmem:[%s3 + $0xb0] sm:$0xff]
    %v2042 = vld [vmem:[%s3 + $0xb8] sm:$0xff]
    %v2043 = vld [vmem:[%s3 + $0xc0] sm:$0xff]
    %v2044 = vld [vmem:[%s3 + $0xc8] sm:$0xff]
    %v2045 = vld [vmem:[%s3 + $0xd0] sm:$0xff]
    %v2046 = vld [vmem:[%s3 + $0xd8] sm:$0xff]
    %v2047 = vld [vmem:[%s3 + $0xe0] sm:$0xff]
    %v2048 = vld [vmem:[%s3 + $0xe8] sm:$0xff]
    %v2049 = vld [vmem:[%s3 + $0xf0] sm:$0xff]
    %v2050 = vld [vmem:[%s3 + $0xf8] sm:$0xff]
    %v2051 = vpack.c.bf16 %v2017, %v2017
    %v2052 = vpack.c.bf16 %v2018, %v2018
    %v2053 = vld [vmem:[%s0 + $0x10] sm:$0xff]
    %v2054 = vld [vmem:[%s0 + $0x18] sm:$0xff]
    %2056 = vst [vmem:[#allocation1] ss:$9 sm:$0xff] %v2053
    %v2057 = vld [vmem:[#allocation1] sm:$0xff]
    %v2058 = vld [vmem:[#allocation1 + $0x9] sm:$0xff]
    %v2059 = vld [vmem:[#allocation1 + $0x12] sm:$0xff]
    %v2060 = vld [vmem:[#allocation1 + $0x1b] sm:$0xff]
    %v2061 = vld [vmem:[#allocation1 + $0x24] sm:$0xff]
    %v2062 = vld [vmem:[#allocation1 + $0x2d] sm:$0xff]
    %v2063 = vld [vmem:[#allocation1 + $0x36] sm:$0xff]
    %v2064 = vld [vmem:[#allocation1 + $0x3f] sm:$0xff]
    %2066 = vst [vmem:[#allocation1] ss:$9 sm:$0xff] %v2054
    %v2067 = vld [vmem:[#allocation1] sm:$0xff]
    %v2068 = vld [vmem:[#allocation1 + $0x9] sm:$0xff]
    %v2069 = vld [vmem:[#allocation1 + $0x12] sm:$0xff]
    %v2070 = vld [vmem:[#allocation1 + $0x1b] sm:$0xff]
    %v2071 = vld [vmem:[#allocation1 + $0x24] sm:$0xff]
    %v2072 = vld [vmem:[#allocation1 + $0x2d] sm:$0xff]
    %v2073 = vld [vmem:[#allocation1 + $0x36] sm:$0xff]
    %v2074 = vld [vmem:[#allocation1 + $0x3f] sm:$0xff]
    %2091 = vmatpush.bf16.msra.mxu0 %v1103
    %2092 = vmatpush.bf16.msra.mxu0 %v1101
    %2093 = vmatpush.bf16.msra.mxu0 %v1099
    %2094 = vmatpush.bf16.msra.mxu0 %v1097
    %2095 = vmatpush.bf16.msra.mxu0 %v1095
    %2096 = vmatpush.bf16.msra.mxu0 %v1093
    %2097 = vmatpush.bf16.msra.mxu0 %v1091
    %2098 = vmatpush.bf16.msra.mxu0 %v1089
    %2099 = vmatmul.bf16.gmra.mxu0 %v2057
    %v2100 = vpop.f32.mrf.mxu0
    %v2101 = vadd.f32 %v281, %v2100
    %v2102 = vpop.f32.mrf.mxu0
    %2103 = vdwg.mxu0
    %2104 = vmatpush.bf16.msra.mxu0 %v1119
    %2105 = vmatpush.bf16.msra.mxu0 %v1117
    %2106 = vmatpush.bf16.msra.mxu0 %v1115
    %2107 = vmatpush.bf16.msra.mxu0 %v1113
    %2108 = vmatpush.bf16.msra.mxu0 %v1111
    %2109 = vmatpush.bf16.msra.mxu0 %v1109
    %2110 = vmatpush.bf16.msra.mxu0 %v1107
    %2111 = vmatpush.bf16.msra.mxu0 %v1105
    %2112 = vmatmul.bf16.gmra.mxu0 %v2058
    %v2113 = vpop.f32.mrf.mxu0
    %v2114 = vadd.f32 %v2101, %v2113
    %v2115 = vpop.f32.mrf.mxu0
    %2116 = vdwg.mxu0
    %2117 = vmatpush.bf16.msra.mxu0 %v1135
    %2118 = vmatpush.bf16.msra.mxu0 %v1133
    %2119 = vmatpush.bf16.msra.mxu0 %v1131
    %2120 = vmatpush.bf16.msra.mxu0 %v1129
    %2121 = vmatpush.bf16.msra.mxu0 %v1127
    %2122 = vmatpush.bf16.msra.mxu0 %v1125
    %2123 = vmatpush.bf16.msra.mxu0 %v1123
    %2124 = vmatpush.bf16.msra.mxu0 %v1121
    %2125 = vmatmul.bf16.gmra.mxu0 %v2059
    %v2126 = vpop.f32.mrf.mxu0
    %v2127 = vadd.f32 %v2114, %v2126
    %v2128 = vpop.f32.mrf.mxu0
    %2129 = vdwg.mxu0
    %2130 = vmatpush.bf16.msra.mxu0 %v1151
    %2131 = vmatpush.bf16.msra.mxu0 %v1149
    %2132 = vmatpush.bf16.msra.mxu0 %v1147
    %2133 = vmatpush.bf16.msra.mxu0 %v1145
    %2134 = vmatpush.bf16.msra.mxu0 %v1143
    %2135 = vmatpush.bf16.msra.mxu0 %v1141
    %2136 = vmatpush.bf16.msra.mxu0 %v1139
    %2137 = vmatpush.bf16.msra.mxu0 %v1137
    %2138 = vmatmul.bf16.gmra.mxu0 %v2060
    %v2139 = vpop.f32.mrf.mxu0
    %v2140 = vadd.f32 %v2127, %v2139
    %v2141 = vpop.f32.mrf.mxu0
    %2142 = vdwg.mxu0
    %2143 = vmatpush.bf16.msra.mxu0 %v1167
    %2144 = vmatpush.bf16.msra.mxu0 %v1165
    %2145 = vmatpush.bf16.msra.mxu0 %v1163
    %2146 = vmatpush.bf16.msra.mxu0 %v1161
    %2147 = vmatpush.bf16.msra.mxu0 %v1159
    %2148 = vmatpush.bf16.msra.mxu0 %v1157
    %2149 = vmatpush.bf16.msra.mxu0 %v1155
    %2150 = vmatpush.bf16.msra.mxu0 %v1153
    %2151 = vmatmul.bf16.gmra.mxu0 %v2061
    %v2152 = vpop.f32.mrf.mxu0
    %v2153 = vadd.f32 %v2140, %v2152
    %v2154 = vpop.f32.mrf.mxu0
    %2155 = vdwg.mxu0
    %2156 = vmatpush.bf16.msra.mxu0 %v1183
    %2157 = vmatpush.bf16.msra.mxu0 %v1181
    %2158 = vmatpush.bf16.msra.mxu0 %v1179
    %2159 = vmatpush.bf16.msra.mxu0 %v1177
    %2160 = vmatpush.bf16.msra.mxu0 %v1175
    %2161 = vmatpush.bf16.msra.mxu0 %v1173
    %2162 = vmatpush.bf16.msra.mxu0 %v1171
    %2163 = vmatpush.bf16.msra.mxu0 %v1169
    %2164 = vmatmul.bf16.gmra.mxu0 %v2062
    %v2165 = vpop.f32.mrf.mxu0
    %v2166 = vadd.f32 %v2153, %v2165
    %v2167 = vpop.f32.mrf.mxu0
    %2168 = vdwg.mxu0
    %2169 = vmatpush.bf16.msra.mxu0 %v1199
    %2170 = vmatpush.bf16.msra.mxu0 %v1197
    %2171 = vmatpush.bf16.msra.mxu0 %v1195
    %2172 = vmatpush.bf16.msra.mxu0 %v1193
    %2173 = vmatpush.bf16.msra.mxu0 %v1191
    %2174 = vmatpush.bf16.msra.mxu0 %v1189
    %2175 = vmatpush.bf16.msra.mxu0 %v1187
    %2176 = vmatpush.bf16.msra.mxu0 %v1185
    %2177 = vmatmul.bf16.gmra.mxu0 %v2063
    %v2178 = vpop.f32.mrf.mxu0
    %v2179 = vadd.f32 %v2166, %v2178
    %v2180 = vpop.f32.mrf.mxu0
    %2181 = vdwg.mxu0
    %2182 = vmatpush.bf16.msra.mxu0 %v1215
    %2183 = vmatpush.bf16.msra.mxu0 %v1213
    %2184 = vmatpush.bf16.msra.mxu0 %v1211
    %2185 = vmatpush.bf16.msra.mxu0 %v1209
    %2186 = vmatpush.bf16.msra.mxu0 %v1207
    %2187 = vmatpush.bf16.msra.mxu0 %v1205
    %2188 = vmatpush.bf16.msra.mxu0 %v1203
    %2189 = vmatpush.bf16.msra.mxu0 %v1201
    %2190 = vmatmul.bf16.gmra.mxu0 %v2064
    %v2191 = vpop.f32.mrf.mxu0
    %v2192 = vadd.f32 %v2179, %v2191
    %v2193 = vpop.f32.mrf.mxu0
    %2194 = vdwg.mxu0
    %2195 = vmatpush.bf16.msra.mxu0 %v1231
    %2196 = vmatpush.bf16.msra.mxu0 %v1229
    %2197 = vmatpush.bf16.msra.mxu0 %v1227
    %2198 = vmatpush.bf16.msra.mxu0 %v1225
    %2199 = vmatpush.bf16.msra.mxu0 %v1223
    %2200 = vmatpush.bf16.msra.mxu0 %v1221
    %2201 = vmatpush.bf16.msra.mxu0 %v1219
    %2202 = vmatpush.bf16.msra.mxu0 %v1217
    %2203 = vmatmul.bf16.gmra.mxu0 %v2067
    %v2204 = vpop.f32.mrf.mxu0
    %v2205 = vadd.f32 %v2192, %v2204
    %v2206 = vpop.f32.mrf.mxu0
    %2207 = vdwg.mxu0
    %2208 = vmatpush.bf16.msra.mxu0 %v1247
    %2209 = vmatpush.bf16.msra.mxu0 %v1245
    %2210 = vmatpush.bf16.msra.mxu0 %v1243
    %2211 = vmatpush.bf16.msra.mxu0 %v1241
    %2212 = vmatpush.bf16.msra.mxu0 %v1239
    %2213 = vmatpush.bf16.msra.mxu0 %v1237
    %2214 = vmatpush.bf16.msra.mxu0 %v1235
    %2215 = vmatpush.bf16.msra.mxu0 %v1233
    %2216 = vmatmul.bf16.gmra.mxu0 %v2068
    %v2217 = vpop.f32.mrf.mxu0
    %v2218 = vadd.f32 %v2205, %v2217
    %v2219 = vpop.f32.mrf.mxu0
    %2220 = vdwg.mxu0
    %2221 = vmatpush.bf16.msra.mxu0 %v1263
    %2222 = vmatpush.bf16.msra.mxu0 %v1261
    %2223 = vmatpush.bf16.msra.mxu0 %v1259
    %2224 = vmatpush.bf16.msra.mxu0 %v1257
    %2225 = vmatpush.bf16.msra.mxu0 %v1255
    %2226 = vmatpush.bf16.msra.mxu0 %v1253
    %2227 = vmatpush.bf16.msra.mxu0 %v1251
    %2228 = vmatpush.bf16.msra.mxu0 %v1249
    %2229 = vmatmul.bf16.gmra.mxu0 %v2069
    %v2230 = vpop.f32.mrf.mxu0
    %v2231 = vadd.f32 %v2218, %v2230
    %v2232 = vpop.f32.mrf.mxu0
    %2233 = vdwg.mxu0
    %2234 = vmatpush.bf16.msra.mxu0 %v1279
    %2235 = vmatpush.bf16.msra.mxu0 %v1277
    %2236 = vmatpush.bf16.msra.mxu0 %v1275
    %2237 = vmatpush.bf16.msra.mxu0 %v1273
    %2238 = vmatpush.bf16.msra.mxu0 %v1271
    %2239 = vmatpush.bf16.msra.mxu0 %v1269
    %2240 = vmatpush.bf16.msra.mxu0 %v1267
    %2241 = vmatpush.bf16.msra.mxu0 %v1265
    %2242 = vmatmul.bf16.gmra.mxu0 %v2070
    %v2243 = vpop.f32.mrf.mxu0
    %v2244 = vadd.f32 %v2231, %v2243
    %v2245 = vpop.f32.mrf.mxu0
    %2246 = vdwg.mxu0
    %2247 = vmatpush.bf16.msra.mxu0 %v1295
    %2248 = vmatpush.bf16.msra.mxu0 %v1293
    %2249 = vmatpush.bf16.msra.mxu0 %v1291
    %2250 = vmatpush.bf16.msra.mxu0 %v1289
    %2251 = vmatpush.bf16.msra.mxu0 %v1287
    %2252 = vmatpush.bf16.msra.mxu0 %v1285
    %2253 = vmatpush.bf16.msra.mxu0 %v1283
    %2254 = vmatpush.bf16.msra.mxu0 %v1281
    %2255 = vmatmul.bf16.gmra.mxu0 %v2071
    %v2256 = vpop.f32.mrf.mxu0
    %v2257 = vadd.f32 %v2244, %v2256
    %v2258 = vpop.f32.mrf.mxu0
    %2259 = vdwg.mxu0
    %2260 = vmatpush.bf16.msra.mxu0 %v1311
    %2261 = vmatpush.bf16.msra.mxu0 %v1309
    %2262 = vmatpush.bf16.msra.mxu0 %v1307
    %2263 = vmatpush.bf16.msra.mxu0 %v1305
    %2264 = vmatpush.bf16.msra.mxu0 %v1303
    %2265 = vmatpush.bf16.msra.mxu0 %v1301
    %2266 = vmatpush.bf16.msra.mxu0 %v1299
    %2267 = vmatpush.bf16.msra.mxu0 %v1297
    %2268 = vmatmul.bf16.gmra.mxu0 %v2072
    %v2269 = vpop.f32.mrf.mxu0
    %v2270 = vadd.f32 %v2257, %v2269
    %v2271 = vpop.f32.mrf.mxu0
    %2272 = vdwg.mxu0
    %2273 = vmatpush.bf16.msra.mxu0 %v1327
    %2274 = vmatpush.bf16.msra.mxu0 %v1325
    %2275 = vmatpush.bf16.msra.mxu0 %v1323
    %2276 = vmatpush.bf16.msra.mxu0 %v1321
    %2277 = vmatpush.bf16.msra.mxu0 %v1319
    %2278 = vmatpush.bf16.msra.mxu0 %v1317
    %2279 = vmatpush.bf16.msra.mxu0 %v1315
    %2280 = vmatpush.bf16.msra.mxu0 %v1313
    %2281 = vmatmul.bf16.gmra.mxu0 %v2073
    %v2282 = vpop.f32.mrf.mxu0
    %v2283 = vadd.f32 %v2270, %v2282
    %v2284 = vpop.f32.mrf.mxu0
    %2285 = vdwg.mxu0
    %2286 = vmatpush.bf16.msra.mxu0 %v1343
    %2287 = vmatpush.bf16.msra.mxu0 %v1341
    %2288 = vmatpush.bf16.msra.mxu0 %v1339
    %2289 = vmatpush.bf16.msra.mxu0 %v1337
    %2290 = vmatpush.bf16.msra.mxu0 %v1335
    %2291 = vmatpush.bf16.msra.mxu0 %v1333
    %2292 = vmatpush.bf16.msra.mxu0 %v1331
    %2293 = vmatpush.bf16.msra.mxu0 %v1329
    %2294 = vmatmul.bf16.gmra.mxu0 %v2074
    %v2295 = vpop.f32.mrf.mxu0
    %v2296 = vadd.f32 %v2283, %v2295
    %v2297 = vpop.f32.mrf.mxu0
    %2298 = vdwg.mxu0
    %2299 = vmatpush.bf16.msra.mxu0 %v1104
    %2300 = vmatpush.bf16.msra.mxu0 %v1102
    %2301 = vmatpush.bf16.msra.mxu0 %v1100
    %2302 = vmatpush.bf16.msra.mxu0 %v1098
    %2303 = vmatpush.bf16.msra.mxu0 %v1096
    %2304 = vmatpush.bf16.msra.mxu0 %v1094
    %2305 = vmatpush.bf16.msra.mxu0 %v1092
    %2306 = vmatpush.bf16.msra.mxu0 %v1090
    %2307 = vmatmul.bf16.gmra.mxu0 %v2057
    %v2308 = vpop.f32.mrf.mxu0
    %v2309 = vadd.f32 %v282, %v2308
    %v2310 = vpop.f32.mrf.mxu0
    %2311 = vdwg.mxu0
    %2312 = vmatpush.bf16.msra.mxu0 %v1120
    %2313 = vmatpush.bf16.msra.mxu0 %v1118
    %2314 = vmatpush.bf16.msra.mxu0 %v1116
    %2315 = vmatpush.bf16.msra.mxu0 %v1114
    %2316 = vmatpush.bf16.msra.mxu0 %v1112
    %2317 = vmatpush.bf16.msra.mxu0 %v1110
    %2318 = vmatpush.bf16.msra.mxu0 %v1108
    %2319 = vmatpush.bf16.msra.mxu0 %v1106
    %2320 = vmatmul.bf16.gmra.mxu0 %v2058
    %v2321 = vpop.f32.mrf.mxu0
    %v2322 = vadd.f32 %v2309, %v2321
    %v2323 = vpop.f32.mrf.mxu0
    %2324 = vdwg.mxu0
    %2325 = vmatpush.bf16.msra.mxu0 %v1136
    %2326 = vmatpush.bf16.msra.mxu0 %v1134
    %2327 = vmatpush.bf16.msra.mxu0 %v1132
    %2328 = vmatpush.bf16.msra.mxu0 %v1130
    %2329 = vmatpush.bf16.msra.mxu0 %v1128
    %2330 = vmatpush.bf16.msra.mxu0 %v1126
    %2331 = vmatpush.bf16.msra.mxu0 %v1124
    %2332 = vmatpush.bf16.msra.mxu0 %v1122
    %2333 = vmatmul.bf16.gmra.mxu0 %v2059
    %v2334 = vpop.f32.mrf.mxu0
    %v2335 = vadd.f32 %v2322, %v2334
    %v2336 = vpop.f32.mrf.mxu0
    %2337 = vdwg.mxu0
    %2338 = vmatpush.bf16.msra.mxu0 %v1152
    %2339 = vmatpush.bf16.msra.mxu0 %v1150
    %2340 = vmatpush.bf16.msra.mxu0 %v1148
    %2341 = vmatpush.bf16.msra.mxu0 %v1146
    %2342 = vmatpush.bf16.msra.mxu0 %v1144
    %2343 = vmatpush.bf16.msra.mxu0 %v1142
    %2344 = vmatpush.bf16.msra.mxu0 %v1140
    %2345 = vmatpush.bf16.msra.mxu0 %v1138
    %2346 = vmatmul.bf16.gmra.mxu0 %v2060
    %v2347 = vpop.f32.mrf.mxu0
    %v2348 = vadd.f32 %v2335, %v2347
    %v2349 = vpop.f32.mrf.mxu0
    %2350 = vdwg.mxu0
    %2351 = vmatpush.bf16.msra.mxu0 %v1168
    %2352 = vmatpush.bf16.msra.mxu0 %v1166
    %2353 = vmatpush.bf16.msra.mxu0 %v1164
    %2354 = vmatpush.bf16.msra.mxu0 %v1162
    %2355 = vmatpush.bf16.msra.mxu0 %v1160
    %2356 = vmatpush.bf16.msra.mxu0 %v1158
    %2357 = vmatpush.bf16.msra.mxu0 %v1156
    %2358 = vmatpush.bf16.msra.mxu0 %v1154
    %2359 = vmatmul.bf16.gmra.mxu0 %v2061
    %v2360 = vpop.f32.mrf.mxu0
    %v2361 = vadd.f32 %v2348, %v2360
    %v2362 = vpop.f32.mrf.mxu0
    %2363 = vdwg.mxu0
    %2364 = vmatpush.bf16.msra.mxu0 %v1184
    %2365 = vmatpush.bf16.msra.mxu0 %v1182
    %2366 = vmatpush.bf16.msra.mxu0 %v1180
    %2367 = vmatpush.bf16.msra.mxu0 %v1178
    %2368 = vmatpush.bf16.msra.mxu0 %v1176
    %2369 = vmatpush.bf16.msra.mxu0 %v1174
    %2370 = vmatpush.bf16.msra.mxu0 %v1172
    %2371 = vmatpush.bf16.msra.mxu0 %v1170
    %2372 = vmatmul.bf16.gmra.mxu0 %v2062
    %v2373 = vpop.f32.mrf.mxu0
    %v2374 = vadd.f32 %v2361, %v2373
    %v2375 = vpop.f32.mrf.mxu0
    %2376 = vdwg.mxu0
    %2377 = vmatpush.bf16.msra.mxu0 %v1200
    %2378 = vmatpush.bf16.msra.mxu0 %v1198
    %2379 = vmatpush.bf16.msra.mxu0 %v1196
    %2380 = vmatpush.bf16.msra.mxu0 %v1194
    %2381 = vmatpush.bf16.msra.mxu0 %v1192
    %2382 = vmatpush.bf16.msra.mxu0 %v1190
    %2383 = vmatpush.bf16.msra.mxu0 %v1188
    %2384 = vmatpush.bf16.msra.mxu0 %v1186
    %2385 = vmatmul.bf16.gmra.mxu0 %v2063
    %v2386 = vpop.f32.mrf.mxu0
    %v2387 = vadd.f32 %v2374, %v2386
    %v2388 = vpop.f32.mrf.mxu0
    %2389 = vdwg.mxu0
    %2390 = vmatpush.bf16.msra.mxu0 %v1216
    %2391 = vmatpush.bf16.msra.mxu0 %v1214
    %2392 = vmatpush.bf16.msra.mxu0 %v1212
    %2393 = vmatpush.bf16.msra.mxu0 %v1210
    %2394 = vmatpush.bf16.msra.mxu0 %v1208
    %2395 = vmatpush.bf16.msra.mxu0 %v1206
    %2396 = vmatpush.bf16.msra.mxu0 %v1204
    %2397 = vmatpush.bf16.msra.mxu0 %v1202
    %2398 = vmatmul.bf16.gmra.mxu0 %v2064
    %v2399 = vpop.f32.mrf.mxu0
    %v2400 = vadd.f32 %v2387, %v2399
    %v2401 = vpop.f32.mrf.mxu0
    %2402 = vdwg.mxu0
    %2403 = vmatpush.bf16.msra.mxu0 %v1232
    %2404 = vmatpush.bf16.msra.mxu0 %v1230
    %2405 = vmatpush.bf16.msra.mxu0 %v1228
    %2406 = vmatpush.bf16.msra.mxu0 %v1226
    %2407 = vmatpush.bf16.msra.mxu0 %v1224
    %2408 = vmatpush.bf16.msra.mxu0 %v1222
    %2409 = vmatpush.bf16.msra.mxu0 %v1220
    %2410 = vmatpush.bf16.msra.mxu0 %v1218
    %2411 = vmatmul.bf16.gmra.mxu0 %v2067
    %v2412 = vpop.f32.mrf.mxu0
    %v2413 = vadd.f32 %v2400, %v2412
    %v2414 = vpop.f32.mrf.mxu0
    %2415 = vdwg.mxu0
    %2416 = vmatpush.bf16.msra.mxu0 %v1248
    %2417 = vmatpush.bf16.msra.mxu0 %v1246
    %2418 = vmatpush.bf16.msra.mxu0 %v1244
    %2419 = vmatpush.bf16.msra.mxu0 %v1242
    %2420 = vmatpush.bf16.msra.mxu0 %v1240
    %2421 = vmatpush.bf16.msra.mxu0 %v1238
    %2422 = vmatpush.bf16.msra.mxu0 %v1236
    %2423 = vmatpush.bf16.msra.mxu0 %v1234
    %2424 = vmatmul.bf16.gmra.mxu0 %v2068
    %v2425 = vpop.f32.mrf.mxu0
    %v2426 = vadd.f32 %v2413, %v2425
    %v2427 = vpop.f32.mrf.mxu0
    %2428 = vdwg.mxu0
    %2429 = vmatpush.bf16.msra.mxu0 %v1264
    %2430 = vmatpush.bf16.msra.mxu0 %v1262
    %2431 = vmatpush.bf16.msra.mxu0 %v1260
    %2432 = vmatpush.bf16.msra.mxu0 %v1258
    %2433 = vmatpush.bf16.msra.mxu0 %v1256
    %2434 = vmatpush.bf16.msra.mxu0 %v1254
    %2435 = vmatpush.bf16.msra.mxu0 %v1252
    %2436 = vmatpush.bf16.msra.mxu0 %v1250
    %2437 = vmatmul.bf16.gmra.mxu0 %v2069
    %v2438 = vpop.f32.mrf.mxu0
    %v2439 = vadd.f32 %v2426, %v2438
    %v2440 = vpop.f32.mrf.mxu0
    %2441 = vdwg.mxu0
    %2442 = vmatpush.bf16.msra.mxu0 %v1280
    %2443 = vmatpush.bf16.msra.mxu0 %v1278
    %2444 = vmatpush.bf16.msra.mxu0 %v1276
    %2445 = vmatpush.bf16.msra.mxu0 %v1274
    %2446 = vmatpush.bf16.msra.mxu0 %v1272
    %2447 = vmatpush.bf16.msra.mxu0 %v1270
    %2448 = vmatpush.bf16.msra.mxu0 %v1268
    %2449 = vmatpush.bf16.msra.mxu0 %v1266
    %2450 = vmatmul.bf16.gmra.mxu0 %v2070
    %v2451 = vpop.f32.mrf.mxu0
    %v2452 = vadd.f32 %v2439, %v2451
    %v2453 = vpop.f32.mrf.mxu0
    %2454 = vdwg.mxu0
    %2455 = vmatpush.bf16.msra.mxu0 %v1296
    %2456 = vmatpush.bf16.msra.mxu0 %v1294
    %2457 = vmatpush.bf16.msra.mxu0 %v1292
    %2458 = vmatpush.bf16.msra.mxu0 %v1290
    %2459 = vmatpush.bf16.msra.mxu0 %v1288
    %2460 = vmatpush.bf16.msra.mxu0 %v1286
    %2461 = vmatpush.bf16.msra.mxu0 %v1284
    %2462 = vmatpush.bf16.msra.mxu0 %v1282
    %2463 = vmatmul.bf16.gmra.mxu0 %v2071
    %v2464 = vpop.f32.mrf.mxu0
    %v2465 = vadd.f32 %v2452, %v2464
    %v2466 = vpop.f32.mrf.mxu0
    %2467 = vdwg.mxu0
    %2468 = vmatpush.bf16.msra.mxu0 %v1312
    %2469 = vmatpush.bf16.msra.mxu0 %v1310
    %2470 = vmatpush.bf16.msra.mxu0 %v1308
    %2471 = vmatpush.bf16.msra.mxu0 %v1306
    %2472 = vmatpush.bf16.msra.mxu0 %v1304
    %2473 = vmatpush.bf16.msra.mxu0 %v1302
    %2474 = vmatpush.bf16.msra.mxu0 %v1300
    %2475 = vmatpush.bf16.msra.mxu0 %v1298
    %2476 = vmatmul.bf16.gmra.mxu0 %v2072
    %v2477 = vpop.f32.mrf.mxu0
    %v2478 = vadd.f32 %v2465, %v2477
    %v2479 = vpop.f32.mrf.mxu0
    %2480 = vdwg.mxu0
    %2481 = vmatpush.bf16.msra.mxu0 %v1328
    %2482 = vmatpush.bf16.msra.mxu0 %v1326
    %2483 = vmatpush.bf16.msra.mxu0 %v1324
    %2484 = vmatpush.bf16.msra.mxu0 %v1322
    %2485 = vmatpush.bf16.msra.mxu0 %v1320
    %2486 = vmatpush.bf16.msra.mxu0 %v1318
    %2487 = vmatpush.bf16.msra.mxu0 %v1316
    %2488 = vmatpush.bf16.msra.mxu0 %v1314
    %2489 = vmatmul.bf16.gmra.mxu0 %v2073
    %v2490 = vpop.f32.mrf.mxu0
    %v2491 = vadd.f32 %v2478, %v2490
    %v2492 = vpop.f32.mrf.mxu0
    %2493 = vdwg.mxu0
    %2494 = vmatpush.bf16.msra.mxu0 %v1344
    %2495 = vmatpush.bf16.msra.mxu0 %v1342
    %2496 = vmatpush.bf16.msra.mxu0 %v1340
    %2497 = vmatpush.bf16.msra.mxu0 %v1338
    %2498 = vmatpush.bf16.msra.mxu0 %v1336
    %2499 = vmatpush.bf16.msra.mxu0 %v1334
    %2500 = vmatpush.bf16.msra.mxu0 %v1332
    %2501 = vmatpush.bf16.msra.mxu0 %v1330
    %2502 = vmatmul.bf16.gmra.mxu0 %v2074
    %v2503 = vpop.f32.mrf.mxu0
    %v2504 = vadd.f32 %v2491, %v2503
    %v2505 = vpop.f32.mrf.mxu0
    %2506 = vdwg.mxu0
    %v2507 = vmax.f32 %v2296, 0.0
    %v2508 = vmax.f32 %v2504, 0.0
    %v2509 = vld [vmem:[%s3 + $0x100] sm:$0xff]
    %v2510 = vld [vmem:[%s3 + $0x108] sm:$0xff]
    %v2511 = vld [vmem:[%s3 + $0x110] sm:$0xff]
    %v2512 = vld [vmem:[%s3 + $0x118] sm:$0xff]
    %v2513 = vld [vmem:[%s3 + $0x120] sm:$0xff]
    %v2514 = vld [vmem:[%s3 + $0x128] sm:$0xff]
    %v2515 = vld [vmem:[%s3 + $0x130] sm:$0xff]
    %v2516 = vld [vmem:[%s3 + $0x138] sm:$0xff]
    %v2517 = vld [vmem:[%s3 + $0x140] sm:$0xff]
    %v2518 = vld [vmem:[%s3 + $0x148] sm:$0xff]
    %v2519 = vld [vmem:[%s3 + $0x150] sm:$0xff]
    %v2520 = vld [vmem:[%s3 + $0x158] sm:$0xff]
    %v2521 = vld [vmem:[%s3 + $0x160] sm:$0xff]
    %v2522 = vld [vmem:[%s3 + $0x168] sm:$0xff]
    %v2523 = vld [vmem:[%s3 + $0x170] sm:$0xff]
    %v2524 = vld [vmem:[%s3 + $0x178] sm:$0xff]
    %v2525 = vld [vmem:[%s3 + $0x180] sm:$0xff]
    %v2526 = vld [vmem:[%s3 + $0x188] sm:$0xff]
    %v2527 = vld [vmem:[%s3 + $0x190] sm:$0xff]
    %v2528 = vld [vmem:[%s3 + $0x198] sm:$0xff]
    %v2529 = vld [vmem:[%s3 + $0x1a0] sm:$0xff]
    %v2530 = vld [vmem:[%s3 + $0x1a8] sm:$0xff]
    %v2531 = vld [vmem:[%s3 + $0x1b0] sm:$0xff]
    %v2532 = vld [vmem:[%s3 + $0x1b8] sm:$0xff]
    %v2533 = vld [vmem:[%s3 + $0x1c0] sm:$0xff]
    %v2534 = vld [vmem:[%s3 + $0x1c8] sm:$0xff]
    %v2535 = vld [vmem:[%s3 + $0x1d0] sm:$0xff]
    %v2536 = vld [vmem:[%s3 + $0x1d8] sm:$0xff]
    %v2537 = vld [vmem:[%s3 + $0x1e0] sm:$0xff]
    %v2538 = vld [vmem:[%s3 + $0x1e8] sm:$0xff]
    %v2539 = vld [vmem:[%s3 + $0x1f0] sm:$0xff]
    %v2540 = vld [vmem:[%s3 + $0x1f8] sm:$0xff]
    %v2541 = vpack.c.bf16 %v2507, %v2507
    %v2542 = vpack.c.bf16 %v2508, %v2508
    %v2575 = vunpack.c.l.b16 %v2509
    %v2576 = vunpack.c.h.b16 %v2509
    %v2577 = vunpack.c.l.b16 %v2510
    %v2578 = vunpack.c.h.b16 %v2510
    %v2579 = vunpack.c.l.b16 %v2511
    %v2580 = vunpack.c.h.b16 %v2511
    %v2581 = vunpack.c.l.b16 %v2512
    %v2582 = vunpack.c.h.b16 %v2512
    %v2583 = vunpack.c.l.b16 %v2513
    %v2584 = vunpack.c.h.b16 %v2513
    %v2585 = vunpack.c.l.b16 %v2514
    %v2586 = vunpack.c.h.b16 %v2514
    %v2587 = vunpack.c.l.b16 %v2515
    %v2588 = vunpack.c.h.b16 %v2515
    %v2589 = vunpack.c.l.b16 %v2516
    %v2590 = vunpack.c.h.b16 %v2516
    %v2591 = vunpack.c.l.b16 %v2517
    %v2592 = vunpack.c.h.b16 %v2517
    %v2593 = vunpack.c.l.b16 %v2518
    %v2594 = vunpack.c.h.b16 %v2518
    %v2595 = vunpack.c.l.b16 %v2519
    %v2596 = vunpack.c.h.b16 %v2519
    %v2597 = vunpack.c.l.b16 %v2520
    %v2598 = vunpack.c.h.b16 %v2520
    %v2599 = vunpack.c.l.b16 %v2521
    %v2600 = vunpack.c.h.b16 %v2521
    %v2601 = vunpack.c.l.b16 %v2522
    %v2602 = vunpack.c.h.b16 %v2522
    %v2603 = vunpack.c.l.b16 %v2523
    %v2604 = vunpack.c.h.b16 %v2523
    %v2605 = vunpack.c.l.b16 %v2524
    %v2606 = vunpack.c.h.b16 %v2524
    %v2607 = vunpack.c.l.b16 %v2525
    %v2608 = vunpack.c.h.b16 %v2525
    %v2609 = vunpack.c.l.b16 %v2526
    %v2610 = vunpack.c.h.b16 %v2526
    %v2611 = vunpack.c.l.b16 %v2527
    %v2612 = vunpack.c.h.b16 %v2527
    %v2613 = vunpack.c.l.b16 %v2528
    %v2614 = vunpack.c.h.b16 %v2528
    %v2615 = vunpack.c.l.b16 %v2529
    %v2616 = vunpack.c.h.b16 %v2529
    %v2617 = vunpack.c.l.b16 %v2530
    %v2618 = vunpack.c.h.b16 %v2530
    %v2619 = vunpack.c.l.b16 %v2531
    %v2620 = vunpack.c.h.b16 %v2531
    %v2621 = vunpack.c.l.b16 %v2532
    %v2622 = vunpack.c.h.b16 %v2532
    %v2623 = vunpack.c.l.b16 %v2533
    %v2624 = vunpack.c.h.b16 %v2533
    %v2625 = vunpack.c.l.b16 %v2534
    %v2626 = vunpack.c.h.b16 %v2534
    %v2627 = vunpack.c.l.b16 %v2535
    %v2628 = vunpack.c.h.b16 %v2535
    %v2629 = vunpack.c.l.b16 %v2536
    %v2630 = vunpack.c.h.b16 %v2536
    %v2631 = vunpack.c.l.b16 %v2537
    %v2632 = vunpack.c.h.b16 %v2537
    %v2633 = vunpack.c.l.b16 %v2538
    %v2634 = vunpack.c.h.b16 %v2538
    %v2635 = vunpack.c.l.b16 %v2539
    %v2636 = vunpack.c.h.b16 %v2539
    %v2637 = vunpack.c.l.b16 %v2540
    %v2638 = vunpack.c.h.b16 %v2540
    %v2639 = vpack.c.b16 %v2577, %v2575
    %v2640 = vpack.c.b16 %v2578, %v2576
    %v2641 = vpack.c.b16 %v2581, %v2579
    %v2642 = vpack.c.b16 %v2582, %v2580
    %v2643 = vpack.c.b16 %v2585, %v2583
    %v2644 = vpack.c.b16 %v2586, %v2584
    %v2645 = vpack.c.b16 %v2589, %v2587
    %v2646 = vpack.c.b16 %v2590, %v2588
    %v2647 = vpack.c.b16 %v2593, %v2591
    %v2648 = vpack.c.b16 %v2594, %v2592
    %v2649 = vpack.c.b16 %v2597, %v2595
    %v2650 = vpack.c.b16 %v2598, %v2596
    %v2651 = vpack.c.b16 %v2601, %v2599
    %v2652 = vpack.c.b16 %v2602, %v2600
    %v2653 = vpack.c.b16 %v2605, %v2603
    %v2654 = vpack.c.b16 %v2606, %v2604
    %v2655 = vpack.c.b16 %v2609, %v2607
    %v2656 = vpack.c.b16 %v2610, %v2608
    %v2657 = vpack.c.b16 %v2613, %v2611
    %v2658 = vpack.c.b16 %v2614, %v2612
    %v2659 = vpack.c.b16 %v2617, %v2615
    %v2660 = vpack.c.b16 %v2618, %v2616
    %v2661 = vpack.c.b16 %v2621, %v2619
    %v2662 = vpack.c.b16 %v2622, %v2620
    %v2663 = vpack.c.b16 %v2625, %v2623
    %v2664 = vpack.c.b16 %v2626, %v2624
    %v2665 = vpack.c.b16 %v2629, %v2627
    %v2666 = vpack.c.b16 %v2630, %v2628
    %v2667 = vpack.c.b16 %v2633, %v2631
    %v2668 = vpack.c.b16 %v2634, %v2632
    %v2669 = vpack.c.b16 %v2637, %v2635
    %v2670 = vpack.c.b16 %v2638, %v2636
    %2703 = vmatpush.bf16.msra.mxu0 %v2653
    %2704 = vmatpush.bf16.msra.mxu0 %v2651
    %2705 = vmatpush.bf16.msra.mxu0 %v2649
    %2706 = vmatpush.bf16.msra.mxu0 %v2647
    %2707 = vmatpush.bf16.msra.mxu0 %v2645
    %2708 = vmatpush.bf16.msra.mxu0 %v2643
    %2709 = vmatpush.bf16.msra.mxu0 %v2641
    %2710 = vmatpush.bf16.msra.mxu0 %v2639
    %2711 = vmatmul.bf16.gmra.mxu0 %v2541
    %v2712 = vpop.f32.mrf.mxu0
    %v2713 = vadd.f32 0.0, %v2712
    %v2714 = vpop.f32.mrf.mxu0
    %2715 = vdwg.mxu0
    %2716 = vmatpush.bf16.msra.mxu0 %v2669
    %2717 = vmatpush.bf16.msra.mxu0 %v2667
    %2718 = vmatpush.bf16.msra.mxu0 %v2665
    %2719 = vmatpush.bf16.msra.mxu0 %v2663
    %2720 = vmatpush.bf16.msra.mxu0 %v2661
    %2721 = vmatpush.bf16.msra.mxu0 %v2659
    %2722 = vmatpush.bf16.msra.mxu0 %v2657
    %2723 = vmatpush.bf16.msra.mxu0 %v2655
    %2724 = vmatmul.bf16.gmra.mxu0 %v2542
    %v2725 = vpop.f32.mrf.mxu0
    %v2726 = vadd.f32 %v2713, %v2725
    %v2727 = vpop.f32.mrf.mxu0
    %2728 = vdwg.mxu0
    %2729 = vmatpush.bf16.msra.mxu0 %v2654
    %2730 = vmatpush.bf16.msra.mxu0 %v2652
    %2731 = vmatpush.bf16.msra.mxu0 %v2650
    %2732 = vmatpush.bf16.msra.mxu0 %v2648
    %2733 = vmatpush.bf16.msra.mxu0 %v2646
    %2734 = vmatpush.bf16.msra.mxu0 %v2644
    %2735 = vmatpush.bf16.msra.mxu0 %v2642
    %2736 = vmatpush.bf16.msra.mxu0 %v2640
    %2737 = vmatmul.bf16.gmra.mxu0 %v2541
    %v2738 = vpop.f32.mrf.mxu0
    %v2739 = vadd.f32 0.0, %v2738
    %v2740 = vpop.f32.mrf.mxu0
    %2741 = vdwg.mxu0
    %2742 = vmatpush.bf16.msra.mxu0 %v2670
    %2743 = vmatpush.bf16.msra.mxu0 %v2668
    %2744 = vmatpush.bf16.msra.mxu0 %v2666
    %2745 = vmatpush.bf16.msra.mxu0 %v2664
    %2746 = vmatpush.bf16.msra.mxu0 %v2662
    %2747 = vmatpush.bf16.msra.mxu0 %v2660
    %2748 = vmatpush.bf16.msra.mxu0 %v2658
    %2749 = vmatpush.bf16.msra.mxu0 %v2656
    %2750 = vmatmul.bf16.gmra.mxu0 %v2542
    %v2751 = vpop.f32.mrf.mxu0
    %v2752 = vadd.f32 %v2739, %v2751
    %v2753 = vpop.f32.mrf.mxu0
    %2754 = vdwg.mxu0
    %v2787 = vunpack.c.l.b16 %v2019
    %v2788 = vunpack.c.h.b16 %v2019
    %v2789 = vunpack.c.l.b16 %v2020
    %v2790 = vunpack.c.h.b16 %v2020
    %v2791 = vunpack.c.l.b16 %v2021
    %v2792 = vunpack.c.h.b16 %v2021
    %v2793 = vunpack.c.l.b16 %v2022
    %v2794 = vunpack.c.h.b16 %v2022
    %v2795 = vunpack.c.l.b16 %v2023
    %v2796 = vunpack.c.h.b16 %v2023
    %v2797 = vunpack.c.l.b16 %v2024
    %v2798 = vunpack.c.h.b16 %v2024
    %v2799 = vunpack.c.l.b16 %v2025
    %v2800 = vunpack.c.h.b16 %v2025
    %v2801 = vunpack.c.l.b16 %v2026
    %v2802 = vunpack.c.h.b16 %v2026
    %v2803 = vunpack.c.l.b16 %v2027
    %v2804 = vunpack.c.h.b16 %v2027
    %v2805 = vunpack.c.l.b16 %v2028
    %v2806 = vunpack.c.h.b16 %v2028
    %v2807 = vunpack.c.l.b16 %v2029
    %v2808 = vunpack.c.h.b16 %v2029
    %v2809 = vunpack.c.l.b16 %v2030
    %v2810 = vunpack.c.h.b16 %v2030
    %v2811 = vunpack.c.l.b16 %v2031
    %v2812 = vunpack.c.h.b16 %v2031
    %v2813 = vunpack.c.l.b16 %v2032
    %v2814 = vunpack.c.h.b16 %v2032
    %v2815 = vunpack.c.l.b16 %v2033
    %v2816 = vunpack.c.h.b16 %v2033
    %v2817 = vunpack.c.l.b16 %v2034
    %v2818 = vunpack.c.h.b16 %v2034
    %v2819 = vunpack.c.l.b16 %v2035
    %v2820 = vunpack.c.h.b16 %v2035
    %v2821 = vunpack.c.l.b16 %v2036
    %v2822 = vunpack.c.h.b16 %v2036
    %v2823 = vunpack.c.l.b16 %v2037
    %v2824 = vunpack.c.h.b16 %v2037
    %v2825 = vunpack.c.l.b16 %v2038
    %v2826 = vunpack.c.h.b16 %v2038
    %v2827 = vunpack.c.l.b16 %v2039
    %v2828 = vunpack.c.h.b16 %v2039
    %v2829 = vunpack.c.l.b16 %v2040
    %v2830 = vunpack.c.h.b16 %v2040
    %v2831 = vunpack.c.l.b16 %v2041
    %v2832 = vunpack.c.h.b16 %v2041
    %v2833 = vunpack.c.l.b16 %v2042
    %v2834 = vunpack.c.h.b16 %v2042
    %v2835 = vunpack.c.l.b16 %v2043
    %v2836 = vunpack.c.h.b16 %v2043
    %v2837 = vunpack.c.l.b16 %v2044
    %v2838 = vunpack.c.h.b16 %v2044
    %v2839 = vunpack.c.l.b16 %v2045
    %v2840 = vunpack.c.h.b16 %v2045
    %v2841 = vunpack.c.l.b16 %v2046
    %v2842 = vunpack.c.h.b16 %v2046
    %v2843 = vunpack.c.l.b16 %v2047
    %v2844 = vunpack.c.h.b16 %v2047
    %v2845 = vunpack.c.l.b16 %v2048
    %v2846 = vunpack.c.h.b16 %v2048
    %v2847 = vunpack.c.l.b16 %v2049
    %v2848 = vunpack.c.h.b16 %v2049
    %v2849 = vunpack.c.l.b16 %v2050
    %v2850 = vunpack.c.h.b16 %v2050
    %v2851 = vpack.c.b16 %v2789, %v2787
    %v2852 = vpack.c.b16 %v2790, %v2788
    %v2853 = vpack.c.b16 %v2793, %v2791
    %v2854 = vpack.c.b16 %v2794, %v2792
    %v2855 = vpack.c.b16 %v2797, %v2795
    %v2856 = vpack.c.b16 %v2798, %v2796
    %v2857 = vpack.c.b16 %v2801, %v2799
    %v2858 = vpack.c.b16 %v2802, %v2800
    %v2859 = vpack.c.b16 %v2805, %v2803
    %v2860 = vpack.c.b16 %v2806, %v2804
    %v2861 = vpack.c.b16 %v2809, %v2807
    %v2862 = vpack.c.b16 %v2810, %v2808
    %v2863 = vpack.c.b16 %v2813, %v2811
    %v2864 = vpack.c.b16 %v2814, %v2812
    %v2865 = vpack.c.b16 %v2817, %v2815
    %v2866 = vpack.c.b16 %v2818, %v2816
    %v2867 = vpack.c.b16 %v2821, %v2819
    %v2868 = vpack.c.b16 %v2822, %v2820
    %v2869 = vpack.c.b16 %v2825, %v2823
    %v2870 = vpack.c.b16 %v2826, %v2824
    %v2871 = vpack.c.b16 %v2829, %v2827
    %v2872 = vpack.c.b16 %v2830, %v2828
    %v2873 = vpack.c.b16 %v2833, %v2831
    %v2874 = vpack.c.b16 %v2834, %v2832
    %v2875 = vpack.c.b16 %v2837, %v2835
    %v2876 = vpack.c.b16 %v2838, %v2836
    %v2877 = vpack.c.b16 %v2841, %v2839
    %v2878 = vpack.c.b16 %v2842, %v2840
    %v2879 = vpack.c.b16 %v2845, %v2843
    %v2880 = vpack.c.b16 %v2846, %v2844
    %v2881 = vpack.c.b16 %v2849, %v2847
    %v2882 = vpack.c.b16 %v2850, %v2848
    %2915 = vmatpush.bf16.msra.mxu0 %v2865
    %2916 = vmatpush.bf16.msra.mxu0 %v2863
    %2917 = vmatpush.bf16.msra.mxu0 %v2861
    %2918 = vmatpush.bf16.msra.mxu0 %v2859
    %2919 = vmatpush.bf16.msra.mxu0 %v2857
    %2920 = vmatpush.bf16.msra.mxu0 %v2855
    %2921 = vmatpush.bf16.msra.mxu0 %v2853
    %2922 = vmatpush.bf16.msra.mxu0 %v2851
    %2923 = vmatmul.bf16.gmra.mxu0 %v2051
    %v2924 = vpop.f32.mrf.mxu0
    %v2925 = vadd.f32 %v2726, %v2924
    %v2926 = vpop.f32.mrf.mxu0
    %2927 = vdwg.mxu0
    %2928 = vmatpush.bf16.msra.mxu0 %v2881
    %2929 = vmatpush.bf16.msra.mxu0 %v2879
    %2930 = vmatpush.bf16.msra.mxu0 %v2877
    %2931 = vmatpush.bf16.msra.mxu0 %v2875
    %2932 = vmatpush.bf16.msra.mxu0 %v2873
    %2933 = vmatpush.bf16.msra.mxu0 %v2871
    %2934 = vmatpush.bf16.msra.mxu0 %v2869
    %2935 = vmatpush.bf16.msra.mxu0 %v2867
    %2936 = vmatmul.bf16.gmra.mxu0 %v2052
    %v2937 = vpop.f32.mrf.mxu0
    %v2938 = vadd.f32 %v2925, %v2937
    %v2939 = vpop.f32.mrf.mxu0
    %2940 = vdwg.mxu0
    %2941 = vmatpush.bf16.msra.mxu0 %v2866
    %2942 = vmatpush.bf16.msra.mxu0 %v2864
    %2943 = vmatpush.bf16.msra.mxu0 %v2862
    %2944 = vmatpush.bf16.msra.mxu0 %v2860
    %2945 = vmatpush.bf16.msra.mxu0 %v2858
    %2946 = vmatpush.bf16.msra.mxu0 %v2856
    %2947 = vmatpush.bf16.msra.mxu0 %v2854
    %2948 = vmatpush.bf16.msra.mxu0 %v2852
    %2949 = vmatmul.bf16.gmra.mxu0 %v2051
    %v2950 = vpop.f32.mrf.mxu0
    %v2951 = vadd.f32 %v2752, %v2950
    %v2952 = vpop.f32.mrf.mxu0
    %2953 = vdwg.mxu0
    %2954 = vmatpush.bf16.msra.mxu0 %v2882
    %2955 = vmatpush.bf16.msra.mxu0 %v2880
    %2956 = vmatpush.bf16.msra.mxu0 %v2878
    %2957 = vmatpush.bf16.msra.mxu0 %v2876
    %2958 = vmatpush.bf16.msra.mxu0 %v2874
    %2959 = vmatpush.bf16.msra.mxu0 %v2872
    %2960 = vmatpush.bf16.msra.mxu0 %v2870
    %2961 = vmatpush.bf16.msra.mxu0 %v2868
    %2962 = vmatmul.bf16.gmra.mxu0 %v2052
    %v2963 = vpop.f32.mrf.mxu0
    %v2964 = vadd.f32 %v2951, %v2963
    %v2965 = vpop.f32.mrf.mxu0
    %2966 = vdwg.mxu0
    %v2967 = vld [vmem:[%s0 + $0x20] sm:$0xff]
    %v2968 = vld [vmem:[%s0 + $0x28] sm:$0xff]
    %2970 = vst [vmem:[#allocation1] ss:$9 sm:$0xff] %v2967
    %v2971 = vld [vmem:[#allocation1] sm:$0xff]
    %v2972 = vld [vmem:[#allocation1 + $0x9] sm:$0xff]
    %v2973 = vld [vmem:[#allocation1 + $0x12] sm:$0xff]
    %v2974 = vld [vmem:[#allocation1 + $0x1b] sm:$0xff]
    %v2975 = vld [vmem:[#allocation1 + $0x24] sm:$0xff]
    %v2976 = vld [vmem:[#allocation1 + $0x2d] sm:$0xff]
    %v2977 = vld [vmem:[#allocation1 + $0x36] sm:$0xff]
    %v2978 = vld [vmem:[#allocation1 + $0x3f] sm:$0xff]
    %2980 = vst [vmem:[#allocation1] ss:$9 sm:$0xff] %v2968
    %v2981 = vld [vmem:[#allocation1] sm:$0xff]
    %v2982 = vld [vmem:[#allocation1 + $0x9] sm:$0xff]
    %v2983 = vld [vmem:[#allocation1 + $0x12] sm:$0xff]
    %v2984 = vld [vmem:[#allocation1 + $0x1b] sm:$0xff]
    %v2985 = vld [vmem:[#allocation1 + $0x24] sm:$0xff]
    %v2986 = vld [vmem:[#allocation1 + $0x2d] sm:$0xff]
    %v2987 = vld [vmem:[#allocation1 + $0x36] sm:$0xff]
    %v2988 = vld [vmem:[#allocation1 + $0x3f] sm:$0xff]
    %3005 = vmatpush.bf16.msra.mxu0 %v1103
    %3006 = vmatpush.bf16.msra.mxu0 %v1101
    %3007 = vmatpush.bf16.msra.mxu0 %v1099
    %3008 = vmatpush.bf16.msra.mxu0 %v1097
    %3009 = vmatpush.bf16.msra.mxu0 %v1095
    %3010 = vmatpush.bf16.msra.mxu0 %v1093
    %3011 = vmatpush.bf16.msra.mxu0 %v1091
    %3012 = vmatpush.bf16.msra.mxu0 %v1089
    %3013 = vmatmul.bf16.gmra.mxu0 %v2971
    %v3014 = vpop.f32.mrf.mxu0
    %v3015 = vadd.f32 %v281, %v3014
    %v3016 = vpop.f32.mrf.mxu0
    %3017 = vdwg.mxu0
    %3018 = vmatpush.bf16.msra.mxu0 %v1119
    %3019 = vmatpush.bf16.msra.mxu0 %v1117
    %3020 = vmatpush.bf16.msra.mxu0 %v1115
    %3021 = vmatpush.bf16.msra.mxu0 %v1113
    %3022 = vmatpush.bf16.msra.mxu0 %v1111
    %3023 = vmatpush.bf16.msra.mxu0 %v1109
    %3024 = vmatpush.bf16.msra.mxu0 %v1107
    %3025 = vmatpush.bf16.msra.mxu0 %v1105
    %3026 = vmatmul.bf16.gmra.mxu0 %v2972
    %v3027 = vpop.f32.mrf.mxu0
    %v3028 = vadd.f32 %v3015, %v3027
    %v3029 = vpop.f32.mrf.mxu0
    %3030 = vdwg.mxu0
    %3031 = vmatpush.bf16.msra.mxu0 %v1135
    %3032 = vmatpush.bf16.msra.mxu0 %v1133
    %3033 = vmatpush.bf16.msra.mxu0 %v1131
    %3034 = vmatpush.bf16.msra.mxu0 %v1129
    %3035 = vmatpush.bf16.msra.mxu0 %v1127
    %3036 = vmatpush.bf16.msra.mxu0 %v1125
    %3037 = vmatpush.bf16.msra.mxu0 %v1123
    %3038 = vmatpush.bf16.msra.mxu0 %v1121
    %3039 = vmatmul.bf16.gmra.mxu0 %v2973
    %v3040 = vpop.f32.mrf.mxu0
    %v3041 = vadd.f32 %v3028, %v3040
    %v3042 = vpop.f32.mrf.mxu0
    %3043 = vdwg.mxu0
    %3044 = vmatpush.bf16.msra.mxu0 %v1151
    %3045 = vmatpush.bf16.msra.mxu0 %v1149
    %3046 = vmatpush.bf16.msra.mxu0 %v1147
    %3047 = vmatpush.bf16.msra.mxu0 %v1145
    %3048 = vmatpush.bf16.msra.mxu0 %v1143
    %3049 = vmatpush.bf16.msra.mxu0 %v1141
    %3050 = vmatpush.bf16.msra.mxu0 %v1139
    %3051 = vmatpush.bf16.msra.mxu0 %v1137
    %3052 = vmatmul.bf16.gmra.mxu0 %v2974
    %v3053 = vpop.f32.mrf.mxu0
    %v3054 = vadd.f32 %v3041, %v3053
    %v3055 = vpop.f32.mrf.mxu0
    %3056 = vdwg.mxu0
    %3057 = vmatpush.bf16.msra.mxu0 %v1167
    %3058 = vmatpush.bf16.msra.mxu0 %v1165
    %3059 = vmatpush.bf16.msra.mxu0 %v1163
    %3060 = vmatpush.bf16.msra.mxu0 %v1161
    %3061 = vmatpush.bf16.msra.mxu0 %v1159
    %3062 = vmatpush.bf16.msra.mxu0 %v1157
    %3063 = vmatpush.bf16.msra.mxu0 %v1155
    %3064 = vmatpush.bf16.msra.mxu0 %v1153
    %3065 = vmatmul.bf16.gmra.mxu0 %v2975
    %v3066 = vpop.f32.mrf.mxu0
    %v3067 = vadd.f32 %v3054, %v3066
    %v3068 = vpop.f32.mrf.mxu0
    %3069 = vdwg.mxu0
    %3070 = vmatpush.bf16.msra.mxu0 %v1183
    %3071 = vmatpush.bf16.msra.mxu0 %v1181
    %3072 = vmatpush.bf16.msra.mxu0 %v1179
    %3073 = vmatpush.bf16.msra.mxu0 %v1177
    %3074 = vmatpush.bf16.msra.mxu0 %v1175
    %3075 = vmatpush.bf16.msra.mxu0 %v1173
    %3076 = vmatpush.bf16.msra.mxu0 %v1171
    %3077 = vmatpush.bf16.msra.mxu0 %v1169
    %3078 = vmatmul.bf16.gmra.mxu0 %v2976
    %v3079 = vpop.f32.mrf.mxu0
    %v3080 = vadd.f32 %v3067, %v3079
    %v3081 = vpop.f32.mrf.mxu0
    %3082 = vdwg.mxu0
    %3083 = vmatpush.bf16.msra.mxu0 %v1199
    %3084 = vmatpush.bf16.msra.mxu0 %v1197
    %3085 = vmatpush.bf16.msra.mxu0 %v1195
    %3086 = vmatpush.bf16.msra.mxu0 %v1193
    %3087 = vmatpush.bf16.msra.mxu0 %v1191
    %3088 = vmatpush.bf16.msra.mxu0 %v1189
    %3089 = vmatpush.bf16.msra.mxu0 %v1187
    %3090 = vmatpush.bf16.msra.mxu0 %v1185
    %3091 = vmatmul.bf16.gmra.mxu0 %v2977
    %v3092 = vpop.f32.mrf.mxu0
    %v3093 = vadd.f32 %v3080, %v3092
    %v3094 = vpop.f32.mrf.mxu0
    %3095 = vdwg.mxu0
    %3096 = vmatpush.bf16.msra.mxu0 %v1215
    %3097 = vmatpush.bf16.msra.mxu0 %v1213
    %3098 = vmatpush.bf16.msra.mxu0 %v1211
    %3099 = vmatpush.bf16.msra.mxu0 %v1209
    %3100 = vmatpush.bf16.msra.mxu0 %v1207
    %3101 = vmatpush.bf16.msra.mxu0 %v1205
    %3102 = vmatpush.bf16.msra.mxu0 %v1203
    %3103 = vmatpush.bf16.msra.mxu0 %v1201
    %3104 = vmatmul.bf16.gmra.mxu0 %v2978
    %v3105 = vpop.f32.mrf.mxu0
    %v3106 = vadd.f32 %v3093, %v3105
    %v3107 = vpop.f32.mrf.mxu0
    %3108 = vdwg.mxu0
    %3109 = vmatpush.bf16.msra.mxu0 %v1231
    %3110 = vmatpush.bf16.msra.mxu0 %v1229
    %3111 = vmatpush.bf16.msra.mxu0 %v1227
    %3112 = vmatpush.bf16.msra.mxu0 %v1225
    %3113 = vmatpush.bf16.msra.mxu0 %v1223
    %3114 = vmatpush.bf16.msra.mxu0 %v1221
    %3115 = vmatpush.bf16.msra.mxu0 %v1219
    %3116 = vmatpush.bf16.msra.mxu0 %v1217
    %3117 = vmatmul.bf16.gmra.mxu0 %v2981
    %v3118 = vpop.f32.mrf.mxu0
    %v3119 = vadd.f32 %v3106, %v3118
    %v3120 = vpop.f32.mrf.mxu0
    %3121 = vdwg.mxu0
    %3122 = vmatpush.bf16.msra.mxu0 %v1247
    %3123 = vmatpush.bf16.msra.mxu0 %v1245
    %3124 = vmatpush.bf16.msra.mxu0 %v1243
    %3125 = vmatpush.bf16.msra.mxu0 %v1241
    %3126 = vmatpush.bf16.msra.mxu0 %v1239
    %3127 = vmatpush.bf16.msra.mxu0 %v1237
    %3128 = vmatpush.bf16.msra.mxu0 %v1235
    %3129 = vmatpush.bf16.msra.mxu0 %v1233
    %3130 = vmatmul.bf16.gmra.mxu0 %v2982
    %v3131 = vpop.f32.mrf.mxu0
    %v3132 = vadd.f32 %v3119, %v3131
    %v3133 = vpop.f32.mrf.mxu0
    %3134 = vdwg.mxu0
    %3135 = vmatpush.bf16.msra.mxu0 %v1263
    %3136 = vmatpush.bf16.msra.mxu0 %v1261
    %3137 = vmatpush.bf16.msra.mxu0 %v1259
    %3138 = vmatpush.bf16.msra.mxu0 %v1257
    %3139 = vmatpush.bf16.msra.mxu0 %v1255
    %3140 = vmatpush.bf16.msra.mxu0 %v1253
    %3141 = vmatpush.bf16.msra.mxu0 %v1251
    %3142 = vmatpush.bf16.msra.mxu0 %v1249
    %3143 = vmatmul.bf16.gmra.mxu0 %v2983
    %v3144 = vpop.f32.mrf.mxu0
    %v3145 = vadd.f32 %v3132, %v3144
    %v3146 = vpop.f32.mrf.mxu0
    %3147 = vdwg.mxu0
    %3148 = vmatpush.bf16.msra.mxu0 %v1279
    %3149 = vmatpush.bf16.msra.mxu0 %v1277
    %3150 = vmatpush.bf16.msra.mxu0 %v1275
    %3151 = vmatpush.bf16.msra.mxu0 %v1273
    %3152 = vmatpush.bf16.msra.mxu0 %v1271
    %3153 = vmatpush.bf16.msra.mxu0 %v1269
    %3154 = vmatpush.bf16.msra.mxu0 %v1267
    %3155 = vmatpush.bf16.msra.mxu0 %v1265
    %3156 = vmatmul.bf16.gmra.mxu0 %v2984
    %v3157 = vpop.f32.mrf.mxu0
    %v3158 = vadd.f32 %v3145, %v3157
    %v3159 = vpop.f32.mrf.mxu0
    %3160 = vdwg.mxu0
    %3161 = vmatpush.bf16.msra.mxu0 %v1295
    %3162 = vmatpush.bf16.msra.mxu0 %v1293
    %3163 = vmatpush.bf16.msra.mxu0 %v1291
    %3164 = vmatpush.bf16.msra.mxu0 %v1289
    %3165 = vmatpush.bf16.msra.mxu0 %v1287
    %3166 = vmatpush.bf16.msra.mxu0 %v1285
    %3167 = vmatpush.bf16.msra.mxu0 %v1283
    %3168 = vmatpush.bf16.msra.mxu0 %v1281
    %3169 = vmatmul.bf16.gmra.mxu0 %v2985
    %v3170 = vpop.f32.mrf.mxu0
    %v3171 = vadd.f32 %v3158, %v3170
    %v3172 = vpop.f32.mrf.mxu0
    %3173 = vdwg.mxu0
    %3174 = vmatpush.bf16.msra.mxu0 %v1311
    %3175 = vmatpush.bf16.msra.mxu0 %v1309
    %3176 = vmatpush.bf16.msra.mxu0 %v1307
    %3177 = vmatpush.bf16.msra.mxu0 %v1305
    %3178 = vmatpush.bf16.msra.mxu0 %v1303
    %3179 = vmatpush.bf16.msra.mxu0 %v1301
    %3180 = vmatpush.bf16.msra.mxu0 %v1299
    %3181 = vmatpush.bf16.msra.mxu0 %v1297
    %3182 = vmatmul.bf16.gmra.mxu0 %v2986
    %v3183 = vpop.f32.mrf.mxu0
    %v3184 = vadd.f32 %v3171, %v3183
    %v3185 = vpop.f32.mrf.mxu0
    %3186 = vdwg.mxu0
    %3187 = vmatpush.bf16.msra.mxu0 %v1327
    %3188 = vmatpush.bf16.msra.mxu0 %v1325
    %3189 = vmatpush.bf16.msra.mxu0 %v1323
    %3190 = vmatpush.bf16.msra.mxu0 %v1321
    %3191 = vmatpush.bf16.msra.mxu0 %v1319
    %3192 = vmatpush.bf16.msra.mxu0 %v1317
    %3193 = vmatpush.bf16.msra.mxu0 %v1315
    %3194 = vmatpush.bf16.msra.mxu0 %v1313
    %3195 = vmatmul.bf16.gmra.mxu0 %v2987
    %v3196 = vpop.f32.mrf.mxu0
    %v3197 = vadd.f32 %v3184, %v3196
    %v3198 = vpop.f32.mrf.mxu0
    %3199 = vdwg.mxu0
    %3200 = vmatpush.bf16.msra.mxu0 %v1343
    %3201 = vmatpush.bf16.msra.mxu0 %v1341
    %3202 = vmatpush.bf16.msra.mxu0 %v1339
    %3203 = vmatpush.bf16.msra.mxu0 %v1337
    %3204 = vmatpush.bf16.msra.mxu0 %v1335
    %3205 = vmatpush.bf16.msra.mxu0 %v1333
    %3206 = vmatpush.bf16.msra.mxu0 %v1331
    %3207 = vmatpush.bf16.msra.mxu0 %v1329
    %3208 = vmatmul.bf16.gmra.mxu0 %v2988
    %v3209 = vpop.f32.mrf.mxu0
    %v3210 = vadd.f32 %v3197, %v3209
    %v3211 = vpop.f32.mrf.mxu0
    %3212 = vdwg.mxu0
    %3213 = vmatpush.bf16.msra.mxu0 %v1104
    %3214 = vmatpush.bf16.msra.mxu0 %v1102
    %3215 = vmatpush.bf16.msra.mxu0 %v1100
    %3216 = vmatpush.bf16.msra.mxu0 %v1098
    %3217 = vmatpush.bf16.msra.mxu0 %v1096
    %3218 = vmatpush.bf16.msra.mxu0 %v1094
    %3219 = vmatpush.bf16.msra.mxu0 %v1092
    %3220 = vmatpush.bf16.msra.mxu0 %v1090
    %3221 = vmatmul.bf16.gmra.mxu0 %v2971
    %v3222 = vpop.f32.mrf.mxu0
    %v3223 = vadd.f32 %v282, %v3222
    %v3224 = vpop.f32.mrf.mxu0
    %3225 = vdwg.mxu0
    %3226 = vmatpush.bf16.msra.mxu0 %v1120
    %3227 = vmatpush.bf16.msra.mxu0 %v1118
    %3228 = vmatpush.bf16.msra.mxu0 %v1116
    %3229 = vmatpush.bf16.msra.mxu0 %v1114
    %3230 = vmatpush.bf16.msra.mxu0 %v1112
    %3231 = vmatpush.bf16.msra.mxu0 %v1110
    %3232 = vmatpush.bf16.msra.mxu0 %v1108
    %3233 = vmatpush.bf16.msra.mxu0 %v1106
    %3234 = vmatmul.bf16.gmra.mxu0 %v2972
    %v3235 = vpop.f32.mrf.mxu0
    %v3236 = vadd.f32 %v3223, %v3235
    %v3237 = vpop.f32.mrf.mxu0
    %3238 = vdwg.mxu0
    %3239 = vmatpush.bf16.msra.mxu0 %v1136
    %3240 = vmatpush.bf16.msra.mxu0 %v1134
    %3241 = vmatpush.bf16.msra.mxu0 %v1132
    %3242 = vmatpush.bf16.msra.mxu0 %v1130
    %3243 = vmatpush.bf16.msra.mxu0 %v1128
    %3244 = vmatpush.bf16.msra.mxu0 %v1126
    %3245 = vmatpush.bf16.msra.mxu0 %v1124
    %3246 = vmatpush.bf16.msra.mxu0 %v1122
    %3247 = vmatmul.bf16.gmra.mxu0 %v2973
    %v3248 = vpop.f32.mrf.mxu0
    %v3249 = vadd.f32 %v3236, %v3248
    %v3250 = vpop.f32.mrf.mxu0
    %3251 = vdwg.mxu0
    %3252 = vmatpush.bf16.msra.mxu0 %v1152
    %3253 = vmatpush.bf16.msra.mxu0 %v1150
    %3254 = vmatpush.bf16.msra.mxu0 %v1148
    %3255 = vmatpush.bf16.msra.mxu0 %v1146
    %3256 = vmatpush.bf16.msra.mxu0 %v1144
    %3257 = vmatpush.bf16.msra.mxu0 %v1142
    %3258 = vmatpush.bf16.msra.mxu0 %v1140
    %3259 = vmatpush.bf16.msra.mxu0 %v1138
    %3260 = vmatmul.bf16.gmra.mxu0 %v2974
    %v3261 = vpop.f32.mrf.mxu0
    %v3262 = vadd.f32 %v3249, %v3261
    %v3263 = vpop.f32.mrf.mxu0
    %3264 = vdwg.mxu0
    %3265 = vmatpush.bf16.msra.mxu0 %v1168
    %3266 = vmatpush.bf16.msra.mxu0 %v1166
    %3267 = vmatpush.bf16.msra.mxu0 %v1164
    %3268 = vmatpush.bf16.msra.mxu0 %v1162
    %3269 = vmatpush.bf16.msra.mxu0 %v1160
    %3270 = vmatpush.bf16.msra.mxu0 %v1158
    %3271 = vmatpush.bf16.msra.mxu0 %v1156
    %3272 = vmatpush.bf16.msra.mxu0 %v1154
    %3273 = vmatmul.bf16.gmra.mxu0 %v2975
    %v3274 = vpop.f32.mrf.mxu0
    %v3275 = vadd.f32 %v3262, %v3274
    %v3276 = vpop.f32.mrf.mxu0
    %3277 = vdwg.mxu0
    %3278 = vmatpush.bf16.msra.mxu0 %v1184
    %3279 = vmatpush.bf16.msra.mxu0 %v1182
    %3280 = vmatpush.bf16.msra.mxu0 %v1180
    %3281 = vmatpush.bf16.msra.mxu0 %v1178
    %3282 = vmatpush.bf16.msra.mxu0 %v1176
    %3283 = vmatpush.bf16.msra.mxu0 %v1174
    %3284 = vmatpush.bf16.msra.mxu0 %v1172
    %3285 = vmatpush.bf16.msra.mxu0 %v1170
    %3286 = vmatmul.bf16.gmra.mxu0 %v2976
    %v3287 = vpop.f32.mrf.mxu0
    %v3288 = vadd.f32 %v3275, %v3287
    %v3289 = vpop.f32.mrf.mxu0
    %3290 = vdwg.mxu0
    %3291 = vmatpush.bf16.msra.mxu0 %v1200
    %3292 = vmatpush.bf16.msra.mxu0 %v1198
    %3293 = vmatpush.bf16.msra.mxu0 %v1196
    %3294 = vmatpush.bf16.msra.mxu0 %v1194
    %3295 = vmatpush.bf16.msra.mxu0 %v1192
    %3296 = vmatpush.bf16.msra.mxu0 %v1190
    %3297 = vmatpush.bf16.msra.mxu0 %v1188
    %3298 = vmatpush.bf16.msra.mxu0 %v1186
    %3299 = vmatmul.bf16.gmra.mxu0 %v2977
    %v3300 = vpop.f32.mrf.mxu0
    %v3301 = vadd.f32 %v3288, %v3300
    %v3302 = vpop.f32.mrf.mxu0
    %3303 = vdwg.mxu0
    %3304 = vmatpush.bf16.msra.mxu0 %v1216
    %3305 = vmatpush.bf16.msra.mxu0 %v1214
    %3306 = vmatpush.bf16.msra.mxu0 %v1212
    %3307 = vmatpush.bf16.msra.mxu0 %v1210
    %3308 = vmatpush.bf16.msra.mxu0 %v1208
    %3309 = vmatpush.bf16.msra.mxu0 %v1206
    %3310 = vmatpush.bf16.msra.mxu0 %v1204
    %3311 = vmatpush.bf16.msra.mxu0 %v1202
    %3312 = vmatmul.bf16.gmra.mxu0 %v2978
    %v3313 = vpop.f32.mrf.mxu0
    %v3314 = vadd.f32 %v3301, %v3313
    %v3315 = vpop.f32.mrf.mxu0
    %3316 = vdwg.mxu0
    %3317 = vmatpush.bf16.msra.mxu0 %v1232
    %3318 = vmatpush.bf16.msra.mxu0 %v1230
    %3319 = vmatpush.bf16.msra.mxu0 %v1228
    %3320 = vmatpush.bf16.msra.mxu0 %v1226
    %3321 = vmatpush.bf16.msra.mxu0 %v1224
    %3322 = vmatpush.bf16.msra.mxu0 %v1222
    %3323 = vmatpush.bf16.msra.mxu0 %v1220
    %3324 = vmatpush.bf16.msra.mxu0 %v1218
    %3325 = vmatmul.bf16.gmra.mxu0 %v2981
    %v3326 = vpop.f32.mrf.mxu0
    %v3327 = vadd.f32 %v3314, %v3326
    %v3328 = vpop.f32.mrf.mxu0
    %3329 = vdwg.mxu0
    %3330 = vmatpush.bf16.msra.mxu0 %v1248
    %3331 = vmatpush.bf16.msra.mxu0 %v1246
    %3332 = vmatpush.bf16.msra.mxu0 %v1244
    %3333 = vmatpush.bf16.msra.mxu0 %v1242
    %3334 = vmatpush.bf16.msra.mxu0 %v1240
    %3335 = vmatpush.bf16.msra.mxu0 %v1238
    %3336 = vmatpush.bf16.msra.mxu0 %v1236
    %3337 = vmatpush.bf16.msra.mxu0 %v1234
    %3338 = vmatmul.bf16.gmra.mxu0 %v2982
    %v3339 = vpop.f32.mrf.mxu0
    %v3340 = vadd.f32 %v3327, %v3339
    %v3341 = vpop.f32.mrf.mxu0
    %3342 = vdwg.mxu0
    %3343 = vmatpush.bf16.msra.mxu0 %v1264
    %3344 = vmatpush.bf16.msra.mxu0 %v1262
    %3345 = vmatpush.bf16.msra.mxu0 %v1260
    %3346 = vmatpush.bf16.msra.mxu0 %v1258
    %3347 = vmatpush.bf16.msra.mxu0 %v1256
    %3348 = vmatpush.bf16.msra.mxu0 %v1254
    %3349 = vmatpush.bf16.msra.mxu0 %v1252
    %3350 = vmatpush.bf16.msra.mxu0 %v1250
    %3351 = vmatmul.bf16.gmra.mxu0 %v2983
    %v3352 = vpop.f32.mrf.mxu0
    %v3353 = vadd.f32 %v3340, %v3352
    %v3354 = vpop.f32.mrf.mxu0
    %3355 = vdwg.mxu0
    %3356 = vmatpush.bf16.msra.mxu0 %v1280
    %3357 = vmatpush.bf16.msra.mxu0 %v1278
    %3358 = vmatpush.bf16.msra.mxu0 %v1276
    %3359 = vmatpush.bf16.msra.mxu0 %v1274
    %3360 = vmatpush.bf16.msra.mxu0 %v1272
    %3361 = vmatpush.bf16.msra.mxu0 %v1270
    %3362 = vmatpush.bf16.msra.mxu0 %v1268
    %3363 = vmatpush.bf16.msra.mxu0 %v1266
    %3364 = vmatmul.bf16.gmra.mxu0 %v2984
    %v3365 = vpop.f32.mrf.mxu0
    %v3366 = vadd.f32 %v3353, %v3365
    %v3367 = vpop.f32.mrf.mxu0
    %3368 = vdwg.mxu0
    %3369 = vmatpush.bf16.msra.mxu0 %v1296
    %3370 = vmatpush.bf16.msra.mxu0 %v1294
    %3371 = vmatpush.bf16.msra.mxu0 %v1292
    %3372 = vmatpush.bf16.msra.mxu0 %v1290
    %3373 = vmatpush.bf16.msra.mxu0 %v1288
    %3374 = vmatpush.bf16.msra.mxu0 %v1286
    %3375 = vmatpush.bf16.msra.mxu0 %v1284
    %3376 = vmatpush.bf16.msra.mxu0 %v1282
    %3377 = vmatmul.bf16.gmra.mxu0 %v2985
    %v3378 = vpop.f32.mrf.mxu0
    %v3379 = vadd.f32 %v3366, %v3378
    %v3380 = vpop.f32.mrf.mxu0
    %3381 = vdwg.mxu0
    %3382 = vmatpush.bf16.msra.mxu0 %v1312
    %3383 = vmatpush.bf16.msra.mxu0 %v1310
    %3384 = vmatpush.bf16.msra.mxu0 %v1308
    %3385 = vmatpush.bf16.msra.mxu0 %v1306
    %3386 = vmatpush.bf16.msra.mxu0 %v1304
    %3387 = vmatpush.bf16.msra.mxu0 %v1302
    %3388 = vmatpush.bf16.msra.mxu0 %v1300
    %3389 = vmatpush.bf16.msra.mxu0 %v1298
    %3390 = vmatmul.bf16.gmra.mxu0 %v2986
    %v3391 = vpop.f32.mrf.mxu0
    %v3392 = vadd.f32 %v3379, %v3391
    %v3393 = vpop.f32.mrf.mxu0
    %3394 = vdwg.mxu0
    %3395 = vmatpush.bf16.msra.mxu0 %v1328
    %3396 = vmatpush.bf16.msra.mxu0 %v1326
    %3397 = vmatpush.bf16.msra.mxu0 %v1324
    %3398 = vmatpush.bf16.msra.mxu0 %v1322
    %3399 = vmatpush.bf16.msra.mxu0 %v1320
    %3400 = vmatpush.bf16.msra.mxu0 %v1318
    %3401 = vmatpush.bf16.msra.mxu0 %v1316
    %3402 = vmatpush.bf16.msra.mxu0 %v1314
    %3403 = vmatmul.bf16.gmra.mxu0 %v2987
    %v3404 = vpop.f32.mrf.mxu0
    %v3405 = vadd.f32 %v3392, %v3404
    %v3406 = vpop.f32.mrf.mxu0
    %3407 = vdwg.mxu0
    %3408 = vmatpush.bf16.msra.mxu0 %v1344
    %3409 = vmatpush.bf16.msra.mxu0 %v1342
    %3410 = vmatpush.bf16.msra.mxu0 %v1340
    %3411 = vmatpush.bf16.msra.mxu0 %v1338
    %3412 = vmatpush.bf16.msra.mxu0 %v1336
    %3413 = vmatpush.bf16.msra.mxu0 %v1334
    %3414 = vmatpush.bf16.msra.mxu0 %v1332
    %3415 = vmatpush.bf16.msra.mxu0 %v1330
    %3416 = vmatmul.bf16.gmra.mxu0 %v2988
    %v3417 = vpop.f32.mrf.mxu0
    %v3418 = vadd.f32 %v3405, %v3417
    %v3419 = vpop.f32.mrf.mxu0
    %3420 = vdwg.mxu0
    %v3421 = vmax.f32 %v3210, 0.0
    %v3422 = vmax.f32 %v3418, 0.0
    %v3423 = vld [vmem:[%s3 + $0x200] sm:$0xff]
    %v3424 = vld [vmem:[%s3 + $0x208] sm:$0xff]
    %v3425 = vld [vmem:[%s3 + $0x210] sm:$0xff]
    %v3426 = vld [vmem:[%s3 + $0x218] sm:$0xff]
    %v3427 = vld [vmem:[%s3 + $0x220] sm:$0xff]
    %v3428 = vld [vmem:[%s3 + $0x228] sm:$0xff]
    %v3429 = vld [vmem:[%s3 + $0x230] sm:$0xff]
    %v3430 = vld [vmem:[%s3 + $0x238] sm:$0xff]
    %v3431 = vld [vmem:[%s3 + $0x240] sm:$0xff]
    %v3432 = vld [vmem:[%s3 + $0x248] sm:$0xff]
    %v3433 = vld [vmem:[%s3 + $0x250] sm:$0xff]
    %v3434 = vld [vmem:[%s3 + $0x258] sm:$0xff]
    %v3435 = vld [vmem:[%s3 + $0x260] sm:$0xff]
    %v3436 = vld [vmem:[%s3 + $0x268] sm:$0xff]
    %v3437 = vld [vmem:[%s3 + $0x270] sm:$0xff]
    %v3438 = vld [vmem:[%s3 + $0x278] sm:$0xff]
    %v3439 = vld [vmem:[%s3 + $0x280] sm:$0xff]
    %v3440 = vld [vmem:[%s3 + $0x288] sm:$0xff]
    %v3441 = vld [vmem:[%s3 + $0x290] sm:$0xff]
    %v3442 = vld [vmem:[%s3 + $0x298] sm:$0xff]
    %v3443 = vld [vmem:[%s3 + $0x2a0] sm:$0xff]
    %v3444 = vld [vmem:[%s3 + $0x2a8] sm:$0xff]
    %v3445 = vld [vmem:[%s3 + $0x2b0] sm:$0xff]
    %v3446 = vld [vmem:[%s3 + $0x2b8] sm:$0xff]
    %v3447 = vld [vmem:[%s3 + $0x2c0] sm:$0xff]
    %v3448 = vld [vmem:[%s3 + $0x2c8] sm:$0xff]
    %v3449 = vld [vmem:[%s3 + $0x2d0] sm:$0xff]
    %v3450 = vld [vmem:[%s3 + $0x2d8] sm:$0xff]
    %v3451 = vld [vmem:[%s3 + $0x2e0] sm:$0xff]
    %v3452 = vld [vmem:[%s3 + $0x2e8] sm:$0xff]
    %v3453 = vld [vmem:[%s3 + $0x2f0] sm:$0xff]
    %v3454 = vld [vmem:[%s3 + $0x2f8] sm:$0xff]
    %v3455 = vpack.c.bf16 %v3421, %v3421
    %v3456 = vpack.c.bf16 %v3422, %v3422
    %v3489 = vunpack.c.l.b16 %v3423
    %v3490 = vunpack.c.h.b16 %v3423
    %v3491 = vunpack.c.l.b16 %v3424
    %v3492 = vunpack.c.h.b16 %v3424
    %v3493 = vunpack.c.l.b16 %v3425
    %v3494 = vunpack.c.h.b16 %v3425
    %v3495 = vunpack.c.l.b16 %v3426
    %v3496 = vunpack.c.h.b16 %v3426
    %v3497 = vunpack.c.l.b16 %v3427
    %v3498 = vunpack.c.h.b16 %v3427
    %v3499 = vunpack.c.l.b16 %v3428
    %v3500 = vunpack.c.h.b16 %v3428
    %v3501 = vunpack.c.l.b16 %v3429
    %v3502 = vunpack.c.h.b16 %v3429
    %v3503 = vunpack.c.l.b16 %v3430
    %v3504 = vunpack.c.h.b16 %v3430
    %v3505 = vunpack.c.l.b16 %v3431
    %v3506 = vunpack.c.h.b16 %v3431
    %v3507 = vunpack.c.l.b16 %v3432
    %v3508 = vunpack.c.h.b16 %v3432
    %v3509 = vunpack.c.l.b16 %v3433
    %v3510 = vunpack.c.h.b16 %v3433
    %v3511 = vunpack.c.l.b16 %v3434
    %v3512 = vunpack.c.h.b16 %v3434
    %v3513 = vunpack.c.l.b16 %v3435
    %v3514 = vunpack.c.h.b16 %v3435
    %v3515 = vunpack.c.l.b16 %v3436
    %v3516 = vunpack.c.h.b16 %v3436
    %v3517 = vunpack.c.l.b16 %v3437
    %v3518 = vunpack.c.h.b16 %v3437
    %v3519 = vunpack.c.l.b16 %v3438
    %v3520 = vunpack.c.h.b16 %v3438
    %v3521 = vunpack.c.l.b16 %v3439
    %v3522 = vunpack.c.h.b16 %v3439
    %v3523 = vunpack.c.l.b16 %v3440
    %v3524 = vunpack.c.h.b16 %v3440
    %v3525 = vunpack.c.l.b16 %v3441
    %v3526 = vunpack.c.h.b16 %v3441
    %v3527 = vunpack.c.l.b16 %v3442
    %v3528 = vunpack.c.h.b16 %v3442
    %v3529 = vunpack.c.l.b16 %v3443
    %v3530 = vunpack.c.h.b16 %v3443
    %v3531 = vunpack.c.l.b16 %v3444
    %v3532 = vunpack.c.h.b16 %v3444
    %v3533 = vunpack.c.l.b16 %v3445
    %v3534 = vunpack.c.h.b16 %v3445
    %v3535 = vunpack.c.l.b16 %v3446
    %v3536 = vunpack.c.h.b16 %v3446
    %v3537 = vunpack.c.l.b16 %v3447
    %v3538 = vunpack.c.h.b16 %v3447
    %v3539 = vunpack.c.l.b16 %v3448
    %v3540 = vunpack.c.h.b16 %v3448
    %v3541 = vunpack.c.l.b16 %v3449
    %v3542 = vunpack.c.h.b16 %v3449
    %v3543 = vunpack.c.l.b16 %v3450
    %v3544 = vunpack.c.h.b16 %v3450
    %v3545 = vunpack.c.l.b16 %v3451
    %v3546 = vunpack.c.h.b16 %v3451
    %v3547 = vunpack.c.l.b16 %v3452
    %v3548 = vunpack.c.h.b16 %v3452
    %v3549 = vunpack.c.l.b16 %v3453
    %v3550 = vunpack.c.h.b16 %v3453
    %v3551 = vunpack.c.l.b16 %v3454
    %v3552 = vunpack.c.h.b16 %v3454
    %v3553 = vpack.c.b16 %v3491, %v3489
    %v3554 = vpack.c.b16 %v3492, %v3490
    %v3555 = vpack.c.b16 %v3495, %v3493
    %v3556 = vpack.c.b16 %v3496, %v3494
    %v3557 = vpack.c.b16 %v3499, %v3497
    %v3558 = vpack.c.b16 %v3500, %v3498
    %v3559 = vpack.c.b16 %v3503, %v3501
    %v3560 = vpack.c.b16 %v3504, %v3502
    %v3561 = vpack.c.b16 %v3507, %v3505
    %v3562 = vpack.c.b16 %v3508, %v3506
    %v3563 = vpack.c.b16 %v3511, %v3509
    %v3564 = vpack.c.b16 %v3512, %v3510
    %v3565 = vpack.c.b16 %v3515, %v3513
    %v3566 = vpack.c.b16 %v3516, %v3514
    %v3567 = vpack.c.b16 %v3519, %v3517
    %v3568 = vpack.c.b16 %v3520, %v3518
    %v3569 = vpack.c.b16 %v3523, %v3521
    %v3570 = vpack.c.b16 %v3524, %v3522
    %v3571 = vpack.c.b16 %v3527, %v3525
    %v3572 = vpack.c.b16 %v3528, %v3526
    %v3573 = vpack.c.b16 %v3531, %v3529
    %v3574 = vpack.c.b16 %v3532, %v3530
    %v3575 = vpack.c.b16 %v3535, %v3533
    %v3576 = vpack.c.b16 %v3536, %v3534
    %v3577 = vpack.c.b16 %v3539, %v3537
    %v3578 = vpack.c.b16 %v3540, %v3538
    %v3579 = vpack.c.b16 %v3543, %v3541
    %v3580 = vpack.c.b16 %v3544, %v3542
    %v3581 = vpack.c.b16 %v3547, %v3545
    %v3582 = vpack.c.b16 %v3548, %v3546
    %v3583 = vpack.c.b16 %v3551, %v3549
    %v3584 = vpack.c.b16 %v3552, %v3550
    %3617 = vmatpush.bf16.msra.mxu0 %v3567
    %3618 = vmatpush.bf16.msra.mxu0 %v3565
    %3619 = vmatpush.bf16.msra.mxu0 %v3563
    %3620 = vmatpush.bf16.msra.mxu0 %v3561
    %3621 = vmatpush.bf16.msra.mxu0 %v3559
    %3622 = vmatpush.bf16.msra.mxu0 %v3557
    %3623 = vmatpush.bf16.msra.mxu0 %v3555
    %3624 = vmatpush.bf16.msra.mxu0 %v3553
    %3625 = vmatmul.bf16.gmra.mxu0 %v3455
    %v3626 = vpop.f32.mrf.mxu0
    %v3627 = vadd.f32 0.0, %v3626
    %v3628 = vpop.f32.mrf.mxu0
    %3629 = vdwg.mxu0
    %3630 = vmatpush.bf16.msra.mxu0 %v3583
    %3631 = vmatpush.bf16.msra.mxu0 %v3581
    %3632 = vmatpush.bf16.msra.mxu0 %v3579
    %3633 = vmatpush.bf16.msra.mxu0 %v3577
    %3634 = vmatpush.bf16.msra.mxu0 %v3575
    %3635 = vmatpush.bf16.msra.mxu0 %v3573
    %3636 = vmatpush.bf16.msra.mxu0 %v3571
    %3637 = vmatpush.bf16.msra.mxu0 %v3569
    %3638 = vmatmul.bf16.gmra.mxu0 %v3456
    %v3639 = vpop.f32.mrf.mxu0
    %v3640 = vadd.f32 %v3627, %v3639
    %v3641 = vpop.f32.mrf.mxu0
    %3642 = vdwg.mxu0
    %3643 = vmatpush.bf16.msra.mxu0 %v3568
    %3644 = vmatpush.bf16.msra.mxu0 %v3566
    %3645 = vmatpush.bf16.msra.mxu0 %v3564
    %3646 = vmatpush.bf16.msra.mxu0 %v3562
    %3647 = vmatpush.bf16.msra.mxu0 %v3560
    %3648 = vmatpush.bf16.msra.mxu0 %v3558
    %3649 = vmatpush.bf16.msra.mxu0 %v3556
    %3650 = vmatpush.bf16.msra.mxu0 %v3554
    %3651 = vmatmul.bf16.gmra.mxu0 %v3455
    %v3652 = vpop.f32.mrf.mxu0
    %v3653 = vadd.f32 0.0, %v3652
    %v3654 = vpop.f32.mrf.mxu0
    %3655 = vdwg.mxu0
    %3656 = vmatpush.bf16.msra.mxu0 %v3584
    %3657 = vmatpush.bf16.msra.mxu0 %v3582
    %3658 = vmatpush.bf16.msra.mxu0 %v3580
    %3659 = vmatpush.bf16.msra.mxu0 %v3578
    %3660 = vmatpush.bf16.msra.mxu0 %v3576
    %3661 = vmatpush.bf16.msra.mxu0 %v3574
    %3662 = vmatpush.bf16.msra.mxu0 %v3572
    %3663 = vmatpush.bf16.msra.mxu0 %v3570
    %3664 = vmatmul.bf16.gmra.mxu0 %v3456
    %v3665 = vpop.f32.mrf.mxu0
    %v3666 = vadd.f32 %v3653, %v3665
    %v3667 = vpop.f32.mrf.mxu0
    %3668 = vdwg.mxu0
    %v3669 = vadd.f32 %v2938, %v3640
    %v3670 = vadd.f32 %v2964, %v3666
    %v3671 = vld [vmem:[%s0 + $0x30] sm:$0xff]
    %v3672 = vld [vmem:[%s0 + $0x38] sm:$0xff]
    %3674 = vst [vmem:[#allocation1] ss:$9 sm:$0xff] %v3671
    %v3675 = vld [vmem:[#allocation1] sm:$0xff]
    %v3676 = vld [vmem:[#allocation1 + $0x9] sm:$0xff]
    %v3677 = vld [vmem:[#allocation1 + $0x12] sm:$0xff]
    %v3678 = vld [vmem:[#allocation1 + $0x1b] sm:$0xff]
    %v3679 = vld [vmem:[#allocation1 + $0x24] sm:$0xff]
    %v3680 = vld [vmem:[#allocation1 + $0x2d] sm:$0xff]
    %v3681 = vld [vmem:[#allocation1 + $0x36] sm:$0xff]
    %v3682 = vld [vmem:[#allocation1 + $0x3f] sm:$0xff]
    %3684 = vst [vmem:[#allocation1] ss:$9 sm:$0xff] %v3672
    %v3685 = vld [vmem:[#allocation1] sm:$0xff]
    %v3686 = vld [vmem:[#allocation1 + $0x9] sm:$0xff]
    %v3687 = vld [vmem:[#allocation1 + $0x12] sm:$0xff]
    %v3688 = vld [vmem:[#allocation1 + $0x1b] sm:$0xff]
    %v3689 = vld [vmem:[#allocation1 + $0x24] sm:$0xff]
    %v3690 = vld [vmem:[#allocation1 + $0x2d] sm:$0xff]
    %v3691 = vld [vmem:[#allocation1 + $0x36] sm:$0xff]
    %v3692 = vld [vmem:[#allocation1 + $0x3f] sm:$0xff]
    %3709 = vmatpush.bf16.msra.mxu0 %v1103
    %3710 = vmatpush.bf16.msra.mxu0 %v1101
    %3711 = vmatpush.bf16.msra.mxu0 %v1099
    %3712 = vmatpush.bf16.msra.mxu0 %v1097
    %3713 = vmatpush.bf16.msra.mxu0 %v1095
    %3714 = vmatpush.bf16.msra.mxu0 %v1093
    %3715 = vmatpush.bf16.msra.mxu0 %v1091
    %3716 = vmatpush.bf16.msra.mxu0 %v1089
    %3717 = vmatmul.bf16.gmra.mxu0 %v3675
    %v3718 = vpop.f32.mrf.mxu0
    %v3719 = vadd.f32 %v281, %v3718
    %v3720 = vpop.f32.mrf.mxu0
    %3721 = vdwg.mxu0
    %3722 = vmatpush.bf16.msra.mxu0 %v1119
    %3723 = vmatpush.bf16.msra.mxu0 %v1117
    %3724 = vmatpush.bf16.msra.mxu0 %v1115
    %3725 = vmatpush.bf16.msra.mxu0 %v1113
    %3726 = vmatpush.bf16.msra.mxu0 %v1111
    %3727 = vmatpush.bf16.msra.mxu0 %v1109
    %3728 = vmatpush.bf16.msra.mxu0 %v1107
    %3729 = vmatpush.bf16.msra.mxu0 %v1105
    %3730 = vmatmul.bf16.gmra.mxu0 %v3676
    %v3731 = vpop.f32.mrf.mxu0
    %v3732 = vadd.f32 %v3719, %v3731
    %v3733 = vpop.f32.mrf.mxu0
    %3734 = vdwg.mxu0
    %3735 = vmatpush.bf16.msra.mxu0 %v1135
    %3736 = vmatpush.bf16.msra.mxu0 %v1133
    %3737 = vmatpush.bf16.msra.mxu0 %v1131
    %3738 = vmatpush.bf16.msra.mxu0 %v1129
    %3739 = vmatpush.bf16.msra.mxu0 %v1127
    %3740 = vmatpush.bf16.msra.mxu0 %v1125
    %3741 = vmatpush.bf16.msra.mxu0 %v1123
    %3742 = vmatpush.bf16.msra.mxu0 %v1121
    %3743 = vmatmul.bf16.gmra.mxu0 %v3677
    %v3744 = vpop.f32.mrf.mxu0
    %v3745 = vadd.f32 %v3732, %v3744
    %v3746 = vpop.f32.mrf.mxu0
    %3747 = vdwg.mxu0
    %3748 = vmatpush.bf16.msra.mxu0 %v1151
    %3749 = vmatpush.bf16.msra.mxu0 %v1149
    %3750 = vmatpush.bf16.msra.mxu0 %v1147
    %3751 = vmatpush.bf16.msra.mxu0 %v1145
    %3752 = vmatpush.bf16.msra.mxu0 %v1143
    %3753 = vmatpush.bf16.msra.mxu0 %v1141
    %3754 = vmatpush.bf16.msra.mxu0 %v1139
    %3755 = vmatpush.bf16.msra.mxu0 %v1137
    %3756 = vmatmul.bf16.gmra.mxu0 %v3678
    %v3757 = vpop.f32.mrf.mxu0
    %v3758 = vadd.f32 %v3745, %v3757
    %v3759 = vpop.f32.mrf.mxu0
    %3760 = vdwg.mxu0
    %3761 = vmatpush.bf16.msra.mxu0 %v1167
    %3762 = vmatpush.bf16.msra.mxu0 %v1165
    %3763 = vmatpush.bf16.msra.mxu0 %v1163
    %3764 = vmatpush.bf16.msra.mxu0 %v1161
    %3765 = vmatpush.bf16.msra.mxu0 %v1159
    %3766 = vmatpush.bf16.msra.mxu0 %v1157
    %3767 = vmatpush.bf16.msra.mxu0 %v1155
    %3768 = vmatpush.bf16.msra.mxu0 %v1153
    %3769 = vmatmul.bf16.gmra.mxu0 %v3679
    %v3770 = vpop.f32.mrf.mxu0
    %v3771 = vadd.f32 %v3758, %v3770
    %v3772 = vpop.f32.mrf.mxu0
    %3773 = vdwg.mxu0
    %3774 = vmatpush.bf16.msra.mxu0 %v1183
    %3775 = vmatpush.bf16.msra.mxu0 %v1181
    %3776 = vmatpush.bf16.msra.mxu0 %v1179
    %3777 = vmatpush.bf16.msra.mxu0 %v1177
    %3778 = vmatpush.bf16.msra.mxu0 %v1175
    %3779 = vmatpush.bf16.msra.mxu0 %v1173
    %3780 = vmatpush.bf16.msra.mxu0 %v1171
    %3781 = vmatpush.bf16.msra.mxu0 %v1169
    %3782 = vmatmul.bf16.gmra.mxu0 %v3680
    %v3783 = vpop.f32.mrf.mxu0
    %v3784 = vadd.f32 %v3771, %v3783
    %v3785 = vpop.f32.mrf.mxu0
    %3786 = vdwg.mxu0
    %3787 = vmatpush.bf16.msra.mxu0 %v1199
    %3788 = vmatpush.bf16.msra.mxu0 %v1197
    %3789 = vmatpush.bf16.msra.mxu0 %v1195
    %3790 = vmatpush.bf16.msra.mxu0 %v1193
    %3791 = vmatpush.bf16.msra.mxu0 %v1191
    %3792 = vmatpush.bf16.msra.mxu0 %v1189
    %3793 = vmatpush.bf16.msra.mxu0 %v1187
    %3794 = vmatpush.bf16.msra.mxu0 %v1185
    %3795 = vmatmul.bf16.gmra.mxu0 %v3681
    %v3796 = vpop.f32.mrf.mxu0
    %v3797 = vadd.f32 %v3784, %v3796
    %v3798 = vpop.f32.mrf.mxu0
    %3799 = vdwg.mxu0
    %3800 = vmatpush.bf16.msra.mxu0 %v1215
    %3801 = vmatpush.bf16.msra.mxu0 %v1213
    %3802 = vmatpush.bf16.msra.mxu0 %v1211
    %3803 = vmatpush.bf16.msra.mxu0 %v1209
    %3804 = vmatpush.bf16.msra.mxu0 %v1207
    %3805 = vmatpush.bf16.msra.mxu0 %v1205
    %3806 = vmatpush.bf16.msra.mxu0 %v1203
    %3807 = vmatpush.bf16.msra.mxu0 %v1201
    %3808 = vmatmul.bf16.gmra.mxu0 %v3682
    %v3809 = vpop.f32.mrf.mxu0
    %v3810 = vadd.f32 %v3797, %v3809
    %v3811 = vpop.f32.mrf.mxu0
    %3812 = vdwg.mxu0
    %3813 = vmatpush.bf16.msra.mxu0 %v1231
    %3814 = vmatpush.bf16.msra.mxu0 %v1229
    %3815 = vmatpush.bf16.msra.mxu0 %v1227
    %3816 = vmatpush.bf16.msra.mxu0 %v1225
    %3817 = vmatpush.bf16.msra.mxu0 %v1223
    %3818 = vmatpush.bf16.msra.mxu0 %v1221
    %3819 = vmatpush.bf16.msra.mxu0 %v1219
    %3820 = vmatpush.bf16.msra.mxu0 %v1217
    %3821 = vmatmul.bf16.gmra.mxu0 %v3685
    %v3822 = vpop.f32.mrf.mxu0
    %v3823 = vadd.f32 %v3810, %v3822
    %v3824 = vpop.f32.mrf.mxu0
    %3825 = vdwg.mxu0
    %3826 = vmatpush.bf16.msra.mxu0 %v1247
    %3827 = vmatpush.bf16.msra.mxu0 %v1245
    %3828 = vmatpush.bf16.msra.mxu0 %v1243
    %3829 = vmatpush.bf16.msra.mxu0 %v1241
    %3830 = vmatpush.bf16.msra.mxu0 %v1239
    %3831 = vmatpush.bf16.msra.mxu0 %v1237
    %3832 = vmatpush.bf16.msra.mxu0 %v1235
    %3833 = vmatpush.bf16.msra.mxu0 %v1233
    %3834 = vmatmul.bf16.gmra.mxu0 %v3686
    %v3835 = vpop.f32.mrf.mxu0
    %v3836 = vadd.f32 %v3823, %v3835
    %v3837 = vpop.f32.mrf.mxu0
    %3838 = vdwg.mxu0
    %3839 = vmatpush.bf16.msra.mxu0 %v1263
    %3840 = vmatpush.bf16.msra.mxu0 %v1261
    %3841 = vmatpush.bf16.msra.mxu0 %v1259
    %3842 = vmatpush.bf16.msra.mxu0 %v1257
    %3843 = vmatpush.bf16.msra.mxu0 %v1255
    %3844 = vmatpush.bf16.msra.mxu0 %v1253
    %3845 = vmatpush.bf16.msra.mxu0 %v1251
    %3846 = vmatpush.bf16.msra.mxu0 %v1249
    %3847 = vmatmul.bf16.gmra.mxu0 %v3687
    %v3848 = vpop.f32.mrf.mxu0
    %v3849 = vadd.f32 %v3836, %v3848
    %v3850 = vpop.f32.mrf.mxu0
    %3851 = vdwg.mxu0
    %3852 = vmatpush.bf16.msra.mxu0 %v1279
    %3853 = vmatpush.bf16.msra.mxu0 %v1277
    %3854 = vmatpush.bf16.msra.mxu0 %v1275
    %3855 = vmatpush.bf16.msra.mxu0 %v1273
    %3856 = vmatpush.bf16.msra.mxu0 %v1271
    %3857 = vmatpush.bf16.msra.mxu0 %v1269
    %3858 = vmatpush.bf16.msra.mxu0 %v1267
    %3859 = vmatpush.bf16.msra.mxu0 %v1265
    %3860 = vmatmul.bf16.gmra.mxu0 %v3688
    %v3861 = vpop.f32.mrf.mxu0
    %v3862 = vadd.f32 %v3849, %v3861
    %v3863 = vpop.f32.mrf.mxu0
    %3864 = vdwg.mxu0
    %3865 = vmatpush.bf16.msra.mxu0 %v1295
    %3866 = vmatpush.bf16.msra.mxu0 %v1293
    %3867 = vmatpush.bf16.msra.mxu0 %v1291
    %3868 = vmatpush.bf16.msra.mxu0 %v1289
    %3869 = vmatpush.bf16.msra.mxu0 %v1287
    %3870 = vmatpush.bf16.msra.mxu0 %v1285
    %3871 = vmatpush.bf16.msra.mxu0 %v1283
    %3872 = vmatpush.bf16.msra.mxu0 %v1281
    %3873 = vmatmul.bf16.gmra.mxu0 %v3689
    %v3874 = vpop.f32.mrf.mxu0
    %v3875 = vadd.f32 %v3862, %v3874
    %v3876 = vpop.f32.mrf.mxu0
    %3877 = vdwg.mxu0
    %3878 = vmatpush.bf16.msra.mxu0 %v1311
    %3879 = vmatpush.bf16.msra.mxu0 %v1309
    %3880 = vmatpush.bf16.msra.mxu0 %v1307
    %3881 = vmatpush.bf16.msra.mxu0 %v1305
    %3882 = vmatpush.bf16.msra.mxu0 %v1303
    %3883 = vmatpush.bf16.msra.mxu0 %v1301
    %3884 = vmatpush.bf16.msra.mxu0 %v1299
    %3885 = vmatpush.bf16.msra.mxu0 %v1297
    %3886 = vmatmul.bf16.gmra.mxu0 %v3690
    %v3887 = vpop.f32.mrf.mxu0
    %v3888 = vadd.f32 %v3875, %v3887
    %v3889 = vpop.f32.mrf.mxu0
    %3890 = vdwg.mxu0
    %3891 = vmatpush.bf16.msra.mxu0 %v1327
    %3892 = vmatpush.bf16.msra.mxu0 %v1325
    %3893 = vmatpush.bf16.msra.mxu0 %v1323
    %3894 = vmatpush.bf16.msra.mxu0 %v1321
    %3895 = vmatpush.bf16.msra.mxu0 %v1319
    %3896 = vmatpush.bf16.msra.mxu0 %v1317
    %3897 = vmatpush.bf16.msra.mxu0 %v1315
    %3898 = vmatpush.bf16.msra.mxu0 %v1313
    %3899 = vmatmul.bf16.gmra.mxu0 %v3691
    %v3900 = vpop.f32.mrf.mxu0
    %v3901 = vadd.f32 %v3888, %v3900
    %v3902 = vpop.f32.mrf.mxu0
    %3903 = vdwg.mxu0
    %3904 = vmatpush.bf16.msra.mxu0 %v1343
    %3905 = vmatpush.bf16.msra.mxu0 %v1341
    %3906 = vmatpush.bf16.msra.mxu0 %v1339
    %3907 = vmatpush.bf16.msra.mxu0 %v1337
    %3908 = vmatpush.bf16.msra.mxu0 %v1335
    %3909 = vmatpush.bf16.msra.mxu0 %v1333
    %3910 = vmatpush.bf16.msra.mxu0 %v1331
    %3911 = vmatpush.bf16.msra.mxu0 %v1329
    %3912 = vmatmul.bf16.gmra.mxu0 %v3692
    %v3913 = vpop.f32.mrf.mxu0
    %v3914 = vadd.f32 %v3901, %v3913
    %v3915 = vpop.f32.mrf.mxu0
    %3916 = vdwg.mxu0
    %3917 = vmatpush.bf16.msra.mxu0 %v1104
    %3918 = vmatpush.bf16.msra.mxu0 %v1102
    %3919 = vmatpush.bf16.msra.mxu0 %v1100
    %3920 = vmatpush.bf16.msra.mxu0 %v1098
    %3921 = vmatpush.bf16.msra.mxu0 %v1096
    %3922 = vmatpush.bf16.msra.mxu0 %v1094
    %3923 = vmatpush.bf16.msra.mxu0 %v1092
    %3924 = vmatpush.bf16.msra.mxu0 %v1090
    %3925 = vmatmul.bf16.gmra.mxu0 %v3675
    %v3926 = vpop.f32.mrf.mxu0
    %v3927 = vadd.f32 %v282, %v3926
    %v3928 = vpop.f32.mrf.mxu0
    %3929 = vdwg.mxu0
    %3930 = vmatpush.bf16.msra.mxu0 %v1120
    %3931 = vmatpush.bf16.msra.mxu0 %v1118
    %3932 = vmatpush.bf16.msra.mxu0 %v1116
    %3933 = vmatpush.bf16.msra.mxu0 %v1114
    %3934 = vmatpush.bf16.msra.mxu0 %v1112
    %3935 = vmatpush.bf16.msra.mxu0 %v1110
    %3936 = vmatpush.bf16.msra.mxu0 %v1108
    %3937 = vmatpush.bf16.msra.mxu0 %v1106
    %3938 = vmatmul.bf16.gmra.mxu0 %v3676
    %v3939 = vpop.f32.mrf.mxu0
    %v3940 = vadd.f32 %v3927, %v3939
    %v3941 = vpop.f32.mrf.mxu0
    %3942 = vdwg.mxu0
    %3943 = vmatpush.bf16.msra.mxu0 %v1136
    %3944 = vmatpush.bf16.msra.mxu0 %v1134
    %3945 = vmatpush.bf16.msra.mxu0 %v1132
    %3946 = vmatpush.bf16.msra.mxu0 %v1130
    %3947 = vmatpush.bf16.msra.mxu0 %v1128
    %3948 = vmatpush.bf16.msra.mxu0 %v1126
    %3949 = vmatpush.bf16.msra.mxu0 %v1124
    %3950 = vmatpush.bf16.msra.mxu0 %v1122
    %3951 = vmatmul.bf16.gmra.mxu0 %v3677
    %v3952 = vpop.f32.mrf.mxu0
    %v3953 = vadd.f32 %v3940, %v3952
    %v3954 = vpop.f32.mrf.mxu0
    %3955 = vdwg.mxu0
    %3956 = vmatpush.bf16.msra.mxu0 %v1152
    %3957 = vmatpush.bf16.msra.mxu0 %v1150
    %3958 = vmatpush.bf16.msra.mxu0 %v1148
    %3959 = vmatpush.bf16.msra.mxu0 %v1146
    %3960 = vmatpush.bf16.msra.mxu0 %v1144
    %3961 = vmatpush.bf16.msra.mxu0 %v1142
    %3962 = vmatpush.bf16.msra.mxu0 %v1140
    %3963 = vmatpush.bf16.msra.mxu0 %v1138
    %3964 = vmatmul.bf16.gmra.mxu0 %v3678
    %v3965 = vpop.f32.mrf.mxu0
    %v3966 = vadd.f32 %v3953, %v3965
    %v3967 = vpop.f32.mrf.mxu0
    %3968 = vdwg.mxu0
    %3969 = vmatpush.bf16.msra.mxu0 %v1168
    %3970 = vmatpush.bf16.msra.mxu0 %v1166
    %3971 = vmatpush.bf16.msra.mxu0 %v1164
    %3972 = vmatpush.bf16.msra.mxu0 %v1162
    %3973 = vmatpush.bf16.msra.mxu0 %v1160
    %3974 = vmatpush.bf16.msra.mxu0 %v1158
    %3975 = vmatpush.bf16.msra.mxu0 %v1156
    %3976 = vmatpush.bf16.msra.mxu0 %v1154
    %3977 = vmatmul.bf16.gmra.mxu0 %v3679
    %v3978 = vpop.f32.mrf.mxu0
    %v3979 = vadd.f32 %v3966, %v3978
    %v3980 = vpop.f32.mrf.mxu0
    %3981 = vdwg.mxu0
    %3982 = vmatpush.bf16.msra.mxu0 %v1184
    %3983 = vmatpush.bf16.msra.mxu0 %v1182
    %3984 = vmatpush.bf16.msra.mxu0 %v1180
    %3985 = vmatpush.bf16.msra.mxu0 %v1178
    %3986 = vmatpush.bf16.msra.mxu0 %v1176
    %3987 = vmatpush.bf16.msra.mxu0 %v1174
    %3988 = vmatpush.bf16.msra.mxu0 %v1172
    %3989 = vmatpush.bf16.msra.mxu0 %v1170
    %3990 = vmatmul.bf16.gmra.mxu0 %v3680
    %v3991 = vpop.f32.mrf.mxu0
    %v3992 = vadd.f32 %v3979, %v3991
    %v3993 = vpop.f32.mrf.mxu0
    %3994 = vdwg.mxu0
    %3995 = vmatpush.bf16.msra.mxu0 %v1200
    %3996 = vmatpush.bf16.msra.mxu0 %v1198
    %3997 = vmatpush.bf16.msra.mxu0 %v1196
    %3998 = vmatpush.bf16.msra.mxu0 %v1194
    %3999 = vmatpush.bf16.msra.mxu0 %v1192
    %4000 = vmatpush.bf16.msra.mxu0 %v1190
    %4001 = vmatpush.bf16.msra.mxu0 %v1188
    %4002 = vmatpush.bf16.msra.mxu0 %v1186
    %4003 = vmatmul.bf16.gmra.mxu0 %v3681
    %v4004 = vpop.f32.mrf.mxu0
    %v4005 = vadd.f32 %v3992, %v4004
    %v4006 = vpop.f32.mrf.mxu0
    %4007 = vdwg.mxu0
    %4008 = vmatpush.bf16.msra.mxu0 %v1216
    %4009 = vmatpush.bf16.msra.mxu0 %v1214
    %4010 = vmatpush.bf16.msra.mxu0 %v1212
    %4011 = vmatpush.bf16.msra.mxu0 %v1210
    %4012 = vmatpush.bf16.msra.mxu0 %v1208
    %4013 = vmatpush.bf16.msra.mxu0 %v1206
    %4014 = vmatpush.bf16.msra.mxu0 %v1204
    %4015 = vmatpush.bf16.msra.mxu0 %v1202
    %4016 = vmatmul.bf16.gmra.mxu0 %v3682
    %v4017 = vpop.f32.mrf.mxu0
    %v4018 = vadd.f32 %v4005, %v4017
    %v4019 = vpop.f32.mrf.mxu0
    %4020 = vdwg.mxu0
    %4021 = vmatpush.bf16.msra.mxu0 %v1232
    %4022 = vmatpush.bf16.msra.mxu0 %v1230
    %4023 = vmatpush.bf16.msra.mxu0 %v1228
    %4024 = vmatpush.bf16.msra.mxu0 %v1226
    %4025 = vmatpush.bf16.msra.mxu0 %v1224
    %4026 = vmatpush.bf16.msra.mxu0 %v1222
    %4027 = vmatpush.bf16.msra.mxu0 %v1220
    %4028 = vmatpush.bf16.msra.mxu0 %v1218
    %4029 = vmatmul.bf16.gmra.mxu0 %v3685
    %v4030 = vpop.f32.mrf.mxu0
    %v4031 = vadd.f32 %v4018, %v4030
    %v4032 = vpop.f32.mrf.mxu0
    %4033 = vdwg.mxu0
    %4034 = vmatpush.bf16.msra.mxu0 %v1248
    %4035 = vmatpush.bf16.msra.mxu0 %v1246
    %4036 = vmatpush.bf16.msra.mxu0 %v1244
    %4037 = vmatpush.bf16.msra.mxu0 %v1242
    %4038 = vmatpush.bf16.msra.mxu0 %v1240
    %4039 = vmatpush.bf16.msra.mxu0 %v1238
    %4040 = vmatpush.bf16.msra.mxu0 %v1236
    %4041 = vmatpush.bf16.msra.mxu0 %v1234
    %4042 = vmatmul.bf16.gmra.mxu0 %v3686
    %v4043 = vpop.f32.mrf.mxu0
    %v4044 = vadd.f32 %v4031, %v4043
    %v4045 = vpop.f32.mrf.mxu0
    %4046 = vdwg.mxu0
    %4047 = vmatpush.bf16.msra.mxu0 %v1264
    %4048 = vmatpush.bf16.msra.mxu0 %v1262
    %4049 = vmatpush.bf16.msra.mxu0 %v1260
    %4050 = vmatpush.bf16.msra.mxu0 %v1258
    %4051 = vmatpush.bf16.msra.mxu0 %v1256
    %4052 = vmatpush.bf16.msra.mxu0 %v1254
    %4053 = vmatpush.bf16.msra.mxu0 %v1252
    %4054 = vmatpush.bf16.msra.mxu0 %v1250
    %4055 = vmatmul.bf16.gmra.mxu0 %v3687
    %v4056 = vpop.f32.mrf.mxu0
    %v4057 = vadd.f32 %v4044, %v4056
    %v4058 = vpop.f32.mrf.mxu0
    %4059 = vdwg.mxu0
    %4060 = vmatpush.bf16.msra.mxu0 %v1280
    %4061 = vmatpush.bf16.msra.mxu0 %v1278
    %4062 = vmatpush.bf16.msra.mxu0 %v1276
    %4063 = vmatpush.bf16.msra.mxu0 %v1274
    %4064 = vmatpush.bf16.msra.mxu0 %v1272
    %4065 = vmatpush.bf16.msra.mxu0 %v1270
    %4066 = vmatpush.bf16.msra.mxu0 %v1268
    %4067 = vmatpush.bf16.msra.mxu0 %v1266
    %4068 = vmatmul.bf16.gmra.mxu0 %v3688
    %v4069 = vpop.f32.mrf.mxu0
    %v4070 = vadd.f32 %v4057, %v4069
    %v4071 = vpop.f32.mrf.mxu0
    %4072 = vdwg.mxu0
    %4073 = vmatpush.bf16.msra.mxu0 %v1296
    %4074 = vmatpush.bf16.msra.mxu0 %v1294
    %4075 = vmatpush.bf16.msra.mxu0 %v1292
    %4076 = vmatpush.bf16.msra.mxu0 %v1290
    %4077 = vmatpush.bf16.msra.mxu0 %v1288
    %4078 = vmatpush.bf16.msra.mxu0 %v1286
    %4079 = vmatpush.bf16.msra.mxu0 %v1284
    %4080 = vmatpush.bf16.msra.mxu0 %v1282
    %4081 = vmatmul.bf16.gmra.mxu0 %v3689
    %v4082 = vpop.f32.mrf.mxu0
    %v4083 = vadd.f32 %v4070, %v4082
    %v4084 = vpop.f32.mrf.mxu0
    %4085 = vdwg.mxu0
    %4086 = vmatpush.bf16.msra.mxu0 %v1312
    %4087 = vmatpush.bf16.msra.mxu0 %v1310
    %4088 = vmatpush.bf16.msra.mxu0 %v1308
    %4089 = vmatpush.bf16.msra.mxu0 %v1306
    %4090 = vmatpush.bf16.msra.mxu0 %v1304
    %4091 = vmatpush.bf16.msra.mxu0 %v1302
    %4092 = vmatpush.bf16.msra.mxu0 %v1300
    %4093 = vmatpush.bf16.msra.mxu0 %v1298
    %4094 = vmatmul.bf16.gmra.mxu0 %v3690
    %v4095 = vpop.f32.mrf.mxu0
    %v4096 = vadd.f32 %v4083, %v4095
    %v4097 = vpop.f32.mrf.mxu0
    %4098 = vdwg.mxu0
    %4099 = vmatpush.bf16.msra.mxu0 %v1328
    %4100 = vmatpush.bf16.msra.mxu0 %v1326
    %4101 = vmatpush.bf16.msra.mxu0 %v1324
    %4102 = vmatpush.bf16.msra.mxu0 %v1322
    %4103 = vmatpush.bf16.msra.mxu0 %v1320
    %4104 = vmatpush.bf16.msra.mxu0 %v1318
    %4105 = vmatpush.bf16.msra.mxu0 %v1316
    %4106 = vmatpush.bf16.msra.mxu0 %v1314
    %4107 = vmatmul.bf16.gmra.mxu0 %v3691
    %v4108 = vpop.f32.mrf.mxu0
    %v4109 = vadd.f32 %v4096, %v4108
    %v4110 = vpop.f32.mrf.mxu0
    %4111 = vdwg.mxu0
    %4112 = vmatpush.bf16.msra.mxu0 %v1344
    %4113 = vmatpush.bf16.msra.mxu0 %v1342
    %4114 = vmatpush.bf16.msra.mxu0 %v1340
    %4115 = vmatpush.bf16.msra.mxu0 %v1338
    %4116 = vmatpush.bf16.msra.mxu0 %v1336
    %4117 = vmatpush.bf16.msra.mxu0 %v1334
    %4118 = vmatpush.bf16.msra.mxu0 %v1332
    %4119 = vmatpush.bf16.msra.mxu0 %v1330
    %4120 = vmatmul.bf16.gmra.mxu0 %v3692
    %v4121 = vpop.f32.mrf.mxu0
    %v4122 = vadd.f32 %v4109, %v4121
    %v4123 = vpop.f32.mrf.mxu0
    %4124 = vdwg.mxu0
    %v4125 = vmax.f32 %v3914, 0.0
    %v4126 = vmax.f32 %v4122, 0.0
    %v4127 = vld [vmem:[%s3 + $0x300] sm:$0xff]
    %v4128 = vld [vmem:[%s3 + $0x308] sm:$0xff]
    %v4129 = vld [vmem:[%s3 + $0x310] sm:$0xff]
    %v4130 = vld [vmem:[%s3 + $0x318] sm:$0xff]
    %v4131 = vld [vmem:[%s3 + $0x320] sm:$0xff]
    %v4132 = vld [vmem:[%s3 + $0x328] sm:$0xff]
    %v4133 = vld [vmem:[%s3 + $0x330] sm:$0xff]
    %v4134 = vld [vmem:[%s3 + $0x338] sm:$0xff]
    %v4135 = vld [vmem:[%s3 + $0x340] sm:$0xff]
    %v4136 = vld [vmem:[%s3 + $0x348] sm:$0xff]
    %v4137 = vld [vmem:[%s3 + $0x350] sm:$0xff]
    %v4138 = vld [vmem:[%s3 + $0x358] sm:$0xff]
    %v4139 = vld [vmem:[%s3 + $0x360] sm:$0xff]
    %v4140 = vld [vmem:[%s3 + $0x368] sm:$0xff]
    %v4141 = vld [vmem:[%s3 + $0x370] sm:$0xff]
    %v4142 = vld [vmem:[%s3 + $0x378] sm:$0xff]
    %v4143 = vld [vmem:[%s3 + $0x380] sm:$0xff]
    %v4144 = vld [vmem:[%s3 + $0x388] sm:$0xff]
    %v4145 = vld [vmem:[%s3 + $0x390] sm:$0xff]
    %v4146 = vld [vmem:[%s3 + $0x398] sm:$0xff]
    %v4147 = vld [vmem:[%s3 + $0x3a0] sm:$0xff]
    %v4148 = vld [vmem:[%s3 + $0x3a8] sm:$0xff]
    %v4149 = vld [vmem:[%s3 + $0x3b0] sm:$0xff]
    %v4150 = vld [vmem:[%s3 + $0x3b8] sm:$0xff]
    %v4151 = vld [vmem:[%s3 + $0x3c0] sm:$0xff]
    %v4152 = vld [vmem:[%s3 + $0x3c8] sm:$0xff]
    %v4153 = vld [vmem:[%s3 + $0x3d0] sm:$0xff]
    %v4154 = vld [vmem:[%s3 + $0x3d8] sm:$0xff]
    %v4155 = vld [vmem:[%s3 + $0x3e0] sm:$0xff]
    %v4156 = vld [vmem:[%s3 + $0x3e8] sm:$0xff]
    %v4157 = vld [vmem:[%s3 + $0x3f0] sm:$0xff]
    %v4158 = vld [vmem:[%s3 + $0x3f8] sm:$0xff]
    %v4159 = vpack.c.bf16 %v4125, %v4125
    %v4160 = vpack.c.bf16 %v4126, %v4126
    %v4193 = vunpack.c.l.b16 %v4127
    %v4194 = vunpack.c.h.b16 %v4127
    %v4195 = vunpack.c.l.b16 %v4128
    %v4196 = vunpack.c.h.b16 %v4128
    %v4197 = vunpack.c.l.b16 %v4129
    %v4198 = vunpack.c.h.b16 %v4129
    %v4199 = vunpack.c.l.b16 %v4130
    %v4200 = vunpack.c.h.b16 %v4130
    %v4201 = vunpack.c.l.b16 %v4131
    %v4202 = vunpack.c.h.b16 %v4131
    %v4203 = vunpack.c.l.b16 %v4132
    %v4204 = vunpack.c.h.b16 %v4132
    %v4205 = vunpack.c.l.b16 %v4133
    %v4206 = vunpack.c.h.b16 %v4133
    %v4207 = vunpack.c.l.b16 %v4134
    %v4208 = vunpack.c.h.b16 %v4134
    %v4209 = vunpack.c.l.b16 %v4135
    %v4210 = vunpack.c.h.b16 %v4135
    %v4211 = vunpack.c.l.b16 %v4136
    %v4212 = vunpack.c.h.b16 %v4136
    %v4213 = vunpack.c.l.b16 %v4137
    %v4214 = vunpack.c.h.b16 %v4137
    %v4215 = vunpack.c.l.b16 %v4138
    %v4216 = vunpack.c.h.b16 %v4138
    %v4217 = vunpack.c.l.b16 %v4139
    %v4218 = vunpack.c.h.b16 %v4139
    %v4219 = vunpack.c.l.b16 %v4140
    %v4220 = vunpack.c.h.b16 %v4140
    %v4221 = vunpack.c.l.b16 %v4141
    %v4222 = vunpack.c.h.b16 %v4141
    %v4223 = vunpack.c.l.b16 %v4142
    %v4224 = vunpack.c.h.b16 %v4142
    %v4225 = vunpack.c.l.b16 %v4143
    %v4226 = vunpack.c.h.b16 %v4143
    %v4227 = vunpack.c.l.b16 %v4144
    %v4228 = vunpack.c.h.b16 %v4144
    %v4229 = vunpack.c.l.b16 %v4145
    %v4230 = vunpack.c.h.b16 %v4145
    %v4231 = vunpack.c.l.b16 %v4146
    %v4232 = vunpack.c.h.b16 %v4146
    %v4233 = vunpack.c.l.b16 %v4147
    %v4234 = vunpack.c.h.b16 %v4147
    %v4235 = vunpack.c.l.b16 %v4148
    %v4236 = vunpack.c.h.b16 %v4148
    %v4237 = vunpack.c.l.b16 %v4149
    %v4238 = vunpack.c.h.b16 %v4149
    %v4239 = vunpack.c.l.b16 %v4150
    %v4240 = vunpack.c.h.b16 %v4150
    %v4241 = vunpack.c.l.b16 %v4151
    %v4242 = vunpack.c.h.b16 %v4151
    %v4243 = vunpack.c.l.b16 %v4152
    %v4244 = vunpack.c.h.b16 %v4152
    %v4245 = vunpack.c.l.b16 %v4153
    %v4246 = vunpack.c.h.b16 %v4153
    %v4247 = vunpack.c.l.b16 %v4154
    %v4248 = vunpack.c.h.b16 %v4154
    %v4249 = vunpack.c.l.b16 %v4155
    %v4250 = vunpack.c.h.b16 %v4155
    %v4251 = vunpack.c.l.b16 %v4156
    %v4252 = vunpack.c.h.b16 %v4156
    %v4253 = vunpack.c.l.b16 %v4157
    %v4254 = vunpack.c.h.b16 %v4157
    %v4255 = vunpack.c.l.b16 %v4158
    %v4256 = vunpack.c.h.b16 %v4158
    %v4257 = vpack.c.b16 %v4195, %v4193
    %v4258 = vpack.c.b16 %v4196, %v4194
    %v4259 = vpack.c.b16 %v4199, %v4197
    %v4260 = vpack.c.b16 %v4200, %v4198
    %v4261 = vpack.c.b16 %v4203, %v4201
    %v4262 = vpack.c.b16 %v4204, %v4202
    %v4263 = vpack.c.b16 %v4207, %v4205
    %v4264 = vpack.c.b16 %v4208, %v4206
    %v4265 = vpack.c.b16 %v4211, %v4209
    %v4266 = vpack.c.b16 %v4212, %v4210
    %v4267 = vpack.c.b16 %v4215, %v4213
    %v4268 = vpack.c.b16 %v4216, %v4214
    %v4269 = vpack.c.b16 %v4219, %v4217
    %v4270 = vpack.c.b16 %v4220, %v4218
    %v4271 = vpack.c.b16 %v4223, %v4221
    %v4272 = vpack.c.b16 %v4224, %v4222
    %v4273 = vpack.c.b16 %v4227, %v4225
    %v4274 = vpack.c.b16 %v4228, %v4226
    %v4275 = vpack.c.b16 %v4231, %v4229
    %v4276 = vpack.c.b16 %v4232, %v4230
    %v4277 = vpack.c.b16 %v4235, %v4233
    %v4278 = vpack.c.b16 %v4236, %v4234
    %v4279 = vpack.c.b16 %v4239, %v4237
    %v4280 = vpack.c.b16 %v4240, %v4238
    %v4281 = vpack.c.b16 %v4243, %v4241
    %v4282 = vpack.c.b16 %v4244, %v4242
    %v4283 = vpack.c.b16 %v4247, %v4245
    %v4284 = vpack.c.b16 %v4248, %v4246
    %v4285 = vpack.c.b16 %v4251, %v4249
    %v4286 = vpack.c.b16 %v4252, %v4250
    %v4287 = vpack.c.b16 %v4255, %v4253
    %v4288 = vpack.c.b16 %v4256, %v4254
    %4321 = vmatpush.bf16.msra.mxu0 %v4271
    %4322 = vmatpush.bf16.msra.mxu0 %v4269
    %4323 = vmatpush.bf16.msra.mxu0 %v4267
    %4324 = vmatpush.bf16.msra.mxu0 %v4265
    %4325 = vmatpush.bf16.msra.mxu0 %v4263
    %4326 = vmatpush.bf16.msra.mxu0 %v4261
    %4327 = vmatpush.bf16.msra.mxu0 %v4259
    %4328 = vmatpush.bf16.msra.mxu0 %v4257
    %4329 = vmatmul.bf16.gmra.mxu0 %v4159
    %v4330 = vpop.f32.mrf.mxu0
    %v4331 = vadd.f32 0.0, %v4330
    %v4332 = vpop.f32.mrf.mxu0
    %4333 = vdwg.mxu0
    %4334 = vmatpush.bf16.msra.mxu0 %v4287
    %4335 = vmatpush.bf16.msra.mxu0 %v4285
    %4336 = vmatpush.bf16.msra.mxu0 %v4283
    %4337 = vmatpush.bf16.msra.mxu0 %v4281
    %4338 = vmatpush.bf16.msra.mxu0 %v4279
    %4339 = vmatpush.bf16.msra.mxu0 %v4277
    %4340 = vmatpush.bf16.msra.mxu0 %v4275
    %4341 = vmatpush.bf16.msra.mxu0 %v4273
    %4342 = vmatmul.bf16.gmra.mxu0 %v4160
    %v4343 = vpop.f32.mrf.mxu0
    %v4344 = vadd.f32 %v4331, %v4343
    %v4345 = vpop.f32.mrf.mxu0
    %4346 = vdwg.mxu0
    %4347 = vmatpush.bf16.msra.mxu0 %v4272
    %4348 = vmatpush.bf16.msra.mxu0 %v4270
    %4349 = vmatpush.bf16.msra.mxu0 %v4268
    %4350 = vmatpush.bf16.msra.mxu0 %v4266
    %4351 = vmatpush.bf16.msra.mxu0 %v4264
    %4352 = vmatpush.bf16.msra.mxu0 %v4262
    %4353 = vmatpush.bf16.msra.mxu0 %v4260
    %4354 = vmatpush.bf16.msra.mxu0 %v4258
    %4355 = vmatmul.bf16.gmra.mxu0 %v4159
    %v4356 = vpop.f32.mrf.mxu0
    %v4357 = vadd.f32 0.0, %v4356
    %v4358 = vpop.f32.mrf.mxu0
    %4359 = vdwg.mxu0
    %4360 = vmatpush.bf16.msra.mxu0 %v4288
    %4361 = vmatpush.bf16.msra.mxu0 %v4286
    %4362 = vmatpush.bf16.msra.mxu0 %v4284
    %4363 = vmatpush.bf16.msra.mxu0 %v4282
    %4364 = vmatpush.bf16.msra.mxu0 %v4280
    %4365 = vmatpush.bf16.msra.mxu0 %v4278
    %4366 = vmatpush.bf16.msra.mxu0 %v4276
    %4367 = vmatpush.bf16.msra.mxu0 %v4274
    %4368 = vmatmul.bf16.gmra.mxu0 %v4160
    %v4369 = vpop.f32.mrf.mxu0
    %v4370 = vadd.f32 %v4357, %v4369
    %v4371 = vpop.f32.mrf.mxu0
    %4372 = vdwg.mxu0
    %v4373 = vadd.f32 %v3669, %v4344
    %v4374 = vadd.f32 %v3670, %v4370
    %v4375 = vld [vmem:[%s4] sm:$0x3]
    %v4377 = vperm.slane %v4375, 0
    %v4378 = vperm.slane %v4375, 1
    %v4381 = vadd.f32 %v4373, %v4377
    %v4382 = vadd.f32 %v4374, %v4378
    %v4385 = vrot.slane %v4382, 6
    %vm4386 = vcmask 1041408
    %v4387 = vsel %vm4386, %v4381, %v4385
    %4389 = vst [vmem:[#allocation2] sm:$0xf] %v4387
    // Predicated region
    $region22: #{_unnamed_function_.5} parent=1 // pred_check
      _
    $region23: #{_unnamed_function_.5} parent=1 // pred_check_branch
      %4391 = sbr.rel (0) target = $region25
    $region24: #{_unnamed_function_.5} parent=1 // pred_region
      %4393 = vsyncadd [#allocation3], 0
      %s4395 = sshll.u32 [#allocation2], 4
      %s4396 = int_to_ptr.vmem [resolvable:$true] %s4395
      %s4397 = sshll.u32 %s5, 4
      %s4398 = int_to_ptr.hbm [resolvable:$true] %s4397
      %4400 = dma.vmem_to_hbm [thread:$0]  %s4396, 64, %s4398, [#allocation3]
    $region25: #{_unnamed_function_.5} parent=1 // pred_fallthru
      _
    // Predicated region
    $region26: #{_unnamed_function_.5} parent=1 // pred_check
      _
    $region27: #{_unnamed_function_.5} parent=1 // pred_check_branch
      %4402 = sbr.rel (0) target = $region29
    $region28: #{_unnamed_function_.5} parent=1 // pred_region
      %4404 = dma.done [#allocation3], 64
    $region29: #{_unnamed_function_.5} parent=1 // pred_fallthru
      _
    %4405 = vsyncpa [#allocation3], 1

</llo_original>
